<compile_context>
chip_gen: v7x
topology: tpu7x:2x2x1
jax: 0.10.0
libtpu: 0.0.40
codegen_flags: <defaults>
</compile_context>

<pallas_src>
import functools

import jax
import jax.numpy as jnp
from jax.experimental import pallas as pl
from jax.experimental.pallas import tpu as pltpu


def _full_spec(shape):
    """BlockSpec covering the whole array (single grid step)."""
    nd = len(shape)
    return pl.BlockSpec(shape, lambda i, _nd=nd: (0,) * _nd)


# ----------------------------------------------------------------------------
# Fused conv3x3 (pad=1) + bias + ReLU + maxpool 2x2/2  --  one kernel per stage
# ----------------------------------------------------------------------------
def _conv_relu_pool_kernel(ph_ref, w_ref, b_ref, o_ref, *, H, W):
    """ph_ref : (1, 4, Pq, Cin)  space-to-depth phases of the zero-padded input,
                                  spatially flattened; phase (a,b) at index a*2+b.
       w_ref  : (9, Cin, Cout)   conv taps, tap (ky,kx) at index ky*3+kx.
       b_ref  : (1, Cout)
       o_ref  : (1, Hh*Wq, Cout) pooled output; every row of Wq entries holds
                                  Wh valid columns + 1 junk column (stripped by
                                  the wrapper)."""
    Hh, Wh = H // 2, W // 2
    Wq = Wh + 1
    rows = Hh * Wq

    m = None
    for dy in (0, 1):               # pooling-window parity (rows)
        for dx in (0, 1):           # pooling-window parity (cols)
            acc = None
            for ky in range(3):     # conv taps
                for kx in range(3):
                    r, c = dy + ky, dx + kx
                    phase = (r % 2) * 2 + (c % 2)
                    start = (r // 2) * Wq + (c // 2)
                    # Contiguous static slice -> (rows, Cin); the shifted-slice
                    # im2col lives entirely in VMEM.
                    xs = ph_ref[0, phase, start:start + rows, :]
                    contrib = jnp.dot(xs, w_ref[ky * 3 + kx],
                                      preferred_element_type=jnp.float32)
                    acc = contrib if acc is None else acc + contrib
            # maxpool fused: running max over the 4 pooling parities.
            m = acc if m is None else jnp.maximum(m, acc)

    # bias + ReLU commute with the pooling max (same bias for all 4 parities).
    o_ref[0] = jnp.maximum(m + b_ref[...], 0.0).astype(o_ref.dtype)


def conv3x3_relu_pool(x, w_hwio, b):
    """x: (N, H, W, Cin) f32, H and W even. Returns (N, H/2, W/2, Cout) f32."""
    N, H, W, Cin = x.shape
    Cout = w_hwio.shape[-1]
    Hh, Wh = H // 2, W // 2
    Hq, Wq = Hh + 1, Wh + 1                    # phase-grid extents ((H+2)/2, ...)
    rows = Hh * Wq
    Pq = ((Hq * Wq + 1 + 7) // 8) * 8          # room for slice overrun, 8-aligned

    # Layout glue (XLA, no data inflation): zero-pad, 2x2 space-to-depth phase
    # split, spatial flatten.  Total bytes == input bytes.
    xp = jnp.pad(x, ((0, 0), (1, 1), (1, 1), (0, 0)))
    ph = xp.reshape(N, Hq, 2, Wq, 2, Cin).transpose(0, 2, 4, 1, 3, 5)
    ph = ph.reshape(N, 4, Hq * Wq, Cin)
    ph = jnp.pad(ph, ((0, 0), (0, 0), (0, Pq - Hq * Wq), (0, 0)))

    w = w_hwio.reshape(9, Cin, Cout).astype(jnp.float32)  # tap-major (ky*3+kx)
    b_row = b.reshape(1, Cout).astype(jnp.float32)

    out_flat = pl.pallas_call(
        functools.partial(_conv_relu_pool_kernel, H=H, W=W),
        out_shape=jax.ShapeDtypeStruct((N, rows, Cout), jnp.float32),
        grid=(N,),
        in_specs=[
            pl.BlockSpec((1, 4, Pq, Cin), lambda n: (n, 0, 0, 0)),
            pl.BlockSpec((9, Cin, Cout), lambda n: (0, 0, 0)),
            pl.BlockSpec((1, Cout), lambda n: (0, 0)),
        ],
        out_specs=pl.BlockSpec((1, rows, Cout), lambda n: (n, 0, 0)),
        compiler_params=pltpu.CompilerParams(
            dimension_semantics=("parallel",)),   # v7x: shard batch over 2 TCs
    )(ph, w, b_row)

    # Strip the per-row junk column (tiny pooled activation, cheap XLA slice).
    return out_flat.reshape(N, Hh, Wq, Cout)[:, :, :Wh, :]


# ----------------------------------------------------------------------------
# Fused FC tail: cls1+ReLU -> cls2+ReLU -> fc -> L2 normalize  (one kernel)
# ----------------------------------------------------------------------------
def _fc_tail_kernel(x_ref, w1_ref, b1_ref, w2_ref, b2_ref, w3_ref, b3_ref, o_ref):
    h = jnp.dot(x_ref[...], w1_ref[...], preferred_element_type=jnp.float32)
    h = jnp.maximum(h + b1_ref[...], 0.0)
    h = jnp.dot(h.astype(w2_ref.dtype), w2_ref[...],
                preferred_element_type=jnp.float32)
    h = jnp.maximum(h + b2_ref[...], 0.0)
    y = jnp.dot(h.astype(w3_ref.dtype), w3_ref[...],
                preferred_element_type=jnp.float32)
    y = y + b3_ref[...]
    # L2 normalize over dim 1.  rsqrt runs on the otherwise-idle EUP slot.
    # A zero row yields NaN, matching PyTorch's x / x.norm(p=2) (no eps).
    inv = jax.lax.rsqrt(jnp.sum(y * y, axis=1, keepdims=True))
    o_ref[...] = (y * inv).astype(o_ref.dtype)


def fc_tail(feat, w1, b1, w2, b2, w3, b3):
    """Weights pre-transposed to (in, out) bf16; biases (1, out) f32."""
    M = feat.shape[0]
    E = w3.shape[1]
    args = (feat.astype(jnp.bfloat16), w1, b1, w2, b2, w3, b3)
    return pl.pallas_call(
        _fc_tail_kernel,
        out_shape=jax.ShapeDtypeStruct((M, E), jnp.float32),
        grid=(1,),
        in_specs=[_full_spec(a.shape) for a in args],
        out_specs=_full_spec((M, E)),
        compiler_params=pltpu.CompilerParams(
            dimension_semantics=("arbitrary",)),
    )(*args)


# ----------------------------------------------------------------------------
# Parameters (deterministic, synthetic — no checkpoint loading)
# ----------------------------------------------------------------------------
def init_params(key, embed_size=32):
    ks = jax.random.split(key, 10)

    def rnd(k, shape, scale):
        return (scale * jax.random.normal(k, shape)).astype(jnp.float32)

    return {
        # features (scaled-down VGG-style backbone), HWIO conv weights
        "conv1_w": rnd(ks[0], (3, 3, 3, 8), 0.10),
        "conv1_b": rnd(ks[1], (8,), 0.10),
        "conv2_w": rnd(ks[2], (3, 3, 8, 16), 0.10),
        "conv2_b": rnd(ks[3], (16,), 0.10),
        # classifier minus final layer (PyTorch Linear convention: (out, in))
        "cls1_w": rnd(ks[4], (64, 16 * 4 * 4), 0.05),
        "cls1_b": rnd(ks[5], (64,), 0.05),
        "cls2_w": rnd(ks[6], (64, 64), 0.05),
        "cls2_b": rnd(ks[7], (64,), 0.05),
        # self.fc: in_features -> embed_size
        "fc_w": rnd(ks[8], (embed_size, 64), 0.05),
        "fc_b": rnd(ks[9], (embed_size,), 0.05),
    }


# ----------------------------------------------------------------------------
# Forward pass (== ImgEncoderFixed.forward; backbone frozen/no_grad in the
# original — irrelevant for inference-only semantics here)
# ----------------------------------------------------------------------------
def img_encoder_fixed(params, image_nchw):
    x = jnp.transpose(image_nchw, (0, 2, 3, 1))   # NCHW -> NHWC (layout choice)

    # self.model.features : fused conv+ReLU+maxpool stages (one kernel each)
    x = conv3x3_relu_pool(x, params["conv1_w"], params["conv1_b"])
    x = conv3x3_relu_pool(x, params["conv2_w"], params["conv2_b"])

    # flatten (weights are synthetic, so NHWC flatten order is equivalent)
    n = x.shape[0]
    feat = x.reshape(n, -1)

    # classifier (last Linear removed, Dropout==identity) + self.fc + L2 norm,
    # all fused in a single kernel; intermediates never leave VMEM.
    out = fc_tail(
        feat,
        params["cls1_w"].T.astype(jnp.bfloat16), params["cls1_b"].reshape(1, -1),
        params["cls2_w"].T.astype(jnp.bfloat16), params["cls2_b"].reshape(1, -1),
        params["fc_w"].T.astype(jnp.bfloat16), params["fc_b"].reshape(1, -1),
    )
    return out


if __name__ == "__main__":
    key = jax.random.PRNGKey(0)
    pkey, xkey = jax.random.split(key)
    embed_size = 32
    params = init_params(pkey, embed_size=embed_size)

    # PyTorch-style NCHW input at small scale
    image = jax.random.normal(xkey, (2, 3, 16, 16), dtype=jnp.float32)

    out = jax.jit(img_encoder_fixed)(params, image)
    out = jax.block_until_ready(out)

    assert out.shape == (2, embed_size), out.shape
    assert bool(jnp.all(jnp.isfinite(out)))
    # rows are L2-normalized
    norms = jnp.linalg.norm(out, axis=1)
    assert bool(jnp.all(jnp.abs(norms - 1.0) < 1e-4)), norms
    print("KERNEL_OK")
</pallas_src>

<mosaic_0001>
module attributes {stable_mosaic.version = 11 : i64} {
  func.func @_conv_relu_pool_kernel(%arg0: i32, %arg1: memref<1x4x88x3xf32, #tpu.memory_space<vmem>>, %arg2: memref<9x3x8xf32, #tpu.memory_space<vmem>>, %arg3: memref<1x8xf32, #tpu.memory_space<vmem>>, %arg4: memref<1x72x8xf32, #tpu.memory_space<vmem>>) attributes {dimension_semantics = [#tpu.dimension_semantics<parallel>], iteration_bounds = array<i64: 2>, scalar_prefetch = 0 : i64, scratch_operands = 0 : i64, tpu.core_type = #tpu.core_type<tc>, window_params = [{transform_indices = @transform_0, window_bounds = array<i64: 1, 4, 88, 3>}, {pipeline_mode = #tpu.pipeline_mode<synchronous>, transform_indices = @transform_1, window_bounds = array<i64: 9, 3, 8>}, {pipeline_mode = #tpu.pipeline_mode<synchronous>, transform_indices = @transform_2, window_bounds = array<i64: 1, 8>}, {transform_indices = @transform_3, window_bounds = array<i64: 1, 72, 8>}]} {
    %c0 = arith.constant 0 : index
    %c0_0 = arith.constant 0 : index
    %c0_1 = arith.constant 0 : index
    %c0_2 = arith.constant 0 : index
    %0 = vector.load %arg1[%c0, %c0_0, %c0_1, %c0_2] : memref<1x4x88x3xf32, #tpu.memory_space<vmem>>, vector<1x1x72x3xf32>
    %1 = vector.shape_cast %0 : vector<1x1x72x3xf32> to vector<72x3xf32>
    %c0_3 = arith.constant 0 : index
    %c0_4 = arith.constant 0 : index
    %c0_5 = arith.constant 0 : index
    %2 = vector.load %arg2[%c0_3, %c0_4, %c0_5] : memref<9x3x8xf32, #tpu.memory_space<vmem>>, vector<1x3x8xf32>
    %3 = vector.shape_cast %2 : vector<1x3x8xf32> to vector<3x8xf32>
    %cst = arith.constant dense<0.000000e+00> : vector<72x8xf32>
    %4 = tpu.matmul %1, %3, %cst {dimension_numbers = #tpu.dot_dimension_numbers<[1], [0], [0], [1], [0, 0, 1, 1], [], []>} : vector<72x3xf32>, vector<3x8xf32>, vector<72x8xf32> -> vector<72x8xf32>
    %c0_6 = arith.constant 0 : index
    %c1 = arith.constant 1 : index
    %c0_7 = arith.constant 0 : index
    %c0_8 = arith.constant 0 : index
    %5 = vector.load %arg1[%c0_6, %c1, %c0_7, %c0_8] : memref<1x4x88x3xf32, #tpu.memory_space<vmem>>, vector<1x1x72x3xf32>
    %6 = vector.shape_cast %5 : vector<1x1x72x3xf32> to vector<72x3xf32>
    %c1_9 = arith.constant 1 : index
    %c0_10 = arith.constant 0 : index
    %c0_11 = arith.constant 0 : index
    %7 = vector.load %arg2[%c1_9, %c0_10, %c0_11] : memref<9x3x8xf32, #tpu.memory_space<vmem>>, vector<1x3x8xf32>
    %8 = vector.shape_cast %7 : vector<1x3x8xf32> to vector<3x8xf32>
    %cst_12 = arith.constant dense<0.000000e+00> : vector<72x8xf32>
    %9 = tpu.matmul %6, %8, %cst_12 {dimension_numbers = #tpu.dot_dimension_numbers<[1], [0], [0], [1], [0, 0, 1, 1], [], []>} : vector<72x3xf32>, vector<3x8xf32>, vector<72x8xf32> -> vector<72x8xf32>
    %10 = arith.addf %4, %9 : vector<72x8xf32>
    %c0_13 = arith.constant 0 : index
    %c0_14 = arith.constant 0 : index
    %c1_15 = arith.constant 1 : index
    %c0_16 = arith.constant 0 : index
    %11 = vector.load %arg1[%c0_13, %c0_14, %c1_15, %c0_16] : memref<1x4x88x3xf32, #tpu.memory_space<vmem>>, vector<1x1x72x3xf32>
    %12 = vector.shape_cast %11 : vector<1x1x72x3xf32> to vector<72x3xf32>
    %c2 = arith.constant 2 : index
    %c0_17 = arith.constant 0 : index
    %c0_18 = arith.constant 0 : index
    %13 = vector.load %arg2[%c2, %c0_17, %c0_18] : memref<9x3x8xf32, #tpu.memory_space<vmem>>, vector<1x3x8xf32>
    %14 = vector.shape_cast %13 : vector<1x3x8xf32> to vector<3x8xf32>
    %cst_19 = arith.constant dense<0.000000e+00> : vector<72x8xf32>
    %15 = tpu.matmul %12, %14, %cst_19 {dimension_numbers = #tpu.dot_dimension_numbers<[1], [0], [0], [1], [0, 0, 1, 1], [], []>} : vector<72x3xf32>, vector<3x8xf32>, vector<72x8xf32> -> vector<72x8xf32>
    %16 = arith.addf %10, %15 : vector<72x8xf32>
    %c0_20 = arith.constant 0 : index
    %c2_21 = arith.constant 2 : index
    %c0_22 = arith.constant 0 : index
    %c0_23 = arith.constant 0 : index
    %17 = vector.load %arg1[%c0_20, %c2_21, %c0_22, %c0_23] : memref<1x4x88x3xf32, #tpu.memory_space<vmem>>, vector<1x1x72x3xf32>
    %18 = vector.shape_cast %17 : vector<1x1x72x3xf32> to vector<72x3xf32>
    %c3 = arith.constant 3 : index
    %c0_24 = arith.constant 0 : index
    %c0_25 = arith.constant 0 : index
    %19 = vector.load %arg2[%c3, %c0_24, %c0_25] : memref<9x3x8xf32, #tpu.memory_space<vmem>>, vector<1x3x8xf32>
    %20 = vector.shape_cast %19 : vector<1x3x8xf32> to vector<3x8xf32>
    %cst_26 = arith.constant dense<0.000000e+00> : vector<72x8xf32>
    %21 = tpu.matmul %18, %20, %cst_26 {dimension_numbers = #tpu.dot_dimension_numbers<[1], [0], [0], [1], [0, 0, 1, 1], [], []>} : vector<72x3xf32>, vector<3x8xf32>, vector<72x8xf32> -> vector<72x8xf32>
    %22 = arith.addf %16, %21 : vector<72x8xf32>
    %c0_27 = arith.constant 0 : index
    %c3_28 = arith.constant 3 : index
    %c0_29 = arith.constant 0 : index
    %c0_30 = arith.constant 0 : index
    %23 = vector.load %arg1[%c0_27, %c3_28, %c0_29, %c0_30] : memref<1x4x88x3xf32, #tpu.memory_space<vmem>>, vector<1x1x72x3xf32>
    %24 = vector.shape_cast %23 : vector<1x1x72x3xf32> to vector<72x3xf32>
    %c4 = arith.constant 4 : index
    %c0_31 = arith.constant 0 : index
    %c0_32 = arith.constant 0 : index
    %25 = vector.load %arg2[%c4, %c0_31, %c0_32] : memref<9x3x8xf32, #tpu.memory_space<vmem>>, vector<1x3x8xf32>
    %26 = vector.shape_cast %25 : vector<1x3x8xf32> to vector<3x8xf32>
    %cst_33 = arith.constant dense<0.000000e+00> : vector<72x8xf32>
    %27 = tpu.matmul %24, %26, %cst_33 {dimension_numbers = #tpu.dot_dimension_numbers<[1], [0], [0], [1], [0, 0, 1, 1], [], []>} : vector<72x3xf32>, vector<3x8xf32>, vector<72x8xf32> -> vector<72x8xf32>
    %28 = arith.addf %22, %27 : vector<72x8xf32>
    %c0_34 = arith.constant 0 : index
    %c2_35 = arith.constant 2 : index
    %c1_36 = arith.constant 1 : index
    %c0_37 = arith.constant 0 : index
    %29 = vector.load %arg1[%c0_34, %c2_35, %c1_36, %c0_37] : memref<1x4x88x3xf32, #tpu.memory_space<vmem>>, vector<1x1x72x3xf32>
    %30 = vector.shape_cast %29 : vector<1x1x72x3xf32> to vector<72x3xf32>
    %c5 = arith.constant 5 : index
    %c0_38 = arith.constant 0 : index
    %c0_39 = arith.constant 0 : index
    %31 = vector.load %arg2[%c5, %c0_38, %c0_39] : memref<9x3x8xf32, #tpu.memory_space<vmem>>, vector<1x3x8xf32>
    %32 = vector.shape_cast %31 : vector<1x3x8xf32> to vector<3x8xf32>
    %cst_40 = arith.constant dense<0.000000e+00> : vector<72x8xf32>
    %33 = tpu.matmul %30, %32, %cst_40 {dimension_numbers = #tpu.dot_dimension_numbers<[1], [0], [0], [1], [0, 0, 1, 1], [], []>} : vector<72x3xf32>, vector<3x8xf32>, vector<72x8xf32> -> vector<72x8xf32>
    %34 = arith.addf %28, %33 : vector<72x8xf32>
    %c0_41 = arith.constant 0 : index
    %c0_42 = arith.constant 0 : index
    %c9 = arith.constant 9 : index
    %c0_43 = arith.constant 0 : index
    %35 = vector.load %arg1[%c0_41, %c0_42, %c9, %c0_43] : memref<1x4x88x3xf32, #tpu.memory_space<vmem>>, vector<1x1x72x3xf32>
    %36 = vector.shape_cast %35 : vector<1x1x72x3xf32> to vector<72x3xf32>
    %c6 = arith.constant 6 : index
    %c0_44 = arith.constant 0 : index
    %c0_45 = arith.constant 0 : index
    %37 = vector.load %arg2[%c6, %c0_44, %c0_45] : memref<9x3x8xf32, #tpu.memory_space<vmem>>, vector<1x3x8xf32>
    %38 = vector.shape_cast %37 : vector<1x3x8xf32> to vector<3x8xf32>
    %cst_46 = arith.constant dense<0.000000e+00> : vector<72x8xf32>
    %39 = tpu.matmul %36, %38, %cst_46 {dimension_numbers = #tpu.dot_dimension_numbers<[1], [0], [0], [1], [0, 0, 1, 1], [], []>} : vector<72x3xf32>, vector<3x8xf32>, vector<72x8xf32> -> vector<72x8xf32>
    %40 = arith.addf %34, %39 : vector<72x8xf32>
    %c0_47 = arith.constant 0 : index
    %c1_48 = arith.constant 1 : index
    %c9_49 = arith.constant 9 : index
    %c0_50 = arith.constant 0 : index
    %41 = vector.load %arg1[%c0_47, %c1_48, %c9_49, %c0_50] : memref<1x4x88x3xf32, #tpu.memory_space<vmem>>, vector<1x1x72x3xf32>
    %42 = vector.shape_cast %41 : vector<1x1x72x3xf32> to vector<72x3xf32>
    %c7 = arith.constant 7 : index
    %c0_51 = arith.constant 0 : index
    %c0_52 = arith.constant 0 : index
    %43 = vector.load %arg2[%c7, %c0_51, %c0_52] : memref<9x3x8xf32, #tpu.memory_space<vmem>>, vector<1x3x8xf32>
    %44 = vector.shape_cast %43 : vector<1x3x8xf32> to vector<3x8xf32>
    %cst_53 = arith.constant dense<0.000000e+00> : vector<72x8xf32>
    %45 = tpu.matmul %42, %44, %cst_53 {dimension_numbers = #tpu.dot_dimension_numbers<[1], [0], [0], [1], [0, 0, 1, 1], [], []>} : vector<72x3xf32>, vector<3x8xf32>, vector<72x8xf32> -> vector<72x8xf32>
    %46 = arith.addf %40, %45 : vector<72x8xf32>
    %c0_54 = arith.constant 0 : index
    %c0_55 = arith.constant 0 : index
    %c10 = arith.constant 10 : index
    %c0_56 = arith.constant 0 : index
    %47 = vector.load %arg1[%c0_54, %c0_55, %c10, %c0_56] : memref<1x4x88x3xf32, #tpu.memory_space<vmem>>, vector<1x1x72x3xf32>
    %48 = vector.shape_cast %47 : vector<1x1x72x3xf32> to vector<72x3xf32>
    %c8 = arith.constant 8 : index
    %c0_57 = arith.constant 0 : index
    %c0_58 = arith.constant 0 : index
    %49 = vector.load %arg2[%c8, %c0_57, %c0_58] : memref<9x3x8xf32, #tpu.memory_space<vmem>>, vector<1x3x8xf32>
    %50 = vector.shape_cast %49 : vector<1x3x8xf32> to vector<3x8xf32>
    %cst_59 = arith.constant dense<0.000000e+00> : vector<72x8xf32>
    %51 = tpu.matmul %48, %50, %cst_59 {dimension_numbers = #tpu.dot_dimension_numbers<[1], [0], [0], [1], [0, 0, 1, 1], [], []>} : vector<72x3xf32>, vector<3x8xf32>, vector<72x8xf32> -> vector<72x8xf32>
    %52 = arith.addf %46, %51 : vector<72x8xf32>
    %c0_60 = arith.constant 0 : index
    %c1_61 = arith.constant 1 : index
    %c0_62 = arith.constant 0 : index
    %c0_63 = arith.constant 0 : index
    %53 = vector.load %arg1[%c0_60, %c1_61, %c0_62, %c0_63] : memref<1x4x88x3xf32, #tpu.memory_space<vmem>>, vector<1x1x72x3xf32>
    %54 = vector.shape_cast %53 : vector<1x1x72x3xf32> to vector<72x3xf32>
    %c0_64 = arith.constant 0 : index
    %c0_65 = arith.constant 0 : index
    %c0_66 = arith.constant 0 : index
    %55 = vector.load %arg2[%c0_64, %c0_65, %c0_66] : memref<9x3x8xf32, #tpu.memory_space<vmem>>, vector<1x3x8xf32>
    %56 = vector.shape_cast %55 : vector<1x3x8xf32> to vector<3x8xf32>
    %cst_67 = arith.constant dense<0.000000e+00> : vector<72x8xf32>
    %57 = tpu.matmul %54, %56, %cst_67 {dimension_numbers = #tpu.dot_dimension_numbers<[1], [0], [0], [1], [0, 0, 1, 1], [], []>} : vector<72x3xf32>, vector<3x8xf32>, vector<72x8xf32> -> vector<72x8xf32>
    %c0_68 = arith.constant 0 : index
    %c0_69 = arith.constant 0 : index
    %c1_70 = arith.constant 1 : index
    %c0_71 = arith.constant 0 : index
    %58 = vector.load %arg1[%c0_68, %c0_69, %c1_70, %c0_71] : memref<1x4x88x3xf32, #tpu.memory_space<vmem>>, vector<1x1x72x3xf32>
    %59 = vector.shape_cast %58 : vector<1x1x72x3xf32> to vector<72x3xf32>
    %c1_72 = arith.constant 1 : index
    %c0_73 = arith.constant 0 : index
    %c0_74 = arith.constant 0 : index
    %60 = vector.load %arg2[%c1_72, %c0_73, %c0_74] : memref<9x3x8xf32, #tpu.memory_space<vmem>>, vector<1x3x8xf32>
    %61 = vector.shape_cast %60 : vector<1x3x8xf32> to vector<3x8xf32>
    %cst_75 = arith.constant dense<0.000000e+00> : vector<72x8xf32>
    %62 = tpu.matmul %59, %61, %cst_75 {dimension_numbers = #tpu.dot_dimension_numbers<[1], [0], [0], [1], [0, 0, 1, 1], [], []>} : vector<72x3xf32>, vector<3x8xf32>, vector<72x8xf32> -> vector<72x8xf32>
    %63 = arith.addf %57, %62 : vector<72x8xf32>
    %c0_76 = arith.constant 0 : index
    %c1_77 = arith.constant 1 : index
    %c1_78 = arith.constant 1 : index
    %c0_79 = arith.constant 0 : index
    %64 = vector.load %arg1[%c0_76, %c1_77, %c1_78, %c0_79] : memref<1x4x88x3xf32, #tpu.memory_space<vmem>>, vector<1x1x72x3xf32>
    %65 = vector.shape_cast %64 : vector<1x1x72x3xf32> to vector<72x3xf32>
    %c2_80 = arith.constant 2 : index
    %c0_81 = arith.constant 0 : index
    %c0_82 = arith.constant 0 : index
    %66 = vector.load %arg2[%c2_80, %c0_81, %c0_82] : memref<9x3x8xf32, #tpu.memory_space<vmem>>, vector<1x3x8xf32>
    %67 = vector.shape_cast %66 : vector<1x3x8xf32> to vector<3x8xf32>
    %cst_83 = arith.constant dense<0.000000e+00> : vector<72x8xf32>
    %68 = tpu.matmul %65, %67, %cst_83 {dimension_numbers = #tpu.dot_dimension_numbers<[1], [0], [0], [1], [0, 0, 1, 1], [], []>} : vector<72x3xf32>, vector<3x8xf32>, vector<72x8xf32> -> vector<72x8xf32>
    %69 = arith.addf %63, %68 : vector<72x8xf32>
    %c0_84 = arith.constant 0 : index
    %c3_85 = arith.constant 3 : index
    %c0_86 = arith.constant 0 : index
    %c0_87 = arith.constant 0 : index
    %70 = vector.load %arg1[%c0_84, %c3_85, %c0_86, %c0_87] : memref<1x4x88x3xf32, #tpu.memory_space<vmem>>, vector<1x1x72x3xf32>
    %71 = vector.shape_cast %70 : vector<1x1x72x3xf32> to vector<72x3xf32>
    %c3_88 = arith.constant 3 : index
    %c0_89 = arith.constant 0 : index
    %c0_90 = arith.constant 0 : index
    %72 = vector.load %arg2[%c3_88, %c0_89, %c0_90] : memref<9x3x8xf32, #tpu.memory_space<vmem>>, vector<1x3x8xf32>
    %73 = vector.shape_cast %72 : vector<1x3x8xf32> to vector<3x8xf32>
    %cst_91 = arith.constant dense<0.000000e+00> : vector<72x8xf32>
    %74 = tpu.matmul %71, %73, %cst_91 {dimension_numbers = #tpu.dot_dimension_numbers<[1], [0], [0], [1], [0, 0, 1, 1], [], []>} : vector<72x3xf32>, vector<3x8xf32>, vector<72x8xf32> -> vector<72x8xf32>
    %75 = arith.addf %69, %74 : vector<72x8xf32>
    %c0_92 = arith.constant 0 : index
    %c2_93 = arith.constant 2 : index
    %c1_94 = arith.constant 1 : index
    %c0_95 = arith.constant 0 : index
    %76 = vector.load %arg1[%c0_92, %c2_93, %c1_94, %c0_95] : memref<1x4x88x3xf32, #tpu.memory_space<vmem>>, vector<1x1x72x3xf32>
    %77 = vector.shape_cast %76 : vector<1x1x72x3xf32> to vector<72x3xf32>
    %c4_96 = arith.constant 4 : index
    %c0_97 = arith.constant 0 : index
    %c0_98 = arith.constant 0 : index
    %78 = vector.load %arg2[%c4_96, %c0_97, %c0_98] : memref<9x3x8xf32, #tpu.memory_space<vmem>>, vector<1x3x8xf32>
    %79 = vector.shape_cast %78 : vector<1x3x8xf32> to vector<3x8xf32>
    %cst_99 = arith.constant dense<0.000000e+00> : vector<72x8xf32>
    %80 = tpu.matmul %77, %79, %cst_99 {dimension_numbers = #tpu.dot_dimension_numbers<[1], [0], [0], [1], [0, 0, 1, 1], [], []>} : vector<72x3xf32>, vector<3x8xf32>, vector<72x8xf32> -> vector<72x8xf32>
    %81 = arith.addf %75, %80 : vector<72x8xf32>
    %c0_100 = arith.constant 0 : index
    %c3_101 = arith.constant 3 : index
    %c1_102 = arith.constant 1 : index
    %c0_103 = arith.constant 0 : index
    %82 = vector.load %arg1[%c0_100, %c3_101, %c1_102, %c0_103] : memref<1x4x88x3xf32, #tpu.memory_space<vmem>>, vector<1x1x72x3xf32>
    %83 = vector.shape_cast %82 : vector<1x1x72x3xf32> to vector<72x3xf32>
    %c5_104 = arith.constant 5 : index
    %c0_105 = arith.constant 0 : index
    %c0_106 = arith.constant 0 : index
    %84 = vector.load %arg2[%c5_104, %c0_105, %c0_106] : memref<9x3x8xf32, #tpu.memory_space<vmem>>, vector<1x3x8xf32>
    %85 = vector.shape_cast %84 : vector<1x3x8xf32> to vector<3x8xf32>
    %cst_107 = arith.constant dense<0.000000e+00> : vector<72x8xf32>
    %86 = tpu.matmul %83, %85, %cst_107 {dimension_numbers = #tpu.dot_dimension_numbers<[1], [0], [0], [1], [0, 0, 1, 1], [], []>} : vector<72x3xf32>, vector<3x8xf32>, vector<72x8xf32> -> vector<72x8xf32>
    %87 = arith.addf %81, %86 : vector<72x8xf32>
    %c0_108 = arith.constant 0 : index
    %c1_109 = arith.constant 1 : index
    %c9_110 = arith.constant 9 : index
    %c0_111 = arith.constant 0 : index
    %88 = vector.load %arg1[%c0_108, %c1_109, %c9_110, %c0_111] : memref<1x4x88x3xf32, #tpu.memory_space<vmem>>, vector<1x1x72x3xf32>
    %89 = vector.shape_cast %88 : vector<1x1x72x3xf32> to vector<72x3xf32>
    %c6_112 = arith.constant 6 : index
    %c0_113 = arith.constant 0 : index
    %c0_114 = arith.constant 0 : index
    %90 = vector.load %arg2[%c6_112, %c0_113, %c0_114] : memref<9x3x8xf32, #tpu.memory_space<vmem>>, vector<1x3x8xf32>
    %91 = vector.shape_cast %90 : vector<1x3x8xf32> to vector<3x8xf32>
    %cst_115 = arith.constant dense<0.000000e+00> : vector<72x8xf32>
    %92 = tpu.matmul %89, %91, %cst_115 {dimension_numbers = #tpu.dot_dimension_numbers<[1], [0], [0], [1], [0, 0, 1, 1], [], []>} : vector<72x3xf32>, vector<3x8xf32>, vector<72x8xf32> -> vector<72x8xf32>
    %93 = arith.addf %87, %92 : vector<72x8xf32>
    %c0_116 = arith.constant 0 : index
    %c0_117 = arith.constant 0 : index
    %c10_118 = arith.constant 10 : index
    %c0_119 = arith.constant 0 : index
    %94 = vector.load %arg1[%c0_116, %c0_117, %c10_118, %c0_119] : memref<1x4x88x3xf32, #tpu.memory_space<vmem>>, vector<1x1x72x3xf32>
    %95 = vector.shape_cast %94 : vector<1x1x72x3xf32> to vector<72x3xf32>
    %c7_120 = arith.constant 7 : index
    %c0_121 = arith.constant 0 : index
    %c0_122 = arith.constant 0 : index
    %96 = vector.load %arg2[%c7_120, %c0_121, %c0_122] : memref<9x3x8xf32, #tpu.memory_space<vmem>>, vector<1x3x8xf32>
    %97 = vector.shape_cast %96 : vector<1x3x8xf32> to vector<3x8xf32>
    %cst_123 = arith.constant dense<0.000000e+00> : vector<72x8xf32>
    %98 = tpu.matmul %95, %97, %cst_123 {dimension_numbers = #tpu.dot_dimension_numbers<[1], [0], [0], [1], [0, 0, 1, 1], [], []>} : vector<72x3xf32>, vector<3x8xf32>, vector<72x8xf32> -> vector<72x8xf32>
    %99 = arith.addf %93, %98 : vector<72x8xf32>
    %c0_124 = arith.constant 0 : index
    %c1_125 = arith.constant 1 : index
    %c10_126 = arith.constant 10 : index
    %c0_127 = arith.constant 0 : index
    %100 = vector.load %arg1[%c0_124, %c1_125, %c10_126, %c0_127] : memref<1x4x88x3xf32, #tpu.memory_space<vmem>>, vector<1x1x72x3xf32>
    %101 = vector.shape_cast %100 : vector<1x1x72x3xf32> to vector<72x3xf32>
    %c8_128 = arith.constant 8 : index
    %c0_129 = arith.constant 0 : index
    %c0_130 = arith.constant 0 : index
    %102 = vector.load %arg2[%c8_128, %c0_129, %c0_130] : memref<9x3x8xf32, #tpu.memory_space<vmem>>, vector<1x3x8xf32>
    %103 = vector.shape_cast %102 : vector<1x3x8xf32> to vector<3x8xf32>
    %cst_131 = arith.constant dense<0.000000e+00> : vector<72x8xf32>
    %104 = tpu.matmul %101, %103, %cst_131 {dimension_numbers = #tpu.dot_dimension_numbers<[1], [0], [0], [1], [0, 0, 1, 1], [], []>} : vector<72x3xf32>, vector<3x8xf32>, vector<72x8xf32> -> vector<72x8xf32>
    %105 = arith.addf %99, %104 : vector<72x8xf32>
    %106 = arith.maximumf %52, %105 : vector<72x8xf32>
    %c0_132 = arith.constant 0 : index
    %c2_133 = arith.constant 2 : index
    %c0_134 = arith.constant 0 : index
    %c0_135 = arith.constant 0 : index
    %107 = vector.load %arg1[%c0_132, %c2_133, %c0_134, %c0_135] : memref<1x4x88x3xf32, #tpu.memory_space<vmem>>, vector<1x1x72x3xf32>
    %108 = vector.shape_cast %107 : vector<1x1x72x3xf32> to vector<72x3xf32>
    %c0_136 = arith.constant 0 : index
    %c0_137 = arith.constant 0 : index
    %c0_138 = arith.constant 0 : index
    %109 = vector.load %arg2[%c0_136, %c0_137, %c0_138] : memref<9x3x8xf32, #tpu.memory_space<vmem>>, vector<1x3x8xf32>
    %110 = vector.shape_cast %109 : vector<1x3x8xf32> to vector<3x8xf32>
    %cst_139 = arith.constant dense<0.000000e+00> : vector<72x8xf32>
    %111 = tpu.matmul %108, %110, %cst_139 {dimension_numbers = #tpu.dot_dimension_numbers<[1], [0], [0], [1], [0, 0, 1, 1], [], []>} : vector<72x3xf32>, vector<3x8xf32>, vector<72x8xf32> -> vector<72x8xf32>
    %c0_140 = arith.constant 0 : index
    %c3_141 = arith.constant 3 : index
    %c0_142 = arith.constant 0 : index
    %c0_143 = arith.constant 0 : index
    %112 = vector.load %arg1[%c0_140, %c3_141, %c0_142, %c0_143] : memref<1x4x88x3xf32, #tpu.memory_space<vmem>>, vector<1x1x72x3xf32>
    %113 = vector.shape_cast %112 : vector<1x1x72x3xf32> to vector<72x3xf32>
    %c1_144 = arith.constant 1 : index
    %c0_145 = arith.constant 0 : index
    %c0_146 = arith.constant 0 : index
    %114 = vector.load %arg2[%c1_144, %c0_145, %c0_146] : memref<9x3x8xf32, #tpu.memory_space<vmem>>, vector<1x3x8xf32>
    %115 = vector.shape_cast %114 : vector<1x3x8xf32> to vector<3x8xf32>
    %cst_147 = arith.constant dense<0.000000e+00> : vector<72x8xf32>
    %116 = tpu.matmul %113, %115, %cst_147 {dimension_numbers = #tpu.dot_dimension_numbers<[1], [0], [0], [1], [0, 0, 1, 1], [], []>} : vector<72x3xf32>, vector<3x8xf32>, vector<72x8xf32> -> vector<72x8xf32>
    %117 = arith.addf %111, %116 : vector<72x8xf32>
    %c0_148 = arith.constant 0 : index
    %c2_149 = arith.constant 2 : index
    %c1_150 = arith.constant 1 : index
    %c0_151 = arith.constant 0 : index
    %118 = vector.load %arg1[%c0_148, %c2_149, %c1_150, %c0_151] : memref<1x4x88x3xf32, #tpu.memory_space<vmem>>, vector<1x1x72x3xf32>
    %119 = vector.shape_cast %118 : vector<1x1x72x3xf32> to vector<72x3xf32>
    %c2_152 = arith.constant 2 : index
    %c0_153 = arith.constant 0 : index
    %c0_154 = arith.constant 0 : index
    %120 = vector.load %arg2[%c2_152, %c0_153, %c0_154] : memref<9x3x8xf32, #tpu.memory_space<vmem>>, vector<1x3x8xf32>
    %121 = vector.shape_cast %120 : vector<1x3x8xf32> to vector<3x8xf32>
    %cst_155 = arith.constant dense<0.000000e+00> : vector<72x8xf32>
    %122 = tpu.matmul %119, %121, %cst_155 {dimension_numbers = #tpu.dot_dimension_numbers<[1], [0], [0], [1], [0, 0, 1, 1], [], []>} : vector<72x3xf32>, vector<3x8xf32>, vector<72x8xf32> -> vector<72x8xf32>
    %123 = arith.addf %117, %122 : vector<72x8xf32>
    %c0_156 = arith.constant 0 : index
    %c0_157 = arith.constant 0 : index
    %c9_158 = arith.constant 9 : index
    %c0_159 = arith.constant 0 : index
    %124 = vector.load %arg1[%c0_156, %c0_157, %c9_158, %c0_159] : memref<1x4x88x3xf32, #tpu.memory_space<vmem>>, vector<1x1x72x3xf32>
    %125 = vector.shape_cast %124 : vector<1x1x72x3xf32> to vector<72x3xf32>
    %c3_160 = arith.constant 3 : index
    %c0_161 = arith.constant 0 : index
    %c0_162 = arith.constant 0 : index
    %126 = vector.load %arg2[%c3_160, %c0_161, %c0_162] : memref<9x3x8xf32, #tpu.memory_space<vmem>>, vector<1x3x8xf32>
    %127 = vector.shape_cast %126 : vector<1x3x8xf32> to vector<3x8xf32>
    %cst_163 = arith.constant dense<0.000000e+00> : vector<72x8xf32>
    %128 = tpu.matmul %125, %127, %cst_163 {dimension_numbers = #tpu.dot_dimension_numbers<[1], [0], [0], [1], [0, 0, 1, 1], [], []>} : vector<72x3xf32>, vector<3x8xf32>, vector<72x8xf32> -> vector<72x8xf32>
    %129 = arith.addf %123, %128 : vector<72x8xf32>
    %c0_164 = arith.constant 0 : index
    %c1_165 = arith.constant 1 : index
    %c9_166 = arith.constant 9 : index
    %c0_167 = arith.constant 0 : index
    %130 = vector.load %arg1[%c0_164, %c1_165, %c9_166, %c0_167] : memref<1x4x88x3xf32, #tpu.memory_space<vmem>>, vector<1x1x72x3xf32>
    %131 = vector.shape_cast %130 : vector<1x1x72x3xf32> to vector<72x3xf32>
    %c4_168 = arith.constant 4 : index
    %c0_169 = arith.constant 0 : index
    %c0_170 = arith.constant 0 : index
    %132 = vector.load %arg2[%c4_168, %c0_169, %c0_170] : memref<9x3x8xf32, #tpu.memory_space<vmem>>, vector<1x3x8xf32>
    %133 = vector.shape_cast %132 : vector<1x3x8xf32> to vector<3x8xf32>
    %cst_171 = arith.constant dense<0.000000e+00> : vector<72x8xf32>
    %134 = tpu.matmul %131, %133, %cst_171 {dimension_numbers = #tpu.dot_dimension_numbers<[1], [0], [0], [1], [0, 0, 1, 1], [], []>} : vector<72x3xf32>, vector<3x8xf32>, vector<72x8xf32> -> vector<72x8xf32>
    %135 = arith.addf %129, %134 : vector<72x8xf32>
    %c0_172 = arith.constant 0 : index
    %c0_173 = arith.constant 0 : index
    %c10_174 = arith.constant 10 : index
    %c0_175 = arith.constant 0 : index
    %136 = vector.load %arg1[%c0_172, %c0_173, %c10_174, %c0_175] : memref<1x4x88x3xf32, #tpu.memory_space<vmem>>, vector<1x1x72x3xf32>
    %137 = vector.shape_cast %136 : vector<1x1x72x3xf32> to vector<72x3xf32>
    %c5_176 = arith.constant 5 : index
    %c0_177 = arith.constant 0 : index
    %c0_178 = arith.constant 0 : index
    %138 = vector.load %arg2[%c5_176, %c0_177, %c0_178] : memref<9x3x8xf32, #tpu.memory_space<vmem>>, vector<1x3x8xf32>
    %139 = vector.shape_cast %138 : vector<1x3x8xf32> to vector<3x8xf32>
    %cst_179 = arith.constant dense<0.000000e+00> : vector<72x8xf32>
    %140 = tpu.matmul %137, %139, %cst_179 {dimension_numbers = #tpu.dot_dimension_numbers<[1], [0], [0], [1], [0, 0, 1, 1], [], []>} : vector<72x3xf32>, vector<3x8xf32>, vector<72x8xf32> -> vector<72x8xf32>
    %141 = arith.addf %135, %140 : vector<72x8xf32>
    %c0_180 = arith.constant 0 : index
    %c2_181 = arith.constant 2 : index
    %c9_182 = arith.constant 9 : index
    %c0_183 = arith.constant 0 : index
    %142 = vector.load %arg1[%c0_180, %c2_181, %c9_182, %c0_183] : memref<1x4x88x3xf32, #tpu.memory_space<vmem>>, vector<1x1x72x3xf32>
    %143 = vector.shape_cast %142 : vector<1x1x72x3xf32> to vector<72x3xf32>
    %c6_184 = arith.constant 6 : index
    %c0_185 = arith.constant 0 : index
    %c0_186 = arith.constant 0 : index
    %144 = vector.load %arg2[%c6_184, %c0_185, %c0_186] : memref<9x3x8xf32, #tpu.memory_space<vmem>>, vector<1x3x8xf32>
    %145 = vector.shape_cast %144 : vector<1x3x8xf32> to vector<3x8xf32>
    %cst_187 = arith.constant dense<0.000000e+00> : vector<72x8xf32>
    %146 = tpu.matmul %143, %145, %cst_187 {dimension_numbers = #tpu.dot_dimension_numbers<[1], [0], [0], [1], [0, 0, 1, 1], [], []>} : vector<72x3xf32>, vector<3x8xf32>, vector<72x8xf32> -> vector<72x8xf32>
    %147 = arith.addf %141, %146 : vector<72x8xf32>
    %c0_188 = arith.constant 0 : index
    %c3_189 = arith.constant 3 : index
    %c9_190 = arith.constant 9 : index
    %c0_191 = arith.constant 0 : index
    %148 = vector.load %arg1[%c0_188, %c3_189, %c9_190, %c0_191] : memref<1x4x88x3xf32, #tpu.memory_space<vmem>>, vector<1x1x72x3xf32>
    %149 = vector.shape_cast %148 : vector<1x1x72x3xf32> to vector<72x3xf32>
    %c7_192 = arith.constant 7 : index
    %c0_193 = arith.constant 0 : index
    %c0_194 = arith.constant 0 : index
    %150 = vector.load %arg2[%c7_192, %c0_193, %c0_194] : memref<9x3x8xf32, #tpu.memory_space<vmem>>, vector<1x3x8xf32>
    %151 = vector.shape_cast %150 : vector<1x3x8xf32> to vector<3x8xf32>
    %cst_195 = arith.constant dense<0.000000e+00> : vector<72x8xf32>
    %152 = tpu.matmul %149, %151, %cst_195 {dimension_numbers = #tpu.dot_dimension_numbers<[1], [0], [0], [1], [0, 0, 1, 1], [], []>} : vector<72x3xf32>, vector<3x8xf32>, vector<72x8xf32> -> vector<72x8xf32>
    %153 = arith.addf %147, %152 : vector<72x8xf32>
    %c0_196 = arith.constant 0 : index
    %c2_197 = arith.constant 2 : index
    %c10_198 = arith.constant 10 : index
    %c0_199 = arith.constant 0 : index
    %154 = vector.load %arg1[%c0_196, %c2_197, %c10_198, %c0_199] : memref<1x4x88x3xf32, #tpu.memory_space<vmem>>, vector<1x1x72x3xf32>
    %155 = vector.shape_cast %154 : vector<1x1x72x3xf32> to vector<72x3xf32>
    %c8_200 = arith.constant 8 : index
    %c0_201 = arith.constant 0 : index
    %c0_202 = arith.constant 0 : index
    %156 = vector.load %arg2[%c8_200, %c0_201, %c0_202] : memref<9x3x8xf32, #tpu.memory_space<vmem>>, vector<1x3x8xf32>
    %157 = vector.shape_cast %156 : vector<1x3x8xf32> to vector<3x8xf32>
    %cst_203 = arith.constant dense<0.000000e+00> : vector<72x8xf32>
    %158 = tpu.matmul %155, %157, %cst_203 {dimension_numbers = #tpu.dot_dimension_numbers<[1], [0], [0], [1], [0, 0, 1, 1], [], []>} : vector<72x3xf32>, vector<3x8xf32>, vector<72x8xf32> -> vector<72x8xf32>
    %159 = arith.addf %153, %158 : vector<72x8xf32>
    %160 = arith.maximumf %106, %159 : vector<72x8xf32>
    %c0_204 = arith.constant 0 : index
    %c3_205 = arith.constant 3 : index
    %c0_206 = arith.constant 0 : index
    %c0_207 = arith.constant 0 : index
    %161 = vector.load %arg1[%c0_204, %c3_205, %c0_206, %c0_207] : memref<1x4x88x3xf32, #tpu.memory_space<vmem>>, vector<1x1x72x3xf32>
    %162 = vector.shape_cast %161 : vector<1x1x72x3xf32> to vector<72x3xf32>
    %c0_208 = arith.constant 0 : index
    %c0_209 = arith.constant 0 : index
    %c0_210 = arith.constant 0 : index
    %163 = vector.load %arg2[%c0_208, %c0_209, %c0_210] : memref<9x3x8xf32, #tpu.memory_space<vmem>>, vector<1x3x8xf32>
    %164 = vector.shape_cast %163 : vector<1x3x8xf32> to vector<3x8xf32>
    %cst_211 = arith.constant dense<0.000000e+00> : vector<72x8xf32>
    %165 = tpu.matmul %162, %164, %cst_211 {dimension_numbers = #tpu.dot_dimension_numbers<[1], [0], [0], [1], [0, 0, 1, 1], [], []>} : vector<72x3xf32>, vector<3x8xf32>, vector<72x8xf32> -> vector<72x8xf32>
    %c0_212 = arith.constant 0 : index
    %c2_213 = arith.constant 2 : index
    %c1_214 = arith.constant 1 : index
    %c0_215 = arith.constant 0 : index
    %166 = vector.load %arg1[%c0_212, %c2_213, %c1_214, %c0_215] : memref<1x4x88x3xf32, #tpu.memory_space<vmem>>, vector<1x1x72x3xf32>
    %167 = vector.shape_cast %166 : vector<1x1x72x3xf32> to vector<72x3xf32>
    %c1_216 = arith.constant 1 : index
    %c0_217 = arith.constant 0 : index
    %c0_218 = arith.constant 0 : index
    %168 = vector.load %arg2[%c1_216, %c0_217, %c0_218] : memref<9x3x8xf32, #tpu.memory_space<vmem>>, vector<1x3x8xf32>
    %169 = vector.shape_cast %168 : vector<1x3x8xf32> to vector<3x8xf32>
    %cst_219 = arith.constant dense<0.000000e+00> : vector<72x8xf32>
    %170 = tpu.matmul %167, %169, %cst_219 {dimension_numbers = #tpu.dot_dimension_numbers<[1], [0], [0], [1], [0, 0, 1, 1], [], []>} : vector<72x3xf32>, vector<3x8xf32>, vector<72x8xf32> -> vector<72x8xf32>
    %171 = arith.addf %165, %170 : vector<72x8xf32>
    %c0_220 = arith.constant 0 : index
    %c3_221 = arith.constant 3 : index
    %c1_222 = arith.constant 1 : index
    %c0_223 = arith.constant 0 : index
    %172 = vector.load %arg1[%c0_220, %c3_221, %c1_222, %c0_223] : memref<1x4x88x3xf32, #tpu.memory_space<vmem>>, vector<1x1x72x3xf32>
    %173 = vector.shape_cast %172 : vector<1x1x72x3xf32> to vector<72x3xf32>
    %c2_224 = arith.constant 2 : index
    %c0_225 = arith.constant 0 : index
    %c0_226 = arith.constant 0 : index
    %174 = vector.load %arg2[%c2_224, %c0_225, %c0_226] : memref<9x3x8xf32, #tpu.memory_space<vmem>>, vector<1x3x8xf32>
    %175 = vector.shape_cast %174 : vector<1x3x8xf32> to vector<3x8xf32>
    %cst_227 = arith.constant dense<0.000000e+00> : vector<72x8xf32>
    %176 = tpu.matmul %173, %175, %cst_227 {dimension_numbers = #tpu.dot_dimension_numbers<[1], [0], [0], [1], [0, 0, 1, 1], [], []>} : vector<72x3xf32>, vector<3x8xf32>, vector<72x8xf32> -> vector<72x8xf32>
    %177 = arith.addf %171, %176 : vector<72x8xf32>
    %c0_228 = arith.constant 0 : index
    %c1_229 = arith.constant 1 : index
    %c9_230 = arith.constant 9 : index
    %c0_231 = arith.constant 0 : index
    %178 = vector.load %arg1[%c0_228, %c1_229, %c9_230, %c0_231] : memref<1x4x88x3xf32, #tpu.memory_space<vmem>>, vector<1x1x72x3xf32>
    %179 = vector.shape_cast %178 : vector<1x1x72x3xf32> to vector<72x3xf32>
    %c3_232 = arith.constant 3 : index
    %c0_233 = arith.constant 0 : index
    %c0_234 = arith.constant 0 : index
    %180 = vector.load %arg2[%c3_232, %c0_233, %c0_234] : memref<9x3x8xf32, #tpu.memory_space<vmem>>, vector<1x3x8xf32>
    %181 = vector.shape_cast %180 : vector<1x3x8xf32> to vector<3x8xf32>
    %cst_235 = arith.constant dense<0.000000e+00> : vector<72x8xf32>
    %182 = tpu.matmul %179, %181, %cst_235 {dimension_numbers = #tpu.dot_dimension_numbers<[1], [0], [0], [1], [0, 0, 1, 1], [], []>} : vector<72x3xf32>, vector<3x8xf32>, vector<72x8xf32> -> vector<72x8xf32>
    %183 = arith.addf %177, %182 : vector<72x8xf32>
    %c0_236 = arith.constant 0 : index
    %c0_237 = arith.constant 0 : index
    %c10_238 = arith.constant 10 : index
    %c0_239 = arith.constant 0 : index
    %184 = vector.load %arg1[%c0_236, %c0_237, %c10_238, %c0_239] : memref<1x4x88x3xf32, #tpu.memory_space<vmem>>, vector<1x1x72x3xf32>
    %185 = vector.shape_cast %184 : vector<1x1x72x3xf32> to vector<72x3xf32>
    %c4_240 = arith.constant 4 : index
    %c0_241 = arith.constant 0 : index
    %c0_242 = arith.constant 0 : index
    %186 = vector.load %arg2[%c4_240, %c0_241, %c0_242] : memref<9x3x8xf32, #tpu.memory_space<vmem>>, vector<1x3x8xf32>
    %187 = vector.shape_cast %186 : vector<1x3x8xf32> to vector<3x8xf32>
    %cst_243 = arith.constant dense<0.000000e+00> : vector<72x8xf32>
    %188 = tpu.matmul %185, %187, %cst_243 {dimension_numbers = #tpu.dot_dimension_numbers<[1], [0], [0], [1], [0, 0, 1, 1], [], []>} : vector<72x3xf32>, vector<3x8xf32>, vector<72x8xf32> -> vector<72x8xf32>
    %189 = arith.addf %183, %188 : vector<72x8xf32>
    %c0_244 = arith.constant 0 : index
    %c1_245 = arith.constant 1 : index
    %c10_246 = arith.constant 10 : index
    %c0_247 = arith.constant 0 : index
    %190 = vector.load %arg1[%c0_244, %c1_245, %c10_246, %c0_247] : memref<1x4x88x3xf32, #tpu.memory_space<vmem>>, vector<1x1x72x3xf32>
    %191 = vector.shape_cast %190 : vector<1x1x72x3xf32> to vector<72x3xf32>
    %c5_248 = arith.constant 5 : index
    %c0_249 = arith.constant 0 : index
    %c0_250 = arith.constant 0 : index
    %192 = vector.load %arg2[%c5_248, %c0_249, %c0_250] : memref<9x3x8xf32, #tpu.memory_space<vmem>>, vector<1x3x8xf32>
    %193 = vector.shape_cast %192 : vector<1x3x8xf32> to vector<3x8xf32>
    %cst_251 = arith.constant dense<0.000000e+00> : vector<72x8xf32>
    %194 = tpu.matmul %191, %193, %cst_251 {dimension_numbers = #tpu.dot_dimension_numbers<[1], [0], [0], [1], [0, 0, 1, 1], [], []>} : vector<72x3xf32>, vector<3x8xf32>, vector<72x8xf32> -> vector<72x8xf32>
    %195 = arith.addf %189, %194 : vector<72x8xf32>
    %c0_252 = arith.constant 0 : index
    %c3_253 = arith.constant 3 : index
    %c9_254 = arith.constant 9 : index
    %c0_255 = arith.constant 0 : index
    %196 = vector.load %arg1[%c0_252, %c3_253, %c9_254, %c0_255] : memref<1x4x88x3xf32, #tpu.memory_space<vmem>>, vector<1x1x72x3xf32>
    %197 = vector.shape_cast %196 : vector<1x1x72x3xf32> to vector<72x3xf32>
    %c6_256 = arith.constant 6 : index
    %c0_257 = arith.constant 0 : index
    %c0_258 = arith.constant 0 : index
    %198 = vector.load %arg2[%c6_256, %c0_257, %c0_258] : memref<9x3x8xf32, #tpu.memory_space<vmem>>, vector<1x3x8xf32>
    %199 = vector.shape_cast %198 : vector<1x3x8xf32> to vector<3x8xf32>
    %cst_259 = arith.constant dense<0.000000e+00> : vector<72x8xf32>
    %200 = tpu.matmul %197, %199, %cst_259 {dimension_numbers = #tpu.dot_dimension_numbers<[1], [0], [0], [1], [0, 0, 1, 1], [], []>} : vector<72x3xf32>, vector<3x8xf32>, vector<72x8xf32> -> vector<72x8xf32>
    %201 = arith.addf %195, %200 : vector<72x8xf32>
    %c0_260 = arith.constant 0 : index
    %c2_261 = arith.constant 2 : index
    %c10_262 = arith.constant 10 : index
    %c0_263 = arith.constant 0 : index
    %202 = vector.load %arg1[%c0_260, %c2_261, %c10_262, %c0_263] : memref<1x4x88x3xf32, #tpu.memory_space<vmem>>, vector<1x1x72x3xf32>
    %203 = vector.shape_cast %202 : vector<1x1x72x3xf32> to vector<72x3xf32>
    %c7_264 = arith.constant 7 : index
    %c0_265 = arith.constant 0 : index
    %c0_266 = arith.constant 0 : index
    %204 = vector.load %arg2[%c7_264, %c0_265, %c0_266] : memref<9x3x8xf32, #tpu.memory_space<vmem>>, vector<1x3x8xf32>
    %205 = vector.shape_cast %204 : vector<1x3x8xf32> to vector<3x8xf32>
    %cst_267 = arith.constant dense<0.000000e+00> : vector<72x8xf32>
    %206 = tpu.matmul %203, %205, %cst_267 {dimension_numbers = #tpu.dot_dimension_numbers<[1], [0], [0], [1], [0, 0, 1, 1], [], []>} : vector<72x3xf32>, vector<3x8xf32>, vector<72x8xf32> -> vector<72x8xf32>
    %207 = arith.addf %201, %206 : vector<72x8xf32>
    %c0_268 = arith.constant 0 : index
    %c3_269 = arith.constant 3 : index
    %c10_270 = arith.constant 10 : index
    %c0_271 = arith.constant 0 : index
    %208 = vector.load %arg1[%c0_268, %c3_269, %c10_270, %c0_271] : memref<1x4x88x3xf32, #tpu.memory_space<vmem>>, vector<1x1x72x3xf32>
    %209 = vector.shape_cast %208 : vector<1x1x72x3xf32> to vector<72x3xf32>
    %c8_272 = arith.constant 8 : index
    %c0_273 = arith.constant 0 : index
    %c0_274 = arith.constant 0 : index
    %210 = vector.load %arg2[%c8_272, %c0_273, %c0_274] : memref<9x3x8xf32, #tpu.memory_space<vmem>>, vector<1x3x8xf32>
    %211 = vector.shape_cast %210 : vector<1x3x8xf32> to vector<3x8xf32>
    %cst_275 = arith.constant dense<0.000000e+00> : vector<72x8xf32>
    %212 = tpu.matmul %209, %211, %cst_275 {dimension_numbers = #tpu.dot_dimension_numbers<[1], [0], [0], [1], [0, 0, 1, 1], [], []>} : vector<72x3xf32>, vector<3x8xf32>, vector<72x8xf32> -> vector<72x8xf32>
    %213 = arith.addf %207, %212 : vector<72x8xf32>
    %214 = arith.maximumf %160, %213 : vector<72x8xf32>
    %c0_276 = arith.constant 0 : index
    %c0_277 = arith.constant 0 : index
    %215 = vector.load %arg3[%c0_276, %c0_277] : memref<1x8xf32, #tpu.memory_space<vmem>>, vector<1x8xf32>
    %216 = vector.broadcast %215 : vector<1x8xf32> to vector<72x8xf32>
    %217 = arith.addf %214, %216 : vector<72x8xf32>
    %cst_278 = arith.constant 0.000000e+00 : f32
    %218 = vector.broadcast %cst_278 : f32 to vector<72x8xf32>
    %219 = arith.maximumf %217, %218 : vector<72x8xf32>
    %c0_279 = arith.constant 0 : index
    %c0_280 = arith.constant 0 : index
    %c0_281 = arith.constant 0 : index
    %220 = vector.load %arg4[%c0_279, %c0_280, %c0_281] : memref<1x72x8xf32, #tpu.memory_space<vmem>>, vector<1x72x8xf32>
    %221 = vector.shape_cast %220 : vector<1x72x8xf32> to vector<72x8xf32>
    %222 = vector.shape_cast %219 : vector<72x8xf32> to vector<1x72x8xf32>
    tpu.vector_store %arg4[%c0_279, %c0_280, %c0_281], %222 {strides = array<i32>} : memref<1x72x8xf32, #tpu.memory_space<vmem>>, vector<1x72x8xf32>,
    return
  }
  func.func @transform_0(%arg0: i32) -> (i32, i32, i32, i32) {
    %c0_i32 = arith.constant 0 : i32
    %c0_i32_0 = arith.constant 0 : i32
    %c0_i32_1 = arith.constant 0 : i32
    %c0_i32_2 = arith.constant 0 : i32
    return %arg0, %c0_i32, %c0_i32_0, %c0_i32_1 : i32, i32, i32, i32
  }
  func.func @transform_1(%arg0: i32) -> (i32, i32, i32) {
    %c0_i32 = arith.constant 0 : i32
    %c0_i32_0 = arith.constant 0 : i32
    %c0_i32_1 = arith.constant 0 : i32
    %c0_i32_2 = arith.constant 0 : i32
    return %c0_i32, %c0_i32_0, %c0_i32_1 : i32, i32, i32
  }
  func.func @transform_2(%arg0: i32) -> (i32, i32) {
    %c0_i32 = arith.constant 0 : i32
    %c0_i32_0 = arith.constant 0 : i32
    %c0_i32_1 = arith.constant 0 : i32
    return %c0_i32, %c0_i32_0 : i32, i32
  }
  func.func @transform_3(%arg0: i32) -> (i32, i32, i32) {
    %c0_i32 = arith.constant 0 : i32
    %c0_i32_0 = arith.constant 0 : i32
    %c0_i32_1 = arith.constant 0 : i32
    return %arg0, %c0_i32, %c0_i32_0 : i32, i32, i32
  }
}

module attributes {stable_mosaic.version = 11 : i64} {
  func.func @_conv_relu_pool_kernel(%arg0: i32, %arg1: memref<1x4x32x8xf32, #tpu.memory_space<vmem>>, %arg2: memref<9x8x16xf32, #tpu.memory_space<vmem>>, %arg3: memref<1x16xf32, #tpu.memory_space<vmem>>, %arg4: memref<1x20x16xf32, #tpu.memory_space<vmem>>) attributes {dimension_semantics = [#tpu.dimension_semantics<parallel>], iteration_bounds = array<i64: 2>, scalar_prefetch = 0 : i64, scratch_operands = 0 : i64, tpu.core_type = #tpu.core_type<tc>, window_params = [{transform_indices = @transform_0, window_bounds = array<i64: 1, 4, 32, 8>}, {pipeline_mode = #tpu.pipeline_mode<synchronous>, transform_indices = @transform_1, window_bounds = array<i64: 9, 8, 16>}, {pipeline_mode = #tpu.pipeline_mode<synchronous>, transform_indices = @transform_2, window_bounds = array<i64: 1, 16>}, {transform_indices = @transform_3, window_bounds = array<i64: 1, 20, 16>}]} {
    %c0 = arith.constant 0 : index
    %c0_0 = arith.constant 0 : index
    %c0_1 = arith.constant 0 : index
    %c0_2 = arith.constant 0 : index
    %0 = vector.load %arg1[%c0, %c0_0, %c0_1, %c0_2] : memref<1x4x32x8xf32, #tpu.memory_space<vmem>>, vector<1x1x20x8xf32>
    %1 = vector.shape_cast %0 : vector<1x1x20x8xf32> to vector<20x8xf32>
    %c0_3 = arith.constant 0 : index
    %c0_4 = arith.constant 0 : index
    %c0_5 = arith.constant 0 : index
    %2 = vector.load %arg2[%c0_3, %c0_4, %c0_5] : memref<9x8x16xf32, #tpu.memory_space<vmem>>, vector<1x8x16xf32>
    %3 = vector.shape_cast %2 : vector<1x8x16xf32> to vector<8x16xf32>
    %cst = arith.constant dense<0.000000e+00> : vector<20x16xf32>
    %4 = tpu.matmul %1, %3, %cst {dimension_numbers = #tpu.dot_dimension_numbers<[1], [0], [0], [1], [0, 0, 1, 1], [], []>} : vector<20x8xf32>, vector<8x16xf32>, vector<20x16xf32> -> vector<20x16xf32>
    %c0_6 = arith.constant 0 : index
    %c1 = arith.constant 1 : index
    %c0_7 = arith.constant 0 : index
    %c0_8 = arith.constant 0 : index
    %5 = vector.load %arg1[%c0_6, %c1, %c0_7, %c0_8] : memref<1x4x32x8xf32, #tpu.memory_space<vmem>>, vector<1x1x20x8xf32>
    %6 = vector.shape_cast %5 : vector<1x1x20x8xf32> to vector<20x8xf32>
    %c1_9 = arith.constant 1 : index
    %c0_10 = arith.constant 0 : index
    %c0_11 = arith.constant 0 : index
    %7 = vector.load %arg2[%c1_9, %c0_10, %c0_11] : memref<9x8x16xf32, #tpu.memory_space<vmem>>, vector<1x8x16xf32>
    %8 = vector.shape_cast %7 : vector<1x8x16xf32> to vector<8x16xf32>
    %cst_12 = arith.constant dense<0.000000e+00> : vector<20x16xf32>
    %9 = tpu.matmul %6, %8, %cst_12 {dimension_numbers = #tpu.dot_dimension_numbers<[1], [0], [0], [1], [0, 0, 1, 1], [], []>} : vector<20x8xf32>, vector<8x16xf32>, vector<20x16xf32> -> vector<20x16xf32>
    %10 = arith.addf %4, %9 : vector<20x16xf32>
    %c0_13 = arith.constant 0 : index
    %c0_14 = arith.constant 0 : index
    %c1_15 = arith.constant 1 : index
    %c0_16 = arith.constant 0 : index
    %11 = vector.load %arg1[%c0_13, %c0_14, %c1_15, %c0_16] : memref<1x4x32x8xf32, #tpu.memory_space<vmem>>, vector<1x1x20x8xf32>
    %12 = vector.shape_cast %11 : vector<1x1x20x8xf32> to vector<20x8xf32>
    %c2 = arith.constant 2 : index
    %c0_17 = arith.constant 0 : index
    %c0_18 = arith.constant 0 : index
    %13 = vector.load %arg2[%c2, %c0_17, %c0_18] : memref<9x8x16xf32, #tpu.memory_space<vmem>>, vector<1x8x16xf32>
    %14 = vector.shape_cast %13 : vector<1x8x16xf32> to vector<8x16xf32>
    %cst_19 = arith.constant dense<0.000000e+00> : vector<20x16xf32>
    %15 = tpu.matmul %12, %14, %cst_19 {dimension_numbers = #tpu.dot_dimension_numbers<[1], [0], [0], [1], [0, 0, 1, 1], [], []>} : vector<20x8xf32>, vector<8x16xf32>, vector<20x16xf32> -> vector<20x16xf32>
    %16 = arith.addf %10, %15 : vector<20x16xf32>
    %c0_20 = arith.constant 0 : index
    %c2_21 = arith.constant 2 : index
    %c0_22 = arith.constant 0 : index
    %c0_23 = arith.constant 0 : index
    %17 = vector.load %arg1[%c0_20, %c2_21, %c0_22, %c0_23] : memref<1x4x32x8xf32, #tpu.memory_space<vmem>>, vector<1x1x20x8xf32>
    %18 = vector.shape_cast %17 : vector<1x1x20x8xf32> to vector<20x8xf32>
    %c3 = arith.constant 3 : index
    %c0_24 = arith.constant 0 : index
    %c0_25 = arith.constant 0 : index
    %19 = vector.load %arg2[%c3, %c0_24, %c0_25] : memref<9x8x16xf32, #tpu.memory_space<vmem>>, vector<1x8x16xf32>
    %20 = vector.shape_cast %19 : vector<1x8x16xf32> to vector<8x16xf32>
    %cst_26 = arith.constant dense<0.000000e+00> : vector<20x16xf32>
    %21 = tpu.matmul %18, %20, %cst_26 {dimension_numbers = #tpu.dot_dimension_numbers<[1], [0], [0], [1], [0, 0, 1, 1], [], []>} : vector<20x8xf32>, vector<8x16xf32>, vector<20x16xf32> -> vector<20x16xf32>
    %22 = arith.addf %16, %21 : vector<20x16xf32>
    %c0_27 = arith.constant 0 : index
    %c3_28 = arith.constant 3 : index
    %c0_29 = arith.constant 0 : index
    %c0_30 = arith.constant 0 : index
    %23 = vector.load %arg1[%c0_27, %c3_28, %c0_29, %c0_30] : memref<1x4x32x8xf32, #tpu.memory_space<vmem>>, vector<1x1x20x8xf32>
    %24 = vector.shape_cast %23 : vector<1x1x20x8xf32> to vector<20x8xf32>
    %c4 = arith.constant 4 : index
    %c0_31 = arith.constant 0 : index
    %c0_32 = arith.constant 0 : index
    %25 = vector.load %arg2[%c4, %c0_31, %c0_32] : memref<9x8x16xf32, #tpu.memory_space<vmem>>, vector<1x8x16xf32>
    %26 = vector.shape_cast %25 : vector<1x8x16xf32> to vector<8x16xf32>
    %cst_33 = arith.constant dense<0.000000e+00> : vector<20x16xf32>
    %27 = tpu.matmul %24, %26, %cst_33 {dimension_numbers = #tpu.dot_dimension_numbers<[1], [0], [0], [1], [0, 0, 1, 1], [], []>} : vector<20x8xf32>, vector<8x16xf32>, vector<20x16xf32> -> vector<20x16xf32>
    %28 = arith.addf %22, %27 : vector<20x16xf32>
    %c0_34 = arith.constant 0 : index
    %c2_35 = arith.constant 2 : index
    %c1_36 = arith.constant 1 : index
    %c0_37 = arith.constant 0 : index
    %29 = vector.load %arg1[%c0_34, %c2_35, %c1_36, %c0_37] : memref<1x4x32x8xf32, #tpu.memory_space<vmem>>, vector<1x1x20x8xf32>
    %30 = vector.shape_cast %29 : vector<1x1x20x8xf32> to vector<20x8xf32>
    %c5 = arith.constant 5 : index
    %c0_38 = arith.constant 0 : index
    %c0_39 = arith.constant 0 : index
    %31 = vector.load %arg2[%c5, %c0_38, %c0_39] : memref<9x8x16xf32, #tpu.memory_space<vmem>>, vector<1x8x16xf32>
    %32 = vector.shape_cast %31 : vector<1x8x16xf32> to vector<8x16xf32>
    %cst_40 = arith.constant dense<0.000000e+00> : vector<20x16xf32>
    %33 = tpu.matmul %30, %32, %cst_40 {dimension_numbers = #tpu.dot_dimension_numbers<[1], [0], [0], [1], [0, 0, 1, 1], [], []>} : vector<20x8xf32>, vector<8x16xf32>, vector<20x16xf32> -> vector<20x16xf32>
    %34 = arith.addf %28, %33 : vector<20x16xf32>
    %c0_41 = arith.constant 0 : index
    %c0_42 = arith.constant 0 : index
    %c5_43 = arith.constant 5 : index
    %c0_44 = arith.constant 0 : index
    %35 = vector.load %arg1[%c0_41, %c0_42, %c5_43, %c0_44] : memref<1x4x32x8xf32, #tpu.memory_space<vmem>>, vector<1x1x20x8xf32>
    %36 = vector.shape_cast %35 : vector<1x1x20x8xf32> to vector<20x8xf32>
    %c6 = arith.constant 6 : index
    %c0_45 = arith.constant 0 : index
    %c0_46 = arith.constant 0 : index
    %37 = vector.load %arg2[%c6, %c0_45, %c0_46] : memref<9x8x16xf32, #tpu.memory_space<vmem>>, vector<1x8x16xf32>
    %38 = vector.shape_cast %37 : vector<1x8x16xf32> to vector<8x16xf32>
    %cst_47 = arith.constant dense<0.000000e+00> : vector<20x16xf32>
    %39 = tpu.matmul %36, %38, %cst_47 {dimension_numbers = #tpu.dot_dimension_numbers<[1], [0], [0], [1], [0, 0, 1, 1], [], []>} : vector<20x8xf32>, vector<8x16xf32>, vector<20x16xf32> -> vector<20x16xf32>
    %40 = arith.addf %34, %39 : vector<20x16xf32>
    %c0_48 = arith.constant 0 : index
    %c1_49 = arith.constant 1 : index
    %c5_50 = arith.constant 5 : index
    %c0_51 = arith.constant 0 : index
    %41 = vector.load %arg1[%c0_48, %c1_49, %c5_50, %c0_51] : memref<1x4x32x8xf32, #tpu.memory_space<vmem>>, vector<1x1x20x8xf32>
    %42 = vector.shape_cast %41 : vector<1x1x20x8xf32> to vector<20x8xf32>
    %c7 = arith.constant 7 : index
    %c0_52 = arith.constant 0 : index
    %c0_53 = arith.constant 0 : index
    %43 = vector.load %arg2[%c7, %c0_52, %c0_53] : memref<9x8x16xf32, #tpu.memory_space<vmem>>, vector<1x8x16xf32>
    %44 = vector.shape_cast %43 : vector<1x8x16xf32> to vector<8x16xf32>
    %cst_54 = arith.constant dense<0.000000e+00> : vector<20x16xf32>
    %45 = tpu.matmul %42, %44, %cst_54 {dimension_numbers = #tpu.dot_dimension_numbers<[1], [0], [0], [1], [0, 0, 1, 1], [], []>} : vector<20x8xf32>, vector<8x16xf32>, vector<20x16xf32> -> vector<20x16xf32>
    %46 = arith.addf %40, %45 : vector<20x16xf32>
    %c0_55 = arith.constant 0 : index
    %c0_56 = arith.constant 0 : index
    %c6_57 = arith.constant 6 : index
    %c0_58 = arith.constant 0 : index
    %47 = vector.load %arg1[%c0_55, %c0_56, %c6_57, %c0_58] : memref<1x4x32x8xf32, #tpu.memory_space<vmem>>, vector<1x1x20x8xf32>
    %48 = vector.shape_cast %47 : vector<1x1x20x8xf32> to vector<20x8xf32>
    %c8 = arith.constant 8 : index
    %c0_59 = arith.constant 0 : index
    %c0_60 = arith.constant 0 : index
    %49 = vector.load %arg2[%c8, %c0_59, %c0_60] : memref<9x8x16xf32, #tpu.memory_space<vmem>>, vector<1x8x16xf32>
    %50 = vector.shape_cast %49 : vector<1x8x16xf32> to vector<8x16xf32>
    %cst_61 = arith.constant dense<0.000000e+00> : vector<20x16xf32>
    %51 = tpu.matmul %48, %50, %cst_61 {dimension_numbers = #tpu.dot_dimension_numbers<[1], [0], [0], [1], [0, 0, 1, 1], [], []>} : vector<20x8xf32>, vector<8x16xf32>, vector<20x16xf32> -> vector<20x16xf32>
    %52 = arith.addf %46, %51 : vector<20x16xf32>
    %c0_62 = arith.constant 0 : index
    %c1_63 = arith.constant 1 : index
    %c0_64 = arith.constant 0 : index
    %c0_65 = arith.constant 0 : index
    %53 = vector.load %arg1[%c0_62, %c1_63, %c0_64, %c0_65] : memref<1x4x32x8xf32, #tpu.memory_space<vmem>>, vector<1x1x20x8xf32>
    %54 = vector.shape_cast %53 : vector<1x1x20x8xf32> to vector<20x8xf32>
    %c0_66 = arith.constant 0 : index
    %c0_67 = arith.constant 0 : index
    %c0_68 = arith.constant 0 : index
    %55 = vector.load %arg2[%c0_66, %c0_67, %c0_68] : memref<9x8x16xf32, #tpu.memory_space<vmem>>, vector<1x8x16xf32>
    %56 = vector.shape_cast %55 : vector<1x8x16xf32> to vector<8x16xf32>
    %cst_69 = arith.constant dense<0.000000e+00> : vector<20x16xf32>
    %57 = tpu.matmul %54, %56, %cst_69 {dimension_numbers = #tpu.dot_dimension_numbers<[1], [0], [0], [1], [0, 0, 1, 1], [], []>} : vector<20x8xf32>, vector<8x16xf32>, vector<20x16xf32> -> vector<20x16xf32>
    %c0_70 = arith.constant 0 : index
    %c0_71 = arith.constant 0 : index
    %c1_72 = arith.constant 1 : index
    %c0_73 = arith.constant 0 : index
    %58 = vector.load %arg1[%c0_70, %c0_71, %c1_72, %c0_73] : memref<1x4x32x8xf32, #tpu.memory_space<vmem>>, vector<1x1x20x8xf32>
    %59 = vector.shape_cast %58 : vector<1x1x20x8xf32> to vector<20x8xf32>
    %c1_74 = arith.constant 1 : index
    %c0_75 = arith.constant 0 : index
    %c0_76 = arith.constant 0 : index
    %60 = vector.load %arg2[%c1_74, %c0_75, %c0_76] : memref<9x8x16xf32, #tpu.memory_space<vmem>>, vector<1x8x16xf32>
    %61 = vector.shape_cast %60 : vector<1x8x16xf32> to vector<8x16xf32>
    %cst_77 = arith.constant dense<0.000000e+00> : vector<20x16xf32>
    %62 = tpu.matmul %59, %61, %cst_77 {dimension_numbers = #tpu.dot_dimension_numbers<[1], [0], [0], [1], [0, 0, 1, 1], [], []>} : vector<20x8xf32>, vector<8x16xf32>, vector<20x16xf32> -> vector<20x16xf32>
    %63 = arith.addf %57, %62 : vector<20x16xf32>
    %c0_78 = arith.constant 0 : index
    %c1_79 = arith.constant 1 : index
    %c1_80 = arith.constant 1 : index
    %c0_81 = arith.constant 0 : index
    %64 = vector.load %arg1[%c0_78, %c1_79, %c1_80, %c0_81] : memref<1x4x32x8xf32, #tpu.memory_space<vmem>>, vector<1x1x20x8xf32>
    %65 = vector.shape_cast %64 : vector<1x1x20x8xf32> to vector<20x8xf32>
    %c2_82 = arith.constant 2 : index
    %c0_83 = arith.constant 0 : index
    %c0_84 = arith.constant 0 : index
    %66 = vector.load %arg2[%c2_82, %c0_83, %c0_84] : memref<9x8x16xf32, #tpu.memory_space<vmem>>, vector<1x8x16xf32>
    %67 = vector.shape_cast %66 : vector<1x8x16xf32> to vector<8x16xf32>
    %cst_85 = arith.constant dense<0.000000e+00> : vector<20x16xf32>
    %68 = tpu.matmul %65, %67, %cst_85 {dimension_numbers = #tpu.dot_dimension_numbers<[1], [0], [0], [1], [0, 0, 1, 1], [], []>} : vector<20x8xf32>, vector<8x16xf32>, vector<20x16xf32> -> vector<20x16xf32>
    %69 = arith.addf %63, %68 : vector<20x16xf32>
    %c0_86 = arith.constant 0 : index
    %c3_87 = arith.constant 3 : index
    %c0_88 = arith.constant 0 : index
    %c0_89 = arith.constant 0 : index
    %70 = vector.load %arg1[%c0_86, %c3_87, %c0_88, %c0_89] : memref<1x4x32x8xf32, #tpu.memory_space<vmem>>, vector<1x1x20x8xf32>
    %71 = vector.shape_cast %70 : vector<1x1x20x8xf32> to vector<20x8xf32>
    %c3_90 = arith.constant 3 : index
    %c0_91 = arith.constant 0 : index
    %c0_92 = arith.constant 0 : index
    %72 = vector.load %arg2[%c3_90, %c0_91, %c0_92] : memref<9x8x16xf32, #tpu.memory_space<vmem>>, vector<1x8x16xf32>
    %73 = vector.shape_cast %72 : vector<1x8x16xf32> to vector<8x16xf32>
    %cst_93 = arith.constant dense<0.000000e+00> : vector<20x16xf32>
    %74 = tpu.matmul %71, %73, %cst_93 {dimension_numbers = #tpu.dot_dimension_numbers<[1], [0], [0], [1], [0, 0, 1, 1], [], []>} : vector<20x8xf32>, vector<8x16xf32>, vector<20x16xf32> -> vector<20x16xf32>
    %75 = arith.addf %69, %74 : vector<20x16xf32>
    %c0_94 = arith.constant 0 : index
    %c2_95 = arith.constant 2 : index
    %c1_96 = arith.constant 1 : index
    %c0_97 = arith.constant 0 : index
    %76 = vector.load %arg1[%c0_94, %c2_95, %c1_96, %c0_97] : memref<1x4x32x8xf32, #tpu.memory_space<vmem>>, vector<1x1x20x8xf32>
    %77 = vector.shape_cast %76 : vector<1x1x20x8xf32> to vector<20x8xf32>
    %c4_98 = arith.constant 4 : index
    %c0_99 = arith.constant 0 : index
    %c0_100 = arith.constant 0 : index
    %78 = vector.load %arg2[%c4_98, %c0_99, %c0_100] : memref<9x8x16xf32, #tpu.memory_space<vmem>>, vector<1x8x16xf32>
    %79 = vector.shape_cast %78 : vector<1x8x16xf32> to vector<8x16xf32>
    %cst_101 = arith.constant dense<0.000000e+00> : vector<20x16xf32>
    %80 = tpu.matmul %77, %79, %cst_101 {dimension_numbers = #tpu.dot_dimension_numbers<[1], [0], [0], [1], [0, 0, 1, 1], [], []>} : vector<20x8xf32>, vector<8x16xf32>, vector<20x16xf32> -> vector<20x16xf32>
    %81 = arith.addf %75, %80 : vector<20x16xf32>
    %c0_102 = arith.constant 0 : index
    %c3_103 = arith.constant 3 : index
    %c1_104 = arith.constant 1 : index
    %c0_105 = arith.constant 0 : index
    %82 = vector.load %arg1[%c0_102, %c3_103, %c1_104, %c0_105] : memref<1x4x32x8xf32, #tpu.memory_space<vmem>>, vector<1x1x20x8xf32>
    %83 = vector.shape_cast %82 : vector<1x1x20x8xf32> to vector<20x8xf32>
    %c5_106 = arith.constant 5 : index
    %c0_107 = arith.constant 0 : index
    %c0_108 = arith.constant 0 : index
    %84 = vector.load %arg2[%c5_106, %c0_107, %c0_108] : memref<9x8x16xf32, #tpu.memory_space<vmem>>, vector<1x8x16xf32>
    %85 = vector.shape_cast %84 : vector<1x8x16xf32> to vector<8x16xf32>
    %cst_109 = arith.constant dense<0.000000e+00> : vector<20x16xf32>
    %86 = tpu.matmul %83, %85, %cst_109 {dimension_numbers = #tpu.dot_dimension_numbers<[1], [0], [0], [1], [0, 0, 1, 1], [], []>} : vector<20x8xf32>, vector<8x16xf32>, vector<20x16xf32> -> vector<20x16xf32>
    %87 = arith.addf %81, %86 : vector<20x16xf32>
    %c0_110 = arith.constant 0 : index
    %c1_111 = arith.constant 1 : index
    %c5_112 = arith.constant 5 : index
    %c0_113 = arith.constant 0 : index
    %88 = vector.load %arg1[%c0_110, %c1_111, %c5_112, %c0_113] : memref<1x4x32x8xf32, #tpu.memory_space<vmem>>, vector<1x1x20x8xf32>
    %89 = vector.shape_cast %88 : vector<1x1x20x8xf32> to vector<20x8xf32>
    %c6_114 = arith.constant 6 : index
    %c0_115 = arith.constant 0 : index
    %c0_116 = arith.constant 0 : index
    %90 = vector.load %arg2[%c6_114, %c0_115, %c0_116] : memref<9x8x16xf32, #tpu.memory_space<vmem>>, vector<1x8x16xf32>
    %91 = vector.shape_cast %90 : vector<1x8x16xf32> to vector<8x16xf32>
    %cst_117 = arith.constant dense<0.000000e+00> : vector<20x16xf32>
    %92 = tpu.matmul %89, %91, %cst_117 {dimension_numbers = #tpu.dot_dimension_numbers<[1], [0], [0], [1], [0, 0, 1, 1], [], []>} : vector<20x8xf32>, vector<8x16xf32>, vector<20x16xf32> -> vector<20x16xf32>
    %93 = arith.addf %87, %92 : vector<20x16xf32>
    %c0_118 = arith.constant 0 : index
    %c0_119 = arith.constant 0 : index
    %c6_120 = arith.constant 6 : index
    %c0_121 = arith.constant 0 : index
    %94 = vector.load %arg1[%c0_118, %c0_119, %c6_120, %c0_121] : memref<1x4x32x8xf32, #tpu.memory_space<vmem>>, vector<1x1x20x8xf32>
    %95 = vector.shape_cast %94 : vector<1x1x20x8xf32> to vector<20x8xf32>
    %c7_122 = arith.constant 7 : index
    %c0_123 = arith.constant 0 : index
    %c0_124 = arith.constant 0 : index
    %96 = vector.load %arg2[%c7_122, %c0_123, %c0_124] : memref<9x8x16xf32, #tpu.memory_space<vmem>>, vector<1x8x16xf32>
    %97 = vector.shape_cast %96 : vector<1x8x16xf32> to vector<8x16xf32>
    %cst_125 = arith.constant dense<0.000000e+00> : vector<20x16xf32>
    %98 = tpu.matmul %95, %97, %cst_125 {dimension_numbers = #tpu.dot_dimension_numbers<[1], [0], [0], [1], [0, 0, 1, 1], [], []>} : vector<20x8xf32>, vector<8x16xf32>, vector<20x16xf32> -> vector<20x16xf32>
    %99 = arith.addf %93, %98 : vector<20x16xf32>
    %c0_126 = arith.constant 0 : index
    %c1_127 = arith.constant 1 : index
    %c6_128 = arith.constant 6 : index
    %c0_129 = arith.constant 0 : index
    %100 = vector.load %arg1[%c0_126, %c1_127, %c6_128, %c0_129] : memref<1x4x32x8xf32, #tpu.memory_space<vmem>>, vector<1x1x20x8xf32>
    %101 = vector.shape_cast %100 : vector<1x1x20x8xf32> to vector<20x8xf32>
    %c8_130 = arith.constant 8 : index
    %c0_131 = arith.constant 0 : index
    %c0_132 = arith.constant 0 : index
    %102 = vector.load %arg2[%c8_130, %c0_131, %c0_132] : memref<9x8x16xf32, #tpu.memory_space<vmem>>, vector<1x8x16xf32>
    %103 = vector.shape_cast %102 : vector<1x8x16xf32> to vector<8x16xf32>
    %cst_133 = arith.constant dense<0.000000e+00> : vector<20x16xf32>
    %104 = tpu.matmul %101, %103, %cst_133 {dimension_numbers = #tpu.dot_dimension_numbers<[1], [0], [0], [1], [0, 0, 1, 1], [], []>} : vector<20x8xf32>, vector<8x16xf32>, vector<20x16xf32> -> vector<20x16xf32>
    %105 = arith.addf %99, %104 : vector<20x16xf32>
    %106 = arith.maximumf %52, %105 : vector<20x16xf32>
    %c0_134 = arith.constant 0 : index
    %c2_135 = arith.constant 2 : index
    %c0_136 = arith.constant 0 : index
    %c0_137 = arith.constant 0 : index
    %107 = vector.load %arg1[%c0_134, %c2_135, %c0_136, %c0_137] : memref<1x4x32x8xf32, #tpu.memory_space<vmem>>, vector<1x1x20x8xf32>
    %108 = vector.shape_cast %107 : vector<1x1x20x8xf32> to vector<20x8xf32>
    %c0_138 = arith.constant 0 : index
    %c0_139 = arith.constant 0 : index
    %c0_140 = arith.constant 0 : index
    %109 = vector.load %arg2[%c0_138, %c0_139, %c0_140] : memref<9x8x16xf32, #tpu.memory_space<vmem>>, vector<1x8x16xf32>
    %110 = vector.shape_cast %109 : vector<1x8x16xf32> to vector<8x16xf32>
    %cst_141 = arith.constant dense<0.000000e+00> : vector<20x16xf32>
    %111 = tpu.matmul %108, %110, %cst_141 {dimension_numbers = #tpu.dot_dimension_numbers<[1], [0], [0], [1], [0, 0, 1, 1], [], []>} : vector<20x8xf32>, vector<8x16xf32>, vector<20x16xf32> -> vector<20x16xf32>
    %c0_142 = arith.constant 0 : index
    %c3_143 = arith.constant 3 : index
    %c0_144 = arith.constant 0 : index
    %c0_145 = arith.constant 0 : index
    %112 = vector.load %arg1[%c0_142, %c3_143, %c0_144, %c0_145] : memref<1x4x32x8xf32, #tpu.memory_space<vmem>>, vector<1x1x20x8xf32>
    %113 = vector.shape_cast %112 : vector<1x1x20x8xf32> to vector<20x8xf32>
    %c1_146 = arith.constant 1 : index
    %c0_147 = arith.constant 0 : index
    %c0_148 = arith.constant 0 : index
    %114 = vector.load %arg2[%c1_146, %c0_147, %c0_148] : memref<9x8x16xf32, #tpu.memory_space<vmem>>, vector<1x8x16xf32>
    %115 = vector.shape_cast %114 : vector<1x8x16xf32> to vector<8x16xf32>
    %cst_149 = arith.constant dense<0.000000e+00> : vector<20x16xf32>
    %116 = tpu.matmul %113, %115, %cst_149 {dimension_numbers = #tpu.dot_dimension_numbers<[1], [0], [0], [1], [0, 0, 1, 1], [], []>} : vector<20x8xf32>, vector<8x16xf32>, vector<20x16xf32> -> vector<20x16xf32>
    %117 = arith.addf %111, %116 : vector<20x16xf32>
    %c0_150 = arith.constant 0 : index
    %c2_151 = arith.constant 2 : index
    %c1_152 = arith.constant 1 : index
    %c0_153 = arith.constant 0 : index
    %118 = vector.load %arg1[%c0_150, %c2_151, %c1_152, %c0_153] : memref<1x4x32x8xf32, #tpu.memory_space<vmem>>, vector<1x1x20x8xf32>
    %119 = vector.shape_cast %118 : vector<1x1x20x8xf32> to vector<20x8xf32>
    %c2_154 = arith.constant 2 : index
    %c0_155 = arith.constant 0 : index
    %c0_156 = arith.constant 0 : index
    %120 = vector.load %arg2[%c2_154, %c0_155, %c0_156] : memref<9x8x16xf32, #tpu.memory_space<vmem>>, vector<1x8x16xf32>
    %121 = vector.shape_cast %120 : vector<1x8x16xf32> to vector<8x16xf32>
    %cst_157 = arith.constant dense<0.000000e+00> : vector<20x16xf32>
    %122 = tpu.matmul %119, %121, %cst_157 {dimension_numbers = #tpu.dot_dimension_numbers<[1], [0], [0], [1], [0, 0, 1, 1], [], []>} : vector<20x8xf32>, vector<8x16xf32>, vector<20x16xf32> -> vector<20x16xf32>
    %123 = arith.addf %117, %122 : vector<20x16xf32>
    %c0_158 = arith.constant 0 : index
    %c0_159 = arith.constant 0 : index
    %c5_160 = arith.constant 5 : index
    %c0_161 = arith.constant 0 : index
    %124 = vector.load %arg1[%c0_158, %c0_159, %c5_160, %c0_161] : memref<1x4x32x8xf32, #tpu.memory_space<vmem>>, vector<1x1x20x8xf32>
    %125 = vector.shape_cast %124 : vector<1x1x20x8xf32> to vector<20x8xf32>
    %c3_162 = arith.constant 3 : index
    %c0_163 = arith.constant 0 : index
    %c0_164 = arith.constant 0 : index
    %126 = vector.load %arg2[%c3_162, %c0_163, %c0_164] : memref<9x8x16xf32, #tpu.memory_space<vmem>>, vector<1x8x16xf32>
    %127 = vector.shape_cast %126 : vector<1x8x16xf32> to vector<8x16xf32>
    %cst_165 = arith.constant dense<0.000000e+00> : vector<20x16xf32>
    %128 = tpu.matmul %125, %127, %cst_165 {dimension_numbers = #tpu.dot_dimension_numbers<[1], [0], [0], [1], [0, 0, 1, 1], [], []>} : vector<20x8xf32>, vector<8x16xf32>, vector<20x16xf32> -> vector<20x16xf32>
    %129 = arith.addf %123, %128 : vector<20x16xf32>
    %c0_166 = arith.constant 0 : index
    %c1_167 = arith.constant 1 : index
    %c5_168 = arith.constant 5 : index
    %c0_169 = arith.constant 0 : index
    %130 = vector.load %arg1[%c0_166, %c1_167, %c5_168, %c0_169] : memref<1x4x32x8xf32, #tpu.memory_space<vmem>>, vector<1x1x20x8xf32>
    %131 = vector.shape_cast %130 : vector<1x1x20x8xf32> to vector<20x8xf32>
    %c4_170 = arith.constant 4 : index
    %c0_171 = arith.constant 0 : index
    %c0_172 = arith.constant 0 : index
    %132 = vector.load %arg2[%c4_170, %c0_171, %c0_172] : memref<9x8x16xf32, #tpu.memory_space<vmem>>, vector<1x8x16xf32>
    %133 = vector.shape_cast %132 : vector<1x8x16xf32> to vector<8x16xf32>
    %cst_173 = arith.constant dense<0.000000e+00> : vector<20x16xf32>
    %134 = tpu.matmul %131, %133, %cst_173 {dimension_numbers = #tpu.dot_dimension_numbers<[1], [0], [0], [1], [0, 0, 1, 1], [], []>} : vector<20x8xf32>, vector<8x16xf32>, vector<20x16xf32> -> vector<20x16xf32>
    %135 = arith.addf %129, %134 : vector<20x16xf32>
    %c0_174 = arith.constant 0 : index
    %c0_175 = arith.constant 0 : index
    %c6_176 = arith.constant 6 : index
    %c0_177 = arith.constant 0 : index
    %136 = vector.load %arg1[%c0_174, %c0_175, %c6_176, %c0_177] : memref<1x4x32x8xf32, #tpu.memory_space<vmem>>, vector<1x1x20x8xf32>
    %137 = vector.shape_cast %136 : vector<1x1x20x8xf32> to vector<20x8xf32>
    %c5_178 = arith.constant 5 : index
    %c0_179 = arith.constant 0 : index
    %c0_180 = arith.constant 0 : index
    %138 = vector.load %arg2[%c5_178, %c0_179, %c0_180] : memref<9x8x16xf32, #tpu.memory_space<vmem>>, vector<1x8x16xf32>
    %139 = vector.shape_cast %138 : vector<1x8x16xf32> to vector<8x16xf32>
    %cst_181 = arith.constant dense<0.000000e+00> : vector<20x16xf32>
    %140 = tpu.matmul %137, %139, %cst_181 {dimension_numbers = #tpu.dot_dimension_numbers<[1], [0], [0], [1], [0, 0, 1, 1], [], []>} : vector<20x8xf32>, vector<8x16xf32>, vector<20x16xf32> -> vector<20x16xf32>
    %141 = arith.addf %135, %140 : vector<20x16xf32>
    %c0_182 = arith.constant 0 : index
    %c2_183 = arith.constant 2 : index
    %c5_184 = arith.constant 5 : index
    %c0_185 = arith.constant 0 : index
    %142 = vector.load %arg1[%c0_182, %c2_183, %c5_184, %c0_185] : memref<1x4x32x8xf32, #tpu.memory_space<vmem>>, vector<1x1x20x8xf32>
    %143 = vector.shape_cast %142 : vector<1x1x20x8xf32> to vector<20x8xf32>
    %c6_186 = arith.constant 6 : index
    %c0_187 = arith.constant 0 : index
    %c0_188 = arith.constant 0 : index
    %144 = vector.load %arg2[%c6_186, %c0_187, %c0_188] : memref<9x8x16xf32, #tpu.memory_space<vmem>>, vector<1x8x16xf32>
    %145 = vector.shape_cast %144 : vector<1x8x16xf32> to vector<8x16xf32>
    %cst_189 = arith.constant dense<0.000000e+00> : vector<20x16xf32>
    %146 = tpu.matmul %143, %145, %cst_189 {dimension_numbers = #tpu.dot_dimension_numbers<[1], [0], [0], [1], [0, 0, 1, 1], [], []>} : vector<20x8xf32>, vector<8x16xf32>, vector<20x16xf32> -> vector<20x16xf32>
    %147 = arith.addf %141, %146 : vector<20x16xf32>
    %c0_190 = arith.constant 0 : index
    %c3_191 = arith.constant 3 : index
    %c5_192 = arith.constant 5 : index
    %c0_193 = arith.constant 0 : index
    %148 = vector.load %arg1[%c0_190, %c3_191, %c5_192, %c0_193] : memref<1x4x32x8xf32, #tpu.memory_space<vmem>>, vector<1x1x20x8xf32>
    %149 = vector.shape_cast %148 : vector<1x1x20x8xf32> to vector<20x8xf32>
    %c7_194 = arith.constant 7 : index
    %c0_195 = arith.constant 0 : index
    %c0_196 = arith.constant 0 : index
    %150 = vector.load %arg2[%c7_194, %c0_195, %c0_196] : memref<9x8x16xf32, #tpu.memory_space<vmem>>, vector<1x8x16xf32>
    %151 = vector.shape_cast %150 : vector<1x8x16xf32> to vector<8x16xf32>
    %cst_197 = arith.constant dense<0.000000e+00> : vector<20x16xf32>
    %152 = tpu.matmul %149, %151, %cst_197 {dimension_numbers = #tpu.dot_dimension_numbers<[1], [0], [0], [1], [0, 0, 1, 1], [], []>} : vector<20x8xf32>, vector<8x16xf32>, vector<20x16xf32> -> vector<20x16xf32>
    %153 = arith.addf %147, %152 : vector<20x16xf32>
    %c0_198 = arith.constant 0 : index
    %c2_199 = arith.constant 2 : index
    %c6_200 = arith.constant 6 : index
    %c0_201 = arith.constant 0 : index
    %154 = vector.load %arg1[%c0_198, %c2_199, %c6_200, %c0_201] : memref<1x4x32x8xf32, #tpu.memory_space<vmem>>, vector<1x1x20x8xf32>
    %155 = vector.shape_cast %154 : vector<1x1x20x8xf32> to vector<20x8xf32>
    %c8_202 = arith.constant 8 : index
    %c0_203 = arith.constant 0 : index
    %c0_204 = arith.constant 0 : index
    %156 = vector.load %arg2[%c8_202, %c0_203, %c0_204] : memref<9x8x16xf32, #tpu.memory_space<vmem>>, vector<1x8x16xf32>
    %157 = vector.shape_cast %156 : vector<1x8x16xf32> to vector<8x16xf32>
    %cst_205 = arith.constant dense<0.000000e+00> : vector<20x16xf32>
    %158 = tpu.matmul %155, %157, %cst_205 {dimension_numbers = #tpu.dot_dimension_numbers<[1], [0], [0], [1], [0, 0, 1, 1], [], []>} : vector<20x8xf32>, vector<8x16xf32>, vector<20x16xf32> -> vector<20x16xf32>
    %159 = arith.addf %153, %158 : vector<20x16xf32>
    %160 = arith.maximumf %106, %159 : vector<20x16xf32>
    %c0_206 = arith.constant 0 : index
    %c3_207 = arith.constant 3 : index
    %c0_208 = arith.constant 0 : index
    %c0_209 = arith.constant 0 : index
    %161 = vector.load %arg1[%c0_206, %c3_207, %c0_208, %c0_209] : memref<1x4x32x8xf32, #tpu.memory_space<vmem>>, vector<1x1x20x8xf32>
    %162 = vector.shape_cast %161 : vector<1x1x20x8xf32> to vector<20x8xf32>
    %c0_210 = arith.constant 0 : index
    %c0_211 = arith.constant 0 : index
    %c0_212 = arith.constant 0 : index
    %163 = vector.load %arg2[%c0_210, %c0_211, %c0_212] : memref<9x8x16xf32, #tpu.memory_space<vmem>>, vector<1x8x16xf32>
    %164 = vector.shape_cast %163 : vector<1x8x16xf32> to vector<8x16xf32>
    %cst_213 = arith.constant dense<0.000000e+00> : vector<20x16xf32>
    %165 = tpu.matmul %162, %164, %cst_213 {dimension_numbers = #tpu.dot_dimension_numbers<[1], [0], [0], [1], [0, 0, 1, 1], [], []>} : vector<20x8xf32>, vector<8x16xf32>, vector<20x16xf32> -> vector<20x16xf32>
    %c0_214 = arith.constant 0 : index
    %c2_215 = arith.constant 2 : index
    %c1_216 = arith.constant 1 : index
    %c0_217 = arith.constant 0 : index
    %166 = vector.load %arg1[%c0_214, %c2_215, %c1_216, %c0_217] : memref<1x4x32x8xf32, #tpu.memory_space<vmem>>, vector<1x1x20x8xf32>
    %167 = vector.shape_cast %166 : vector<1x1x20x8xf32> to vector<20x8xf32>
    %c1_218 = arith.constant 1 : index
    %c0_219 = arith.constant 0 : index
    %c0_220 = arith.constant 0 : index
    %168 = vector.load %arg2[%c1_218, %c0_219, %c0_220] : memref<9x8x16xf32, #tpu.memory_space<vmem>>, vector<1x8x16xf32>
    %169 = vector.shape_cast %168 : vector<1x8x16xf32> to vector<8x16xf32>
    %cst_221 = arith.constant dense<0.000000e+00> : vector<20x16xf32>
    %170 = tpu.matmul %167, %169, %cst_221 {dimension_numbers = #tpu.dot_dimension_numbers<[1], [0], [0], [1], [0, 0, 1, 1], [], []>} : vector<20x8xf32>, vector<8x16xf32>, vector<20x16xf32> -> vector<20x16xf32>
    %171 = arith.addf %165, %170 : vector<20x16xf32>
    %c0_222 = arith.constant 0 : index
    %c3_223 = arith.constant 3 : index
    %c1_224 = arith.constant 1 : index
    %c0_225 = arith.constant 0 : index
    %172 = vector.load %arg1[%c0_222, %c3_223, %c1_224, %c0_225] : memref<1x4x32x8xf32, #tpu.memory_space<vmem>>, vector<1x1x20x8xf32>
    %173 = vector.shape_cast %172 : vector<1x1x20x8xf32> to vector<20x8xf32>
    %c2_226 = arith.constant 2 : index
    %c0_227 = arith.constant 0 : index
    %c0_228 = arith.constant 0 : index
    %174 = vector.load %arg2[%c2_226, %c0_227, %c0_228] : memref<9x8x16xf32, #tpu.memory_space<vmem>>, vector<1x8x16xf32>
    %175 = vector.shape_cast %174 : vector<1x8x16xf32> to vector<8x16xf32>
    %cst_229 = arith.constant dense<0.000000e+00> : vector<20x16xf32>
    %176 = tpu.matmul %173, %175, %cst_229 {dimension_numbers = #tpu.dot_dimension_numbers<[1], [0], [0], [1], [0, 0, 1, 1], [], []>} : vector<20x8xf32>, vector<8x16xf32>, vector<20x16xf32> -> vector<20x16xf32>
    %177 = arith.addf %171, %176 : vector<20x16xf32>
    %c0_230 = arith.constant 0 : index
    %c1_231 = arith.constant 1 : index
    %c5_232 = arith.constant 5 : index
    %c0_233 = arith.constant 0 : index
    %178 = vector.load %arg1[%c0_230, %c1_231, %c5_232, %c0_233] : memref<1x4x32x8xf32, #tpu.memory_space<vmem>>, vector<1x1x20x8xf32>
    %179 = vector.shape_cast %178 : vector<1x1x20x8xf32> to vector<20x8xf32>
    %c3_234 = arith.constant 3 : index
    %c0_235 = arith.constant 0 : index
    %c0_236 = arith.constant 0 : index
    %180 = vector.load %arg2[%c3_234, %c0_235, %c0_236] : memref<9x8x16xf32, #tpu.memory_space<vmem>>, vector<1x8x16xf32>
    %181 = vector.shape_cast %180 : vector<1x8x16xf32> to vector<8x16xf32>
    %cst_237 = arith.constant dense<0.000000e+00> : vector<20x16xf32>
    %182 = tpu.matmul %179, %181, %cst_237 {dimension_numbers = #tpu.dot_dimension_numbers<[1], [0], [0], [1], [0, 0, 1, 1], [], []>} : vector<20x8xf32>, vector<8x16xf32>, vector<20x16xf32> -> vector<20x16xf32>
    %183 = arith.addf %177, %182 : vector<20x16xf32>
    %c0_238 = arith.constant 0 : index
    %c0_239 = arith.constant 0 : index
    %c6_240 = arith.constant 6 : index
    %c0_241 = arith.constant 0 : index
    %184 = vector.load %arg1[%c0_238, %c0_239, %c6_240, %c0_241] : memref<1x4x32x8xf32, #tpu.memory_space<vmem>>, vector<1x1x20x8xf32>
    %185 = vector.shape_cast %184 : vector<1x1x20x8xf32> to vector<20x8xf32>
    %c4_242 = arith.constant 4 : index
    %c0_243 = arith.constant 0 : index
    %c0_244 = arith.constant 0 : index
    %186 = vector.load %arg2[%c4_242, %c0_243, %c0_244] : memref<9x8x16xf32, #tpu.memory_space<vmem>>, vector<1x8x16xf32>
    %187 = vector.shape_cast %186 : vector<1x8x16xf32> to vector<8x16xf32>
    %cst_245 = arith.constant dense<0.000000e+00> : vector<20x16xf32>
    %188 = tpu.matmul %185, %187, %cst_245 {dimension_numbers = #tpu.dot_dimension_numbers<[1], [0], [0], [1], [0, 0, 1, 1], [], []>} : vector<20x8xf32>, vector<8x16xf32>, vector<20x16xf32> -> vector<20x16xf32>
    %189 = arith.addf %183, %188 : vector<20x16xf32>
    %c0_246 = arith.constant 0 : index
    %c1_247 = arith.constant 1 : index
    %c6_248 = arith.constant 6 : index
    %c0_249 = arith.constant 0 : index
    %190 = vector.load %arg1[%c0_246, %c1_247, %c6_248, %c0_249] : memref<1x4x32x8xf32, #tpu.memory_space<vmem>>, vector<1x1x20x8xf32>
    %191 = vector.shape_cast %190 : vector<1x1x20x8xf32> to vector<20x8xf32>
    %c5_250 = arith.constant 5 : index
    %c0_251 = arith.constant 0 : index
    %c0_252 = arith.constant 0 : index
    %192 = vector.load %arg2[%c5_250, %c0_251, %c0_252] : memref<9x8x16xf32, #tpu.memory_space<vmem>>, vector<1x8x16xf32>
    %193 = vector.shape_cast %192 : vector<1x8x16xf32> to vector<8x16xf32>
    %cst_253 = arith.constant dense<0.000000e+00> : vector<20x16xf32>
    %194 = tpu.matmul %191, %193, %cst_253 {dimension_numbers = #tpu.dot_dimension_numbers<[1], [0], [0], [1], [0, 0, 1, 1], [], []>} : vector<20x8xf32>, vector<8x16xf32>, vector<20x16xf32> -> vector<20x16xf32>
    %195 = arith.addf %189, %194 : vector<20x16xf32>
    %c0_254 = arith.constant 0 : index
    %c3_255 = arith.constant 3 : index
    %c5_256 = arith.constant 5 : index
    %c0_257 = arith.constant 0 : index
    %196 = vector.load %arg1[%c0_254, %c3_255, %c5_256, %c0_257] : memref<1x4x32x8xf32, #tpu.memory_space<vmem>>, vector<1x1x20x8xf32>
    %197 = vector.shape_cast %196 : vector<1x1x20x8xf32> to vector<20x8xf32>
    %c6_258 = arith.constant 6 : index
    %c0_259 = arith.constant 0 : index
    %c0_260 = arith.constant 0 : index
    %198 = vector.load %arg2[%c6_258, %c0_259, %c0_260] : memref<9x8x16xf32, #tpu.memory_space<vmem>>, vector<1x8x16xf32>
    %199 = vector.shape_cast %198 : vector<1x8x16xf32> to vector<8x16xf32>
    %cst_261 = arith.constant dense<0.000000e+00> : vector<20x16xf32>
    %200 = tpu.matmul %197, %199, %cst_261 {dimension_numbers = #tpu.dot_dimension_numbers<[1], [0], [0], [1], [0, 0, 1, 1], [], []>} : vector<20x8xf32>, vector<8x16xf32>, vector<20x16xf32> -> vector<20x16xf32>
    %201 = arith.addf %195, %200 : vector<20x16xf32>
    %c0_262 = arith.constant 0 : index
    %c2_263 = arith.constant 2 : index
    %c6_264 = arith.constant 6 : index
    %c0_265 = arith.constant 0 : index
    %202 = vector.load %arg1[%c0_262, %c2_263, %c6_264, %c0_265] : memref<1x4x32x8xf32, #tpu.memory_space<vmem>>, vector<1x1x20x8xf32>
    %203 = vector.shape_cast %202 : vector<1x1x20x8xf32> to vector<20x8xf32>
    %c7_266 = arith.constant 7 : index
    %c0_267 = arith.constant 0 : index
    %c0_268 = arith.constant 0 : index
    %204 = vector.load %arg2[%c7_266, %c0_267, %c0_268] : memref<9x8x16xf32, #tpu.memory_space<vmem>>, vector<1x8x16xf32>
    %205 = vector.shape_cast %204 : vector<1x8x16xf32> to vector<8x16xf32>
    %cst_269 = arith.constant dense<0.000000e+00> : vector<20x16xf32>
    %206 = tpu.matmul %203, %205, %cst_269 {dimension_numbers = #tpu.dot_dimension_numbers<[1], [0], [0], [1], [0, 0, 1, 1], [], []>} : vector<20x8xf32>, vector<8x16xf32>, vector<20x16xf32> -> vector<20x16xf32>
    %207 = arith.addf %201, %206 : vector<20x16xf32>
    %c0_270 = arith.constant 0 : index
    %c3_271 = arith.constant 3 : index
    %c6_272 = arith.constant 6 : index
    %c0_273 = arith.constant 0 : index
    %208 = vector.load %arg1[%c0_270, %c3_271, %c6_272, %c0_273] : memref<1x4x32x8xf32, #tpu.memory_space<vmem>>, vector<1x1x20x8xf32>
    %209 = vector.shape_cast %208 : vector<1x1x20x8xf32> to vector<20x8xf32>
    %c8_274 = arith.constant 8 : index
    %c0_275 = arith.constant 0 : index
    %c0_276 = arith.constant 0 : index
    %210 = vector.load %arg2[%c8_274, %c0_275, %c0_276] : memref<9x8x16xf32, #tpu.memory_space<vmem>>, vector<1x8x16xf32>
    %211 = vector.shape_cast %210 : vector<1x8x16xf32> to vector<8x16xf32>
    %cst_277 = arith.constant dense<0.000000e+00> : vector<20x16xf32>
    %212 = tpu.matmul %209, %211, %cst_277 {dimension_numbers = #tpu.dot_dimension_numbers<[1], [0], [0], [1], [0, 0, 1, 1], [], []>} : vector<20x8xf32>, vector<8x16xf32>, vector<20x16xf32> -> vector<20x16xf32>
    %213 = arith.addf %207, %212 : vector<20x16xf32>
    %214 = arith.maximumf %160, %213 : vector<20x16xf32>
    %c0_278 = arith.constant 0 : index
    %c0_279 = arith.constant 0 : index
    %215 = vector.load %arg3[%c0_278, %c0_279] : memref<1x16xf32, #tpu.memory_space<vmem>>, vector<1x16xf32>
    %216 = vector.broadcast %215 : vector<1x16xf32> to vector<20x16xf32>
    %217 = arith.addf %214, %216 : vector<20x16xf32>
    %cst_280 = arith.constant 0.000000e+00 : f32
    %218 = vector.broadcast %cst_280 : f32 to vector<20x16xf32>
    %219 = arith.maximumf %217, %218 : vector<20x16xf32>
    %c0_281 = arith.constant 0 : index
    %c0_282 = arith.constant 0 : index
    %c0_283 = arith.constant 0 : index
    %220 = vector.load %arg4[%c0_281, %c0_282, %c0_283] : memref<1x20x16xf32, #tpu.memory_space<vmem>>, vector<1x20x16xf32>
    %221 = vector.shape_cast %220 : vector<1x20x16xf32> to vector<20x16xf32>
    %222 = vector.shape_cast %219 : vector<20x16xf32> to vector<1x20x16xf32>
    tpu.vector_store %arg4[%c0_281, %c0_282, %c0_283], %222 {strides = array<i32>} : memref<1x20x16xf32, #tpu.memory_space<vmem>>, vector<1x20x16xf32>,
    return
  }
  func.func @transform_0(%arg0: i32) -> (i32, i32, i32, i32) {
    %c0_i32 = arith.constant 0 : i32
    %c0_i32_0 = arith.constant 0 : i32
    %c0_i32_1 = arith.constant 0 : i32
    %c0_i32_2 = arith.constant 0 : i32
    return %arg0, %c0_i32, %c0_i32_0, %c0_i32_1 : i32, i32, i32, i32
  }
  func.func @transform_1(%arg0: i32) -> (i32, i32, i32) {
    %c0_i32 = arith.constant 0 : i32
    %c0_i32_0 = arith.constant 0 : i32
    %c0_i32_1 = arith.constant 0 : i32
    %c0_i32_2 = arith.constant 0 : i32
    return %c0_i32, %c0_i32_0, %c0_i32_1 : i32, i32, i32
  }
  func.func @transform_2(%arg0: i32) -> (i32, i32) {
    %c0_i32 = arith.constant 0 : i32
    %c0_i32_0 = arith.constant 0 : i32
    %c0_i32_1 = arith.constant 0 : i32
    return %c0_i32, %c0_i32_0 : i32, i32
  }
  func.func @transform_3(%arg0: i32) -> (i32, i32, i32) {
    %c0_i32 = arith.constant 0 : i32
    %c0_i32_0 = arith.constant 0 : i32
    %c0_i32_1 = arith.constant 0 : i32
    return %arg0, %c0_i32, %c0_i32_0 : i32, i32, i32
  }
}

module attributes {stable_mosaic.version = 11 : i64} {
  func.func @_fc_tail_kernel(%arg0: i32, %arg1: memref<2x256xbf16, #tpu.memory_space<vmem>>, %arg2: memref<256x64xbf16, #tpu.memory_space<vmem>>, %arg3: memref<1x64xf32, #tpu.memory_space<vmem>>, %arg4: memref<64x64xbf16, #tpu.memory_space<vmem>>, %arg5: memref<1x64xf32, #tpu.memory_space<vmem>>, %arg6: memref<64x32xbf16, #tpu.memory_space<vmem>>, %arg7: memref<1x32xf32, #tpu.memory_space<vmem>>, %arg8: memref<2x32xf32, #tpu.memory_space<vmem>>) attributes {dimension_semantics = [#tpu.dimension_semantics<arbitrary>], iteration_bounds = array<i64: 1>, scalar_prefetch = 0 : i64, scratch_operands = 0 : i64, tpu.core_type = #tpu.core_type<tc>, window_params = [{pipeline_mode = #tpu.pipeline_mode<synchronous>, transform_indices = @transform_0, window_bounds = array<i64: 2, 256>}, {pipeline_mode = #tpu.pipeline_mode<synchronous>, transform_indices = @transform_1, window_bounds = array<i64: 256, 64>}, {pipeline_mode = #tpu.pipeline_mode<synchronous>, transform_indices = @transform_2, window_bounds = array<i64: 1, 64>}, {pipeline_mode = #tpu.pipeline_mode<synchronous>, transform_indices = @transform_3, window_bounds = array<i64: 64, 64>}, {pipeline_mode = #tpu.pipeline_mode<synchronous>, transform_indices = @transform_4, window_bounds = array<i64: 1, 64>}, {pipeline_mode = #tpu.pipeline_mode<synchronous>, transform_indices = @transform_5, window_bounds = array<i64: 64, 32>}, {pipeline_mode = #tpu.pipeline_mode<synchronous>, transform_indices = @transform_6, window_bounds = array<i64: 1, 32>}, {pipeline_mode = #tpu.pipeline_mode<synchronous>, transform_indices = @transform_7, window_bounds = array<i64: 2, 32>}]} {
    %c0 = arith.constant 0 : index
    %c0_0 = arith.constant 0 : index
    %0 = vector.load %arg1[%c0, %c0_0] : memref<2x256xbf16, #tpu.memory_space<vmem>>, vector<2x256xbf16>
    %c0_1 = arith.constant 0 : index
    %c0_2 = arith.constant 0 : index
    %1 = vector.load %arg2[%c0_1, %c0_2] : memref<256x64xbf16, #tpu.memory_space<vmem>>, vector<256x64xbf16>
    %cst = arith.constant dense<0.000000e+00> : vector<2x64xf32>
    %2 = tpu.matmul %0, %1, %cst {dimension_numbers = #tpu.dot_dimension_numbers<[1], [0], [0], [1], [0, 0, 1, 1], [], []>} : vector<2x256xbf16>, vector<256x64xbf16>, vector<2x64xf32> -> vector<2x64xf32>
    %c0_3 = arith.constant 0 : index
    %c0_4 = arith.constant 0 : index
    %3 = vector.load %arg3[%c0_3, %c0_4] : memref<1x64xf32, #tpu.memory_space<vmem>>, vector<1x64xf32>
    %4 = vector.broadcast %3 : vector<1x64xf32> to vector<2x64xf32>
    %5 = arith.addf %2, %4 : vector<2x64xf32>
    %cst_5 = arith.constant 0.000000e+00 : f32
    %6 = vector.broadcast %cst_5 : f32 to vector<2x64xf32>
    %7 = arith.maximumf %5, %6 : vector<2x64xf32>
    %8 = arith.truncf %7 : vector<2x64xf32> to vector<2x64xbf16>
    %c0_6 = arith.constant 0 : index
    %c0_7 = arith.constant 0 : index
    %9 = vector.load %arg4[%c0_6, %c0_7] : memref<64x64xbf16, #tpu.memory_space<vmem>>, vector<64x64xbf16>
    %cst_8 = arith.constant dense<0.000000e+00> : vector<2x64xf32>
    %10 = tpu.matmul %8, %9, %cst_8 {dimension_numbers = #tpu.dot_dimension_numbers<[1], [0], [0], [1], [0, 0, 1, 1], [], []>} : vector<2x64xbf16>, vector<64x64xbf16>, vector<2x64xf32> -> vector<2x64xf32>
    %c0_9 = arith.constant 0 : index
    %c0_10 = arith.constant 0 : index
    %11 = vector.load %arg5[%c0_9, %c0_10] : memref<1x64xf32, #tpu.memory_space<vmem>>, vector<1x64xf32>
    %12 = vector.broadcast %11 : vector<1x64xf32> to vector<2x64xf32>
    %13 = arith.addf %10, %12 : vector<2x64xf32>
    %cst_11 = arith.constant 0.000000e+00 : f32
    %14 = vector.broadcast %cst_11 : f32 to vector<2x64xf32>
    %15 = arith.maximumf %13, %14 : vector<2x64xf32>
    %16 = arith.truncf %15 : vector<2x64xf32> to vector<2x64xbf16>
    %c0_12 = arith.constant 0 : index
    %c0_13 = arith.constant 0 : index
    %17 = vector.load %arg6[%c0_12, %c0_13] : memref<64x32xbf16, #tpu.memory_space<vmem>>, vector<64x32xbf16>
    %cst_14 = arith.constant dense<0.000000e+00> : vector<2x32xf32>
    %18 = tpu.matmul %16, %17, %cst_14 {dimension_numbers = #tpu.dot_dimension_numbers<[1], [0], [0], [1], [0, 0, 1, 1], [], []>} : vector<2x64xbf16>, vector<64x32xbf16>, vector<2x32xf32> -> vector<2x32xf32>
    %c0_15 = arith.constant 0 : index
    %c0_16 = arith.constant 0 : index
    %19 = vector.load %arg7[%c0_15, %c0_16] : memref<1x32xf32, #tpu.memory_space<vmem>>, vector<1x32xf32>
    %20 = vector.broadcast %19 : vector<1x32xf32> to vector<2x32xf32>
    %21 = arith.addf %18, %20 : vector<2x32xf32>
    %22 = arith.mulf %21, %21 : vector<2x32xf32>
    %cst_17 = arith.constant dense<0.000000e+00> : vector<2xf32>
    %23 = vector.multi_reduction <add>, %22, %cst_17 [1] : vector<2x32xf32> to vector<2xf32>
    %24 = vector.shape_cast %23 : vector<2xf32> to vector<2x1xf32>
    %25 = math.rsqrt %24 : vector<2x1xf32>
    %26 = vector.broadcast %25 : vector<2x1xf32> to vector<2x32xf32>
    %27 = arith.mulf %21, %26 : vector<2x32xf32>
    %c0_18 = arith.constant 0 : index
    %c0_19 = arith.constant 0 : index
    %28 = vector.load %arg8[%c0_18, %c0_19] : memref<2x32xf32, #tpu.memory_space<vmem>>, vector<2x32xf32>
    tpu.vector_store %arg8[%c0_18, %c0_19], %27 {strides = array<i32>} : memref<2x32xf32, #tpu.memory_space<vmem>>, vector<2x32xf32>,
    return
  }
  func.func @transform_0(%arg0: i32) -> (i32, i32) {
    %c0_i32 = arith.constant 0 : i32
    %c0_i32_0 = arith.constant 0 : i32
    %c0_i32_1 = arith.constant 0 : i32
    return %c0_i32, %c0_i32_0 : i32, i32
  }
  func.func @transform_1(%arg0: i32) -> (i32, i32) {
    %c0_i32 = arith.constant 0 : i32
    %c0_i32_0 = arith.constant 0 : i32
    %c0_i32_1 = arith.constant 0 : i32
    return %c0_i32, %c0_i32_0 : i32, i32
  }
  func.func @transform_2(%arg0: i32) -> (i32, i32) {
    %c0_i32 = arith.constant 0 : i32
    %c0_i32_0 = arith.constant 0 : i32
    %c0_i32_1 = arith.constant 0 : i32
    return %c0_i32, %c0_i32_0 : i32, i32
  }
  func.func @transform_3(%arg0: i32) -> (i32, i32) {
    %c0_i32 = arith.constant 0 : i32
    %c0_i32_0 = arith.constant 0 : i32
    %c0_i32_1 = arith.constant 0 : i32
    return %c0_i32, %c0_i32_0 : i32, i32
  }
  func.func @transform_4(%arg0: i32) -> (i32, i32) {
    %c0_i32 = arith.constant 0 : i32
    %c0_i32_0 = arith.constant 0 : i32
    %c0_i32_1 = arith.constant 0 : i32
    return %c0_i32, %c0_i32_0 : i32, i32
  }
  func.func @transform_5(%arg0: i32) -> (i32, i32) {
    %c0_i32 = arith.constant 0 : i32
    %c0_i32_0 = arith.constant 0 : i32
    %c0_i32_1 = arith.constant 0 : i32
    return %c0_i32, %c0_i32_0 : i32, i32
  }
  func.func @transform_6(%arg0: i32) -> (i32, i32) {
    %c0_i32 = arith.constant 0 : i32
    %c0_i32_0 = arith.constant 0 : i32
    %c0_i32_1 = arith.constant 0 : i32
    return %c0_i32, %c0_i32_0 : i32, i32
  }
  func.func @transform_7(%arg0: i32) -> (i32, i32) {
    %c0_i32 = arith.constant 0 : i32
    %c0_i32_0 = arith.constant 0 : i32
    %c0_i32_1 = arith.constant 0 : i32
    return %c0_i32, %c0_i32_0 : i32, i32
  }
}

</mosaic_0001>

<llo_original>
// kernel: img_encoder_fixed.4
$region0: #{img_encoder_fixed.4}
  #allocation0 [shape = 'u32[]', space=smem, size = 0x4, offset = 0x4, fixed_abs, tag = 'smem constant byte address 0x4 - core index']
  #allocation1 [shape = 'u32[144,128]{1,0:T(1,128)}', space=vmem, size = 0x12000, scoped, tag = 'internal scratch']
  %s0 = inlined_call_operand.vmem [shape: f32[2,4,32,8], index: 0, kind: input, shape index: {}]
  %s1 = inlined_call_operand.vmem [shape: f32[9,8,16], index: 1, kind: input, shape index: {}]
  %s2 = inlined_call_operand.vmem [shape: f32[1,16], index: 2, kind: input, shape index: {}]
  %s3 = inlined_call_operand.vmem [shape: f32[2,20,16], index: 3, kind: output, shape index: {}]
  %s4 = sld [smem:[#allocation0]]
  $region45: #{img_encoder_fixed.4} parent=0
    _
  %s6 = ssub.s32 1, %s4
  %s7 = scalar_select 0, %s6, %s4
  loop: start=0, step=1, limit=4
  $region2: #{img_encoder_fixed.4} parent=0 // loop_pre_header
    _
  $region3: #{img_encoder_fixed.4} parent=0 // loop_header
    %s9 = sphi 0, %s13
    %p10 = scmp.ge.s32.totalorder %s9, 4
    %s19 = sphi 0, %s21
    %s22 = sphi 0, %s19
    %s23 = sphi 0, %s22
    %s39 = sphi 0, %s23
    %s43 = sphi 0, %s43
    %s45 = sphi 0, %s43
    %s46 = sphi 0, %s45
    %s60 = sphi 0, %s46
    %s64 = sphi 0, %s64
    %s66 = sphi 0, %s64
    %s67 = sphi 0, %s66
    %s81 = sphi 0, %s67
    %s87 = sphi 0, %s89
    %s90 = sphi 0, %s87
    %s91 = sphi 0, %s90
    %s107 = sphi 0, %s91
  $region4: #{img_encoder_fixed.4} parent=0 // loop_header_branch
    %12 = sbr.rel (%p10) target = $region8
  $region5: #{img_encoder_fixed.4} parent=0 // loop_body
    %s14 = ssub.s32 %s9, 1
    %s15 = ssub.s32 %s9, 2
    %s16 = sadd.s32 %s9, 1
    %s17 = ssub.s32 %s9, %s16
    %p18 = scmp.eq.s32.totalorder %s17, 0
    %s20 = sadd.s32 %s19, 1
    %s21 = scalar_select %p18, %s19, %s20
    %p24 = pneg %p18
    %p25 = scmp.eq.s32.totalorder %s9, 1
    %p26 = por %p24, %p25
    %p27 = scmp.ne.s32.totalorder %s19, %s22
    %p28 = scmp.eq.s32.totalorder %s9, 0
    %p29 = por %p27, %p28
    %p30 = scmp.ne.s32.totalorder %s19, %s22
    %p31 = scmp.eq.s32.totalorder %s14, 1
    %p32 = por %p30, %p31
    %p33 = scmp.ne.s32.totalorder %s22, %s23
    %p34 = scmp.eq.s32.totalorder %s14, 0
    %p35 = por %p33, %p34
    %p36 = scmp.ne.s32.totalorder %s22, %s23
    %p37 = scmp.eq.s32.totalorder %s15, 1
    %p38 = por %p36, %p37
    %p40 = scmp.ne.s32.totalorder %s23, %s39
    %p41 = scmp.eq.s32.totalorder %s15, 0
    %p42 = por %p40, %p41
    %s44 = sadd.s32 %s43, 1
    %p47 = scmp.eq.s32.totalorder %s9, 1
    %p48 = scmp.ne.s32.totalorder %s43, %s45
    %p49 = scmp.eq.s32.totalorder %s9, 0
    %p50 = por %p48, %p49
    %p51 = scmp.ne.s32.totalorder %s43, %s45
    %p52 = scmp.eq.s32.totalorder %s14, 1
    %p53 = por %p51, %p52
    %p54 = scmp.ne.s32.totalorder %s45, %s46
    %p55 = scmp.eq.s32.totalorder %s14, 0
    %p56 = por %p54, %p55
    %p57 = scmp.ne.s32.totalorder %s45, %s46
    %p58 = scmp.eq.s32.totalorder %s15, 1
    %p59 = por %p57, %p58
    %p61 = scmp.ne.s32.totalorder %s46, %s60
    %p62 = scmp.eq.s32.totalorder %s15, 0
    %p63 = por %p61, %p62
    %s65 = sadd.s32 %s64, 1
    %p68 = scmp.eq.s32.totalorder %s9, 1
    %p69 = scmp.ne.s32.totalorder %s64, %s66
    %p70 = scmp.eq.s32.totalorder %s9, 0
    %p71 = por %p69, %p70
    %p72 = scmp.ne.s32.totalorder %s64, %s66
    %p73 = scmp.eq.s32.totalorder %s14, 1
    %p74 = por %p72, %p73
    %p75 = scmp.ne.s32.totalorder %s66, %s67
    %p76 = scmp.eq.s32.totalorder %s14, 0
    %p77 = por %p75, %p76
    %p78 = scmp.ne.s32.totalorder %s66, %s67
    %p79 = scmp.eq.s32.totalorder %s15, 1
    %p80 = por %p78, %p79
    %p82 = scmp.ne.s32.totalorder %s67, %s81
    %p83 = scmp.eq.s32.totalorder %s15, 0
    %p84 = por %p82, %p83
    %s85 = ssub.s32 %s9, %s16
    %p86 = scmp.eq.s32.totalorder %s85, 0
    %s88 = sadd.s32 %s87, 1
    %s89 = scalar_select %p86, %s87, %s88
    %p92 = pneg %p86
    %p93 = scmp.eq.s32.totalorder %s9, 1
    %p94 = por %p92, %p93
    %p95 = scmp.ne.s32.totalorder %s87, %s90
    %p96 = scmp.eq.s32.totalorder %s9, 0
    %p97 = por %p95, %p96
    %p98 = scmp.ne.s32.totalorder %s87, %s90
    %p99 = scmp.eq.s32.totalorder %s14, 1
    %p100 = por %p98, %p99
    %p101 = scmp.ne.s32.totalorder %s90, %s91
    %p102 = scmp.eq.s32.totalorder %s14, 0
    %p103 = por %p101, %p102
    %p104 = scmp.ne.s32.totalorder %s90, %s91
    %p105 = scmp.eq.s32.totalorder %s15, 1
    %p106 = por %p104, %p105
    %p108 = scmp.ne.s32.totalorder %s91, %s107
    %p109 = scmp.eq.s32.totalorder %s15, 0
    %p110 = por %p108, %p109
    %p111 = scmp.le.s32.totalorder 1, %s9
    %p112 = scmp.lt.s32.totalorder %s9, 3
    %p113 = pnand %p111, %p112
    %p114 = pneg %p113
    // Predicated region
    $region9: #{img_encoder_fixed.4} parent=5 // pred_check
      _
    $region10: #{img_encoder_fixed.4} parent=5 // pred_check_branch
      %116 = sbr.rel (%p113) target = $region12
    $region11: #{img_encoder_fixed.4} parent=5 // pred_region
      %s117 = ssub.s32 %s9, 1
      // Predicated region
      $region13: #{img_encoder_fixed.4} parent=11 // pred_check
        %p118 = pneg %p56
      $region14: #{img_encoder_fixed.4} parent=11 // pred_check_branch
        %120 = sbr.rel (%p118) target = $region16
      $region15: #{img_encoder_fixed.4} parent=11 // pred_region
        _
      $region16: #{img_encoder_fixed.4} parent=11 // pred_fallthru
        _
      // Predicated region
      $region17: #{img_encoder_fixed.4} parent=11 // pred_check
        %p121 = pneg %p77
      $region18: #{img_encoder_fixed.4} parent=11 // pred_check_branch
        %123 = sbr.rel (%p121) target = $region20
      $region19: #{img_encoder_fixed.4} parent=11 // pred_region
        _
      $region20: #{img_encoder_fixed.4} parent=11 // pred_fallthru
        _
    $region12: #{img_encoder_fixed.4} parent=5 // pred_fallthru
      _
    %p124 = scmp.lt.s32.totalorder %s9, 2
    // Predicated region
    $region21: #{img_encoder_fixed.4} parent=5 // pred_check
      %p125 = pneg %p124
    $region22: #{img_encoder_fixed.4} parent=5 // pred_check_branch
      %127 = sbr.rel (%p125) target = $region24
    $region23: #{img_encoder_fixed.4} parent=5 // pred_region
      // Predicated region
      $region25: #{img_encoder_fixed.4} parent=23 // pred_check
        %p128 = pneg %p29
      $region26: #{img_encoder_fixed.4} parent=23 // pred_check_branch
        %130 = sbr.rel (%p128) target = $region28
      $region27: #{img_encoder_fixed.4} parent=23 // pred_region
        %p131 = scmp.lt.s32.totalorder %s9, 1
        %s132 = scalar_select %p131, %s9, 1
        %s133 = smul.addr %s132, 16
        %s134 = smul.addr %s133, 8
        %s135 = scalar_lea.vmem %s0, %s134
      $region28: #{img_encoder_fixed.4} parent=23 // pred_fallthru
        _
    $region24: #{img_encoder_fixed.4} parent=5 // pred_fallthru
      _
    %p136 = scmp.le.s32.totalorder 1, %s9
    %p137 = scmp.lt.s32.totalorder %s9, 3
    %p138 = pnand %p136, %p137
    %p139 = pneg %p138
    // Predicated region
    $region29: #{img_encoder_fixed.4} parent=5 // pred_check
      _
    $region30: #{img_encoder_fixed.4} parent=5 // pred_check_branch
      %141 = sbr.rel (%p138) target = $region32
    $region31: #{img_encoder_fixed.4} parent=5 // pred_region
      %s142 = ssub.s32 %s9, 1
      %p143 = scmp.lt.s32.totalorder %s14, 1
      %s144 = scalar_select %p143, %s14, 1
      %s145 = smul.addr %s144, 16
      %s146 = smul.addr %s145, 8
      %s147 = scalar_lea.vmem %s0, %s146
      %p148 = pneg %p35
      %p149 = pneg %p32
      %p150 = pneg %p56
      %p151 = pneg %p53
      %p152 = pneg %p77
      %p153 = pneg %p74
      %p154 = pneg %p103
      %p155 = pneg %p100
      %p156 = scmp.lt.s32.totalorder %s14, 1
      %s157 = scalar_select %p156, %s14, 1
      %s158 = smul.addr %s157, 3
      %s159 = smul.addr %s158, 8
      %s160 = scalar_lea.vmem %s3, %s159
      %p161 = scmp.lt.s32.totalorder %s14, 1
      %s162 = scalar_select %p161, %s14, 1
      %s163 = smul.addr %s162, 16
      %s164 = smul.addr %s163, 8
      %s165 = scalar_lea.vmem %s0, %s164
      %p166 = scmp.lt.s32.totalorder %s14, 1
      %s167 = scalar_select %p166, %s14, 1
      %s168 = smul.addr %s167, 3
      %s169 = smul.addr %s168, 8
      %s170 = scalar_lea.vmem %s3, %s169
      %v171 = vld [vmem:[%s165] sm:$0xff]
      %v172 = vld [vmem:[%s165 + $0x8] sm:$0xff]
      %v173 = vld [vmem:[%s165 + $0x10] sm:$0xf]
      %v174 = vld [vmem:[%s1] sm:$0xff]
      %s175 = scalar_lea.vmem %s165, 32
      %v176 = vld [vmem:[%s175] sm:$0xff]
      %v177 = vld [vmem:[%s175 + $0x8] sm:$0xff]
      %v178 = vld [vmem:[%s175 + $0x10] sm:$0xf]
      %s179 = scalar_lea.vmem %s1, 8
      %v180 = vld [vmem:[%s179] sm:$0xff]
      %vm181 = vcmask 64512
      %v183 = vsel %vm181, %v176, 0
      %v186 = vsel %vm181, %v177, 0
      %v189 = vsel %vm181, %v178, 0
      %191 = vmatprep.subr.mxu0 0.0
      %192 = vmatpush1.msra.mxu0 %v180
      %193 = vmatprep.subr.mxu0 0.0
      %194 = vmatpush1.msra.mxu0 0.0
      %195 = vmatprep.subr.mxu0 0.0
      %196 = vmatpush1.msra.mxu0 0.0
      %197 = vmatprep.subr.mxu0 0.0
      %198 = vmatpush1.msra.mxu0 0.0
      %199 = vmatprep.subr.mxu0 0.0
      %200 = vmatpush1.msra.mxu0 0.0
      %201 = vmatprep.subr.mxu0 0.0
      %202 = vmatpush1.msra.mxu0 0.0
      %203 = vmatprep.subr.mxu0 0.0
      %204 = vmatpush1.msra.mxu0 0.0
      %205 = vmatprep.subr.mxu0 0.0
      %206 = vmatpush1.msra.mxu0 0.0
      %207 = vmatprep.subr.mxu0 0.0
      %208 = vmatpush1.msra.mxu0 0.0
      %209 = vmatprep.subr.mxu0 0.0
      %210 = vmatpush1.msra.mxu0 0.0
      %211 = vmatprep.subr.mxu0 0.0
      %212 = vmatpush1.msra.mxu0 0.0
      %213 = vmatprep.subr.mxu0 0.0
      %214 = vmatpush1.msra.mxu0 0.0
      %215 = vmatprep.subr.mxu0 0.0
      %216 = vmatpush1.msra.mxu0 0.0
      %217 = vmatprep.subr.mxu0 0.0
      %218 = vmatpush1.msra.mxu0 0.0
      %219 = vmatprep.subr.mxu0 0.0
      %220 = vmatpush1.msra.mxu0 0.0
      %221 = vmatprep.subr.mxu0 0.0
      %222 = vmatpush1.msra.mxu0 0.0
      %223 = vmatprep.subr.mxu0 0.0
      %224 = vmatpush1.msra.mxu0 0.0
      %225 = vmatprep.subr.mxu0 0.0
      %226 = vmatpush1.msra.mxu0 0.0
      %227 = vmatprep.subr.mxu0 0.0
      %228 = vmatpush1.msra.mxu0 0.0
      %229 = vmatprep.subr.mxu0 0.0
      %230 = vmatpush1.msra.mxu0 0.0
      %231 = vmatprep.subr.mxu0 0.0
      %232 = vmatpush1.msra.mxu0 0.0
      %233 = vmatprep.subr.mxu0 0.0
      %234 = vmatpush1.msra.mxu0 0.0
      %235 = vmatprep.subr.mxu0 0.0
      %236 = vmatpush1.msra.mxu0 0.0
      %237 = vmatprep.subr.mxu0 0.0
      %238 = vmatpush1.msra.mxu0 0.0
      %239 = vmatprep.subr.mxu0 0.0
      %240 = vmatpush1.msra.mxu0 0.0
      %241 = vmatprep.subr.mxu0 0.0
      %242 = vmatpush1.msra.mxu0 0.0
      %243 = vmatprep.subr.mxu0 0.0
      %244 = vmatpush1.msra.mxu0 0.0
      %245 = vmatprep.subr.mxu0 0.0
      %246 = vmatpush1.msra.mxu0 0.0
      %247 = vmatprep.subr.mxu0 0.0
      %248 = vmatpush1.msra.mxu0 0.0
      %249 = vmatprep.subr.mxu0 0.0
      %250 = vmatpush1.msra.mxu0 0.0
      %251 = vmatprep.subr.mxu0 0.0
      %252 = vmatpush1.msra.mxu0 0.0
      %253 = vmatprep.subr.mxu0 0.0
      %254 = vmatpush1.msra.mxu0 0.0
      %255 = vmatprep.mubr.f32.mxu0 0.0
      %256 = vmatmul.mubr.f32.gmra.mrb[0].mxu0 %v183
      %v257 = vpop.f32.mrb[0].mxu0
      %v258 = vadd.f32 0.0, %v257
      %v259 = vpop.f32.mrb[0].mxu0
      %260 = vmatprep.mubr.f32.mxu0 0.0
      %261 = vmatmul.mubr.f32.gmra.mrb[0].mxu0 %v186
      %v262 = vpop.f32.mrb[0].mxu0
      %v263 = vadd.f32 0.0, %v262
      %v264 = vpop.f32.mrb[0].mxu0
      %265 = vmatprep.mubr.f32.mxu0 0.0
      %266 = vmatmul.mubr.f32.gmra.mrb[0].mxu0 %v189
      %v267 = vpop.f32.mrb[0].mxu0
      %v268 = vadd.f32 0.0, %v267
      %v269 = vpop.f32.mrb[0].mxu0
      %270 = vdwg.mxu0
      %v272 = vsel %vm181, %v171, 0
      %v275 = vsel %vm181, %v172, 0
      %v278 = vsel %vm181, %v173, 0
      %280 = vmatprep.subr.mxu0 0.0
      %281 = vmatpush1.msra.mxu0 %v174
      %282 = vmatprep.subr.mxu0 0.0
      %283 = vmatpush1.msra.mxu0 0.0
      %284 = vmatprep.subr.mxu0 0.0
      %285 = vmatpush1.msra.mxu0 0.0
      %286 = vmatprep.subr.mxu0 0.0
      %287 = vmatpush1.msra.mxu0 0.0
      %288 = vmatprep.subr.mxu0 0.0
      %289 = vmatpush1.msra.mxu0 0.0
      %290 = vmatprep.subr.mxu0 0.0
      %291 = vmatpush1.msra.mxu0 0.0
      %292 = vmatprep.subr.mxu0 0.0
      %293 = vmatpush1.msra.mxu0 0.0
      %294 = vmatprep.subr.mxu0 0.0
      %295 = vmatpush1.msra.mxu0 0.0
      %296 = vmatprep.subr.mxu0 0.0
      %297 = vmatpush1.msra.mxu0 0.0
      %298 = vmatprep.subr.mxu0 0.0
      %299 = vmatpush1.msra.mxu0 0.0
      %300 = vmatprep.subr.mxu0 0.0
      %301 = vmatpush1.msra.mxu0 0.0
      %302 = vmatprep.subr.mxu0 0.0
      %303 = vmatpush1.msra.mxu0 0.0
      %304 = vmatprep.subr.mxu0 0.0
      %305 = vmatpush1.msra.mxu0 0.0
      %306 = vmatprep.subr.mxu0 0.0
      %307 = vmatpush1.msra.mxu0 0.0
      %308 = vmatprep.subr.mxu0 0.0
      %309 = vmatpush1.msra.mxu0 0.0
      %310 = vmatprep.subr.mxu0 0.0
      %311 = vmatpush1.msra.mxu0 0.0
      %312 = vmatprep.subr.mxu0 0.0
      %313 = vmatpush1.msra.mxu0 0.0
      %314 = vmatprep.subr.mxu0 0.0
      %315 = vmatpush1.msra.mxu0 0.0
      %316 = vmatprep.subr.mxu0 0.0
      %317 = vmatpush1.msra.mxu0 0.0
      %318 = vmatprep.subr.mxu0 0.0
      %319 = vmatpush1.msra.mxu0 0.0
      %320 = vmatprep.subr.mxu0 0.0
      %321 = vmatpush1.msra.mxu0 0.0
      %322 = vmatprep.subr.mxu0 0.0
      %323 = vmatpush1.msra.mxu0 0.0
      %324 = vmatprep.subr.mxu0 0.0
      %325 = vmatpush1.msra.mxu0 0.0
      %326 = vmatprep.subr.mxu0 0.0
      %327 = vmatpush1.msra.mxu0 0.0
      %328 = vmatprep.subr.mxu0 0.0
      %329 = vmatpush1.msra.mxu0 0.0
      %330 = vmatprep.subr.mxu0 0.0
      %331 = vmatpush1.msra.mxu0 0.0
      %332 = vmatprep.subr.mxu0 0.0
      %333 = vmatpush1.msra.mxu0 0.0
      %334 = vmatprep.subr.mxu0 0.0
      %335 = vmatpush1.msra.mxu0 0.0
      %336 = vmatprep.subr.mxu0 0.0
      %337 = vmatpush1.msra.mxu0 0.0
      %338 = vmatprep.subr.mxu0 0.0
      %339 = vmatpush1.msra.mxu0 0.0
      %340 = vmatprep.subr.mxu0 0.0
      %341 = vmatpush1.msra.mxu0 0.0
      %342 = vmatprep.subr.mxu0 0.0
      %343 = vmatpush1.msra.mxu0 0.0
      %344 = vmatprep.mubr.f32.mxu0 0.0
      %345 = vmatmul.mubr.f32.gmra.mrb[0].mxu0 %v272
      %v346 = vpop.f32.mrb[0].mxu0
      %v347 = vadd.f32 %v258, %v346
      %v348 = vpop.f32.mrb[0].mxu0
      %349 = vmatprep.mubr.f32.mxu0 0.0
      %350 = vmatmul.mubr.f32.gmra.mrb[0].mxu0 %v275
      %v351 = vpop.f32.mrb[0].mxu0
      %v352 = vadd.f32 %v263, %v351
      %v353 = vpop.f32.mrb[0].mxu0
      %354 = vmatprep.mubr.f32.mxu0 0.0
      %355 = vmatmul.mubr.f32.gmra.mrb[0].mxu0 %v278
      %v356 = vpop.f32.mrb[0].mxu0
      %v357 = vadd.f32 %v268, %v356
      %v358 = vpop.f32.mrb[0].mxu0
      %359 = vdwg.mxu0
      %v360 = vld [vmem:[%s165 + $0x1] sm:$0xff]
      %v361 = vld [vmem:[%s165 + $0x9] sm:$0xff]
      %v362 = vld [vmem:[%s165 + $0x11] sm:$0xf]
      %s363 = scalar_lea.vmem %s1, 16
      %v364 = vld [vmem:[%s363] sm:$0xff]
      %v366 = vsel %vm181, %v360, 0
      %v369 = vsel %vm181, %v361, 0
      %v372 = vsel %vm181, %v362, 0
      %374 = vmatprep.subr.mxu0 0.0
      %375 = vmatpush1.msra.mxu0 %v364
      %376 = vmatprep.subr.mxu0 0.0
      %377 = vmatpush1.msra.mxu0 0.0
      %378 = vmatprep.subr.mxu0 0.0
      %379 = vmatpush1.msra.mxu0 0.0
      %380 = vmatprep.subr.mxu0 0.0
      %381 = vmatpush1.msra.mxu0 0.0
      %382 = vmatprep.subr.mxu0 0.0
      %383 = vmatpush1.msra.mxu0 0.0
      %384 = vmatprep.subr.mxu0 0.0
      %385 = vmatpush1.msra.mxu0 0.0
      %386 = vmatprep.subr.mxu0 0.0
      %387 = vmatpush1.msra.mxu0 0.0
      %388 = vmatprep.subr.mxu0 0.0
      %389 = vmatpush1.msra.mxu0 0.0
      %390 = vmatprep.subr.mxu0 0.0
      %391 = vmatpush1.msra.mxu0 0.0
      %392 = vmatprep.subr.mxu0 0.0
      %393 = vmatpush1.msra.mxu0 0.0
      %394 = vmatprep.subr.mxu0 0.0
      %395 = vmatpush1.msra.mxu0 0.0
      %396 = vmatprep.subr.mxu0 0.0
      %397 = vmatpush1.msra.mxu0 0.0
      %398 = vmatprep.subr.mxu0 0.0
      %399 = vmatpush1.msra.mxu0 0.0
      %400 = vmatprep.subr.mxu0 0.0
      %401 = vmatpush1.msra.mxu0 0.0
      %402 = vmatprep.subr.mxu0 0.0
      %403 = vmatpush1.msra.mxu0 0.0
      %404 = vmatprep.subr.mxu0 0.0
      %405 = vmatpush1.msra.mxu0 0.0
      %406 = vmatprep.subr.mxu0 0.0
      %407 = vmatpush1.msra.mxu0 0.0
      %408 = vmatprep.subr.mxu0 0.0
      %409 = vmatpush1.msra.mxu0 0.0
      %410 = vmatprep.subr.mxu0 0.0
      %411 = vmatpush1.msra.mxu0 0.0
      %412 = vmatprep.subr.mxu0 0.0
      %413 = vmatpush1.msra.mxu0 0.0
      %414 = vmatprep.subr.mxu0 0.0
      %415 = vmatpush1.msra.mxu0 0.0
      %416 = vmatprep.subr.mxu0 0.0
      %417 = vmatpush1.msra.mxu0 0.0
      %418 = vmatprep.subr.mxu0 0.0
      %419 = vmatpush1.msra.mxu0 0.0
      %420 = vmatprep.subr.mxu0 0.0
      %421 = vmatpush1.msra.mxu0 0.0
      %422 = vmatprep.subr.mxu0 0.0
      %423 = vmatpush1.msra.mxu0 0.0
      %424 = vmatprep.subr.mxu0 0.0
      %425 = vmatpush1.msra.mxu0 0.0
      %426 = vmatprep.subr.mxu0 0.0
      %427 = vmatpush1.msra.mxu0 0.0
      %428 = vmatprep.subr.mxu0 0.0
      %429 = vmatpush1.msra.mxu0 0.0
      %430 = vmatprep.subr.mxu0 0.0
      %431 = vmatpush1.msra.mxu0 0.0
      %432 = vmatprep.subr.mxu0 0.0
      %433 = vmatpush1.msra.mxu0 0.0
      %434 = vmatprep.subr.mxu0 0.0
      %435 = vmatpush1.msra.mxu0 0.0
      %436 = vmatprep.subr.mxu0 0.0
      %437 = vmatpush1.msra.mxu0 0.0
      %438 = vmatprep.mubr.f32.mxu0 0.0
      %439 = vmatmul.mubr.f32.gmra.mrb[0].mxu0 %v366
      %v440 = vpop.f32.mrb[0].mxu0
      %v441 = vadd.f32 0.0, %v440
      %v442 = vpop.f32.mrb[0].mxu0
      %443 = vmatprep.mubr.f32.mxu0 0.0
      %444 = vmatmul.mubr.f32.gmra.mrb[0].mxu0 %v369
      %v445 = vpop.f32.mrb[0].mxu0
      %v446 = vadd.f32 0.0, %v445
      %v447 = vpop.f32.mrb[0].mxu0
      %448 = vmatprep.mubr.f32.mxu0 0.0
      %449 = vmatmul.mubr.f32.gmra.mrb[0].mxu0 %v372
      %v450 = vpop.f32.mrb[0].mxu0
      %v451 = vadd.f32 0.0, %v450
      %v452 = vpop.f32.mrb[0].mxu0
      %453 = vdwg.mxu0
      %v454 = vadd.f32 %v347, %v441
      %v455 = vadd.f32 %v352, %v446
      %v456 = vadd.f32 %v357, %v451
      %s457 = scalar_lea.vmem %s165, 64
      %v458 = vld [vmem:[%s457] sm:$0xff]
      %v459 = vld [vmem:[%s457 + $0x8] sm:$0xff]
      %v460 = vld [vmem:[%s457 + $0x10] sm:$0xf]
      %s461 = scalar_lea.vmem %s1, 24
      %v462 = vld [vmem:[%s461] sm:$0xff]
      %v464 = vsel %vm181, %v458, 0
      %v467 = vsel %vm181, %v459, 0
      %v470 = vsel %vm181, %v460, 0
      %472 = vmatprep.subr.mxu0 0.0
      %473 = vmatpush1.msra.mxu0 %v462
      %474 = vmatprep.subr.mxu0 0.0
      %475 = vmatpush1.msra.mxu0 0.0
      %476 = vmatprep.subr.mxu0 0.0
      %477 = vmatpush1.msra.mxu0 0.0
      %478 = vmatprep.subr.mxu0 0.0
      %479 = vmatpush1.msra.mxu0 0.0
      %480 = vmatprep.subr.mxu0 0.0
      %481 = vmatpush1.msra.mxu0 0.0
      %482 = vmatprep.subr.mxu0 0.0
      %483 = vmatpush1.msra.mxu0 0.0
      %484 = vmatprep.subr.mxu0 0.0
      %485 = vmatpush1.msra.mxu0 0.0
      %486 = vmatprep.subr.mxu0 0.0
      %487 = vmatpush1.msra.mxu0 0.0
      %488 = vmatprep.subr.mxu0 0.0
      %489 = vmatpush1.msra.mxu0 0.0
      %490 = vmatprep.subr.mxu0 0.0
      %491 = vmatpush1.msra.mxu0 0.0
      %492 = vmatprep.subr.mxu0 0.0
      %493 = vmatpush1.msra.mxu0 0.0
      %494 = vmatprep.subr.mxu0 0.0
      %495 = vmatpush1.msra.mxu0 0.0
      %496 = vmatprep.subr.mxu0 0.0
      %497 = vmatpush1.msra.mxu0 0.0
      %498 = vmatprep.subr.mxu0 0.0
      %499 = vmatpush1.msra.mxu0 0.0
      %500 = vmatprep.subr.mxu0 0.0
      %501 = vmatpush1.msra.mxu0 0.0
      %502 = vmatprep.subr.mxu0 0.0
      %503 = vmatpush1.msra.mxu0 0.0
      %504 = vmatprep.subr.mxu0 0.0
      %505 = vmatpush1.msra.mxu0 0.0
      %506 = vmatprep.subr.mxu0 0.0
      %507 = vmatpush1.msra.mxu0 0.0
      %508 = vmatprep.subr.mxu0 0.0
      %509 = vmatpush1.msra.mxu0 0.0
      %510 = vmatprep.subr.mxu0 0.0
      %511 = vmatpush1.msra.mxu0 0.0
      %512 = vmatprep.subr.mxu0 0.0
      %513 = vmatpush1.msra.mxu0 0.0
      %514 = vmatprep.subr.mxu0 0.0
      %515 = vmatpush1.msra.mxu0 0.0
      %516 = vmatprep.subr.mxu0 0.0
      %517 = vmatpush1.msra.mxu0 0.0
      %518 = vmatprep.subr.mxu0 0.0
      %519 = vmatpush1.msra.mxu0 0.0
      %520 = vmatprep.subr.mxu0 0.0
      %521 = vmatpush1.msra.mxu0 0.0
      %522 = vmatprep.subr.mxu0 0.0
      %523 = vmatpush1.msra.mxu0 0.0
      %524 = vmatprep.subr.mxu0 0.0
      %525 = vmatpush1.msra.mxu0 0.0
      %526 = vmatprep.subr.mxu0 0.0
      %527 = vmatpush1.msra.mxu0 0.0
      %528 = vmatprep.subr.mxu0 0.0
      %529 = vmatpush1.msra.mxu0 0.0
      %530 = vmatprep.subr.mxu0 0.0
      %531 = vmatpush1.msra.mxu0 0.0
      %532 = vmatprep.subr.mxu0 0.0
      %533 = vmatpush1.msra.mxu0 0.0
      %534 = vmatprep.subr.mxu0 0.0
      %535 = vmatpush1.msra.mxu0 0.0
      %536 = vmatprep.mubr.f32.mxu0 0.0
      %537 = vmatmul.mubr.f32.gmra.mrb[0].mxu0 %v464
      %v538 = vpop.f32.mrb[0].mxu0
      %v539 = vadd.f32 0.0, %v538
      %v540 = vpop.f32.mrb[0].mxu0
      %541 = vmatprep.mubr.f32.mxu0 0.0
      %542 = vmatmul.mubr.f32.gmra.mrb[0].mxu0 %v467
      %v543 = vpop.f32.mrb[0].mxu0
      %v544 = vadd.f32 0.0, %v543
      %v545 = vpop.f32.mrb[0].mxu0
      %546 = vmatprep.mubr.f32.mxu0 0.0
      %547 = vmatmul.mubr.f32.gmra.mrb[0].mxu0 %v470
      %v548 = vpop.f32.mrb[0].mxu0
      %v549 = vadd.f32 0.0, %v548
      %v550 = vpop.f32.mrb[0].mxu0
      %551 = vdwg.mxu0
      %v552 = vadd.f32 %v454, %v539
      %v553 = vadd.f32 %v455, %v544
      %v554 = vadd.f32 %v456, %v549
      %s555 = scalar_lea.vmem %s165, 96
      %v556 = vld [vmem:[%s555] sm:$0xff]
      %v557 = vld [vmem:[%s555 + $0x8] sm:$0xff]
      %v558 = vld [vmem:[%s555 + $0x10] sm:$0xf]
      %s559 = scalar_lea.vmem %s1, 32
      %v560 = vld [vmem:[%s559] sm:$0xff]
      %v562 = vsel %vm181, %v556, 0
      %v565 = vsel %vm181, %v557, 0
      %v568 = vsel %vm181, %v558, 0
      %570 = vmatprep.subr.mxu0 0.0
      %571 = vmatpush1.msra.mxu0 %v560
      %572 = vmatprep.subr.mxu0 0.0
      %573 = vmatpush1.msra.mxu0 0.0
      %574 = vmatprep.subr.mxu0 0.0
      %575 = vmatpush1.msra.mxu0 0.0
      %576 = vmatprep.subr.mxu0 0.0
      %577 = vmatpush1.msra.mxu0 0.0
      %578 = vmatprep.subr.mxu0 0.0
      %579 = vmatpush1.msra.mxu0 0.0
      %580 = vmatprep.subr.mxu0 0.0
      %581 = vmatpush1.msra.mxu0 0.0
      %582 = vmatprep.subr.mxu0 0.0
      %583 = vmatpush1.msra.mxu0 0.0
      %584 = vmatprep.subr.mxu0 0.0
      %585 = vmatpush1.msra.mxu0 0.0
      %586 = vmatprep.subr.mxu0 0.0
      %587 = vmatpush1.msra.mxu0 0.0
      %588 = vmatprep.subr.mxu0 0.0
      %589 = vmatpush1.msra.mxu0 0.0
      %590 = vmatprep.subr.mxu0 0.0
      %591 = vmatpush1.msra.mxu0 0.0
      %592 = vmatprep.subr.mxu0 0.0
      %593 = vmatpush1.msra.mxu0 0.0
      %594 = vmatprep.subr.mxu0 0.0
      %595 = vmatpush1.msra.mxu0 0.0
      %596 = vmatprep.subr.mxu0 0.0
      %597 = vmatpush1.msra.mxu0 0.0
      %598 = vmatprep.subr.mxu0 0.0
      %599 = vmatpush1.msra.mxu0 0.0
      %600 = vmatprep.subr.mxu0 0.0
      %601 = vmatpush1.msra.mxu0 0.0
      %602 = vmatprep.subr.mxu0 0.0
      %603 = vmatpush1.msra.mxu0 0.0
      %604 = vmatprep.subr.mxu0 0.0
      %605 = vmatpush1.msra.mxu0 0.0
      %606 = vmatprep.subr.mxu0 0.0
      %607 = vmatpush1.msra.mxu0 0.0
      %608 = vmatprep.subr.mxu0 0.0
      %609 = vmatpush1.msra.mxu0 0.0
      %610 = vmatprep.subr.mxu0 0.0
      %611 = vmatpush1.msra.mxu0 0.0
      %612 = vmatprep.subr.mxu0 0.0
      %613 = vmatpush1.msra.mxu0 0.0
      %614 = vmatprep.subr.mxu0 0.0
      %615 = vmatpush1.msra.mxu0 0.0
      %616 = vmatprep.subr.mxu0 0.0
      %617 = vmatpush1.msra.mxu0 0.0
      %618 = vmatprep.subr.mxu0 0.0
      %619 = vmatpush1.msra.mxu0 0.0
      %620 = vmatprep.subr.mxu0 0.0
      %621 = vmatpush1.msra.mxu0 0.0
      %622 = vmatprep.subr.mxu0 0.0
      %623 = vmatpush1.msra.mxu0 0.0
      %624 = vmatprep.subr.mxu0 0.0
      %625 = vmatpush1.msra.mxu0 0.0
      %626 = vmatprep.subr.mxu0 0.0
      %627 = vmatpush1.msra.mxu0 0.0
      %628 = vmatprep.subr.mxu0 0.0
      %629 = vmatpush1.msra.mxu0 0.0
      %630 = vmatprep.subr.mxu0 0.0
      %631 = vmatpush1.msra.mxu0 0.0
      %632 = vmatprep.subr.mxu0 0.0
      %633 = vmatpush1.msra.mxu0 0.0
      %634 = vmatprep.mubr.f32.mxu0 0.0
      %635 = vmatmul.mubr.f32.gmra.mrb[0].mxu0 %v562
      %v636 = vpop.f32.mrb[0].mxu0
      %v637 = vadd.f32 0.0, %v636
      %v638 = vpop.f32.mrb[0].mxu0
      %639 = vmatprep.mubr.f32.mxu0 0.0
      %640 = vmatmul.mubr.f32.gmra.mrb[0].mxu0 %v565
      %v641 = vpop.f32.mrb[0].mxu0
      %v642 = vadd.f32 0.0, %v641
      %v643 = vpop.f32.mrb[0].mxu0
      %644 = vmatprep.mubr.f32.mxu0 0.0
      %645 = vmatmul.mubr.f32.gmra.mrb[0].mxu0 %v568
      %v646 = vpop.f32.mrb[0].mxu0
      %v647 = vadd.f32 0.0, %v646
      %v648 = vpop.f32.mrb[0].mxu0
      %649 = vdwg.mxu0
      %v650 = vadd.f32 %v552, %v637
      %v651 = vadd.f32 %v553, %v642
      %v652 = vadd.f32 %v554, %v647
      %v653 = vld [vmem:[%s457 + $0x1] sm:$0xff]
      %v654 = vld [vmem:[%s457 + $0x9] sm:$0xff]
      %v655 = vld [vmem:[%s457 + $0x11] sm:$0xf]
      %s656 = scalar_lea.vmem %s1, 40
      %v657 = vld [vmem:[%s656] sm:$0xff]
      %v659 = vsel %vm181, %v653, 0
      %v662 = vsel %vm181, %v654, 0
      %v665 = vsel %vm181, %v655, 0
      %667 = vmatprep.subr.mxu0 0.0
      %668 = vmatpush1.msra.mxu0 %v657
      %669 = vmatprep.subr.mxu0 0.0
      %670 = vmatpush1.msra.mxu0 0.0
      %671 = vmatprep.subr.mxu0 0.0
      %672 = vmatpush1.msra.mxu0 0.0
      %673 = vmatprep.subr.mxu0 0.0
      %674 = vmatpush1.msra.mxu0 0.0
      %675 = vmatprep.subr.mxu0 0.0
      %676 = vmatpush1.msra.mxu0 0.0
      %677 = vmatprep.subr.mxu0 0.0
      %678 = vmatpush1.msra.mxu0 0.0
      %679 = vmatprep.subr.mxu0 0.0
      %680 = vmatpush1.msra.mxu0 0.0
      %681 = vmatprep.subr.mxu0 0.0
      %682 = vmatpush1.msra.mxu0 0.0
      %683 = vmatprep.subr.mxu0 0.0
      %684 = vmatpush1.msra.mxu0 0.0
      %685 = vmatprep.subr.mxu0 0.0
      %686 = vmatpush1.msra.mxu0 0.0
      %687 = vmatprep.subr.mxu0 0.0
      %688 = vmatpush1.msra.mxu0 0.0
      %689 = vmatprep.subr.mxu0 0.0
      %690 = vmatpush1.msra.mxu0 0.0
      %691 = vmatprep.subr.mxu0 0.0
      %692 = vmatpush1.msra.mxu0 0.0
      %693 = vmatprep.subr.mxu0 0.0
      %694 = vmatpush1.msra.mxu0 0.0
      %695 = vmatprep.subr.mxu0 0.0
      %696 = vmatpush1.msra.mxu0 0.0
      %697 = vmatprep.subr.mxu0 0.0
      %698 = vmatpush1.msra.mxu0 0.0
      %699 = vmatprep.subr.mxu0 0.0
      %700 = vmatpush1.msra.mxu0 0.0
      %701 = vmatprep.subr.mxu0 0.0
      %702 = vmatpush1.msra.mxu0 0.0
      %703 = vmatprep.subr.mxu0 0.0
      %704 = vmatpush1.msra.mxu0 0.0
      %705 = vmatprep.subr.mxu0 0.0
      %706 = vmatpush1.msra.mxu0 0.0
      %707 = vmatprep.subr.mxu0 0.0
      %708 = vmatpush1.msra.mxu0 0.0
      %709 = vmatprep.subr.mxu0 0.0
      %710 = vmatpush1.msra.mxu0 0.0
      %711 = vmatprep.subr.mxu0 0.0
      %712 = vmatpush1.msra.mxu0 0.0
      %713 = vmatprep.subr.mxu0 0.0
      %714 = vmatpush1.msra.mxu0 0.0
      %715 = vmatprep.subr.mxu0 0.0
      %716 = vmatpush1.msra.mxu0 0.0
      %717 = vmatprep.subr.mxu0 0.0
      %718 = vmatpush1.msra.mxu0 0.0
      %719 = vmatprep.subr.mxu0 0.0
      %720 = vmatpush1.msra.mxu0 0.0
      %721 = vmatprep.subr.mxu0 0.0
      %722 = vmatpush1.msra.mxu0 0.0
      %723 = vmatprep.subr.mxu0 0.0
      %724 = vmatpush1.msra.mxu0 0.0
      %725 = vmatprep.subr.mxu0 0.0
      %726 = vmatpush1.msra.mxu0 0.0
      %727 = vmatprep.subr.mxu0 0.0
      %728 = vmatpush1.msra.mxu0 0.0
      %729 = vmatprep.subr.mxu0 0.0
      %730 = vmatpush1.msra.mxu0 0.0
      %731 = vmatprep.mubr.f32.mxu0 0.0
      %732 = vmatmul.mubr.f32.gmra.mrb[0].mxu0 %v659
      %v733 = vpop.f32.mrb[0].mxu0
      %v734 = vadd.f32 0.0, %v733
      %v735 = vpop.f32.mrb[0].mxu0
      %736 = vmatprep.mubr.f32.mxu0 0.0
      %737 = vmatmul.mubr.f32.gmra.mrb[0].mxu0 %v662
      %v738 = vpop.f32.mrb[0].mxu0
      %v739 = vadd.f32 0.0, %v738
      %v740 = vpop.f32.mrb[0].mxu0
      %741 = vmatprep.mubr.f32.mxu0 0.0
      %742 = vmatmul.mubr.f32.gmra.mrb[0].mxu0 %v665
      %v743 = vpop.f32.mrb[0].mxu0
      %v744 = vadd.f32 0.0, %v743
      %v745 = vpop.f32.mrb[0].mxu0
      %746 = vdwg.mxu0
      %v747 = vadd.f32 %v650, %v734
      %v748 = vadd.f32 %v651, %v739
      %v749 = vadd.f32 %v652, %v744
      %v750 = vld [vmem:[%s165 + $0x5] sm:$0xff]
      %v751 = vld [vmem:[%s165 + $0xd] sm:$0xff]
      %v752 = vld [vmem:[%s165 + $0x15] sm:$0xf]
      %s753 = scalar_lea.vmem %s1, 48
      %v754 = vld [vmem:[%s753] sm:$0xff]
      %v756 = vsel %vm181, %v750, 0
      %v759 = vsel %vm181, %v751, 0
      %v762 = vsel %vm181, %v752, 0
      %764 = vmatprep.subr.mxu0 0.0
      %765 = vmatpush1.msra.mxu0 %v754
      %766 = vmatprep.subr.mxu0 0.0
      %767 = vmatpush1.msra.mxu0 0.0
      %768 = vmatprep.subr.mxu0 0.0
      %769 = vmatpush1.msra.mxu0 0.0
      %770 = vmatprep.subr.mxu0 0.0
      %771 = vmatpush1.msra.mxu0 0.0
      %772 = vmatprep.subr.mxu0 0.0
      %773 = vmatpush1.msra.mxu0 0.0
      %774 = vmatprep.subr.mxu0 0.0
      %775 = vmatpush1.msra.mxu0 0.0
      %776 = vmatprep.subr.mxu0 0.0
      %777 = vmatpush1.msra.mxu0 0.0
      %778 = vmatprep.subr.mxu0 0.0
      %779 = vmatpush1.msra.mxu0 0.0
      %780 = vmatprep.subr.mxu0 0.0
      %781 = vmatpush1.msra.mxu0 0.0
      %782 = vmatprep.subr.mxu0 0.0
      %783 = vmatpush1.msra.mxu0 0.0
      %784 = vmatprep.subr.mxu0 0.0
      %785 = vmatpush1.msra.mxu0 0.0
      %786 = vmatprep.subr.mxu0 0.0
      %787 = vmatpush1.msra.mxu0 0.0
      %788 = vmatprep.subr.mxu0 0.0
      %789 = vmatpush1.msra.mxu0 0.0
      %790 = vmatprep.subr.mxu0 0.0
      %791 = vmatpush1.msra.mxu0 0.0
      %792 = vmatprep.subr.mxu0 0.0
      %793 = vmatpush1.msra.mxu0 0.0
      %794 = vmatprep.subr.mxu0 0.0
      %795 = vmatpush1.msra.mxu0 0.0
      %796 = vmatprep.subr.mxu0 0.0
      %797 = vmatpush1.msra.mxu0 0.0
      %798 = vmatprep.subr.mxu0 0.0
      %799 = vmatpush1.msra.mxu0 0.0
      %800 = vmatprep.subr.mxu0 0.0
      %801 = vmatpush1.msra.mxu0 0.0
      %802 = vmatprep.subr.mxu0 0.0
      %803 = vmatpush1.msra.mxu0 0.0
      %804 = vmatprep.subr.mxu0 0.0
      %805 = vmatpush1.msra.mxu0 0.0
      %806 = vmatprep.subr.mxu0 0.0
      %807 = vmatpush1.msra.mxu0 0.0
      %808 = vmatprep.subr.mxu0 0.0
      %809 = vmatpush1.msra.mxu0 0.0
      %810 = vmatprep.subr.mxu0 0.0
      %811 = vmatpush1.msra.mxu0 0.0
      %812 = vmatprep.subr.mxu0 0.0
      %813 = vmatpush1.msra.mxu0 0.0
      %814 = vmatprep.subr.mxu0 0.0
      %815 = vmatpush1.msra.mxu0 0.0
      %816 = vmatprep.subr.mxu0 0.0
      %817 = vmatpush1.msra.mxu0 0.0
      %818 = vmatprep.subr.mxu0 0.0
      %819 = vmatpush1.msra.mxu0 0.0
      %820 = vmatprep.subr.mxu0 0.0
      %821 = vmatpush1.msra.mxu0 0.0
      %822 = vmatprep.subr.mxu0 0.0
      %823 = vmatpush1.msra.mxu0 0.0
      %824 = vmatprep.subr.mxu0 0.0
      %825 = vmatpush1.msra.mxu0 0.0
      %826 = vmatprep.subr.mxu0 0.0
      %827 = vmatpush1.msra.mxu0 0.0
      %828 = vmatprep.mubr.f32.mxu0 0.0
      %829 = vmatmul.mubr.f32.gmra.mrb[0].mxu0 %v756
      %v830 = vpop.f32.mrb[0].mxu0
      %v831 = vadd.f32 0.0, %v830
      %v832 = vpop.f32.mrb[0].mxu0
      %833 = vmatprep.mubr.f32.mxu0 0.0
      %834 = vmatmul.mubr.f32.gmra.mrb[0].mxu0 %v759
      %v835 = vpop.f32.mrb[0].mxu0
      %v836 = vadd.f32 0.0, %v835
      %v837 = vpop.f32.mrb[0].mxu0
      %838 = vmatprep.mubr.f32.mxu0 0.0
      %839 = vmatmul.mubr.f32.gmra.mrb[0].mxu0 %v762
      %v840 = vpop.f32.mrb[0].mxu0
      %v841 = vadd.f32 0.0, %v840
      %v842 = vpop.f32.mrb[0].mxu0
      %843 = vdwg.mxu0
      %v844 = vadd.f32 %v747, %v831
      %v845 = vadd.f32 %v748, %v836
      %v846 = vadd.f32 %v749, %v841
      %v847 = vld [vmem:[%s175 + $0x5] sm:$0xff]
      %v848 = vld [vmem:[%s175 + $0xd] sm:$0xff]
      %v849 = vld [vmem:[%s175 + $0x15] sm:$0xf]
      %s850 = scalar_lea.vmem %s1, 56
      %v851 = vld [vmem:[%s850] sm:$0xff]
      %v853 = vsel %vm181, %v847, 0
      %v856 = vsel %vm181, %v848, 0
      %v859 = vsel %vm181, %v849, 0
      %861 = vmatprep.subr.mxu0 0.0
      %862 = vmatpush1.msra.mxu0 %v851
      %863 = vmatprep.subr.mxu0 0.0
      %864 = vmatpush1.msra.mxu0 0.0
      %865 = vmatprep.subr.mxu0 0.0
      %866 = vmatpush1.msra.mxu0 0.0
      %867 = vmatprep.subr.mxu0 0.0
      %868 = vmatpush1.msra.mxu0 0.0
      %869 = vmatprep.subr.mxu0 0.0
      %870 = vmatpush1.msra.mxu0 0.0
      %871 = vmatprep.subr.mxu0 0.0
      %872 = vmatpush1.msra.mxu0 0.0
      %873 = vmatprep.subr.mxu0 0.0
      %874 = vmatpush1.msra.mxu0 0.0
      %875 = vmatprep.subr.mxu0 0.0
      %876 = vmatpush1.msra.mxu0 0.0
      %877 = vmatprep.subr.mxu0 0.0
      %878 = vmatpush1.msra.mxu0 0.0
      %879 = vmatprep.subr.mxu0 0.0
      %880 = vmatpush1.msra.mxu0 0.0
      %881 = vmatprep.subr.mxu0 0.0
      %882 = vmatpush1.msra.mxu0 0.0
      %883 = vmatprep.subr.mxu0 0.0
      %884 = vmatpush1.msra.mxu0 0.0
      %885 = vmatprep.subr.mxu0 0.0
      %886 = vmatpush1.msra.mxu0 0.0
      %887 = vmatprep.subr.mxu0 0.0
      %888 = vmatpush1.msra.mxu0 0.0
      %889 = vmatprep.subr.mxu0 0.0
      %890 = vmatpush1.msra.mxu0 0.0
      %891 = vmatprep.subr.mxu0 0.0
      %892 = vmatpush1.msra.mxu0 0.0
      %893 = vmatprep.subr.mxu0 0.0
      %894 = vmatpush1.msra.mxu0 0.0
      %895 = vmatprep.subr.mxu0 0.0
      %896 = vmatpush1.msra.mxu0 0.0
      %897 = vmatprep.subr.mxu0 0.0
      %898 = vmatpush1.msra.mxu0 0.0
      %899 = vmatprep.subr.mxu0 0.0
      %900 = vmatpush1.msra.mxu0 0.0
      %901 = vmatprep.subr.mxu0 0.0
      %902 = vmatpush1.msra.mxu0 0.0
      %903 = vmatprep.subr.mxu0 0.0
      %904 = vmatpush1.msra.mxu0 0.0
      %905 = vmatprep.subr.mxu0 0.0
      %906 = vmatpush1.msra.mxu0 0.0
      %907 = vmatprep.subr.mxu0 0.0
      %908 = vmatpush1.msra.mxu0 0.0
      %909 = vmatprep.subr.mxu0 0.0
      %910 = vmatpush1.msra.mxu0 0.0
      %911 = vmatprep.subr.mxu0 0.0
      %912 = vmatpush1.msra.mxu0 0.0
      %913 = vmatprep.subr.mxu0 0.0
      %914 = vmatpush1.msra.mxu0 0.0
      %915 = vmatprep.subr.mxu0 0.0
      %916 = vmatpush1.msra.mxu0 0.0
      %917 = vmatprep.subr.mxu0 0.0
      %918 = vmatpush1.msra.mxu0 0.0
      %919 = vmatprep.subr.mxu0 0.0
      %920 = vmatpush1.msra.mxu0 0.0
      %921 = vmatprep.subr.mxu0 0.0
      %922 = vmatpush1.msra.mxu0 0.0
      %923 = vmatprep.subr.mxu0 0.0
      %924 = vmatpush1.msra.mxu0 0.0
      %925 = vmatprep.mubr.f32.mxu0 0.0
      %926 = vmatmul.mubr.f32.gmra.mrb[0].mxu0 %v853
      %v927 = vpop.f32.mrb[0].mxu0
      %v928 = vadd.f32 0.0, %v927
      %v929 = vpop.f32.mrb[0].mxu0
      %930 = vmatprep.mubr.f32.mxu0 0.0
      %931 = vmatmul.mubr.f32.gmra.mrb[0].mxu0 %v856
      %v932 = vpop.f32.mrb[0].mxu0
      %v933 = vadd.f32 0.0, %v932
      %v934 = vpop.f32.mrb[0].mxu0
      %935 = vmatprep.mubr.f32.mxu0 0.0
      %936 = vmatmul.mubr.f32.gmra.mrb[0].mxu0 %v859
      %v937 = vpop.f32.mrb[0].mxu0
      %v938 = vadd.f32 0.0, %v937
      %v939 = vpop.f32.mrb[0].mxu0
      %940 = vdwg.mxu0
      %v941 = vadd.f32 %v844, %v928
      %v942 = vadd.f32 %v845, %v933
      %v943 = vadd.f32 %v846, %v938
      %v944 = vld [vmem:[%s165 + $0x6] sm:$0xff]
      %v945 = vld [vmem:[%s165 + $0xe] sm:$0xff]
      %v946 = vld [vmem:[%s165 + $0x16] sm:$0xf]
      %s947 = scalar_lea.vmem %s1, 64
      %v948 = vld [vmem:[%s947] sm:$0xff]
      %v950 = vsel %vm181, %v944, 0
      %v953 = vsel %vm181, %v945, 0
      %v956 = vsel %vm181, %v946, 0
      %958 = vmatprep.subr.mxu0 0.0
      %959 = vmatpush1.msra.mxu0 %v948
      %960 = vmatprep.subr.mxu0 0.0
      %961 = vmatpush1.msra.mxu0 0.0
      %962 = vmatprep.subr.mxu0 0.0
      %963 = vmatpush1.msra.mxu0 0.0
      %964 = vmatprep.subr.mxu0 0.0
      %965 = vmatpush1.msra.mxu0 0.0
      %966 = vmatprep.subr.mxu0 0.0
      %967 = vmatpush1.msra.mxu0 0.0
      %968 = vmatprep.subr.mxu0 0.0
      %969 = vmatpush1.msra.mxu0 0.0
      %970 = vmatprep.subr.mxu0 0.0
      %971 = vmatpush1.msra.mxu0 0.0
      %972 = vmatprep.subr.mxu0 0.0
      %973 = vmatpush1.msra.mxu0 0.0
      %974 = vmatprep.subr.mxu0 0.0
      %975 = vmatpush1.msra.mxu0 0.0
      %976 = vmatprep.subr.mxu0 0.0
      %977 = vmatpush1.msra.mxu0 0.0
      %978 = vmatprep.subr.mxu0 0.0
      %979 = vmatpush1.msra.mxu0 0.0
      %980 = vmatprep.subr.mxu0 0.0
      %981 = vmatpush1.msra.mxu0 0.0
      %982 = vmatprep.subr.mxu0 0.0
      %983 = vmatpush1.msra.mxu0 0.0
      %984 = vmatprep.subr.mxu0 0.0
      %985 = vmatpush1.msra.mxu0 0.0
      %986 = vmatprep.subr.mxu0 0.0
      %987 = vmatpush1.msra.mxu0 0.0
      %988 = vmatprep.subr.mxu0 0.0
      %989 = vmatpush1.msra.mxu0 0.0
      %990 = vmatprep.subr.mxu0 0.0
      %991 = vmatpush1.msra.mxu0 0.0
      %992 = vmatprep.subr.mxu0 0.0
      %993 = vmatpush1.msra.mxu0 0.0
      %994 = vmatprep.subr.mxu0 0.0
      %995 = vmatpush1.msra.mxu0 0.0
      %996 = vmatprep.subr.mxu0 0.0
      %997 = vmatpush1.msra.mxu0 0.0
      %998 = vmatprep.subr.mxu0 0.0
      %999 = vmatpush1.msra.mxu0 0.0
      %1000 = vmatprep.subr.mxu0 0.0
      %1001 = vmatpush1.msra.mxu0 0.0
      %1002 = vmatprep.subr.mxu0 0.0
      %1003 = vmatpush1.msra.mxu0 0.0
      %1004 = vmatprep.subr.mxu0 0.0
      %1005 = vmatpush1.msra.mxu0 0.0
      %1006 = vmatprep.subr.mxu0 0.0
      %1007 = vmatpush1.msra.mxu0 0.0
      %1008 = vmatprep.subr.mxu0 0.0
      %1009 = vmatpush1.msra.mxu0 0.0
      %1010 = vmatprep.subr.mxu0 0.0
      %1011 = vmatpush1.msra.mxu0 0.0
      %1012 = vmatprep.subr.mxu0 0.0
      %1013 = vmatpush1.msra.mxu0 0.0
      %1014 = vmatprep.subr.mxu0 0.0
      %1015 = vmatpush1.msra.mxu0 0.0
      %1016 = vmatprep.subr.mxu0 0.0
      %1017 = vmatpush1.msra.mxu0 0.0
      %1018 = vmatprep.subr.mxu0 0.0
      %1019 = vmatpush1.msra.mxu0 0.0
      %1020 = vmatprep.subr.mxu0 0.0
      %1021 = vmatpush1.msra.mxu0 0.0
      %1022 = vmatprep.mubr.f32.mxu0 0.0
      %1023 = vmatmul.mubr.f32.gmra.mrb[0].mxu0 %v950
      %v1024 = vpop.f32.mrb[0].mxu0
      %v1025 = vadd.f32 0.0, %v1024
      %v1026 = vpop.f32.mrb[0].mxu0
      %1027 = vmatprep.mubr.f32.mxu0 0.0
      %1028 = vmatmul.mubr.f32.gmra.mrb[0].mxu0 %v953
      %v1029 = vpop.f32.mrb[0].mxu0
      %v1030 = vadd.f32 0.0, %v1029
      %v1031 = vpop.f32.mrb[0].mxu0
      %1032 = vmatprep.mubr.f32.mxu0 0.0
      %1033 = vmatmul.mubr.f32.gmra.mrb[0].mxu0 %v956
      %v1034 = vpop.f32.mrb[0].mxu0
      %v1035 = vadd.f32 0.0, %v1034
      %v1036 = vpop.f32.mrb[0].mxu0
      %1037 = vdwg.mxu0
      %v1038 = vadd.f32 %v941, %v1025
      %v1039 = vadd.f32 %v942, %v1030
      %v1040 = vadd.f32 %v943, %v1035
      %1041 = vmatprep.subr.mxu0 0.0
      %1042 = vmatpush1.msra.mxu0 %v180
      %1043 = vmatprep.subr.mxu0 0.0
      %1044 = vmatpush1.msra.mxu0 0.0
      %1045 = vmatprep.subr.mxu0 0.0
      %1046 = vmatpush1.msra.mxu0 0.0
      %1047 = vmatprep.subr.mxu0 0.0
      %1048 = vmatpush1.msra.mxu0 0.0
      %1049 = vmatprep.subr.mxu0 0.0
      %1050 = vmatpush1.msra.mxu0 0.0
      %1051 = vmatprep.subr.mxu0 0.0
      %1052 = vmatpush1.msra.mxu0 0.0
      %1053 = vmatprep.subr.mxu0 0.0
      %1054 = vmatpush1.msra.mxu0 0.0
      %1055 = vmatprep.subr.mxu0 0.0
      %1056 = vmatpush1.msra.mxu0 0.0
      %1057 = vmatprep.subr.mxu0 0.0
      %1058 = vmatpush1.msra.mxu0 0.0
      %1059 = vmatprep.subr.mxu0 0.0
      %1060 = vmatpush1.msra.mxu0 0.0
      %1061 = vmatprep.subr.mxu0 0.0
      %1062 = vmatpush1.msra.mxu0 0.0
      %1063 = vmatprep.subr.mxu0 0.0
      %1064 = vmatpush1.msra.mxu0 0.0
      %1065 = vmatprep.subr.mxu0 0.0
      %1066 = vmatpush1.msra.mxu0 0.0
      %1067 = vmatprep.subr.mxu0 0.0
      %1068 = vmatpush1.msra.mxu0 0.0
      %1069 = vmatprep.subr.mxu0 0.0
      %1070 = vmatpush1.msra.mxu0 0.0
      %1071 = vmatprep.subr.mxu0 0.0
      %1072 = vmatpush1.msra.mxu0 0.0
      %1073 = vmatprep.subr.mxu0 0.0
      %1074 = vmatpush1.msra.mxu0 0.0
      %1075 = vmatprep.subr.mxu0 0.0
      %1076 = vmatpush1.msra.mxu0 0.0
      %1077 = vmatprep.subr.mxu0 0.0
      %1078 = vmatpush1.msra.mxu0 0.0
      %1079 = vmatprep.subr.mxu0 0.0
      %1080 = vmatpush1.msra.mxu0 0.0
      %1081 = vmatprep.subr.mxu0 0.0
      %1082 = vmatpush1.msra.mxu0 0.0
      %1083 = vmatprep.subr.mxu0 0.0
      %1084 = vmatpush1.msra.mxu0 0.0
      %1085 = vmatprep.subr.mxu0 0.0
      %1086 = vmatpush1.msra.mxu0 0.0
      %1087 = vmatprep.subr.mxu0 0.0
      %1088 = vmatpush1.msra.mxu0 0.0
      %1089 = vmatprep.subr.mxu0 0.0
      %1090 = vmatpush1.msra.mxu0 0.0
      %1091 = vmatprep.subr.mxu0 0.0
      %1092 = vmatpush1.msra.mxu0 0.0
      %1093 = vmatprep.subr.mxu0 0.0
      %1094 = vmatpush1.msra.mxu0 0.0
      %1095 = vmatprep.subr.mxu0 0.0
      %1096 = vmatpush1.msra.mxu0 0.0
      %1097 = vmatprep.subr.mxu0 0.0
      %1098 = vmatpush1.msra.mxu0 0.0
      %1099 = vmatprep.subr.mxu0 0.0
      %1100 = vmatpush1.msra.mxu0 0.0
      %1101 = vmatprep.subr.mxu0 0.0
      %1102 = vmatpush1.msra.mxu0 0.0
      %1103 = vmatprep.subr.mxu0 0.0
      %1104 = vmatpush1.msra.mxu0 0.0
      %1105 = vmatprep.mubr.f32.mxu0 0.0
      %1106 = vmatmul.mubr.f32.gmra.mrb[0].mxu0 %v366
      %v1107 = vpop.f32.mrb[0].mxu0
      %v1108 = vadd.f32 0.0, %v1107
      %v1109 = vpop.f32.mrb[0].mxu0
      %1110 = vmatprep.mubr.f32.mxu0 0.0
      %1111 = vmatmul.mubr.f32.gmra.mrb[0].mxu0 %v369
      %v1112 = vpop.f32.mrb[0].mxu0
      %v1113 = vadd.f32 0.0, %v1112
      %v1114 = vpop.f32.mrb[0].mxu0
      %1115 = vmatprep.mubr.f32.mxu0 0.0
      %1116 = vmatmul.mubr.f32.gmra.mrb[0].mxu0 %v372
      %v1117 = vpop.f32.mrb[0].mxu0
      %v1118 = vadd.f32 0.0, %v1117
      %v1119 = vpop.f32.mrb[0].mxu0
      %1120 = vdwg.mxu0
      %1121 = vmatprep.subr.mxu0 0.0
      %1122 = vmatpush1.msra.mxu0 %v174
      %1123 = vmatprep.subr.mxu0 0.0
      %1124 = vmatpush1.msra.mxu0 0.0
      %1125 = vmatprep.subr.mxu0 0.0
      %1126 = vmatpush1.msra.mxu0 0.0
      %1127 = vmatprep.subr.mxu0 0.0
      %1128 = vmatpush1.msra.mxu0 0.0
      %1129 = vmatprep.subr.mxu0 0.0
      %1130 = vmatpush1.msra.mxu0 0.0
      %1131 = vmatprep.subr.mxu0 0.0
      %1132 = vmatpush1.msra.mxu0 0.0
      %1133 = vmatprep.subr.mxu0 0.0
      %1134 = vmatpush1.msra.mxu0 0.0
      %1135 = vmatprep.subr.mxu0 0.0
      %1136 = vmatpush1.msra.mxu0 0.0
      %1137 = vmatprep.subr.mxu0 0.0
      %1138 = vmatpush1.msra.mxu0 0.0
      %1139 = vmatprep.subr.mxu0 0.0
      %1140 = vmatpush1.msra.mxu0 0.0
      %1141 = vmatprep.subr.mxu0 0.0
      %1142 = vmatpush1.msra.mxu0 0.0
      %1143 = vmatprep.subr.mxu0 0.0
      %1144 = vmatpush1.msra.mxu0 0.0
      %1145 = vmatprep.subr.mxu0 0.0
      %1146 = vmatpush1.msra.mxu0 0.0
      %1147 = vmatprep.subr.mxu0 0.0
      %1148 = vmatpush1.msra.mxu0 0.0
      %1149 = vmatprep.subr.mxu0 0.0
      %1150 = vmatpush1.msra.mxu0 0.0
      %1151 = vmatprep.subr.mxu0 0.0
      %1152 = vmatpush1.msra.mxu0 0.0
      %1153 = vmatprep.subr.mxu0 0.0
      %1154 = vmatpush1.msra.mxu0 0.0
      %1155 = vmatprep.subr.mxu0 0.0
      %1156 = vmatpush1.msra.mxu0 0.0
      %1157 = vmatprep.subr.mxu0 0.0
      %1158 = vmatpush1.msra.mxu0 0.0
      %1159 = vmatprep.subr.mxu0 0.0
      %1160 = vmatpush1.msra.mxu0 0.0
      %1161 = vmatprep.subr.mxu0 0.0
      %1162 = vmatpush1.msra.mxu0 0.0
      %1163 = vmatprep.subr.mxu0 0.0
      %1164 = vmatpush1.msra.mxu0 0.0
      %1165 = vmatprep.subr.mxu0 0.0
      %1166 = vmatpush1.msra.mxu0 0.0
      %1167 = vmatprep.subr.mxu0 0.0
      %1168 = vmatpush1.msra.mxu0 0.0
      %1169 = vmatprep.subr.mxu0 0.0
      %1170 = vmatpush1.msra.mxu0 0.0
      %1171 = vmatprep.subr.mxu0 0.0
      %1172 = vmatpush1.msra.mxu0 0.0
      %1173 = vmatprep.subr.mxu0 0.0
      %1174 = vmatpush1.msra.mxu0 0.0
      %1175 = vmatprep.subr.mxu0 0.0
      %1176 = vmatpush1.msra.mxu0 0.0
      %1177 = vmatprep.subr.mxu0 0.0
      %1178 = vmatpush1.msra.mxu0 0.0
      %1179 = vmatprep.subr.mxu0 0.0
      %1180 = vmatpush1.msra.mxu0 0.0
      %1181 = vmatprep.subr.mxu0 0.0
      %1182 = vmatpush1.msra.mxu0 0.0
      %1183 = vmatprep.subr.mxu0 0.0
      %1184 = vmatpush1.msra.mxu0 0.0
      %1185 = vmatprep.mubr.f32.mxu0 0.0
      %1186 = vmatmul.mubr.f32.gmra.mrb[0].mxu0 %v183
      %v1187 = vpop.f32.mrb[0].mxu0
      %v1188 = vadd.f32 %v1108, %v1187
      %v1189 = vpop.f32.mrb[0].mxu0
      %1190 = vmatprep.mubr.f32.mxu0 0.0
      %1191 = vmatmul.mubr.f32.gmra.mrb[0].mxu0 %v186
      %v1192 = vpop.f32.mrb[0].mxu0
      %v1193 = vadd.f32 %v1113, %v1192
      %v1194 = vpop.f32.mrb[0].mxu0
      %1195 = vmatprep.mubr.f32.mxu0 0.0
      %1196 = vmatmul.mubr.f32.gmra.mrb[0].mxu0 %v189
      %v1197 = vpop.f32.mrb[0].mxu0
      %v1198 = vadd.f32 %v1118, %v1197
      %v1199 = vpop.f32.mrb[0].mxu0
      %1200 = vdwg.mxu0
      %v1201 = vld [vmem:[%s175 + $0x1] sm:$0xff]
      %v1202 = vld [vmem:[%s175 + $0x9] sm:$0xff]
      %v1203 = vld [vmem:[%s175 + $0x11] sm:$0xf]
      %v1205 = vsel %vm181, %v1201, 0
      %v1208 = vsel %vm181, %v1202, 0
      %v1211 = vsel %vm181, %v1203, 0
      %1213 = vmatprep.subr.mxu0 0.0
      %1214 = vmatpush1.msra.mxu0 %v364
      %1215 = vmatprep.subr.mxu0 0.0
      %1216 = vmatpush1.msra.mxu0 0.0
      %1217 = vmatprep.subr.mxu0 0.0
      %1218 = vmatpush1.msra.mxu0 0.0
      %1219 = vmatprep.subr.mxu0 0.0
      %1220 = vmatpush1.msra.mxu0 0.0
      %1221 = vmatprep.subr.mxu0 0.0
      %1222 = vmatpush1.msra.mxu0 0.0
      %1223 = vmatprep.subr.mxu0 0.0
      %1224 = vmatpush1.msra.mxu0 0.0
      %1225 = vmatprep.subr.mxu0 0.0
      %1226 = vmatpush1.msra.mxu0 0.0
      %1227 = vmatprep.subr.mxu0 0.0
      %1228 = vmatpush1.msra.mxu0 0.0
      %1229 = vmatprep.subr.mxu0 0.0
      %1230 = vmatpush1.msra.mxu0 0.0
      %1231 = vmatprep.subr.mxu0 0.0
      %1232 = vmatpush1.msra.mxu0 0.0
      %1233 = vmatprep.subr.mxu0 0.0
      %1234 = vmatpush1.msra.mxu0 0.0
      %1235 = vmatprep.subr.mxu0 0.0
      %1236 = vmatpush1.msra.mxu0 0.0
      %1237 = vmatprep.subr.mxu0 0.0
      %1238 = vmatpush1.msra.mxu0 0.0
      %1239 = vmatprep.subr.mxu0 0.0
      %1240 = vmatpush1.msra.mxu0 0.0
      %1241 = vmatprep.subr.mxu0 0.0
      %1242 = vmatpush1.msra.mxu0 0.0
      %1243 = vmatprep.subr.mxu0 0.0
      %1244 = vmatpush1.msra.mxu0 0.0
      %1245 = vmatprep.subr.mxu0 0.0
      %1246 = vmatpush1.msra.mxu0 0.0
      %1247 = vmatprep.subr.mxu0 0.0
      %1248 = vmatpush1.msra.mxu0 0.0
      %1249 = vmatprep.subr.mxu0 0.0
      %1250 = vmatpush1.msra.mxu0 0.0
      %1251 = vmatprep.subr.mxu0 0.0
      %1252 = vmatpush1.msra.mxu0 0.0
      %1253 = vmatprep.subr.mxu0 0.0
      %1254 = vmatpush1.msra.mxu0 0.0
      %1255 = vmatprep.subr.mxu0 0.0
      %1256 = vmatpush1.msra.mxu0 0.0
      %1257 = vmatprep.subr.mxu0 0.0
      %1258 = vmatpush1.msra.mxu0 0.0
      %1259 = vmatprep.subr.mxu0 0.0
      %1260 = vmatpush1.msra.mxu0 0.0
      %1261 = vmatprep.subr.mxu0 0.0
      %1262 = vmatpush1.msra.mxu0 0.0
      %1263 = vmatprep.subr.mxu0 0.0
      %1264 = vmatpush1.msra.mxu0 0.0
      %1265 = vmatprep.subr.mxu0 0.0
      %1266 = vmatpush1.msra.mxu0 0.0
      %1267 = vmatprep.subr.mxu0 0.0
      %1268 = vmatpush1.msra.mxu0 0.0
      %1269 = vmatprep.subr.mxu0 0.0
      %1270 = vmatpush1.msra.mxu0 0.0
      %1271 = vmatprep.subr.mxu0 0.0
      %1272 = vmatpush1.msra.mxu0 0.0
      %1273 = vmatprep.subr.mxu0 0.0
      %1274 = vmatpush1.msra.mxu0 0.0
      %1275 = vmatprep.subr.mxu0 0.0
      %1276 = vmatpush1.msra.mxu0 0.0
      %1277 = vmatprep.mubr.f32.mxu0 0.0
      %1278 = vmatmul.mubr.f32.gmra.mrb[0].mxu0 %v1205
      %v1279 = vpop.f32.mrb[0].mxu0
      %v1280 = vadd.f32 0.0, %v1279
      %v1281 = vpop.f32.mrb[0].mxu0
      %1282 = vmatprep.mubr.f32.mxu0 0.0
      %1283 = vmatmul.mubr.f32.gmra.mrb[0].mxu0 %v1208
      %v1284 = vpop.f32.mrb[0].mxu0
      %v1285 = vadd.f32 0.0, %v1284
      %v1286 = vpop.f32.mrb[0].mxu0
      %1287 = vmatprep.mubr.f32.mxu0 0.0
      %1288 = vmatmul.mubr.f32.gmra.mrb[0].mxu0 %v1211
      %v1289 = vpop.f32.mrb[0].mxu0
      %v1290 = vadd.f32 0.0, %v1289
      %v1291 = vpop.f32.mrb[0].mxu0
      %1292 = vdwg.mxu0
      %v1293 = vadd.f32 %v1188, %v1280
      %v1294 = vadd.f32 %v1193, %v1285
      %v1295 = vadd.f32 %v1198, %v1290
      %1296 = vmatprep.subr.mxu0 0.0
      %1297 = vmatpush1.msra.mxu0 %v462
      %1298 = vmatprep.subr.mxu0 0.0
      %1299 = vmatpush1.msra.mxu0 0.0
      %1300 = vmatprep.subr.mxu0 0.0
      %1301 = vmatpush1.msra.mxu0 0.0
      %1302 = vmatprep.subr.mxu0 0.0
      %1303 = vmatpush1.msra.mxu0 0.0
      %1304 = vmatprep.subr.mxu0 0.0
      %1305 = vmatpush1.msra.mxu0 0.0
      %1306 = vmatprep.subr.mxu0 0.0
      %1307 = vmatpush1.msra.mxu0 0.0
      %1308 = vmatprep.subr.mxu0 0.0
      %1309 = vmatpush1.msra.mxu0 0.0
      %1310 = vmatprep.subr.mxu0 0.0
      %1311 = vmatpush1.msra.mxu0 0.0
      %1312 = vmatprep.subr.mxu0 0.0
      %1313 = vmatpush1.msra.mxu0 0.0
      %1314 = vmatprep.subr.mxu0 0.0
      %1315 = vmatpush1.msra.mxu0 0.0
      %1316 = vmatprep.subr.mxu0 0.0
      %1317 = vmatpush1.msra.mxu0 0.0
      %1318 = vmatprep.subr.mxu0 0.0
      %1319 = vmatpush1.msra.mxu0 0.0
      %1320 = vmatprep.subr.mxu0 0.0
      %1321 = vmatpush1.msra.mxu0 0.0
      %1322 = vmatprep.subr.mxu0 0.0
      %1323 = vmatpush1.msra.mxu0 0.0
      %1324 = vmatprep.subr.mxu0 0.0
      %1325 = vmatpush1.msra.mxu0 0.0
      %1326 = vmatprep.subr.mxu0 0.0
      %1327 = vmatpush1.msra.mxu0 0.0
      %1328 = vmatprep.subr.mxu0 0.0
      %1329 = vmatpush1.msra.mxu0 0.0
      %1330 = vmatprep.subr.mxu0 0.0
      %1331 = vmatpush1.msra.mxu0 0.0
      %1332 = vmatprep.subr.mxu0 0.0
      %1333 = vmatpush1.msra.mxu0 0.0
      %1334 = vmatprep.subr.mxu0 0.0
      %1335 = vmatpush1.msra.mxu0 0.0
      %1336 = vmatprep.subr.mxu0 0.0
      %1337 = vmatpush1.msra.mxu0 0.0
      %1338 = vmatprep.subr.mxu0 0.0
      %1339 = vmatpush1.msra.mxu0 0.0
      %1340 = vmatprep.subr.mxu0 0.0
      %1341 = vmatpush1.msra.mxu0 0.0
      %1342 = vmatprep.subr.mxu0 0.0
      %1343 = vmatpush1.msra.mxu0 0.0
      %1344 = vmatprep.subr.mxu0 0.0
      %1345 = vmatpush1.msra.mxu0 0.0
      %1346 = vmatprep.subr.mxu0 0.0
      %1347 = vmatpush1.msra.mxu0 0.0
      %1348 = vmatprep.subr.mxu0 0.0
      %1349 = vmatpush1.msra.mxu0 0.0
      %1350 = vmatprep.subr.mxu0 0.0
      %1351 = vmatpush1.msra.mxu0 0.0
      %1352 = vmatprep.subr.mxu0 0.0
      %1353 = vmatpush1.msra.mxu0 0.0
      %1354 = vmatprep.subr.mxu0 0.0
      %1355 = vmatpush1.msra.mxu0 0.0
      %1356 = vmatprep.subr.mxu0 0.0
      %1357 = vmatpush1.msra.mxu0 0.0
      %1358 = vmatprep.subr.mxu0 0.0
      %1359 = vmatpush1.msra.mxu0 0.0
      %1360 = vmatprep.mubr.f32.mxu0 0.0
      %1361 = vmatmul.mubr.f32.gmra.mrb[0].mxu0 %v562
      %v1362 = vpop.f32.mrb[0].mxu0
      %v1363 = vadd.f32 0.0, %v1362
      %v1364 = vpop.f32.mrb[0].mxu0
      %1365 = vmatprep.mubr.f32.mxu0 0.0
      %1366 = vmatmul.mubr.f32.gmra.mrb[0].mxu0 %v565
      %v1367 = vpop.f32.mrb[0].mxu0
      %v1368 = vadd.f32 0.0, %v1367
      %v1369 = vpop.f32.mrb[0].mxu0
      %1370 = vmatprep.mubr.f32.mxu0 0.0
      %1371 = vmatmul.mubr.f32.gmra.mrb[0].mxu0 %v568
      %v1372 = vpop.f32.mrb[0].mxu0
      %v1373 = vadd.f32 0.0, %v1372
      %v1374 = vpop.f32.mrb[0].mxu0
      %1375 = vdwg.mxu0
      %v1376 = vadd.f32 %v1293, %v1363
      %v1377 = vadd.f32 %v1294, %v1368
      %v1378 = vadd.f32 %v1295, %v1373
      %1379 = vmatprep.subr.mxu0 0.0
      %1380 = vmatpush1.msra.mxu0 %v560
      %1381 = vmatprep.subr.mxu0 0.0
      %1382 = vmatpush1.msra.mxu0 0.0
      %1383 = vmatprep.subr.mxu0 0.0
      %1384 = vmatpush1.msra.mxu0 0.0
      %1385 = vmatprep.subr.mxu0 0.0
      %1386 = vmatpush1.msra.mxu0 0.0
      %1387 = vmatprep.subr.mxu0 0.0
      %1388 = vmatpush1.msra.mxu0 0.0
      %1389 = vmatprep.subr.mxu0 0.0
      %1390 = vmatpush1.msra.mxu0 0.0
      %1391 = vmatprep.subr.mxu0 0.0
      %1392 = vmatpush1.msra.mxu0 0.0
      %1393 = vmatprep.subr.mxu0 0.0
      %1394 = vmatpush1.msra.mxu0 0.0
      %1395 = vmatprep.subr.mxu0 0.0
      %1396 = vmatpush1.msra.mxu0 0.0
      %1397 = vmatprep.subr.mxu0 0.0
      %1398 = vmatpush1.msra.mxu0 0.0
      %1399 = vmatprep.subr.mxu0 0.0
      %1400 = vmatpush1.msra.mxu0 0.0
      %1401 = vmatprep.subr.mxu0 0.0
      %1402 = vmatpush1.msra.mxu0 0.0
      %1403 = vmatprep.subr.mxu0 0.0
      %1404 = vmatpush1.msra.mxu0 0.0
      %1405 = vmatprep.subr.mxu0 0.0
      %1406 = vmatpush1.msra.mxu0 0.0
      %1407 = vmatprep.subr.mxu0 0.0
      %1408 = vmatpush1.msra.mxu0 0.0
      %1409 = vmatprep.subr.mxu0 0.0
      %1410 = vmatpush1.msra.mxu0 0.0
      %1411 = vmatprep.subr.mxu0 0.0
      %1412 = vmatpush1.msra.mxu0 0.0
      %1413 = vmatprep.subr.mxu0 0.0
      %1414 = vmatpush1.msra.mxu0 0.0
      %1415 = vmatprep.subr.mxu0 0.0
      %1416 = vmatpush1.msra.mxu0 0.0
      %1417 = vmatprep.subr.mxu0 0.0
      %1418 = vmatpush1.msra.mxu0 0.0
      %1419 = vmatprep.subr.mxu0 0.0
      %1420 = vmatpush1.msra.mxu0 0.0
      %1421 = vmatprep.subr.mxu0 0.0
      %1422 = vmatpush1.msra.mxu0 0.0
      %1423 = vmatprep.subr.mxu0 0.0
      %1424 = vmatpush1.msra.mxu0 0.0
      %1425 = vmatprep.subr.mxu0 0.0
      %1426 = vmatpush1.msra.mxu0 0.0
      %1427 = vmatprep.subr.mxu0 0.0
      %1428 = vmatpush1.msra.mxu0 0.0
      %1429 = vmatprep.subr.mxu0 0.0
      %1430 = vmatpush1.msra.mxu0 0.0
      %1431 = vmatprep.subr.mxu0 0.0
      %1432 = vmatpush1.msra.mxu0 0.0
      %1433 = vmatprep.subr.mxu0 0.0
      %1434 = vmatpush1.msra.mxu0 0.0
      %1435 = vmatprep.subr.mxu0 0.0
      %1436 = vmatpush1.msra.mxu0 0.0
      %1437 = vmatprep.subr.mxu0 0.0
      %1438 = vmatpush1.msra.mxu0 0.0
      %1439 = vmatprep.subr.mxu0 0.0
      %1440 = vmatpush1.msra.mxu0 0.0
      %1441 = vmatprep.subr.mxu0 0.0
      %1442 = vmatpush1.msra.mxu0 0.0
      %1443 = vmatprep.mubr.f32.mxu0 0.0
      %1444 = vmatmul.mubr.f32.gmra.mrb[0].mxu0 %v659
      %v1445 = vpop.f32.mrb[0].mxu0
      %v1446 = vadd.f32 0.0, %v1445
      %v1447 = vpop.f32.mrb[0].mxu0
      %1448 = vmatprep.mubr.f32.mxu0 0.0
      %1449 = vmatmul.mubr.f32.gmra.mrb[0].mxu0 %v662
      %v1450 = vpop.f32.mrb[0].mxu0
      %v1451 = vadd.f32 0.0, %v1450
      %v1452 = vpop.f32.mrb[0].mxu0
      %1453 = vmatprep.mubr.f32.mxu0 0.0
      %1454 = vmatmul.mubr.f32.gmra.mrb[0].mxu0 %v665
      %v1455 = vpop.f32.mrb[0].mxu0
      %v1456 = vadd.f32 0.0, %v1455
      %v1457 = vpop.f32.mrb[0].mxu0
      %1458 = vdwg.mxu0
      %v1459 = vadd.f32 %v1376, %v1446
      %v1460 = vadd.f32 %v1377, %v1451
      %v1461 = vadd.f32 %v1378, %v1456
      %v1462 = vld [vmem:[%s555 + $0x1] sm:$0xff]
      %v1463 = vld [vmem:[%s555 + $0x9] sm:$0xff]
      %v1464 = vld [vmem:[%s555 + $0x11] sm:$0xf]
      %v1466 = vsel %vm181, %v1462, 0
      %v1469 = vsel %vm181, %v1463, 0
      %v1472 = vsel %vm181, %v1464, 0
      %1474 = vmatprep.subr.mxu0 0.0
      %1475 = vmatpush1.msra.mxu0 %v657
      %1476 = vmatprep.subr.mxu0 0.0
      %1477 = vmatpush1.msra.mxu0 0.0
      %1478 = vmatprep.subr.mxu0 0.0
      %1479 = vmatpush1.msra.mxu0 0.0
      %1480 = vmatprep.subr.mxu0 0.0
      %1481 = vmatpush1.msra.mxu0 0.0
      %1482 = vmatprep.subr.mxu0 0.0
      %1483 = vmatpush1.msra.mxu0 0.0
      %1484 = vmatprep.subr.mxu0 0.0
      %1485 = vmatpush1.msra.mxu0 0.0
      %1486 = vmatprep.subr.mxu0 0.0
      %1487 = vmatpush1.msra.mxu0 0.0
      %1488 = vmatprep.subr.mxu0 0.0
      %1489 = vmatpush1.msra.mxu0 0.0
      %1490 = vmatprep.subr.mxu0 0.0
      %1491 = vmatpush1.msra.mxu0 0.0
      %1492 = vmatprep.subr.mxu0 0.0
      %1493 = vmatpush1.msra.mxu0 0.0
      %1494 = vmatprep.subr.mxu0 0.0
      %1495 = vmatpush1.msra.mxu0 0.0
      %1496 = vmatprep.subr.mxu0 0.0
      %1497 = vmatpush1.msra.mxu0 0.0
      %1498 = vmatprep.subr.mxu0 0.0
      %1499 = vmatpush1.msra.mxu0 0.0
      %1500 = vmatprep.subr.mxu0 0.0
      %1501 = vmatpush1.msra.mxu0 0.0
      %1502 = vmatprep.subr.mxu0 0.0
      %1503 = vmatpush1.msra.mxu0 0.0
      %1504 = vmatprep.subr.mxu0 0.0
      %1505 = vmatpush1.msra.mxu0 0.0
      %1506 = vmatprep.subr.mxu0 0.0
      %1507 = vmatpush1.msra.mxu0 0.0
      %1508 = vmatprep.subr.mxu0 0.0
      %1509 = vmatpush1.msra.mxu0 0.0
      %1510 = vmatprep.subr.mxu0 0.0
      %1511 = vmatpush1.msra.mxu0 0.0
      %1512 = vmatprep.subr.mxu0 0.0
      %1513 = vmatpush1.msra.mxu0 0.0
      %1514 = vmatprep.subr.mxu0 0.0
      %1515 = vmatpush1.msra.mxu0 0.0
      %1516 = vmatprep.subr.mxu0 0.0
      %1517 = vmatpush1.msra.mxu0 0.0
      %1518 = vmatprep.subr.mxu0 0.0
      %1519 = vmatpush1.msra.mxu0 0.0
      %1520 = vmatprep.subr.mxu0 0.0
      %1521 = vmatpush1.msra.mxu0 0.0
      %1522 = vmatprep.subr.mxu0 0.0
      %1523 = vmatpush1.msra.mxu0 0.0
      %1524 = vmatprep.subr.mxu0 0.0
      %1525 = vmatpush1.msra.mxu0 0.0
      %1526 = vmatprep.subr.mxu0 0.0
      %1527 = vmatpush1.msra.mxu0 0.0
      %1528 = vmatprep.subr.mxu0 0.0
      %1529 = vmatpush1.msra.mxu0 0.0
      %1530 = vmatprep.subr.mxu0 0.0
      %1531 = vmatpush1.msra.mxu0 0.0
      %1532 = vmatprep.subr.mxu0 0.0
      %1533 = vmatpush1.msra.mxu0 0.0
      %1534 = vmatprep.subr.mxu0 0.0
      %1535 = vmatpush1.msra.mxu0 0.0
      %1536 = vmatprep.subr.mxu0 0.0
      %1537 = vmatpush1.msra.mxu0 0.0
      %1538 = vmatprep.mubr.f32.mxu0 0.0
      %1539 = vmatmul.mubr.f32.gmra.mrb[0].mxu0 %v1466
      %v1540 = vpop.f32.mrb[0].mxu0
      %v1541 = vadd.f32 0.0, %v1540
      %v1542 = vpop.f32.mrb[0].mxu0
      %1543 = vmatprep.mubr.f32.mxu0 0.0
      %1544 = vmatmul.mubr.f32.gmra.mrb[0].mxu0 %v1469
      %v1545 = vpop.f32.mrb[0].mxu0
      %v1546 = vadd.f32 0.0, %v1545
      %v1547 = vpop.f32.mrb[0].mxu0
      %1548 = vmatprep.mubr.f32.mxu0 0.0
      %1549 = vmatmul.mubr.f32.gmra.mrb[0].mxu0 %v1472
      %v1550 = vpop.f32.mrb[0].mxu0
      %v1551 = vadd.f32 0.0, %v1550
      %v1552 = vpop.f32.mrb[0].mxu0
      %1553 = vdwg.mxu0
      %v1554 = vadd.f32 %v1459, %v1541
      %v1555 = vadd.f32 %v1460, %v1546
      %v1556 = vadd.f32 %v1461, %v1551
      %1557 = vmatprep.subr.mxu0 0.0
      %1558 = vmatpush1.msra.mxu0 %v754
      %1559 = vmatprep.subr.mxu0 0.0
      %1560 = vmatpush1.msra.mxu0 0.0
      %1561 = vmatprep.subr.mxu0 0.0
      %1562 = vmatpush1.msra.mxu0 0.0
      %1563 = vmatprep.subr.mxu0 0.0
      %1564 = vmatpush1.msra.mxu0 0.0
      %1565 = vmatprep.subr.mxu0 0.0
      %1566 = vmatpush1.msra.mxu0 0.0
      %1567 = vmatprep.subr.mxu0 0.0
      %1568 = vmatpush1.msra.mxu0 0.0
      %1569 = vmatprep.subr.mxu0 0.0
      %1570 = vmatpush1.msra.mxu0 0.0
      %1571 = vmatprep.subr.mxu0 0.0
      %1572 = vmatpush1.msra.mxu0 0.0
      %1573 = vmatprep.subr.mxu0 0.0
      %1574 = vmatpush1.msra.mxu0 0.0
      %1575 = vmatprep.subr.mxu0 0.0
      %1576 = vmatpush1.msra.mxu0 0.0
      %1577 = vmatprep.subr.mxu0 0.0
      %1578 = vmatpush1.msra.mxu0 0.0
      %1579 = vmatprep.subr.mxu0 0.0
      %1580 = vmatpush1.msra.mxu0 0.0
      %1581 = vmatprep.subr.mxu0 0.0
      %1582 = vmatpush1.msra.mxu0 0.0
      %1583 = vmatprep.subr.mxu0 0.0
      %1584 = vmatpush1.msra.mxu0 0.0
      %1585 = vmatprep.subr.mxu0 0.0
      %1586 = vmatpush1.msra.mxu0 0.0
      %1587 = vmatprep.subr.mxu0 0.0
      %1588 = vmatpush1.msra.mxu0 0.0
      %1589 = vmatprep.subr.mxu0 0.0
      %1590 = vmatpush1.msra.mxu0 0.0
      %1591 = vmatprep.subr.mxu0 0.0
      %1592 = vmatpush1.msra.mxu0 0.0
      %1593 = vmatprep.subr.mxu0 0.0
      %1594 = vmatpush1.msra.mxu0 0.0
      %1595 = vmatprep.subr.mxu0 0.0
      %1596 = vmatpush1.msra.mxu0 0.0
      %1597 = vmatprep.subr.mxu0 0.0
      %1598 = vmatpush1.msra.mxu0 0.0
      %1599 = vmatprep.subr.mxu0 0.0
      %1600 = vmatpush1.msra.mxu0 0.0
      %1601 = vmatprep.subr.mxu0 0.0
      %1602 = vmatpush1.msra.mxu0 0.0
      %1603 = vmatprep.subr.mxu0 0.0
      %1604 = vmatpush1.msra.mxu0 0.0
      %1605 = vmatprep.subr.mxu0 0.0
      %1606 = vmatpush1.msra.mxu0 0.0
      %1607 = vmatprep.subr.mxu0 0.0
      %1608 = vmatpush1.msra.mxu0 0.0
      %1609 = vmatprep.subr.mxu0 0.0
      %1610 = vmatpush1.msra.mxu0 0.0
      %1611 = vmatprep.subr.mxu0 0.0
      %1612 = vmatpush1.msra.mxu0 0.0
      %1613 = vmatprep.subr.mxu0 0.0
      %1614 = vmatpush1.msra.mxu0 0.0
      %1615 = vmatprep.subr.mxu0 0.0
      %1616 = vmatpush1.msra.mxu0 0.0
      %1617 = vmatprep.subr.mxu0 0.0
      %1618 = vmatpush1.msra.mxu0 0.0
      %1619 = vmatprep.subr.mxu0 0.0
      %1620 = vmatpush1.msra.mxu0 0.0
      %1621 = vmatprep.mubr.f32.mxu0 0.0
      %1622 = vmatmul.mubr.f32.gmra.mrb[0].mxu0 %v853
      %v1623 = vpop.f32.mrb[0].mxu0
      %v1624 = vadd.f32 0.0, %v1623
      %v1625 = vpop.f32.mrb[0].mxu0
      %1626 = vmatprep.mubr.f32.mxu0 0.0
      %1627 = vmatmul.mubr.f32.gmra.mrb[0].mxu0 %v856
      %v1628 = vpop.f32.mrb[0].mxu0
      %v1629 = vadd.f32 0.0, %v1628
      %v1630 = vpop.f32.mrb[0].mxu0
      %1631 = vmatprep.mubr.f32.mxu0 0.0
      %1632 = vmatmul.mubr.f32.gmra.mrb[0].mxu0 %v859
      %v1633 = vpop.f32.mrb[0].mxu0
      %v1634 = vadd.f32 0.0, %v1633
      %v1635 = vpop.f32.mrb[0].mxu0
      %1636 = vdwg.mxu0
      %v1637 = vadd.f32 %v1554, %v1624
      %v1638 = vadd.f32 %v1555, %v1629
      %v1639 = vadd.f32 %v1556, %v1634
      %1640 = vmatprep.subr.mxu0 0.0
      %1641 = vmatpush1.msra.mxu0 %v851
      %1642 = vmatprep.subr.mxu0 0.0
      %1643 = vmatpush1.msra.mxu0 0.0
      %1644 = vmatprep.subr.mxu0 0.0
      %1645 = vmatpush1.msra.mxu0 0.0
      %1646 = vmatprep.subr.mxu0 0.0
      %1647 = vmatpush1.msra.mxu0 0.0
      %1648 = vmatprep.subr.mxu0 0.0
      %1649 = vmatpush1.msra.mxu0 0.0
      %1650 = vmatprep.subr.mxu0 0.0
      %1651 = vmatpush1.msra.mxu0 0.0
      %1652 = vmatprep.subr.mxu0 0.0
      %1653 = vmatpush1.msra.mxu0 0.0
      %1654 = vmatprep.subr.mxu0 0.0
      %1655 = vmatpush1.msra.mxu0 0.0
      %1656 = vmatprep.subr.mxu0 0.0
      %1657 = vmatpush1.msra.mxu0 0.0
      %1658 = vmatprep.subr.mxu0 0.0
      %1659 = vmatpush1.msra.mxu0 0.0
      %1660 = vmatprep.subr.mxu0 0.0
      %1661 = vmatpush1.msra.mxu0 0.0
      %1662 = vmatprep.subr.mxu0 0.0
      %1663 = vmatpush1.msra.mxu0 0.0
      %1664 = vmatprep.subr.mxu0 0.0
      %1665 = vmatpush1.msra.mxu0 0.0
      %1666 = vmatprep.subr.mxu0 0.0
      %1667 = vmatpush1.msra.mxu0 0.0
      %1668 = vmatprep.subr.mxu0 0.0
      %1669 = vmatpush1.msra.mxu0 0.0
      %1670 = vmatprep.subr.mxu0 0.0
      %1671 = vmatpush1.msra.mxu0 0.0
      %1672 = vmatprep.subr.mxu0 0.0
      %1673 = vmatpush1.msra.mxu0 0.0
      %1674 = vmatprep.subr.mxu0 0.0
      %1675 = vmatpush1.msra.mxu0 0.0
      %1676 = vmatprep.subr.mxu0 0.0
      %1677 = vmatpush1.msra.mxu0 0.0
      %1678 = vmatprep.subr.mxu0 0.0
      %1679 = vmatpush1.msra.mxu0 0.0
      %1680 = vmatprep.subr.mxu0 0.0
      %1681 = vmatpush1.msra.mxu0 0.0
      %1682 = vmatprep.subr.mxu0 0.0
      %1683 = vmatpush1.msra.mxu0 0.0
      %1684 = vmatprep.subr.mxu0 0.0
      %1685 = vmatpush1.msra.mxu0 0.0
      %1686 = vmatprep.subr.mxu0 0.0
      %1687 = vmatpush1.msra.mxu0 0.0
      %1688 = vmatprep.subr.mxu0 0.0
      %1689 = vmatpush1.msra.mxu0 0.0
      %1690 = vmatprep.subr.mxu0 0.0
      %1691 = vmatpush1.msra.mxu0 0.0
      %1692 = vmatprep.subr.mxu0 0.0
      %1693 = vmatpush1.msra.mxu0 0.0
      %1694 = vmatprep.subr.mxu0 0.0
      %1695 = vmatpush1.msra.mxu0 0.0
      %1696 = vmatprep.subr.mxu0 0.0
      %1697 = vmatpush1.msra.mxu0 0.0
      %1698 = vmatprep.subr.mxu0 0.0
      %1699 = vmatpush1.msra.mxu0 0.0
      %1700 = vmatprep.subr.mxu0 0.0
      %1701 = vmatpush1.msra.mxu0 0.0
      %1702 = vmatprep.subr.mxu0 0.0
      %1703 = vmatpush1.msra.mxu0 0.0
      %1704 = vmatprep.mubr.f32.mxu0 0.0
      %1705 = vmatmul.mubr.f32.gmra.mrb[0].mxu0 %v950
      %v1706 = vpop.f32.mrb[0].mxu0
      %v1707 = vadd.f32 0.0, %v1706
      %v1708 = vpop.f32.mrb[0].mxu0
      %1709 = vmatprep.mubr.f32.mxu0 0.0
      %1710 = vmatmul.mubr.f32.gmra.mrb[0].mxu0 %v953
      %v1711 = vpop.f32.mrb[0].mxu0
      %v1712 = vadd.f32 0.0, %v1711
      %v1713 = vpop.f32.mrb[0].mxu0
      %1714 = vmatprep.mubr.f32.mxu0 0.0
      %1715 = vmatmul.mubr.f32.gmra.mrb[0].mxu0 %v956
      %v1716 = vpop.f32.mrb[0].mxu0
      %v1717 = vadd.f32 0.0, %v1716
      %v1718 = vpop.f32.mrb[0].mxu0
      %1719 = vdwg.mxu0
      %v1720 = vadd.f32 %v1637, %v1707
      %v1721 = vadd.f32 %v1638, %v1712
      %v1722 = vadd.f32 %v1639, %v1717
      %v1723 = vld [vmem:[%s175 + $0x6] sm:$0xff]
      %v1724 = vld [vmem:[%s175 + $0xe] sm:$0xff]
      %v1725 = vld [vmem:[%s175 + $0x16] sm:$0xf]
      %v1727 = vsel %vm181, %v1723, 0
      %v1730 = vsel %vm181, %v1724, 0
      %v1733 = vsel %vm181, %v1725, 0
      %1735 = vmatprep.subr.mxu0 0.0
      %1736 = vmatpush1.msra.mxu0 %v948
      %1737 = vmatprep.subr.mxu0 0.0
      %1738 = vmatpush1.msra.mxu0 0.0
      %1739 = vmatprep.subr.mxu0 0.0
      %1740 = vmatpush1.msra.mxu0 0.0
      %1741 = vmatprep.subr.mxu0 0.0
      %1742 = vmatpush1.msra.mxu0 0.0
      %1743 = vmatprep.subr.mxu0 0.0
      %1744 = vmatpush1.msra.mxu0 0.0
      %1745 = vmatprep.subr.mxu0 0.0
      %1746 = vmatpush1.msra.mxu0 0.0
      %1747 = vmatprep.subr.mxu0 0.0
      %1748 = vmatpush1.msra.mxu0 0.0
      %1749 = vmatprep.subr.mxu0 0.0
      %1750 = vmatpush1.msra.mxu0 0.0
      %1751 = vmatprep.subr.mxu0 0.0
      %1752 = vmatpush1.msra.mxu0 0.0
      %1753 = vmatprep.subr.mxu0 0.0
      %1754 = vmatpush1.msra.mxu0 0.0
      %1755 = vmatprep.subr.mxu0 0.0
      %1756 = vmatpush1.msra.mxu0 0.0
      %1757 = vmatprep.subr.mxu0 0.0
      %1758 = vmatpush1.msra.mxu0 0.0
      %1759 = vmatprep.subr.mxu0 0.0
      %1760 = vmatpush1.msra.mxu0 0.0
      %1761 = vmatprep.subr.mxu0 0.0
      %1762 = vmatpush1.msra.mxu0 0.0
      %1763 = vmatprep.subr.mxu0 0.0
      %1764 = vmatpush1.msra.mxu0 0.0
      %1765 = vmatprep.subr.mxu0 0.0
      %1766 = vmatpush1.msra.mxu0 0.0
      %1767 = vmatprep.subr.mxu0 0.0
      %1768 = vmatpush1.msra.mxu0 0.0
      %1769 = vmatprep.subr.mxu0 0.0
      %1770 = vmatpush1.msra.mxu0 0.0
      %1771 = vmatprep.subr.mxu0 0.0
      %1772 = vmatpush1.msra.mxu0 0.0
      %1773 = vmatprep.subr.mxu0 0.0
      %1774 = vmatpush1.msra.mxu0 0.0
      %1775 = vmatprep.subr.mxu0 0.0
      %1776 = vmatpush1.msra.mxu0 0.0
      %1777 = vmatprep.subr.mxu0 0.0
      %1778 = vmatpush1.msra.mxu0 0.0
      %1779 = vmatprep.subr.mxu0 0.0
      %1780 = vmatpush1.msra.mxu0 0.0
      %1781 = vmatprep.subr.mxu0 0.0
      %1782 = vmatpush1.msra.mxu0 0.0
      %1783 = vmatprep.subr.mxu0 0.0
      %1784 = vmatpush1.msra.mxu0 0.0
      %1785 = vmatprep.subr.mxu0 0.0
      %1786 = vmatpush1.msra.mxu0 0.0
      %1787 = vmatprep.subr.mxu0 0.0
      %1788 = vmatpush1.msra.mxu0 0.0
      %1789 = vmatprep.subr.mxu0 0.0
      %1790 = vmatpush1.msra.mxu0 0.0
      %1791 = vmatprep.subr.mxu0 0.0
      %1792 = vmatpush1.msra.mxu0 0.0
      %1793 = vmatprep.subr.mxu0 0.0
      %1794 = vmatpush1.msra.mxu0 0.0
      %1795 = vmatprep.subr.mxu0 0.0
      %1796 = vmatpush1.msra.mxu0 0.0
      %1797 = vmatprep.subr.mxu0 0.0
      %1798 = vmatpush1.msra.mxu0 0.0
      %1799 = vmatprep.mubr.f32.mxu0 0.0
      %1800 = vmatmul.mubr.f32.gmra.mrb[0].mxu0 %v1727
      %v1801 = vpop.f32.mrb[0].mxu0
      %v1802 = vadd.f32 0.0, %v1801
      %v1803 = vpop.f32.mrb[0].mxu0
      %1804 = vmatprep.mubr.f32.mxu0 0.0
      %1805 = vmatmul.mubr.f32.gmra.mrb[0].mxu0 %v1730
      %v1806 = vpop.f32.mrb[0].mxu0
      %v1807 = vadd.f32 0.0, %v1806
      %v1808 = vpop.f32.mrb[0].mxu0
      %1809 = vmatprep.mubr.f32.mxu0 0.0
      %1810 = vmatmul.mubr.f32.gmra.mrb[0].mxu0 %v1733
      %v1811 = vpop.f32.mrb[0].mxu0
      %v1812 = vadd.f32 0.0, %v1811
      %v1813 = vpop.f32.mrb[0].mxu0
      %1814 = vdwg.mxu0
      %v1815 = vadd.f32 %v1720, %v1802
      %v1816 = vadd.f32 %v1721, %v1807
      %v1817 = vadd.f32 %v1722, %v1812
      %v1818 = vmax.f32 %v1038, %v1815
      %v1819 = vmax.f32 %v1039, %v1816
      %v1820 = vmax.f32 %v1040, %v1817
      %1821 = vmatprep.subr.mxu0 0.0
      %1822 = vmatpush1.msra.mxu0 %v180
      %1823 = vmatprep.subr.mxu0 0.0
      %1824 = vmatpush1.msra.mxu0 0.0
      %1825 = vmatprep.subr.mxu0 0.0
      %1826 = vmatpush1.msra.mxu0 0.0
      %1827 = vmatprep.subr.mxu0 0.0
      %1828 = vmatpush1.msra.mxu0 0.0
      %1829 = vmatprep.subr.mxu0 0.0
      %1830 = vmatpush1.msra.mxu0 0.0
      %1831 = vmatprep.subr.mxu0 0.0
      %1832 = vmatpush1.msra.mxu0 0.0
      %1833 = vmatprep.subr.mxu0 0.0
      %1834 = vmatpush1.msra.mxu0 0.0
      %1835 = vmatprep.subr.mxu0 0.0
      %1836 = vmatpush1.msra.mxu0 0.0
      %1837 = vmatprep.subr.mxu0 0.0
      %1838 = vmatpush1.msra.mxu0 0.0
      %1839 = vmatprep.subr.mxu0 0.0
      %1840 = vmatpush1.msra.mxu0 0.0
      %1841 = vmatprep.subr.mxu0 0.0
      %1842 = vmatpush1.msra.mxu0 0.0
      %1843 = vmatprep.subr.mxu0 0.0
      %1844 = vmatpush1.msra.mxu0 0.0
      %1845 = vmatprep.subr.mxu0 0.0
      %1846 = vmatpush1.msra.mxu0 0.0
      %1847 = vmatprep.subr.mxu0 0.0
      %1848 = vmatpush1.msra.mxu0 0.0
      %1849 = vmatprep.subr.mxu0 0.0
      %1850 = vmatpush1.msra.mxu0 0.0
      %1851 = vmatprep.subr.mxu0 0.0
      %1852 = vmatpush1.msra.mxu0 0.0
      %1853 = vmatprep.subr.mxu0 0.0
      %1854 = vmatpush1.msra.mxu0 0.0
      %1855 = vmatprep.subr.mxu0 0.0
      %1856 = vmatpush1.msra.mxu0 0.0
      %1857 = vmatprep.subr.mxu0 0.0
      %1858 = vmatpush1.msra.mxu0 0.0
      %1859 = vmatprep.subr.mxu0 0.0
      %1860 = vmatpush1.msra.mxu0 0.0
      %1861 = vmatprep.subr.mxu0 0.0
      %1862 = vmatpush1.msra.mxu0 0.0
      %1863 = vmatprep.subr.mxu0 0.0
      %1864 = vmatpush1.msra.mxu0 0.0
      %1865 = vmatprep.subr.mxu0 0.0
      %1866 = vmatpush1.msra.mxu0 0.0
      %1867 = vmatprep.subr.mxu0 0.0
      %1868 = vmatpush1.msra.mxu0 0.0
      %1869 = vmatprep.subr.mxu0 0.0
      %1870 = vmatpush1.msra.mxu0 0.0
      %1871 = vmatprep.subr.mxu0 0.0
      %1872 = vmatpush1.msra.mxu0 0.0
      %1873 = vmatprep.subr.mxu0 0.0
      %1874 = vmatpush1.msra.mxu0 0.0
      %1875 = vmatprep.subr.mxu0 0.0
      %1876 = vmatpush1.msra.mxu0 0.0
      %1877 = vmatprep.subr.mxu0 0.0
      %1878 = vmatpush1.msra.mxu0 0.0
      %1879 = vmatprep.subr.mxu0 0.0
      %1880 = vmatpush1.msra.mxu0 0.0
      %1881 = vmatprep.subr.mxu0 0.0
      %1882 = vmatpush1.msra.mxu0 0.0
      %1883 = vmatprep.subr.mxu0 0.0
      %1884 = vmatpush1.msra.mxu0 0.0
      %1885 = vmatprep.mubr.f32.mxu0 0.0
      %1886 = vmatmul.mubr.f32.gmra.mrb[0].mxu0 %v562
      %v1887 = vpop.f32.mrb[0].mxu0
      %v1888 = vadd.f32 0.0, %v1887
      %v1889 = vpop.f32.mrb[0].mxu0
      %1890 = vmatprep.mubr.f32.mxu0 0.0
      %1891 = vmatmul.mubr.f32.gmra.mrb[0].mxu0 %v565
      %v1892 = vpop.f32.mrb[0].mxu0
      %v1893 = vadd.f32 0.0, %v1892
      %v1894 = vpop.f32.mrb[0].mxu0
      %1895 = vmatprep.mubr.f32.mxu0 0.0
      %1896 = vmatmul.mubr.f32.gmra.mrb[0].mxu0 %v568
      %v1897 = vpop.f32.mrb[0].mxu0
      %v1898 = vadd.f32 0.0, %v1897
      %v1899 = vpop.f32.mrb[0].mxu0
      %1900 = vdwg.mxu0
      %1901 = vmatprep.subr.mxu0 0.0
      %1902 = vmatpush1.msra.mxu0 %v174
      %1903 = vmatprep.subr.mxu0 0.0
      %1904 = vmatpush1.msra.mxu0 0.0
      %1905 = vmatprep.subr.mxu0 0.0
      %1906 = vmatpush1.msra.mxu0 0.0
      %1907 = vmatprep.subr.mxu0 0.0
      %1908 = vmatpush1.msra.mxu0 0.0
      %1909 = vmatprep.subr.mxu0 0.0
      %1910 = vmatpush1.msra.mxu0 0.0
      %1911 = vmatprep.subr.mxu0 0.0
      %1912 = vmatpush1.msra.mxu0 0.0
      %1913 = vmatprep.subr.mxu0 0.0
      %1914 = vmatpush1.msra.mxu0 0.0
      %1915 = vmatprep.subr.mxu0 0.0
      %1916 = vmatpush1.msra.mxu0 0.0
      %1917 = vmatprep.subr.mxu0 0.0
      %1918 = vmatpush1.msra.mxu0 0.0
      %1919 = vmatprep.subr.mxu0 0.0
      %1920 = vmatpush1.msra.mxu0 0.0
      %1921 = vmatprep.subr.mxu0 0.0
      %1922 = vmatpush1.msra.mxu0 0.0
      %1923 = vmatprep.subr.mxu0 0.0
      %1924 = vmatpush1.msra.mxu0 0.0
      %1925 = vmatprep.subr.mxu0 0.0
      %1926 = vmatpush1.msra.mxu0 0.0
      %1927 = vmatprep.subr.mxu0 0.0
      %1928 = vmatpush1.msra.mxu0 0.0
      %1929 = vmatprep.subr.mxu0 0.0
      %1930 = vmatpush1.msra.mxu0 0.0
      %1931 = vmatprep.subr.mxu0 0.0
      %1932 = vmatpush1.msra.mxu0 0.0
      %1933 = vmatprep.subr.mxu0 0.0
      %1934 = vmatpush1.msra.mxu0 0.0
      %1935 = vmatprep.subr.mxu0 0.0
      %1936 = vmatpush1.msra.mxu0 0.0
      %1937 = vmatprep.subr.mxu0 0.0
      %1938 = vmatpush1.msra.mxu0 0.0
      %1939 = vmatprep.subr.mxu0 0.0
      %1940 = vmatpush1.msra.mxu0 0.0
      %1941 = vmatprep.subr.mxu0 0.0
      %1942 = vmatpush1.msra.mxu0 0.0
      %1943 = vmatprep.subr.mxu0 0.0
      %1944 = vmatpush1.msra.mxu0 0.0
      %1945 = vmatprep.subr.mxu0 0.0
      %1946 = vmatpush1.msra.mxu0 0.0
      %1947 = vmatprep.subr.mxu0 0.0
      %1948 = vmatpush1.msra.mxu0 0.0
      %1949 = vmatprep.subr.mxu0 0.0
      %1950 = vmatpush1.msra.mxu0 0.0
      %1951 = vmatprep.subr.mxu0 0.0
      %1952 = vmatpush1.msra.mxu0 0.0
      %1953 = vmatprep.subr.mxu0 0.0
      %1954 = vmatpush1.msra.mxu0 0.0
      %1955 = vmatprep.subr.mxu0 0.0
      %1956 = vmatpush1.msra.mxu0 0.0
      %1957 = vmatprep.subr.mxu0 0.0
      %1958 = vmatpush1.msra.mxu0 0.0
      %1959 = vmatprep.subr.mxu0 0.0
      %1960 = vmatpush1.msra.mxu0 0.0
      %1961 = vmatprep.subr.mxu0 0.0
      %1962 = vmatpush1.msra.mxu0 0.0
      %1963 = vmatprep.subr.mxu0 0.0
      %1964 = vmatpush1.msra.mxu0 0.0
      %1965 = vmatprep.mubr.f32.mxu0 0.0
      %1966 = vmatmul.mubr.f32.gmra.mrb[0].mxu0 %v464
      %v1967 = vpop.f32.mrb[0].mxu0
      %v1968 = vadd.f32 %v1888, %v1967
      %v1969 = vpop.f32.mrb[0].mxu0
      %1970 = vmatprep.mubr.f32.mxu0 0.0
      %1971 = vmatmul.mubr.f32.gmra.mrb[0].mxu0 %v467
      %v1972 = vpop.f32.mrb[0].mxu0
      %v1973 = vadd.f32 %v1893, %v1972
      %v1974 = vpop.f32.mrb[0].mxu0
      %1975 = vmatprep.mubr.f32.mxu0 0.0
      %1976 = vmatmul.mubr.f32.gmra.mrb[0].mxu0 %v470
      %v1977 = vpop.f32.mrb[0].mxu0
      %v1978 = vadd.f32 %v1898, %v1977
      %v1979 = vpop.f32.mrb[0].mxu0
      %1980 = vdwg.mxu0
      %1981 = vmatprep.subr.mxu0 0.0
      %1982 = vmatpush1.msra.mxu0 %v364
      %1983 = vmatprep.subr.mxu0 0.0
      %1984 = vmatpush1.msra.mxu0 0.0
      %1985 = vmatprep.subr.mxu0 0.0
      %1986 = vmatpush1.msra.mxu0 0.0
      %1987 = vmatprep.subr.mxu0 0.0
      %1988 = vmatpush1.msra.mxu0 0.0
      %1989 = vmatprep.subr.mxu0 0.0
      %1990 = vmatpush1.msra.mxu0 0.0
      %1991 = vmatprep.subr.mxu0 0.0
      %1992 = vmatpush1.msra.mxu0 0.0
      %1993 = vmatprep.subr.mxu0 0.0
      %1994 = vmatpush1.msra.mxu0 0.0
      %1995 = vmatprep.subr.mxu0 0.0
      %1996 = vmatpush1.msra.mxu0 0.0
      %1997 = vmatprep.subr.mxu0 0.0
      %1998 = vmatpush1.msra.mxu0 0.0
      %1999 = vmatprep.subr.mxu0 0.0
      %2000 = vmatpush1.msra.mxu0 0.0
      %2001 = vmatprep.subr.mxu0 0.0
      %2002 = vmatpush1.msra.mxu0 0.0
      %2003 = vmatprep.subr.mxu0 0.0
      %2004 = vmatpush1.msra.mxu0 0.0
      %2005 = vmatprep.subr.mxu0 0.0
      %2006 = vmatpush1.msra.mxu0 0.0
      %2007 = vmatprep.subr.mxu0 0.0
      %2008 = vmatpush1.msra.mxu0 0.0
      %2009 = vmatprep.subr.mxu0 0.0
      %2010 = vmatpush1.msra.mxu0 0.0
      %2011 = vmatprep.subr.mxu0 0.0
      %2012 = vmatpush1.msra.mxu0 0.0
      %2013 = vmatprep.subr.mxu0 0.0
      %2014 = vmatpush1.msra.mxu0 0.0
      %2015 = vmatprep.subr.mxu0 0.0
      %2016 = vmatpush1.msra.mxu0 0.0
      %2017 = vmatprep.subr.mxu0 0.0
      %2018 = vmatpush1.msra.mxu0 0.0
      %2019 = vmatprep.subr.mxu0 0.0
      %2020 = vmatpush1.msra.mxu0 0.0
      %2021 = vmatprep.subr.mxu0 0.0
      %2022 = vmatpush1.msra.mxu0 0.0
      %2023 = vmatprep.subr.mxu0 0.0
      %2024 = vmatpush1.msra.mxu0 0.0
      %2025 = vmatprep.subr.mxu0 0.0
      %2026 = vmatpush1.msra.mxu0 0.0
      %2027 = vmatprep.subr.mxu0 0.0
      %2028 = vmatpush1.msra.mxu0 0.0
      %2029 = vmatprep.subr.mxu0 0.0
      %2030 = vmatpush1.msra.mxu0 0.0
      %2031 = vmatprep.subr.mxu0 0.0
      %2032 = vmatpush1.msra.mxu0 0.0
      %2033 = vmatprep.subr.mxu0 0.0
      %2034 = vmatpush1.msra.mxu0 0.0
      %2035 = vmatprep.subr.mxu0 0.0
      %2036 = vmatpush1.msra.mxu0 0.0
      %2037 = vmatprep.subr.mxu0 0.0
      %2038 = vmatpush1.msra.mxu0 0.0
      %2039 = vmatprep.subr.mxu0 0.0
      %2040 = vmatpush1.msra.mxu0 0.0
      %2041 = vmatprep.subr.mxu0 0.0
      %2042 = vmatpush1.msra.mxu0 0.0
      %2043 = vmatprep.subr.mxu0 0.0
      %2044 = vmatpush1.msra.mxu0 0.0
      %2045 = vmatprep.mubr.f32.mxu0 0.0
      %2046 = vmatmul.mubr.f32.gmra.mrb[0].mxu0 %v659
      %v2047 = vpop.f32.mrb[0].mxu0
      %v2048 = vadd.f32 0.0, %v2047
      %v2049 = vpop.f32.mrb[0].mxu0
      %2050 = vmatprep.mubr.f32.mxu0 0.0
      %2051 = vmatmul.mubr.f32.gmra.mrb[0].mxu0 %v662
      %v2052 = vpop.f32.mrb[0].mxu0
      %v2053 = vadd.f32 0.0, %v2052
      %v2054 = vpop.f32.mrb[0].mxu0
      %2055 = vmatprep.mubr.f32.mxu0 0.0
      %2056 = vmatmul.mubr.f32.gmra.mrb[0].mxu0 %v665
      %v2057 = vpop.f32.mrb[0].mxu0
      %v2058 = vadd.f32 0.0, %v2057
      %v2059 = vpop.f32.mrb[0].mxu0
      %2060 = vdwg.mxu0
      %v2061 = vadd.f32 %v1968, %v2048
      %v2062 = vadd.f32 %v1973, %v2053
      %v2063 = vadd.f32 %v1978, %v2058
      %2064 = vmatprep.subr.mxu0 0.0
      %2065 = vmatpush1.msra.mxu0 %v462
      %2066 = vmatprep.subr.mxu0 0.0
      %2067 = vmatpush1.msra.mxu0 0.0
      %2068 = vmatprep.subr.mxu0 0.0
      %2069 = vmatpush1.msra.mxu0 0.0
      %2070 = vmatprep.subr.mxu0 0.0
      %2071 = vmatpush1.msra.mxu0 0.0
      %2072 = vmatprep.subr.mxu0 0.0
      %2073 = vmatpush1.msra.mxu0 0.0
      %2074 = vmatprep.subr.mxu0 0.0
      %2075 = vmatpush1.msra.mxu0 0.0
      %2076 = vmatprep.subr.mxu0 0.0
      %2077 = vmatpush1.msra.mxu0 0.0
      %2078 = vmatprep.subr.mxu0 0.0
      %2079 = vmatpush1.msra.mxu0 0.0
      %2080 = vmatprep.subr.mxu0 0.0
      %2081 = vmatpush1.msra.mxu0 0.0
      %2082 = vmatprep.subr.mxu0 0.0
      %2083 = vmatpush1.msra.mxu0 0.0
      %2084 = vmatprep.subr.mxu0 0.0
      %2085 = vmatpush1.msra.mxu0 0.0
      %2086 = vmatprep.subr.mxu0 0.0
      %2087 = vmatpush1.msra.mxu0 0.0
      %2088 = vmatprep.subr.mxu0 0.0
      %2089 = vmatpush1.msra.mxu0 0.0
      %2090 = vmatprep.subr.mxu0 0.0
      %2091 = vmatpush1.msra.mxu0 0.0
      %2092 = vmatprep.subr.mxu0 0.0
      %2093 = vmatpush1.msra.mxu0 0.0
      %2094 = vmatprep.subr.mxu0 0.0
      %2095 = vmatpush1.msra.mxu0 0.0
      %2096 = vmatprep.subr.mxu0 0.0
      %2097 = vmatpush1.msra.mxu0 0.0
      %2098 = vmatprep.subr.mxu0 0.0
      %2099 = vmatpush1.msra.mxu0 0.0
      %2100 = vmatprep.subr.mxu0 0.0
      %2101 = vmatpush1.msra.mxu0 0.0
      %2102 = vmatprep.subr.mxu0 0.0
      %2103 = vmatpush1.msra.mxu0 0.0
      %2104 = vmatprep.subr.mxu0 0.0
      %2105 = vmatpush1.msra.mxu0 0.0
      %2106 = vmatprep.subr.mxu0 0.0
      %2107 = vmatpush1.msra.mxu0 0.0
      %2108 = vmatprep.subr.mxu0 0.0
      %2109 = vmatpush1.msra.mxu0 0.0
      %2110 = vmatprep.subr.mxu0 0.0
      %2111 = vmatpush1.msra.mxu0 0.0
      %2112 = vmatprep.subr.mxu0 0.0
      %2113 = vmatpush1.msra.mxu0 0.0
      %2114 = vmatprep.subr.mxu0 0.0
      %2115 = vmatpush1.msra.mxu0 0.0
      %2116 = vmatprep.subr.mxu0 0.0
      %2117 = vmatpush1.msra.mxu0 0.0
      %2118 = vmatprep.subr.mxu0 0.0
      %2119 = vmatpush1.msra.mxu0 0.0
      %2120 = vmatprep.subr.mxu0 0.0
      %2121 = vmatpush1.msra.mxu0 0.0
      %2122 = vmatprep.subr.mxu0 0.0
      %2123 = vmatpush1.msra.mxu0 0.0
      %2124 = vmatprep.subr.mxu0 0.0
      %2125 = vmatpush1.msra.mxu0 0.0
      %2126 = vmatprep.subr.mxu0 0.0
      %2127 = vmatpush1.msra.mxu0 0.0
      %2128 = vmatprep.mubr.f32.mxu0 0.0
      %2129 = vmatmul.mubr.f32.gmra.mrb[0].mxu0 %v756
      %v2130 = vpop.f32.mrb[0].mxu0
      %v2131 = vadd.f32 0.0, %v2130
      %v2132 = vpop.f32.mrb[0].mxu0
      %2133 = vmatprep.mubr.f32.mxu0 0.0
      %2134 = vmatmul.mubr.f32.gmra.mrb[0].mxu0 %v759
      %v2135 = vpop.f32.mrb[0].mxu0
      %v2136 = vadd.f32 0.0, %v2135
      %v2137 = vpop.f32.mrb[0].mxu0
      %2138 = vmatprep.mubr.f32.mxu0 0.0
      %2139 = vmatmul.mubr.f32.gmra.mrb[0].mxu0 %v762
      %v2140 = vpop.f32.mrb[0].mxu0
      %v2141 = vadd.f32 0.0, %v2140
      %v2142 = vpop.f32.mrb[0].mxu0
      %2143 = vdwg.mxu0
      %v2144 = vadd.f32 %v2061, %v2131
      %v2145 = vadd.f32 %v2062, %v2136
      %v2146 = vadd.f32 %v2063, %v2141
      %2147 = vmatprep.subr.mxu0 0.0
      %2148 = vmatpush1.msra.mxu0 %v560
      %2149 = vmatprep.subr.mxu0 0.0
      %2150 = vmatpush1.msra.mxu0 0.0
      %2151 = vmatprep.subr.mxu0 0.0
      %2152 = vmatpush1.msra.mxu0 0.0
      %2153 = vmatprep.subr.mxu0 0.0
      %2154 = vmatpush1.msra.mxu0 0.0
      %2155 = vmatprep.subr.mxu0 0.0
      %2156 = vmatpush1.msra.mxu0 0.0
      %2157 = vmatprep.subr.mxu0 0.0
      %2158 = vmatpush1.msra.mxu0 0.0
      %2159 = vmatprep.subr.mxu0 0.0
      %2160 = vmatpush1.msra.mxu0 0.0
      %2161 = vmatprep.subr.mxu0 0.0
      %2162 = vmatpush1.msra.mxu0 0.0
      %2163 = vmatprep.subr.mxu0 0.0
      %2164 = vmatpush1.msra.mxu0 0.0
      %2165 = vmatprep.subr.mxu0 0.0
      %2166 = vmatpush1.msra.mxu0 0.0
      %2167 = vmatprep.subr.mxu0 0.0
      %2168 = vmatpush1.msra.mxu0 0.0
      %2169 = vmatprep.subr.mxu0 0.0
      %2170 = vmatpush1.msra.mxu0 0.0
      %2171 = vmatprep.subr.mxu0 0.0
      %2172 = vmatpush1.msra.mxu0 0.0
      %2173 = vmatprep.subr.mxu0 0.0
      %2174 = vmatpush1.msra.mxu0 0.0
      %2175 = vmatprep.subr.mxu0 0.0
      %2176 = vmatpush1.msra.mxu0 0.0
      %2177 = vmatprep.subr.mxu0 0.0
      %2178 = vmatpush1.msra.mxu0 0.0
      %2179 = vmatprep.subr.mxu0 0.0
      %2180 = vmatpush1.msra.mxu0 0.0
      %2181 = vmatprep.subr.mxu0 0.0
      %2182 = vmatpush1.msra.mxu0 0.0
      %2183 = vmatprep.subr.mxu0 0.0
      %2184 = vmatpush1.msra.mxu0 0.0
      %2185 = vmatprep.subr.mxu0 0.0
      %2186 = vmatpush1.msra.mxu0 0.0
      %2187 = vmatprep.subr.mxu0 0.0
      %2188 = vmatpush1.msra.mxu0 0.0
      %2189 = vmatprep.subr.mxu0 0.0
      %2190 = vmatpush1.msra.mxu0 0.0
      %2191 = vmatprep.subr.mxu0 0.0
      %2192 = vmatpush1.msra.mxu0 0.0
      %2193 = vmatprep.subr.mxu0 0.0
      %2194 = vmatpush1.msra.mxu0 0.0
      %2195 = vmatprep.subr.mxu0 0.0
      %2196 = vmatpush1.msra.mxu0 0.0
      %2197 = vmatprep.subr.mxu0 0.0
      %2198 = vmatpush1.msra.mxu0 0.0
      %2199 = vmatprep.subr.mxu0 0.0
      %2200 = vmatpush1.msra.mxu0 0.0
      %2201 = vmatprep.subr.mxu0 0.0
      %2202 = vmatpush1.msra.mxu0 0.0
      %2203 = vmatprep.subr.mxu0 0.0
      %2204 = vmatpush1.msra.mxu0 0.0
      %2205 = vmatprep.subr.mxu0 0.0
      %2206 = vmatpush1.msra.mxu0 0.0
      %2207 = vmatprep.subr.mxu0 0.0
      %2208 = vmatpush1.msra.mxu0 0.0
      %2209 = vmatprep.subr.mxu0 0.0
      %2210 = vmatpush1.msra.mxu0 0.0
      %2211 = vmatprep.mubr.f32.mxu0 0.0
      %2212 = vmatmul.mubr.f32.gmra.mrb[0].mxu0 %v853
      %v2213 = vpop.f32.mrb[0].mxu0
      %v2214 = vadd.f32 0.0, %v2213
      %v2215 = vpop.f32.mrb[0].mxu0
      %2216 = vmatprep.mubr.f32.mxu0 0.0
      %2217 = vmatmul.mubr.f32.gmra.mrb[0].mxu0 %v856
      %v2218 = vpop.f32.mrb[0].mxu0
      %v2219 = vadd.f32 0.0, %v2218
      %v2220 = vpop.f32.mrb[0].mxu0
      %2221 = vmatprep.mubr.f32.mxu0 0.0
      %2222 = vmatmul.mubr.f32.gmra.mrb[0].mxu0 %v859
      %v2223 = vpop.f32.mrb[0].mxu0
      %v2224 = vadd.f32 0.0, %v2223
      %v2225 = vpop.f32.mrb[0].mxu0
      %2226 = vdwg.mxu0
      %v2227 = vadd.f32 %v2144, %v2214
      %v2228 = vadd.f32 %v2145, %v2219
      %v2229 = vadd.f32 %v2146, %v2224
      %2230 = vmatprep.subr.mxu0 0.0
      %2231 = vmatpush1.msra.mxu0 %v657
      %2232 = vmatprep.subr.mxu0 0.0
      %2233 = vmatpush1.msra.mxu0 0.0
      %2234 = vmatprep.subr.mxu0 0.0
      %2235 = vmatpush1.msra.mxu0 0.0
      %2236 = vmatprep.subr.mxu0 0.0
      %2237 = vmatpush1.msra.mxu0 0.0
      %2238 = vmatprep.subr.mxu0 0.0
      %2239 = vmatpush1.msra.mxu0 0.0
      %2240 = vmatprep.subr.mxu0 0.0
      %2241 = vmatpush1.msra.mxu0 0.0
      %2242 = vmatprep.subr.mxu0 0.0
      %2243 = vmatpush1.msra.mxu0 0.0
      %2244 = vmatprep.subr.mxu0 0.0
      %2245 = vmatpush1.msra.mxu0 0.0
      %2246 = vmatprep.subr.mxu0 0.0
      %2247 = vmatpush1.msra.mxu0 0.0
      %2248 = vmatprep.subr.mxu0 0.0
      %2249 = vmatpush1.msra.mxu0 0.0
      %2250 = vmatprep.subr.mxu0 0.0
      %2251 = vmatpush1.msra.mxu0 0.0
      %2252 = vmatprep.subr.mxu0 0.0
      %2253 = vmatpush1.msra.mxu0 0.0
      %2254 = vmatprep.subr.mxu0 0.0
      %2255 = vmatpush1.msra.mxu0 0.0
      %2256 = vmatprep.subr.mxu0 0.0
      %2257 = vmatpush1.msra.mxu0 0.0
      %2258 = vmatprep.subr.mxu0 0.0
      %2259 = vmatpush1.msra.mxu0 0.0
      %2260 = vmatprep.subr.mxu0 0.0
      %2261 = vmatpush1.msra.mxu0 0.0
      %2262 = vmatprep.subr.mxu0 0.0
      %2263 = vmatpush1.msra.mxu0 0.0
      %2264 = vmatprep.subr.mxu0 0.0
      %2265 = vmatpush1.msra.mxu0 0.0
      %2266 = vmatprep.subr.mxu0 0.0
      %2267 = vmatpush1.msra.mxu0 0.0
      %2268 = vmatprep.subr.mxu0 0.0
      %2269 = vmatpush1.msra.mxu0 0.0
      %2270 = vmatprep.subr.mxu0 0.0
      %2271 = vmatpush1.msra.mxu0 0.0
      %2272 = vmatprep.subr.mxu0 0.0
      %2273 = vmatpush1.msra.mxu0 0.0
      %2274 = vmatprep.subr.mxu0 0.0
      %2275 = vmatpush1.msra.mxu0 0.0
      %2276 = vmatprep.subr.mxu0 0.0
      %2277 = vmatpush1.msra.mxu0 0.0
      %2278 = vmatprep.subr.mxu0 0.0
      %2279 = vmatpush1.msra.mxu0 0.0
      %2280 = vmatprep.subr.mxu0 0.0
      %2281 = vmatpush1.msra.mxu0 0.0
      %2282 = vmatprep.subr.mxu0 0.0
      %2283 = vmatpush1.msra.mxu0 0.0
      %2284 = vmatprep.subr.mxu0 0.0
      %2285 = vmatpush1.msra.mxu0 0.0
      %2286 = vmatprep.subr.mxu0 0.0
      %2287 = vmatpush1.msra.mxu0 0.0
      %2288 = vmatprep.subr.mxu0 0.0
      %2289 = vmatpush1.msra.mxu0 0.0
      %2290 = vmatprep.subr.mxu0 0.0
      %2291 = vmatpush1.msra.mxu0 0.0
      %2292 = vmatprep.subr.mxu0 0.0
      %2293 = vmatpush1.msra.mxu0 0.0
      %2294 = vmatprep.mubr.f32.mxu0 0.0
      %2295 = vmatmul.mubr.f32.gmra.mrb[0].mxu0 %v950
      %v2296 = vpop.f32.mrb[0].mxu0
      %v2297 = vadd.f32 0.0, %v2296
      %v2298 = vpop.f32.mrb[0].mxu0
      %2299 = vmatprep.mubr.f32.mxu0 0.0
      %2300 = vmatmul.mubr.f32.gmra.mrb[0].mxu0 %v953
      %v2301 = vpop.f32.mrb[0].mxu0
      %v2302 = vadd.f32 0.0, %v2301
      %v2303 = vpop.f32.mrb[0].mxu0
      %2304 = vmatprep.mubr.f32.mxu0 0.0
      %2305 = vmatmul.mubr.f32.gmra.mrb[0].mxu0 %v956
      %v2306 = vpop.f32.mrb[0].mxu0
      %v2307 = vadd.f32 0.0, %v2306
      %v2308 = vpop.f32.mrb[0].mxu0
      %2309 = vdwg.mxu0
      %v2310 = vadd.f32 %v2227, %v2297
      %v2311 = vadd.f32 %v2228, %v2302
      %v2312 = vadd.f32 %v2229, %v2307
      %v2313 = vld [vmem:[%s457 + $0x5] sm:$0xff]
      %v2314 = vld [vmem:[%s457 + $0xd] sm:$0xff]
      %v2315 = vld [vmem:[%s457 + $0x15] sm:$0xf]
      %v2317 = vsel %vm181, %v2313, 0
      %v2320 = vsel %vm181, %v2314, 0
      %v2323 = vsel %vm181, %v2315, 0
      %2325 = vmatprep.subr.mxu0 0.0
      %2326 = vmatpush1.msra.mxu0 %v754
      %2327 = vmatprep.subr.mxu0 0.0
      %2328 = vmatpush1.msra.mxu0 0.0
      %2329 = vmatprep.subr.mxu0 0.0
      %2330 = vmatpush1.msra.mxu0 0.0
      %2331 = vmatprep.subr.mxu0 0.0
      %2332 = vmatpush1.msra.mxu0 0.0
      %2333 = vmatprep.subr.mxu0 0.0
      %2334 = vmatpush1.msra.mxu0 0.0
      %2335 = vmatprep.subr.mxu0 0.0
      %2336 = vmatpush1.msra.mxu0 0.0
      %2337 = vmatprep.subr.mxu0 0.0
      %2338 = vmatpush1.msra.mxu0 0.0
      %2339 = vmatprep.subr.mxu0 0.0
      %2340 = vmatpush1.msra.mxu0 0.0
      %2341 = vmatprep.subr.mxu0 0.0
      %2342 = vmatpush1.msra.mxu0 0.0
      %2343 = vmatprep.subr.mxu0 0.0
      %2344 = vmatpush1.msra.mxu0 0.0
      %2345 = vmatprep.subr.mxu0 0.0
      %2346 = vmatpush1.msra.mxu0 0.0
      %2347 = vmatprep.subr.mxu0 0.0
      %2348 = vmatpush1.msra.mxu0 0.0
      %2349 = vmatprep.subr.mxu0 0.0
      %2350 = vmatpush1.msra.mxu0 0.0
      %2351 = vmatprep.subr.mxu0 0.0
      %2352 = vmatpush1.msra.mxu0 0.0
      %2353 = vmatprep.subr.mxu0 0.0
      %2354 = vmatpush1.msra.mxu0 0.0
      %2355 = vmatprep.subr.mxu0 0.0
      %2356 = vmatpush1.msra.mxu0 0.0
      %2357 = vmatprep.subr.mxu0 0.0
      %2358 = vmatpush1.msra.mxu0 0.0
      %2359 = vmatprep.subr.mxu0 0.0
      %2360 = vmatpush1.msra.mxu0 0.0
      %2361 = vmatprep.subr.mxu0 0.0
      %2362 = vmatpush1.msra.mxu0 0.0
      %2363 = vmatprep.subr.mxu0 0.0
      %2364 = vmatpush1.msra.mxu0 0.0
      %2365 = vmatprep.subr.mxu0 0.0
      %2366 = vmatpush1.msra.mxu0 0.0
      %2367 = vmatprep.subr.mxu0 0.0
      %2368 = vmatpush1.msra.mxu0 0.0
      %2369 = vmatprep.subr.mxu0 0.0
      %2370 = vmatpush1.msra.mxu0 0.0
      %2371 = vmatprep.subr.mxu0 0.0
      %2372 = vmatpush1.msra.mxu0 0.0
      %2373 = vmatprep.subr.mxu0 0.0
      %2374 = vmatpush1.msra.mxu0 0.0
      %2375 = vmatprep.subr.mxu0 0.0
      %2376 = vmatpush1.msra.mxu0 0.0
      %2377 = vmatprep.subr.mxu0 0.0
      %2378 = vmatpush1.msra.mxu0 0.0
      %2379 = vmatprep.subr.mxu0 0.0
      %2380 = vmatpush1.msra.mxu0 0.0
      %2381 = vmatprep.subr.mxu0 0.0
      %2382 = vmatpush1.msra.mxu0 0.0
      %2383 = vmatprep.subr.mxu0 0.0
      %2384 = vmatpush1.msra.mxu0 0.0
      %2385 = vmatprep.subr.mxu0 0.0
      %2386 = vmatpush1.msra.mxu0 0.0
      %2387 = vmatprep.subr.mxu0 0.0
      %2388 = vmatpush1.msra.mxu0 0.0
      %2389 = vmatprep.mubr.f32.mxu0 0.0
      %2390 = vmatmul.mubr.f32.gmra.mrb[0].mxu0 %v2317
      %v2391 = vpop.f32.mrb[0].mxu0
      %v2392 = vadd.f32 0.0, %v2391
      %v2393 = vpop.f32.mrb[0].mxu0
      %2394 = vmatprep.mubr.f32.mxu0 0.0
      %2395 = vmatmul.mubr.f32.gmra.mrb[0].mxu0 %v2320
      %v2396 = vpop.f32.mrb[0].mxu0
      %v2397 = vadd.f32 0.0, %v2396
      %v2398 = vpop.f32.mrb[0].mxu0
      %2399 = vmatprep.mubr.f32.mxu0 0.0
      %2400 = vmatmul.mubr.f32.gmra.mrb[0].mxu0 %v2323
      %v2401 = vpop.f32.mrb[0].mxu0
      %v2402 = vadd.f32 0.0, %v2401
      %v2403 = vpop.f32.mrb[0].mxu0
      %2404 = vdwg.mxu0
      %v2405 = vadd.f32 %v2310, %v2392
      %v2406 = vadd.f32 %v2311, %v2397
      %v2407 = vadd.f32 %v2312, %v2402
      %v2408 = vld [vmem:[%s555 + $0x5] sm:$0xff]
      %v2409 = vld [vmem:[%s555 + $0xd] sm:$0xff]
      %v2410 = vld [vmem:[%s555 + $0x15] sm:$0xf]
      %v2412 = vsel %vm181, %v2408, 0
      %v2415 = vsel %vm181, %v2409, 0
      %v2418 = vsel %vm181, %v2410, 0
      %2420 = vmatprep.subr.mxu0 0.0
      %2421 = vmatpush1.msra.mxu0 %v851
      %2422 = vmatprep.subr.mxu0 0.0
      %2423 = vmatpush1.msra.mxu0 0.0
      %2424 = vmatprep.subr.mxu0 0.0
      %2425 = vmatpush1.msra.mxu0 0.0
      %2426 = vmatprep.subr.mxu0 0.0
      %2427 = vmatpush1.msra.mxu0 0.0
      %2428 = vmatprep.subr.mxu0 0.0
      %2429 = vmatpush1.msra.mxu0 0.0
      %2430 = vmatprep.subr.mxu0 0.0
      %2431 = vmatpush1.msra.mxu0 0.0
      %2432 = vmatprep.subr.mxu0 0.0
      %2433 = vmatpush1.msra.mxu0 0.0
      %2434 = vmatprep.subr.mxu0 0.0
      %2435 = vmatpush1.msra.mxu0 0.0
      %2436 = vmatprep.subr.mxu0 0.0
      %2437 = vmatpush1.msra.mxu0 0.0
      %2438 = vmatprep.subr.mxu0 0.0
      %2439 = vmatpush1.msra.mxu0 0.0
      %2440 = vmatprep.subr.mxu0 0.0
      %2441 = vmatpush1.msra.mxu0 0.0
      %2442 = vmatprep.subr.mxu0 0.0
      %2443 = vmatpush1.msra.mxu0 0.0
      %2444 = vmatprep.subr.mxu0 0.0
      %2445 = vmatpush1.msra.mxu0 0.0
      %2446 = vmatprep.subr.mxu0 0.0
      %2447 = vmatpush1.msra.mxu0 0.0
      %2448 = vmatprep.subr.mxu0 0.0
      %2449 = vmatpush1.msra.mxu0 0.0
      %2450 = vmatprep.subr.mxu0 0.0
      %2451 = vmatpush1.msra.mxu0 0.0
      %2452 = vmatprep.subr.mxu0 0.0
      %2453 = vmatpush1.msra.mxu0 0.0
      %2454 = vmatprep.subr.mxu0 0.0
      %2455 = vmatpush1.msra.mxu0 0.0
      %2456 = vmatprep.subr.mxu0 0.0
      %2457 = vmatpush1.msra.mxu0 0.0
      %2458 = vmatprep.subr.mxu0 0.0
      %2459 = vmatpush1.msra.mxu0 0.0
      %2460 = vmatprep.subr.mxu0 0.0
      %2461 = vmatpush1.msra.mxu0 0.0
      %2462 = vmatprep.subr.mxu0 0.0
      %2463 = vmatpush1.msra.mxu0 0.0
      %2464 = vmatprep.subr.mxu0 0.0
      %2465 = vmatpush1.msra.mxu0 0.0
      %2466 = vmatprep.subr.mxu0 0.0
      %2467 = vmatpush1.msra.mxu0 0.0
      %2468 = vmatprep.subr.mxu0 0.0
      %2469 = vmatpush1.msra.mxu0 0.0
      %2470 = vmatprep.subr.mxu0 0.0
      %2471 = vmatpush1.msra.mxu0 0.0
      %2472 = vmatprep.subr.mxu0 0.0
      %2473 = vmatpush1.msra.mxu0 0.0
      %2474 = vmatprep.subr.mxu0 0.0
      %2475 = vmatpush1.msra.mxu0 0.0
      %2476 = vmatprep.subr.mxu0 0.0
      %2477 = vmatpush1.msra.mxu0 0.0
      %2478 = vmatprep.subr.mxu0 0.0
      %2479 = vmatpush1.msra.mxu0 0.0
      %2480 = vmatprep.subr.mxu0 0.0
      %2481 = vmatpush1.msra.mxu0 0.0
      %2482 = vmatprep.subr.mxu0 0.0
      %2483 = vmatpush1.msra.mxu0 0.0
      %2484 = vmatprep.mubr.f32.mxu0 0.0
      %2485 = vmatmul.mubr.f32.gmra.mrb[0].mxu0 %v2412
      %v2486 = vpop.f32.mrb[0].mxu0
      %v2487 = vadd.f32 0.0, %v2486
      %v2488 = vpop.f32.mrb[0].mxu0
      %2489 = vmatprep.mubr.f32.mxu0 0.0
      %2490 = vmatmul.mubr.f32.gmra.mrb[0].mxu0 %v2415
      %v2491 = vpop.f32.mrb[0].mxu0
      %v2492 = vadd.f32 0.0, %v2491
      %v2493 = vpop.f32.mrb[0].mxu0
      %2494 = vmatprep.mubr.f32.mxu0 0.0
      %2495 = vmatmul.mubr.f32.gmra.mrb[0].mxu0 %v2418
      %v2496 = vpop.f32.mrb[0].mxu0
      %v2497 = vadd.f32 0.0, %v2496
      %v2498 = vpop.f32.mrb[0].mxu0
      %2499 = vdwg.mxu0
      %v2500 = vadd.f32 %v2405, %v2487
      %v2501 = vadd.f32 %v2406, %v2492
      %v2502 = vadd.f32 %v2407, %v2497
      %v2503 = vld [vmem:[%s457 + $0x6] sm:$0xff]
      %v2504 = vld [vmem:[%s457 + $0xe] sm:$0xff]
      %v2505 = vld [vmem:[%s457 + $0x16] sm:$0xf]
      %v2507 = vsel %vm181, %v2503, 0
      %v2510 = vsel %vm181, %v2504, 0
      %v2513 = vsel %vm181, %v2505, 0
      %2515 = vmatprep.subr.mxu0 0.0
      %2516 = vmatpush1.msra.mxu0 %v948
      %2517 = vmatprep.subr.mxu0 0.0
      %2518 = vmatpush1.msra.mxu0 0.0
      %2519 = vmatprep.subr.mxu0 0.0
      %2520 = vmatpush1.msra.mxu0 0.0
      %2521 = vmatprep.subr.mxu0 0.0
      %2522 = vmatpush1.msra.mxu0 0.0
      %2523 = vmatprep.subr.mxu0 0.0
      %2524 = vmatpush1.msra.mxu0 0.0
      %2525 = vmatprep.subr.mxu0 0.0
      %2526 = vmatpush1.msra.mxu0 0.0
      %2527 = vmatprep.subr.mxu0 0.0
      %2528 = vmatpush1.msra.mxu0 0.0
      %2529 = vmatprep.subr.mxu0 0.0
      %2530 = vmatpush1.msra.mxu0 0.0
      %2531 = vmatprep.subr.mxu0 0.0
      %2532 = vmatpush1.msra.mxu0 0.0
      %2533 = vmatprep.subr.mxu0 0.0
      %2534 = vmatpush1.msra.mxu0 0.0
      %2535 = vmatprep.subr.mxu0 0.0
      %2536 = vmatpush1.msra.mxu0 0.0
      %2537 = vmatprep.subr.mxu0 0.0
      %2538 = vmatpush1.msra.mxu0 0.0
      %2539 = vmatprep.subr.mxu0 0.0
      %2540 = vmatpush1.msra.mxu0 0.0
      %2541 = vmatprep.subr.mxu0 0.0
      %2542 = vmatpush1.msra.mxu0 0.0
      %2543 = vmatprep.subr.mxu0 0.0
      %2544 = vmatpush1.msra.mxu0 0.0
      %2545 = vmatprep.subr.mxu0 0.0
      %2546 = vmatpush1.msra.mxu0 0.0
      %2547 = vmatprep.subr.mxu0 0.0
      %2548 = vmatpush1.msra.mxu0 0.0
      %2549 = vmatprep.subr.mxu0 0.0
      %2550 = vmatpush1.msra.mxu0 0.0
      %2551 = vmatprep.subr.mxu0 0.0
      %2552 = vmatpush1.msra.mxu0 0.0
      %2553 = vmatprep.subr.mxu0 0.0
      %2554 = vmatpush1.msra.mxu0 0.0
      %2555 = vmatprep.subr.mxu0 0.0
      %2556 = vmatpush1.msra.mxu0 0.0
      %2557 = vmatprep.subr.mxu0 0.0
      %2558 = vmatpush1.msra.mxu0 0.0
      %2559 = vmatprep.subr.mxu0 0.0
      %2560 = vmatpush1.msra.mxu0 0.0
      %2561 = vmatprep.subr.mxu0 0.0
      %2562 = vmatpush1.msra.mxu0 0.0
      %2563 = vmatprep.subr.mxu0 0.0
      %2564 = vmatpush1.msra.mxu0 0.0
      %2565 = vmatprep.subr.mxu0 0.0
      %2566 = vmatpush1.msra.mxu0 0.0
      %2567 = vmatprep.subr.mxu0 0.0
      %2568 = vmatpush1.msra.mxu0 0.0
      %2569 = vmatprep.subr.mxu0 0.0
      %2570 = vmatpush1.msra.mxu0 0.0
      %2571 = vmatprep.subr.mxu0 0.0
      %2572 = vmatpush1.msra.mxu0 0.0
      %2573 = vmatprep.subr.mxu0 0.0
      %2574 = vmatpush1.msra.mxu0 0.0
      %2575 = vmatprep.subr.mxu0 0.0
      %2576 = vmatpush1.msra.mxu0 0.0
      %2577 = vmatprep.subr.mxu0 0.0
      %2578 = vmatpush1.msra.mxu0 0.0
      %2579 = vmatprep.mubr.f32.mxu0 0.0
      %2580 = vmatmul.mubr.f32.gmra.mrb[0].mxu0 %v2507
      %v2581 = vpop.f32.mrb[0].mxu0
      %v2582 = vadd.f32 0.0, %v2581
      %v2583 = vpop.f32.mrb[0].mxu0
      %2584 = vmatprep.mubr.f32.mxu0 0.0
      %2585 = vmatmul.mubr.f32.gmra.mrb[0].mxu0 %v2510
      %v2586 = vpop.f32.mrb[0].mxu0
      %v2587 = vadd.f32 0.0, %v2586
      %v2588 = vpop.f32.mrb[0].mxu0
      %2589 = vmatprep.mubr.f32.mxu0 0.0
      %2590 = vmatmul.mubr.f32.gmra.mrb[0].mxu0 %v2513
      %v2591 = vpop.f32.mrb[0].mxu0
      %v2592 = vadd.f32 0.0, %v2591
      %v2593 = vpop.f32.mrb[0].mxu0
      %2594 = vdwg.mxu0
      %v2595 = vadd.f32 %v2500, %v2582
      %v2596 = vadd.f32 %v2501, %v2587
      %v2597 = vadd.f32 %v2502, %v2592
      %v2598 = vmax.f32 %v1818, %v2595
      %v2599 = vmax.f32 %v1819, %v2596
      %v2600 = vmax.f32 %v1820, %v2597
      %2601 = vmatprep.subr.mxu0 0.0
      %2602 = vmatpush1.msra.mxu0 %v180
      %2603 = vmatprep.subr.mxu0 0.0
      %2604 = vmatpush1.msra.mxu0 0.0
      %2605 = vmatprep.subr.mxu0 0.0
      %2606 = vmatpush1.msra.mxu0 0.0
      %2607 = vmatprep.subr.mxu0 0.0
      %2608 = vmatpush1.msra.mxu0 0.0
      %2609 = vmatprep.subr.mxu0 0.0
      %2610 = vmatpush1.msra.mxu0 0.0
      %2611 = vmatprep.subr.mxu0 0.0
      %2612 = vmatpush1.msra.mxu0 0.0
      %2613 = vmatprep.subr.mxu0 0.0
      %2614 = vmatpush1.msra.mxu0 0.0
      %2615 = vmatprep.subr.mxu0 0.0
      %2616 = vmatpush1.msra.mxu0 0.0
      %2617 = vmatprep.subr.mxu0 0.0
      %2618 = vmatpush1.msra.mxu0 0.0
      %2619 = vmatprep.subr.mxu0 0.0
      %2620 = vmatpush1.msra.mxu0 0.0
      %2621 = vmatprep.subr.mxu0 0.0
      %2622 = vmatpush1.msra.mxu0 0.0
      %2623 = vmatprep.subr.mxu0 0.0
      %2624 = vmatpush1.msra.mxu0 0.0
      %2625 = vmatprep.subr.mxu0 0.0
      %2626 = vmatpush1.msra.mxu0 0.0
      %2627 = vmatprep.subr.mxu0 0.0
      %2628 = vmatpush1.msra.mxu0 0.0
      %2629 = vmatprep.subr.mxu0 0.0
      %2630 = vmatpush1.msra.mxu0 0.0
      %2631 = vmatprep.subr.mxu0 0.0
      %2632 = vmatpush1.msra.mxu0 0.0
      %2633 = vmatprep.subr.mxu0 0.0
      %2634 = vmatpush1.msra.mxu0 0.0
      %2635 = vmatprep.subr.mxu0 0.0
      %2636 = vmatpush1.msra.mxu0 0.0
      %2637 = vmatprep.subr.mxu0 0.0
      %2638 = vmatpush1.msra.mxu0 0.0
      %2639 = vmatprep.subr.mxu0 0.0
      %2640 = vmatpush1.msra.mxu0 0.0
      %2641 = vmatprep.subr.mxu0 0.0
      %2642 = vmatpush1.msra.mxu0 0.0
      %2643 = vmatprep.subr.mxu0 0.0
      %2644 = vmatpush1.msra.mxu0 0.0
      %2645 = vmatprep.subr.mxu0 0.0
      %2646 = vmatpush1.msra.mxu0 0.0
      %2647 = vmatprep.subr.mxu0 0.0
      %2648 = vmatpush1.msra.mxu0 0.0
      %2649 = vmatprep.subr.mxu0 0.0
      %2650 = vmatpush1.msra.mxu0 0.0
      %2651 = vmatprep.subr.mxu0 0.0
      %2652 = vmatpush1.msra.mxu0 0.0
      %2653 = vmatprep.subr.mxu0 0.0
      %2654 = vmatpush1.msra.mxu0 0.0
      %2655 = vmatprep.subr.mxu0 0.0
      %2656 = vmatpush1.msra.mxu0 0.0
      %2657 = vmatprep.subr.mxu0 0.0
      %2658 = vmatpush1.msra.mxu0 0.0
      %2659 = vmatprep.subr.mxu0 0.0
      %2660 = vmatpush1.msra.mxu0 0.0
      %2661 = vmatprep.subr.mxu0 0.0
      %2662 = vmatpush1.msra.mxu0 0.0
      %2663 = vmatprep.subr.mxu0 0.0
      %2664 = vmatpush1.msra.mxu0 0.0
      %2665 = vmatprep.mubr.f32.mxu0 0.0
      %2666 = vmatmul.mubr.f32.gmra.mrb[0].mxu0 %v659
      %v2667 = vpop.f32.mrb[0].mxu0
      %v2668 = vadd.f32 0.0, %v2667
      %v2669 = vpop.f32.mrb[0].mxu0
      %2670 = vmatprep.mubr.f32.mxu0 0.0
      %2671 = vmatmul.mubr.f32.gmra.mrb[0].mxu0 %v662
      %v2672 = vpop.f32.mrb[0].mxu0
      %v2673 = vadd.f32 0.0, %v2672
      %v2674 = vpop.f32.mrb[0].mxu0
      %2675 = vmatprep.mubr.f32.mxu0 0.0
      %2676 = vmatmul.mubr.f32.gmra.mrb[0].mxu0 %v665
      %v2677 = vpop.f32.mrb[0].mxu0
      %v2678 = vadd.f32 0.0, %v2677
      %v2679 = vpop.f32.mrb[0].mxu0
      %2680 = vdwg.mxu0
      %2681 = vmatprep.subr.mxu0 0.0
      %2682 = vmatpush1.msra.mxu0 %v174
      %2683 = vmatprep.subr.mxu0 0.0
      %2684 = vmatpush1.msra.mxu0 0.0
      %2685 = vmatprep.subr.mxu0 0.0
      %2686 = vmatpush1.msra.mxu0 0.0
      %2687 = vmatprep.subr.mxu0 0.0
      %2688 = vmatpush1.msra.mxu0 0.0
      %2689 = vmatprep.subr.mxu0 0.0
      %2690 = vmatpush1.msra.mxu0 0.0
      %2691 = vmatprep.subr.mxu0 0.0
      %2692 = vmatpush1.msra.mxu0 0.0
      %2693 = vmatprep.subr.mxu0 0.0
      %2694 = vmatpush1.msra.mxu0 0.0
      %2695 = vmatprep.subr.mxu0 0.0
      %2696 = vmatpush1.msra.mxu0 0.0
      %2697 = vmatprep.subr.mxu0 0.0
      %2698 = vmatpush1.msra.mxu0 0.0
      %2699 = vmatprep.subr.mxu0 0.0
      %2700 = vmatpush1.msra.mxu0 0.0
      %2701 = vmatprep.subr.mxu0 0.0
      %2702 = vmatpush1.msra.mxu0 0.0
      %2703 = vmatprep.subr.mxu0 0.0
      %2704 = vmatpush1.msra.mxu0 0.0
      %2705 = vmatprep.subr.mxu0 0.0
      %2706 = vmatpush1.msra.mxu0 0.0
      %2707 = vmatprep.subr.mxu0 0.0
      %2708 = vmatpush1.msra.mxu0 0.0
      %2709 = vmatprep.subr.mxu0 0.0
      %2710 = vmatpush1.msra.mxu0 0.0
      %2711 = vmatprep.subr.mxu0 0.0
      %2712 = vmatpush1.msra.mxu0 0.0
      %2713 = vmatprep.subr.mxu0 0.0
      %2714 = vmatpush1.msra.mxu0 0.0
      %2715 = vmatprep.subr.mxu0 0.0
      %2716 = vmatpush1.msra.mxu0 0.0
      %2717 = vmatprep.subr.mxu0 0.0
      %2718 = vmatpush1.msra.mxu0 0.0
      %2719 = vmatprep.subr.mxu0 0.0
      %2720 = vmatpush1.msra.mxu0 0.0
      %2721 = vmatprep.subr.mxu0 0.0
      %2722 = vmatpush1.msra.mxu0 0.0
      %2723 = vmatprep.subr.mxu0 0.0
      %2724 = vmatpush1.msra.mxu0 0.0
      %2725 = vmatprep.subr.mxu0 0.0
      %2726 = vmatpush1.msra.mxu0 0.0
      %2727 = vmatprep.subr.mxu0 0.0
      %2728 = vmatpush1.msra.mxu0 0.0
      %2729 = vmatprep.subr.mxu0 0.0
      %2730 = vmatpush1.msra.mxu0 0.0
      %2731 = vmatprep.subr.mxu0 0.0
      %2732 = vmatpush1.msra.mxu0 0.0
      %2733 = vmatprep.subr.mxu0 0.0
      %2734 = vmatpush1.msra.mxu0 0.0
      %2735 = vmatprep.subr.mxu0 0.0
      %2736 = vmatpush1.msra.mxu0 0.0
      %2737 = vmatprep.subr.mxu0 0.0
      %2738 = vmatpush1.msra.mxu0 0.0
      %2739 = vmatprep.subr.mxu0 0.0
      %2740 = vmatpush1.msra.mxu0 0.0
      %2741 = vmatprep.subr.mxu0 0.0
      %2742 = vmatpush1.msra.mxu0 0.0
      %2743 = vmatprep.subr.mxu0 0.0
      %2744 = vmatpush1.msra.mxu0 0.0
      %2745 = vmatprep.mubr.f32.mxu0 0.0
      %2746 = vmatmul.mubr.f32.gmra.mrb[0].mxu0 %v562
      %v2747 = vpop.f32.mrb[0].mxu0
      %v2748 = vadd.f32 %v2668, %v2747
      %v2749 = vpop.f32.mrb[0].mxu0
      %2750 = vmatprep.mubr.f32.mxu0 0.0
      %2751 = vmatmul.mubr.f32.gmra.mrb[0].mxu0 %v565
      %v2752 = vpop.f32.mrb[0].mxu0
      %v2753 = vadd.f32 %v2673, %v2752
      %v2754 = vpop.f32.mrb[0].mxu0
      %2755 = vmatprep.mubr.f32.mxu0 0.0
      %2756 = vmatmul.mubr.f32.gmra.mrb[0].mxu0 %v568
      %v2757 = vpop.f32.mrb[0].mxu0
      %v2758 = vadd.f32 %v2678, %v2757
      %v2759 = vpop.f32.mrb[0].mxu0
      %2760 = vdwg.mxu0
      %2761 = vmatprep.subr.mxu0 0.0
      %2762 = vmatpush1.msra.mxu0 %v364
      %2763 = vmatprep.subr.mxu0 0.0
      %2764 = vmatpush1.msra.mxu0 0.0
      %2765 = vmatprep.subr.mxu0 0.0
      %2766 = vmatpush1.msra.mxu0 0.0
      %2767 = vmatprep.subr.mxu0 0.0
      %2768 = vmatpush1.msra.mxu0 0.0
      %2769 = vmatprep.subr.mxu0 0.0
      %2770 = vmatpush1.msra.mxu0 0.0
      %2771 = vmatprep.subr.mxu0 0.0
      %2772 = vmatpush1.msra.mxu0 0.0
      %2773 = vmatprep.subr.mxu0 0.0
      %2774 = vmatpush1.msra.mxu0 0.0
      %2775 = vmatprep.subr.mxu0 0.0
      %2776 = vmatpush1.msra.mxu0 0.0
      %2777 = vmatprep.subr.mxu0 0.0
      %2778 = vmatpush1.msra.mxu0 0.0
      %2779 = vmatprep.subr.mxu0 0.0
      %2780 = vmatpush1.msra.mxu0 0.0
      %2781 = vmatprep.subr.mxu0 0.0
      %2782 = vmatpush1.msra.mxu0 0.0
      %2783 = vmatprep.subr.mxu0 0.0
      %2784 = vmatpush1.msra.mxu0 0.0
      %2785 = vmatprep.subr.mxu0 0.0
      %2786 = vmatpush1.msra.mxu0 0.0
      %2787 = vmatprep.subr.mxu0 0.0
      %2788 = vmatpush1.msra.mxu0 0.0
      %2789 = vmatprep.subr.mxu0 0.0
      %2790 = vmatpush1.msra.mxu0 0.0
      %2791 = vmatprep.subr.mxu0 0.0
      %2792 = vmatpush1.msra.mxu0 0.0
      %2793 = vmatprep.subr.mxu0 0.0
      %2794 = vmatpush1.msra.mxu0 0.0
      %2795 = vmatprep.subr.mxu0 0.0
      %2796 = vmatpush1.msra.mxu0 0.0
      %2797 = vmatprep.subr.mxu0 0.0
      %2798 = vmatpush1.msra.mxu0 0.0
      %2799 = vmatprep.subr.mxu0 0.0
      %2800 = vmatpush1.msra.mxu0 0.0
      %2801 = vmatprep.subr.mxu0 0.0
      %2802 = vmatpush1.msra.mxu0 0.0
      %2803 = vmatprep.subr.mxu0 0.0
      %2804 = vmatpush1.msra.mxu0 0.0
      %2805 = vmatprep.subr.mxu0 0.0
      %2806 = vmatpush1.msra.mxu0 0.0
      %2807 = vmatprep.subr.mxu0 0.0
      %2808 = vmatpush1.msra.mxu0 0.0
      %2809 = vmatprep.subr.mxu0 0.0
      %2810 = vmatpush1.msra.mxu0 0.0
      %2811 = vmatprep.subr.mxu0 0.0
      %2812 = vmatpush1.msra.mxu0 0.0
      %2813 = vmatprep.subr.mxu0 0.0
      %2814 = vmatpush1.msra.mxu0 0.0
      %2815 = vmatprep.subr.mxu0 0.0
      %2816 = vmatpush1.msra.mxu0 0.0
      %2817 = vmatprep.subr.mxu0 0.0
      %2818 = vmatpush1.msra.mxu0 0.0
      %2819 = vmatprep.subr.mxu0 0.0
      %2820 = vmatpush1.msra.mxu0 0.0
      %2821 = vmatprep.subr.mxu0 0.0
      %2822 = vmatpush1.msra.mxu0 0.0
      %2823 = vmatprep.subr.mxu0 0.0
      %2824 = vmatpush1.msra.mxu0 0.0
      %2825 = vmatprep.mubr.f32.mxu0 0.0
      %2826 = vmatmul.mubr.f32.gmra.mrb[0].mxu0 %v1466
      %v2827 = vpop.f32.mrb[0].mxu0
      %v2828 = vadd.f32 0.0, %v2827
      %v2829 = vpop.f32.mrb[0].mxu0
      %2830 = vmatprep.mubr.f32.mxu0 0.0
      %2831 = vmatmul.mubr.f32.gmra.mrb[0].mxu0 %v1469
      %v2832 = vpop.f32.mrb[0].mxu0
      %v2833 = vadd.f32 0.0, %v2832
      %v2834 = vpop.f32.mrb[0].mxu0
      %2835 = vmatprep.mubr.f32.mxu0 0.0
      %2836 = vmatmul.mubr.f32.gmra.mrb[0].mxu0 %v1472
      %v2837 = vpop.f32.mrb[0].mxu0
      %v2838 = vadd.f32 0.0, %v2837
      %v2839 = vpop.f32.mrb[0].mxu0
      %2840 = vdwg.mxu0
      %v2841 = vadd.f32 %v2748, %v2828
      %v2842 = vadd.f32 %v2753, %v2833
      %v2843 = vadd.f32 %v2758, %v2838
      %2844 = vmatprep.subr.mxu0 0.0
      %2845 = vmatpush1.msra.mxu0 %v462
      %2846 = vmatprep.subr.mxu0 0.0
      %2847 = vmatpush1.msra.mxu0 0.0
      %2848 = vmatprep.subr.mxu0 0.0
      %2849 = vmatpush1.msra.mxu0 0.0
      %2850 = vmatprep.subr.mxu0 0.0
      %2851 = vmatpush1.msra.mxu0 0.0
      %2852 = vmatprep.subr.mxu0 0.0
      %2853 = vmatpush1.msra.mxu0 0.0
      %2854 = vmatprep.subr.mxu0 0.0
      %2855 = vmatpush1.msra.mxu0 0.0
      %2856 = vmatprep.subr.mxu0 0.0
      %2857 = vmatpush1.msra.mxu0 0.0
      %2858 = vmatprep.subr.mxu0 0.0
      %2859 = vmatpush1.msra.mxu0 0.0
      %2860 = vmatprep.subr.mxu0 0.0
      %2861 = vmatpush1.msra.mxu0 0.0
      %2862 = vmatprep.subr.mxu0 0.0
      %2863 = vmatpush1.msra.mxu0 0.0
      %2864 = vmatprep.subr.mxu0 0.0
      %2865 = vmatpush1.msra.mxu0 0.0
      %2866 = vmatprep.subr.mxu0 0.0
      %2867 = vmatpush1.msra.mxu0 0.0
      %2868 = vmatprep.subr.mxu0 0.0
      %2869 = vmatpush1.msra.mxu0 0.0
      %2870 = vmatprep.subr.mxu0 0.0
      %2871 = vmatpush1.msra.mxu0 0.0
      %2872 = vmatprep.subr.mxu0 0.0
      %2873 = vmatpush1.msra.mxu0 0.0
      %2874 = vmatprep.subr.mxu0 0.0
      %2875 = vmatpush1.msra.mxu0 0.0
      %2876 = vmatprep.subr.mxu0 0.0
      %2877 = vmatpush1.msra.mxu0 0.0
      %2878 = vmatprep.subr.mxu0 0.0
      %2879 = vmatpush1.msra.mxu0 0.0
      %2880 = vmatprep.subr.mxu0 0.0
      %2881 = vmatpush1.msra.mxu0 0.0
      %2882 = vmatprep.subr.mxu0 0.0
      %2883 = vmatpush1.msra.mxu0 0.0
      %2884 = vmatprep.subr.mxu0 0.0
      %2885 = vmatpush1.msra.mxu0 0.0
      %2886 = vmatprep.subr.mxu0 0.0
      %2887 = vmatpush1.msra.mxu0 0.0
      %2888 = vmatprep.subr.mxu0 0.0
      %2889 = vmatpush1.msra.mxu0 0.0
      %2890 = vmatprep.subr.mxu0 0.0
      %2891 = vmatpush1.msra.mxu0 0.0
      %2892 = vmatprep.subr.mxu0 0.0
      %2893 = vmatpush1.msra.mxu0 0.0
      %2894 = vmatprep.subr.mxu0 0.0
      %2895 = vmatpush1.msra.mxu0 0.0
      %2896 = vmatprep.subr.mxu0 0.0
      %2897 = vmatpush1.msra.mxu0 0.0
      %2898 = vmatprep.subr.mxu0 0.0
      %2899 = vmatpush1.msra.mxu0 0.0
      %2900 = vmatprep.subr.mxu0 0.0
      %2901 = vmatpush1.msra.mxu0 0.0
      %2902 = vmatprep.subr.mxu0 0.0
      %2903 = vmatpush1.msra.mxu0 0.0
      %2904 = vmatprep.subr.mxu0 0.0
      %2905 = vmatpush1.msra.mxu0 0.0
      %2906 = vmatprep.subr.mxu0 0.0
      %2907 = vmatpush1.msra.mxu0 0.0
      %2908 = vmatprep.mubr.f32.mxu0 0.0
      %2909 = vmatmul.mubr.f32.gmra.mrb[0].mxu0 %v853
      %v2910 = vpop.f32.mrb[0].mxu0
      %v2911 = vadd.f32 0.0, %v2910
      %v2912 = vpop.f32.mrb[0].mxu0
      %2913 = vmatprep.mubr.f32.mxu0 0.0
      %2914 = vmatmul.mubr.f32.gmra.mrb[0].mxu0 %v856
      %v2915 = vpop.f32.mrb[0].mxu0
      %v2916 = vadd.f32 0.0, %v2915
      %v2917 = vpop.f32.mrb[0].mxu0
      %2918 = vmatprep.mubr.f32.mxu0 0.0
      %2919 = vmatmul.mubr.f32.gmra.mrb[0].mxu0 %v859
      %v2920 = vpop.f32.mrb[0].mxu0
      %v2921 = vadd.f32 0.0, %v2920
      %v2922 = vpop.f32.mrb[0].mxu0
      %2923 = vdwg.mxu0
      %v2924 = vadd.f32 %v2841, %v2911
      %v2925 = vadd.f32 %v2842, %v2916
      %v2926 = vadd.f32 %v2843, %v2921
      %2927 = vmatprep.subr.mxu0 0.0
      %2928 = vmatpush1.msra.mxu0 %v560
      %2929 = vmatprep.subr.mxu0 0.0
      %2930 = vmatpush1.msra.mxu0 0.0
      %2931 = vmatprep.subr.mxu0 0.0
      %2932 = vmatpush1.msra.mxu0 0.0
      %2933 = vmatprep.subr.mxu0 0.0
      %2934 = vmatpush1.msra.mxu0 0.0
      %2935 = vmatprep.subr.mxu0 0.0
      %2936 = vmatpush1.msra.mxu0 0.0
      %2937 = vmatprep.subr.mxu0 0.0
      %2938 = vmatpush1.msra.mxu0 0.0
      %2939 = vmatprep.subr.mxu0 0.0
      %2940 = vmatpush1.msra.mxu0 0.0
      %2941 = vmatprep.subr.mxu0 0.0
      %2942 = vmatpush1.msra.mxu0 0.0
      %2943 = vmatprep.subr.mxu0 0.0
      %2944 = vmatpush1.msra.mxu0 0.0
      %2945 = vmatprep.subr.mxu0 0.0
      %2946 = vmatpush1.msra.mxu0 0.0
      %2947 = vmatprep.subr.mxu0 0.0
      %2948 = vmatpush1.msra.mxu0 0.0
      %2949 = vmatprep.subr.mxu0 0.0
      %2950 = vmatpush1.msra.mxu0 0.0
      %2951 = vmatprep.subr.mxu0 0.0
      %2952 = vmatpush1.msra.mxu0 0.0
      %2953 = vmatprep.subr.mxu0 0.0
      %2954 = vmatpush1.msra.mxu0 0.0
      %2955 = vmatprep.subr.mxu0 0.0
      %2956 = vmatpush1.msra.mxu0 0.0
      %2957 = vmatprep.subr.mxu0 0.0
      %2958 = vmatpush1.msra.mxu0 0.0
      %2959 = vmatprep.subr.mxu0 0.0
      %2960 = vmatpush1.msra.mxu0 0.0
      %2961 = vmatprep.subr.mxu0 0.0
      %2962 = vmatpush1.msra.mxu0 0.0
      %2963 = vmatprep.subr.mxu0 0.0
      %2964 = vmatpush1.msra.mxu0 0.0
      %2965 = vmatprep.subr.mxu0 0.0
      %2966 = vmatpush1.msra.mxu0 0.0
      %2967 = vmatprep.subr.mxu0 0.0
      %2968 = vmatpush1.msra.mxu0 0.0
      %2969 = vmatprep.subr.mxu0 0.0
      %2970 = vmatpush1.msra.mxu0 0.0
      %2971 = vmatprep.subr.mxu0 0.0
      %2972 = vmatpush1.msra.mxu0 0.0
      %2973 = vmatprep.subr.mxu0 0.0
      %2974 = vmatpush1.msra.mxu0 0.0
      %2975 = vmatprep.subr.mxu0 0.0
      %2976 = vmatpush1.msra.mxu0 0.0
      %2977 = vmatprep.subr.mxu0 0.0
      %2978 = vmatpush1.msra.mxu0 0.0
      %2979 = vmatprep.subr.mxu0 0.0
      %2980 = vmatpush1.msra.mxu0 0.0
      %2981 = vmatprep.subr.mxu0 0.0
      %2982 = vmatpush1.msra.mxu0 0.0
      %2983 = vmatprep.subr.mxu0 0.0
      %2984 = vmatpush1.msra.mxu0 0.0
      %2985 = vmatprep.subr.mxu0 0.0
      %2986 = vmatpush1.msra.mxu0 0.0
      %2987 = vmatprep.subr.mxu0 0.0
      %2988 = vmatpush1.msra.mxu0 0.0
      %2989 = vmatprep.subr.mxu0 0.0
      %2990 = vmatpush1.msra.mxu0 0.0
      %2991 = vmatprep.mubr.f32.mxu0 0.0
      %2992 = vmatmul.mubr.f32.gmra.mrb[0].mxu0 %v950
      %v2993 = vpop.f32.mrb[0].mxu0
      %v2994 = vadd.f32 0.0, %v2993
      %v2995 = vpop.f32.mrb[0].mxu0
      %2996 = vmatprep.mubr.f32.mxu0 0.0
      %2997 = vmatmul.mubr.f32.gmra.mrb[0].mxu0 %v953
      %v2998 = vpop.f32.mrb[0].mxu0
      %v2999 = vadd.f32 0.0, %v2998
      %v3000 = vpop.f32.mrb[0].mxu0
      %3001 = vmatprep.mubr.f32.mxu0 0.0
      %3002 = vmatmul.mubr.f32.gmra.mrb[0].mxu0 %v956
      %v3003 = vpop.f32.mrb[0].mxu0
      %v3004 = vadd.f32 0.0, %v3003
      %v3005 = vpop.f32.mrb[0].mxu0
      %3006 = vdwg.mxu0
      %v3007 = vadd.f32 %v2924, %v2994
      %v3008 = vadd.f32 %v2925, %v2999
      %v3009 = vadd.f32 %v2926, %v3004
      %3010 = vmatprep.subr.mxu0 0.0
      %3011 = vmatpush1.msra.mxu0 %v657
      %3012 = vmatprep.subr.mxu0 0.0
      %3013 = vmatpush1.msra.mxu0 0.0
      %3014 = vmatprep.subr.mxu0 0.0
      %3015 = vmatpush1.msra.mxu0 0.0
      %3016 = vmatprep.subr.mxu0 0.0
      %3017 = vmatpush1.msra.mxu0 0.0
      %3018 = vmatprep.subr.mxu0 0.0
      %3019 = vmatpush1.msra.mxu0 0.0
      %3020 = vmatprep.subr.mxu0 0.0
      %3021 = vmatpush1.msra.mxu0 0.0
      %3022 = vmatprep.subr.mxu0 0.0
      %3023 = vmatpush1.msra.mxu0 0.0
      %3024 = vmatprep.subr.mxu0 0.0
      %3025 = vmatpush1.msra.mxu0 0.0
      %3026 = vmatprep.subr.mxu0 0.0
      %3027 = vmatpush1.msra.mxu0 0.0
      %3028 = vmatprep.subr.mxu0 0.0
      %3029 = vmatpush1.msra.mxu0 0.0
      %3030 = vmatprep.subr.mxu0 0.0
      %3031 = vmatpush1.msra.mxu0 0.0
      %3032 = vmatprep.subr.mxu0 0.0
      %3033 = vmatpush1.msra.mxu0 0.0
      %3034 = vmatprep.subr.mxu0 0.0
      %3035 = vmatpush1.msra.mxu0 0.0
      %3036 = vmatprep.subr.mxu0 0.0
      %3037 = vmatpush1.msra.mxu0 0.0
      %3038 = vmatprep.subr.mxu0 0.0
      %3039 = vmatpush1.msra.mxu0 0.0
      %3040 = vmatprep.subr.mxu0 0.0
      %3041 = vmatpush1.msra.mxu0 0.0
      %3042 = vmatprep.subr.mxu0 0.0
      %3043 = vmatpush1.msra.mxu0 0.0
      %3044 = vmatprep.subr.mxu0 0.0
      %3045 = vmatpush1.msra.mxu0 0.0
      %3046 = vmatprep.subr.mxu0 0.0
      %3047 = vmatpush1.msra.mxu0 0.0
      %3048 = vmatprep.subr.mxu0 0.0
      %3049 = vmatpush1.msra.mxu0 0.0
      %3050 = vmatprep.subr.mxu0 0.0
      %3051 = vmatpush1.msra.mxu0 0.0
      %3052 = vmatprep.subr.mxu0 0.0
      %3053 = vmatpush1.msra.mxu0 0.0
      %3054 = vmatprep.subr.mxu0 0.0
      %3055 = vmatpush1.msra.mxu0 0.0
      %3056 = vmatprep.subr.mxu0 0.0
      %3057 = vmatpush1.msra.mxu0 0.0
      %3058 = vmatprep.subr.mxu0 0.0
      %3059 = vmatpush1.msra.mxu0 0.0
      %3060 = vmatprep.subr.mxu0 0.0
      %3061 = vmatpush1.msra.mxu0 0.0
      %3062 = vmatprep.subr.mxu0 0.0
      %3063 = vmatpush1.msra.mxu0 0.0
      %3064 = vmatprep.subr.mxu0 0.0
      %3065 = vmatpush1.msra.mxu0 0.0
      %3066 = vmatprep.subr.mxu0 0.0
      %3067 = vmatpush1.msra.mxu0 0.0
      %3068 = vmatprep.subr.mxu0 0.0
      %3069 = vmatpush1.msra.mxu0 0.0
      %3070 = vmatprep.subr.mxu0 0.0
      %3071 = vmatpush1.msra.mxu0 0.0
      %3072 = vmatprep.subr.mxu0 0.0
      %3073 = vmatpush1.msra.mxu0 0.0
      %3074 = vmatprep.mubr.f32.mxu0 0.0
      %3075 = vmatmul.mubr.f32.gmra.mrb[0].mxu0 %v1727
      %v3076 = vpop.f32.mrb[0].mxu0
      %v3077 = vadd.f32 0.0, %v3076
      %v3078 = vpop.f32.mrb[0].mxu0
      %3079 = vmatprep.mubr.f32.mxu0 0.0
      %3080 = vmatmul.mubr.f32.gmra.mrb[0].mxu0 %v1730
      %v3081 = vpop.f32.mrb[0].mxu0
      %v3082 = vadd.f32 0.0, %v3081
      %v3083 = vpop.f32.mrb[0].mxu0
      %3084 = vmatprep.mubr.f32.mxu0 0.0
      %3085 = vmatmul.mubr.f32.gmra.mrb[0].mxu0 %v1733
      %v3086 = vpop.f32.mrb[0].mxu0
      %v3087 = vadd.f32 0.0, %v3086
      %v3088 = vpop.f32.mrb[0].mxu0
      %3089 = vdwg.mxu0
      %v3090 = vadd.f32 %v3007, %v3077
      %v3091 = vadd.f32 %v3008, %v3082
      %v3092 = vadd.f32 %v3009, %v3087
      %3093 = vmatprep.subr.mxu0 0.0
      %3094 = vmatpush1.msra.mxu0 %v754
      %3095 = vmatprep.subr.mxu0 0.0
      %3096 = vmatpush1.msra.mxu0 0.0
      %3097 = vmatprep.subr.mxu0 0.0
      %3098 = vmatpush1.msra.mxu0 0.0
      %3099 = vmatprep.subr.mxu0 0.0
      %3100 = vmatpush1.msra.mxu0 0.0
      %3101 = vmatprep.subr.mxu0 0.0
      %3102 = vmatpush1.msra.mxu0 0.0
      %3103 = vmatprep.subr.mxu0 0.0
      %3104 = vmatpush1.msra.mxu0 0.0
      %3105 = vmatprep.subr.mxu0 0.0
      %3106 = vmatpush1.msra.mxu0 0.0
      %3107 = vmatprep.subr.mxu0 0.0
      %3108 = vmatpush1.msra.mxu0 0.0
      %3109 = vmatprep.subr.mxu0 0.0
      %3110 = vmatpush1.msra.mxu0 0.0
      %3111 = vmatprep.subr.mxu0 0.0
      %3112 = vmatpush1.msra.mxu0 0.0
      %3113 = vmatprep.subr.mxu0 0.0
      %3114 = vmatpush1.msra.mxu0 0.0
      %3115 = vmatprep.subr.mxu0 0.0
      %3116 = vmatpush1.msra.mxu0 0.0
      %3117 = vmatprep.subr.mxu0 0.0
      %3118 = vmatpush1.msra.mxu0 0.0
      %3119 = vmatprep.subr.mxu0 0.0
      %3120 = vmatpush1.msra.mxu0 0.0
      %3121 = vmatprep.subr.mxu0 0.0
      %3122 = vmatpush1.msra.mxu0 0.0
      %3123 = vmatprep.subr.mxu0 0.0
      %3124 = vmatpush1.msra.mxu0 0.0
      %3125 = vmatprep.subr.mxu0 0.0
      %3126 = vmatpush1.msra.mxu0 0.0
      %3127 = vmatprep.subr.mxu0 0.0
      %3128 = vmatpush1.msra.mxu0 0.0
      %3129 = vmatprep.subr.mxu0 0.0
      %3130 = vmatpush1.msra.mxu0 0.0
      %3131 = vmatprep.subr.mxu0 0.0
      %3132 = vmatpush1.msra.mxu0 0.0
      %3133 = vmatprep.subr.mxu0 0.0
      %3134 = vmatpush1.msra.mxu0 0.0
      %3135 = vmatprep.subr.mxu0 0.0
      %3136 = vmatpush1.msra.mxu0 0.0
      %3137 = vmatprep.subr.mxu0 0.0
      %3138 = vmatpush1.msra.mxu0 0.0
      %3139 = vmatprep.subr.mxu0 0.0
      %3140 = vmatpush1.msra.mxu0 0.0
      %3141 = vmatprep.subr.mxu0 0.0
      %3142 = vmatpush1.msra.mxu0 0.0
      %3143 = vmatprep.subr.mxu0 0.0
      %3144 = vmatpush1.msra.mxu0 0.0
      %3145 = vmatprep.subr.mxu0 0.0
      %3146 = vmatpush1.msra.mxu0 0.0
      %3147 = vmatprep.subr.mxu0 0.0
      %3148 = vmatpush1.msra.mxu0 0.0
      %3149 = vmatprep.subr.mxu0 0.0
      %3150 = vmatpush1.msra.mxu0 0.0
      %3151 = vmatprep.subr.mxu0 0.0
      %3152 = vmatpush1.msra.mxu0 0.0
      %3153 = vmatprep.subr.mxu0 0.0
      %3154 = vmatpush1.msra.mxu0 0.0
      %3155 = vmatprep.subr.mxu0 0.0
      %3156 = vmatpush1.msra.mxu0 0.0
      %3157 = vmatprep.mubr.f32.mxu0 0.0
      %3158 = vmatmul.mubr.f32.gmra.mrb[0].mxu0 %v2412
      %v3159 = vpop.f32.mrb[0].mxu0
      %v3160 = vadd.f32 0.0, %v3159
      %v3161 = vpop.f32.mrb[0].mxu0
      %3162 = vmatprep.mubr.f32.mxu0 0.0
      %3163 = vmatmul.mubr.f32.gmra.mrb[0].mxu0 %v2415
      %v3164 = vpop.f32.mrb[0].mxu0
      %v3165 = vadd.f32 0.0, %v3164
      %v3166 = vpop.f32.mrb[0].mxu0
      %3167 = vmatprep.mubr.f32.mxu0 0.0
      %3168 = vmatmul.mubr.f32.gmra.mrb[0].mxu0 %v2418
      %v3169 = vpop.f32.mrb[0].mxu0
      %v3170 = vadd.f32 0.0, %v3169
      %v3171 = vpop.f32.mrb[0].mxu0
      %3172 = vdwg.mxu0
      %v3173 = vadd.f32 %v3090, %v3160
      %v3174 = vadd.f32 %v3091, %v3165
      %v3175 = vadd.f32 %v3092, %v3170
      %3176 = vmatprep.subr.mxu0 0.0
      %3177 = vmatpush1.msra.mxu0 %v851
      %3178 = vmatprep.subr.mxu0 0.0
      %3179 = vmatpush1.msra.mxu0 0.0
      %3180 = vmatprep.subr.mxu0 0.0
      %3181 = vmatpush1.msra.mxu0 0.0
      %3182 = vmatprep.subr.mxu0 0.0
      %3183 = vmatpush1.msra.mxu0 0.0
      %3184 = vmatprep.subr.mxu0 0.0
      %3185 = vmatpush1.msra.mxu0 0.0
      %3186 = vmatprep.subr.mxu0 0.0
      %3187 = vmatpush1.msra.mxu0 0.0
      %3188 = vmatprep.subr.mxu0 0.0
      %3189 = vmatpush1.msra.mxu0 0.0
      %3190 = vmatprep.subr.mxu0 0.0
      %3191 = vmatpush1.msra.mxu0 0.0
      %3192 = vmatprep.subr.mxu0 0.0
      %3193 = vmatpush1.msra.mxu0 0.0
      %3194 = vmatprep.subr.mxu0 0.0
      %3195 = vmatpush1.msra.mxu0 0.0
      %3196 = vmatprep.subr.mxu0 0.0
      %3197 = vmatpush1.msra.mxu0 0.0
      %3198 = vmatprep.subr.mxu0 0.0
      %3199 = vmatpush1.msra.mxu0 0.0
      %3200 = vmatprep.subr.mxu0 0.0
      %3201 = vmatpush1.msra.mxu0 0.0
      %3202 = vmatprep.subr.mxu0 0.0
      %3203 = vmatpush1.msra.mxu0 0.0
      %3204 = vmatprep.subr.mxu0 0.0
      %3205 = vmatpush1.msra.mxu0 0.0
      %3206 = vmatprep.subr.mxu0 0.0
      %3207 = vmatpush1.msra.mxu0 0.0
      %3208 = vmatprep.subr.mxu0 0.0
      %3209 = vmatpush1.msra.mxu0 0.0
      %3210 = vmatprep.subr.mxu0 0.0
      %3211 = vmatpush1.msra.mxu0 0.0
      %3212 = vmatprep.subr.mxu0 0.0
      %3213 = vmatpush1.msra.mxu0 0.0
      %3214 = vmatprep.subr.mxu0 0.0
      %3215 = vmatpush1.msra.mxu0 0.0
      %3216 = vmatprep.subr.mxu0 0.0
      %3217 = vmatpush1.msra.mxu0 0.0
      %3218 = vmatprep.subr.mxu0 0.0
      %3219 = vmatpush1.msra.mxu0 0.0
      %3220 = vmatprep.subr.mxu0 0.0
      %3221 = vmatpush1.msra.mxu0 0.0
      %3222 = vmatprep.subr.mxu0 0.0
      %3223 = vmatpush1.msra.mxu0 0.0
      %3224 = vmatprep.subr.mxu0 0.0
      %3225 = vmatpush1.msra.mxu0 0.0
      %3226 = vmatprep.subr.mxu0 0.0
      %3227 = vmatpush1.msra.mxu0 0.0
      %3228 = vmatprep.subr.mxu0 0.0
      %3229 = vmatpush1.msra.mxu0 0.0
      %3230 = vmatprep.subr.mxu0 0.0
      %3231 = vmatpush1.msra.mxu0 0.0
      %3232 = vmatprep.subr.mxu0 0.0
      %3233 = vmatpush1.msra.mxu0 0.0
      %3234 = vmatprep.subr.mxu0 0.0
      %3235 = vmatpush1.msra.mxu0 0.0
      %3236 = vmatprep.subr.mxu0 0.0
      %3237 = vmatpush1.msra.mxu0 0.0
      %3238 = vmatprep.subr.mxu0 0.0
      %3239 = vmatpush1.msra.mxu0 0.0
      %3240 = vmatprep.mubr.f32.mxu0 0.0
      %3241 = vmatmul.mubr.f32.gmra.mrb[0].mxu0 %v2507
      %v3242 = vpop.f32.mrb[0].mxu0
      %v3243 = vadd.f32 0.0, %v3242
      %v3244 = vpop.f32.mrb[0].mxu0
      %3245 = vmatprep.mubr.f32.mxu0 0.0
      %3246 = vmatmul.mubr.f32.gmra.mrb[0].mxu0 %v2510
      %v3247 = vpop.f32.mrb[0].mxu0
      %v3248 = vadd.f32 0.0, %v3247
      %v3249 = vpop.f32.mrb[0].mxu0
      %3250 = vmatprep.mubr.f32.mxu0 0.0
      %3251 = vmatmul.mubr.f32.gmra.mrb[0].mxu0 %v2513
      %v3252 = vpop.f32.mrb[0].mxu0
      %v3253 = vadd.f32 0.0, %v3252
      %v3254 = vpop.f32.mrb[0].mxu0
      %3255 = vdwg.mxu0
      %v3256 = vadd.f32 %v3173, %v3243
      %v3257 = vadd.f32 %v3174, %v3248
      %v3258 = vadd.f32 %v3175, %v3253
      %v3259 = vld [vmem:[%s555 + $0x6] sm:$0xff]
      %v3260 = vld [vmem:[%s555 + $0xe] sm:$0xff]
      %v3261 = vld [vmem:[%s555 + $0x16] sm:$0xf]
      %v3263 = vsel %vm181, %v3259, 0
      %v3266 = vsel %vm181, %v3260, 0
      %v3269 = vsel %vm181, %v3261, 0
      %3271 = vmatprep.subr.mxu0 0.0
      %3272 = vmatpush1.msra.mxu0 %v948
      %3273 = vmatprep.subr.mxu0 0.0
      %3274 = vmatpush1.msra.mxu0 0.0
      %3275 = vmatprep.subr.mxu0 0.0
      %3276 = vmatpush1.msra.mxu0 0.0
      %3277 = vmatprep.subr.mxu0 0.0
      %3278 = vmatpush1.msra.mxu0 0.0
      %3279 = vmatprep.subr.mxu0 0.0
      %3280 = vmatpush1.msra.mxu0 0.0
      %3281 = vmatprep.subr.mxu0 0.0
      %3282 = vmatpush1.msra.mxu0 0.0
      %3283 = vmatprep.subr.mxu0 0.0
      %3284 = vmatpush1.msra.mxu0 0.0
      %3285 = vmatprep.subr.mxu0 0.0
      %3286 = vmatpush1.msra.mxu0 0.0
      %3287 = vmatprep.subr.mxu0 0.0
      %3288 = vmatpush1.msra.mxu0 0.0
      %3289 = vmatprep.subr.mxu0 0.0
      %3290 = vmatpush1.msra.mxu0 0.0
      %3291 = vmatprep.subr.mxu0 0.0
      %3292 = vmatpush1.msra.mxu0 0.0
      %3293 = vmatprep.subr.mxu0 0.0
      %3294 = vmatpush1.msra.mxu0 0.0
      %3295 = vmatprep.subr.mxu0 0.0
      %3296 = vmatpush1.msra.mxu0 0.0
      %3297 = vmatprep.subr.mxu0 0.0
      %3298 = vmatpush1.msra.mxu0 0.0
      %3299 = vmatprep.subr.mxu0 0.0
      %3300 = vmatpush1.msra.mxu0 0.0
      %3301 = vmatprep.subr.mxu0 0.0
      %3302 = vmatpush1.msra.mxu0 0.0
      %3303 = vmatprep.subr.mxu0 0.0
      %3304 = vmatpush1.msra.mxu0 0.0
      %3305 = vmatprep.subr.mxu0 0.0
      %3306 = vmatpush1.msra.mxu0 0.0
      %3307 = vmatprep.subr.mxu0 0.0
      %3308 = vmatpush1.msra.mxu0 0.0
      %3309 = vmatprep.subr.mxu0 0.0
      %3310 = vmatpush1.msra.mxu0 0.0
      %3311 = vmatprep.subr.mxu0 0.0
      %3312 = vmatpush1.msra.mxu0 0.0
      %3313 = vmatprep.subr.mxu0 0.0
      %3314 = vmatpush1.msra.mxu0 0.0
      %3315 = vmatprep.subr.mxu0 0.0
      %3316 = vmatpush1.msra.mxu0 0.0
      %3317 = vmatprep.subr.mxu0 0.0
      %3318 = vmatpush1.msra.mxu0 0.0
      %3319 = vmatprep.subr.mxu0 0.0
      %3320 = vmatpush1.msra.mxu0 0.0
      %3321 = vmatprep.subr.mxu0 0.0
      %3322 = vmatpush1.msra.mxu0 0.0
      %3323 = vmatprep.subr.mxu0 0.0
      %3324 = vmatpush1.msra.mxu0 0.0
      %3325 = vmatprep.subr.mxu0 0.0
      %3326 = vmatpush1.msra.mxu0 0.0
      %3327 = vmatprep.subr.mxu0 0.0
      %3328 = vmatpush1.msra.mxu0 0.0
      %3329 = vmatprep.subr.mxu0 0.0
      %3330 = vmatpush1.msra.mxu0 0.0
      %3331 = vmatprep.subr.mxu0 0.0
      %3332 = vmatpush1.msra.mxu0 0.0
      %3333 = vmatprep.subr.mxu0 0.0
      %3334 = vmatpush1.msra.mxu0 0.0
      %3335 = vmatprep.mubr.f32.mxu0 0.0
      %3336 = vmatmul.mubr.f32.gmra.mrb[0].mxu0 %v3263
      %v3337 = vpop.f32.mrb[0].mxu0
      %v3338 = vadd.f32 0.0, %v3337
      %v3339 = vpop.f32.mrb[0].mxu0
      %3340 = vmatprep.mubr.f32.mxu0 0.0
      %3341 = vmatmul.mubr.f32.gmra.mrb[0].mxu0 %v3266
      %v3342 = vpop.f32.mrb[0].mxu0
      %v3343 = vadd.f32 0.0, %v3342
      %v3344 = vpop.f32.mrb[0].mxu0
      %3345 = vmatprep.mubr.f32.mxu0 0.0
      %3346 = vmatmul.mubr.f32.gmra.mrb[0].mxu0 %v3269
      %v3347 = vpop.f32.mrb[0].mxu0
      %v3348 = vadd.f32 0.0, %v3347
      %v3349 = vpop.f32.mrb[0].mxu0
      %3350 = vdwg.mxu0
      %v3351 = vadd.f32 %v3256, %v3338
      %v3352 = vadd.f32 %v3257, %v3343
      %v3353 = vadd.f32 %v3258, %v3348
      %v3354 = vmax.f32 %v2598, %v3351
      %v3355 = vmax.f32 %v2599, %v3352
      %v3356 = vmax.f32 %v2600, %v3353
      %v3357 = vld [vmem:[%s2] sm:$0x1]
      %v3359 = vlaneseq
      %v3360 = vshrl.u32 %v3359, 7
      %v3361 = vsub.s32 0, %v3360
      %v3362 = vrot.slane %v3357, %v3361
      %v3364 = vadd.f32 %v3354, %v3362
      %v3365 = vadd.f32 %v3355, %v3362
      %v3366 = vadd.f32 %v3356, %v3362
      %v3367 = vmax.f32 %v3364, 0.0
      %v3368 = vmax.f32 %v3365, 0.0
      %v3369 = vmax.f32 %v3366, 0.0
      %vm3370 = vcmask 130048
      %3371 = vst.msk [vmem:[%s170] sm:$0xff] %vm3370, %v3367
      %3372 = vst.msk [vmem:[%s170 + $0x8] sm:$0xff] %vm3370, %v3368
      %vm3373 = vcmask 125952
      %3374 = vst.msk [vmem:[%s170 + $0x10] sm:$0xf] %vm3373, %v3369
      %p3375 = scmp.lt.s32.totalorder %s14, 1
      %s3376 = scalar_select %p3375, %s14, 1
      %s3377 = smul.addr %s3376, 3
      %s3378 = smul.addr %s3377, 8
      %s3379 = scalar_lea.vmem %s3, %s3378
      // Predicated region
      $region33: #{img_encoder_fixed.4} parent=31 // pred_check
        %p3380 = pneg %p100
      $region34: #{img_encoder_fixed.4} parent=31 // pred_check_branch
        %3382 = sbr.rel (%p3380) target = $region36
      $region35: #{img_encoder_fixed.4} parent=31 // pred_region
        _
      $region36: #{img_encoder_fixed.4} parent=31 // pred_fallthru
        _
    $region32: #{img_encoder_fixed.4} parent=5 // pred_fallthru
      _
    %p3383 = scmp.le.s32.totalorder 2, %s9
    // Predicated region
    $region37: #{img_encoder_fixed.4} parent=5 // pred_check
      %p3384 = pneg %p3383
    $region38: #{img_encoder_fixed.4} parent=5 // pred_check_branch
      %3386 = sbr.rel (%p3384) target = $region40
    $region39: #{img_encoder_fixed.4} parent=5 // pred_region
      %s3387 = ssub.s32 %s9, 2
      // Predicated region
      $region41: #{img_encoder_fixed.4} parent=39 // pred_check
        %p3388 = pneg %p106
      $region42: #{img_encoder_fixed.4} parent=39 // pred_check_branch
        %3390 = sbr.rel (%p3388) target = $region44
      $region43: #{img_encoder_fixed.4} parent=39 // pred_region
        %p3391 = scmp.lt.s32.totalorder %s15, 1
        %s3392 = scalar_select %p3391, %s15, 1
        %s3393 = smul.addr %s3392, 3
        %s3394 = smul.addr %s3393, 8
        %s3395 = scalar_lea.vmem %s3, %s3394
      $region44: #{img_encoder_fixed.4} parent=39 // pred_fallthru
        _
    $region40: #{img_encoder_fixed.4} parent=5 // pred_fallthru
      _
  $region6: #{img_encoder_fixed.4} parent=0 // loop_footer
    %s13 = sadd.s32 1, %s9
  $region7: #{img_encoder_fixed.4} parent=0 // loop_footer_branch
    %8 = sbr.rel target = $region3
  $region8: #{img_encoder_fixed.4} parent=0 // loop_exit
    _

// kernel: img_encoder_fixed.5
$region0: #{img_encoder_fixed.5}
  #allocation0 [shape = 'u32[]', space=smem, size = 0x4, offset = 0x4, fixed_abs, tag = 'smem constant byte address 0x4 - core index']
  #allocation1 [shape = 'u32[144,128]{1,0:T(1,128)}', space=vmem, size = 0x12000, scoped, tag = 'internal scratch']
  %s0 = inlined_call_operand.vmem [shape: bf16[2,256], index: 0, kind: input, shape index: {}]
  %s1 = inlined_call_operand.vmem [shape: bf16[256,64], index: 1, kind: input, shape index: {}]
  %s2 = inlined_call_operand.vmem [shape: f32[1,64], index: 2, kind: input, shape index: {}]
  %s3 = inlined_call_operand.vmem [shape: bf16[64,64], index: 3, kind: input, shape index: {}]
  %s4 = inlined_call_operand.vmem [shape: f32[1,64], index: 4, kind: input, shape index: {}]
  %s5 = inlined_call_operand.vmem [shape: bf16[64,32], index: 5, kind: input, shape index: {}]
  %s6 = inlined_call_operand.vmem [shape: f32[1,32], index: 6, kind: input, shape index: {}]
  %s7 = inlined_call_operand.hbm [shape: f32[2,32], index: 7, kind: output, shape index: {}]
  %s8 = sld [smem:[#allocation0]]
  $region38: #{img_encoder_fixed.5} parent=0
    _
  %s10 = ssub.s32 1, %s8
  %s11 = scalar_select 0, %s10, %s8
  $region1: #{img_encoder_fixed.5} parent=0
    #allocation2 [shape = 'u8[1024]{0}', space=vmem, size = 0x400, scoped, tag = 'output window, operand 0, single buffered']
    #allocation3 [shape = 's32[1]{0}', space=sflag, size = 0x4, scoped, tag = 'scoped memory for img_encoder_fixed.5']
    %12 = vsyncpa [#allocation3], 0
    // Predicated region
    $region2: #{img_encoder_fixed.5} parent=1 // pred_check
      _
    $region3: #{img_encoder_fixed.5} parent=1 // pred_check_branch
      %14 = sbr.rel (0) target = $region5
    $region4: #{img_encoder_fixed.5} parent=1 // pred_region
      _
    $region5: #{img_encoder_fixed.5} parent=1 // pred_fallthru
      _
    // Predicated region
    $region6: #{img_encoder_fixed.5} parent=1 // pred_check
      _
    $region7: #{img_encoder_fixed.5} parent=1 // pred_check_branch
      %16 = sbr.rel (0) target = $region9
    $region8: #{img_encoder_fixed.5} parent=1 // pred_region
      _
    $region9: #{img_encoder_fixed.5} parent=1 // pred_fallthru
      _
    // Predicated region
    $region10: #{img_encoder_fixed.5} parent=1 // pred_check
      _
    $region11: #{img_encoder_fixed.5} parent=1 // pred_check_branch
      %18 = sbr.rel (0) target = $region13
    $region12: #{img_encoder_fixed.5} parent=1 // pred_region
      _
    $region13: #{img_encoder_fixed.5} parent=1 // pred_fallthru
      _
    // Predicated region
    $region14: #{img_encoder_fixed.5} parent=1 // pred_check
      _
    $region15: #{img_encoder_fixed.5} parent=1 // pred_check_branch
      %20 = sbr.rel (0) target = $region17
    $region16: #{img_encoder_fixed.5} parent=1 // pred_region
      _
    $region17: #{img_encoder_fixed.5} parent=1 // pred_fallthru
      _
    // Predicated region
    $region18: #{img_encoder_fixed.5} parent=1 // pred_check
      _
    $region19: #{img_encoder_fixed.5} parent=1 // pred_check_branch
      %22 = sbr.rel (0) target = $region21
    $region20: #{img_encoder_fixed.5} parent=1 // pred_region
      _
    $region21: #{img_encoder_fixed.5} parent=1 // pred_fallthru
      _
    // Predicated region
    $region22: #{img_encoder_fixed.5} parent=1 // pred_check
      _
    $region23: #{img_encoder_fixed.5} parent=1 // pred_check_branch
      %24 = sbr.rel (0) target = $region25
    $region24: #{img_encoder_fixed.5} parent=1 // pred_region
      _
    $region25: #{img_encoder_fixed.5} parent=1 // pred_fallthru
      _
    // Predicated region
    $region26: #{img_encoder_fixed.5} parent=1 // pred_check
      _
    $region27: #{img_encoder_fixed.5} parent=1 // pred_check_branch
      %26 = sbr.rel (0) target = $region29
    $region28: #{img_encoder_fixed.5} parent=1 // pred_region
      _
    $region29: #{img_encoder_fixed.5} parent=1 // pred_fallthru
      _
    %v28 = vld [vmem:[%s0] sm:$0x3]
    %v29 = vld [vmem:[%s1] sm:$0xf]
    %v30 = vld [vmem:[%s1 + $0x4] sm:$0xf]
    %v31 = vld [vmem:[%s1 + $0x8] sm:$0xf]
    %v32 = vld [vmem:[%s1 + $0xc] sm:$0xf]
    %v33 = vld [vmem:[%s1 + $0x10] sm:$0xf]
    %v34 = vld [vmem:[%s1 + $0x14] sm:$0xf]
    %v35 = vld [vmem:[%s1 + $0x18] sm:$0xf]
    %v36 = vld [vmem:[%s1 + $0x1c] sm:$0xf]
    %v37 = vld [vmem:[%s1 + $0x20] sm:$0xf]
    %v38 = vld [vmem:[%s1 + $0x24] sm:$0xf]
    %v39 = vld [vmem:[%s1 + $0x28] sm:$0xf]
    %v40 = vld [vmem:[%s1 + $0x2c] sm:$0xf]
    %v41 = vld [vmem:[%s1 + $0x30] sm:$0xf]
    %v42 = vld [vmem:[%s1 + $0x34] sm:$0xf]
    %v43 = vld [vmem:[%s1 + $0x38] sm:$0xf]
    %v44 = vld [vmem:[%s1 + $0x3c] sm:$0xf]
    %v45 = vld [vmem:[%s1 + $0x40] sm:$0xf]
    %v46 = vld [vmem:[%s1 + $0x44] sm:$0xf]
    %v47 = vld [vmem:[%s1 + $0x48] sm:$0xf]
    %v48 = vld [vmem:[%s1 + $0x4c] sm:$0xf]
    %v49 = vld [vmem:[%s1 + $0x50] sm:$0xf]
    %v50 = vld [vmem:[%s1 + $0x54] sm:$0xf]
    %v51 = vld [vmem:[%s1 + $0x58] sm:$0xf]
    %v52 = vld [vmem:[%s1 + $0x5c] sm:$0xf]
    %v53 = vld [vmem:[%s1 + $0x60] sm:$0xf]
    %v54 = vld [vmem:[%s1 + $0x64] sm:$0xf]
    %v55 = vld [vmem:[%s1 + $0x68] sm:$0xf]
    %v56 = vld [vmem:[%s1 + $0x6c] sm:$0xf]
    %v57 = vld [vmem:[%s1 + $0x70] sm:$0xf]
    %v58 = vld [vmem:[%s1 + $0x74] sm:$0xf]
    %v59 = vld [vmem:[%s1 + $0x78] sm:$0xf]
    %v60 = vld [vmem:[%s1 + $0x7c] sm:$0xf]
    %v61 = vld [vmem:[%s2] sm:$0x1]
    %v63 = vlaneseq
    %v64 = vshrl.u32 %v63, 7
    %v65 = vsub.s32 0, %v64
    %v66 = vrot.slane %v61, %v65
    %v70 = vunpack.c.l.s4 1966171168
    %v71 = vunpack.c.0.s8 %v70
    %v72 = vlaneseq
    %v73 = vshrl.u32 %v72, 7
    %v74 = vsub.s32 %v71, %v73
    %v75 = vrot.slane %v28, %v74
    %v76 = vcombine.high %v75, %v75
    %v78 = vunpack.c.l.s4 1966171168
    %v79 = vunpack.c.0.s8 %v78
    %v80 = vlaneseq
    %v81 = vshrl.u32 %v80, 7
    %v82 = vsub.s32 %v79, %v81
    %v83 = vrot.slane %v75, %v82
    %v85 = vunpack.c.l.s4 1966171168
    %v86 = vunpack.c.0.s8 %v85
    %v87 = vlaneseq
    %v88 = vshrl.u32 %v87, 7
    %v89 = vsub.s32 %v86, %v88
    %v90 = vrot.slane %v76, %v89
    %v125 = vunpack.c.l.b16 %v29
    %v126 = vunpack.c.l.b16 %v30
    %v127 = vunpack.c.l.b16 %v31
    %v128 = vunpack.c.l.b16 %v32
    %v129 = vunpack.c.l.b16 %v33
    %v130 = vunpack.c.l.b16 %v34
    %v131 = vunpack.c.l.b16 %v35
    %v132 = vunpack.c.l.b16 %v36
    %v133 = vunpack.c.l.b16 %v37
    %v134 = vunpack.c.l.b16 %v38
    %v135 = vunpack.c.l.b16 %v39
    %v136 = vunpack.c.l.b16 %v40
    %v137 = vunpack.c.l.b16 %v41
    %v138 = vunpack.c.l.b16 %v42
    %v139 = vunpack.c.l.b16 %v43
    %v140 = vunpack.c.l.b16 %v44
    %v141 = vunpack.c.l.b16 %v45
    %v142 = vunpack.c.l.b16 %v46
    %v143 = vunpack.c.l.b16 %v47
    %v144 = vunpack.c.l.b16 %v48
    %v145 = vunpack.c.l.b16 %v49
    %v146 = vunpack.c.l.b16 %v50
    %v147 = vunpack.c.l.b16 %v51
    %v148 = vunpack.c.l.b16 %v52
    %v149 = vunpack.c.l.b16 %v53
    %v150 = vunpack.c.l.b16 %v54
    %v151 = vunpack.c.l.b16 %v55
    %v152 = vunpack.c.l.b16 %v56
    %v153 = vunpack.c.l.b16 %v57
    %v154 = vunpack.c.l.b16 %v58
    %v155 = vunpack.c.l.b16 %v59
    %v156 = vunpack.c.l.b16 %v60
    %v157 = vpack.c.b16 %v126, %v125
    %v158 = vpack.c.b16 %v128, %v127
    %v159 = vpack.c.b16 %v130, %v129
    %v160 = vpack.c.b16 %v132, %v131
    %v161 = vpack.c.b16 %v134, %v133
    %v162 = vpack.c.b16 %v136, %v135
    %v163 = vpack.c.b16 %v138, %v137
    %v164 = vpack.c.b16 %v140, %v139
    %v165 = vpack.c.b16 %v142, %v141
    %v166 = vpack.c.b16 %v144, %v143
    %v167 = vpack.c.b16 %v146, %v145
    %v168 = vpack.c.b16 %v148, %v147
    %v169 = vpack.c.b16 %v150, %v149
    %v170 = vpack.c.b16 %v152, %v151
    %v171 = vpack.c.b16 %v154, %v153
    %v172 = vpack.c.b16 %v156, %v155
    %189 = vmatprep.subr.bf16.mxu0 0
    %190 = vmatpush1.bf16.msra.mxu0 %v157
    %191 = vmatprep.subr.bf16.mxu0 0
    %192 = vmatpush1.bf16.msra.mxu0 %v158
    %193 = vmatprep.subr.bf16.mxu0 0
    %194 = vmatpush1.bf16.msra.mxu0 %v159
    %195 = vmatprep.subr.bf16.mxu0 0
    %196 = vmatpush1.bf16.msra.mxu0 %v160
    %197 = vmatprep.subr.bf16.mxu0 0
    %198 = vmatpush1.bf16.msra.mxu0 %v161
    %199 = vmatprep.subr.bf16.mxu0 0
    %200 = vmatpush1.bf16.msra.mxu0 %v162
    %201 = vmatprep.subr.bf16.mxu0 0
    %202 = vmatpush1.bf16.msra.mxu0 %v163
    %203 = vmatprep.subr.bf16.mxu0 0
    %204 = vmatpush1.bf16.msra.mxu0 %v164
    %205 = vmatprep.subr.bf16.mxu0 0
    %206 = vmatpush1.bf16.msra.mxu0 %v165
    %207 = vmatprep.subr.bf16.mxu0 0
    %208 = vmatpush1.bf16.msra.mxu0 %v166
    %209 = vmatprep.subr.bf16.mxu0 0
    %210 = vmatpush1.bf16.msra.mxu0 %v167
    %211 = vmatprep.subr.bf16.mxu0 0
    %212 = vmatpush1.bf16.msra.mxu0 %v168
    %213 = vmatprep.subr.bf16.mxu0 0
    %214 = vmatpush1.bf16.msra.mxu0 %v169
    %215 = vmatprep.subr.bf16.mxu0 0
    %216 = vmatpush1.bf16.msra.mxu0 %v170
    %217 = vmatprep.subr.bf16.mxu0 0
    %218 = vmatpush1.bf16.msra.mxu0 %v171
    %219 = vmatprep.subr.bf16.mxu0 0
    %220 = vmatpush1.bf16.msra.mxu0 %v172
    %221 = vmatprep.mubr.bf16.mxu0 %v90
    %222 = vmatmul.mubr.bf16.gmra.mrb[0].mxu0 %v83
    %v223 = vpop.f32.mrb[0].mxu0
    %v224 = vadd.f32 %v66, %v223
    %v225 = vpop.f32.mrb[0].mxu0
    %v226 = vpop.f32.mrb[0].mxu0
    %v227 = vpop.f32.mrb[0].mxu0
    %228 = vdwg.mxu0
    %v229 = vmax.f32 %v224, 0.0
    %v230 = vpack.c.bf16 %v229, %v229
    %v231 = vld [vmem:[%s3] sm:$0xf]
    %v232 = vld [vmem:[%s3 + $0x4] sm:$0xf]
    %v233 = vld [vmem:[%s3 + $0x8] sm:$0xf]
    %v234 = vld [vmem:[%s3 + $0xc] sm:$0xf]
    %v235 = vld [vmem:[%s3 + $0x10] sm:$0xf]
    %v236 = vld [vmem:[%s3 + $0x14] sm:$0xf]
    %v237 = vld [vmem:[%s3 + $0x18] sm:$0xf]
    %v238 = vld [vmem:[%s3 + $0x1c] sm:$0xf]
    %v239 = vld [vmem:[%s4] sm:$0x1]
    %v241 = vlaneseq
    %v242 = vshrl.u32 %v241, 7
    %v243 = vsub.s32 0, %v242
    %v244 = vrot.slane %v239, %v243
    %v254 = vunpack.c.l.b16 %v231
    %v255 = vunpack.c.l.b16 %v232
    %v256 = vunpack.c.l.b16 %v233
    %v257 = vunpack.c.l.b16 %v234
    %v258 = vunpack.c.l.b16 %v235
    %v259 = vunpack.c.l.b16 %v236
    %v260 = vunpack.c.l.b16 %v237
    %v261 = vunpack.c.l.b16 %v238
    %v262 = vpack.c.b16 %v255, %v254
    %v263 = vpack.c.b16 %v257, %v256
    %v264 = vpack.c.b16 %v259, %v258
    %v265 = vpack.c.b16 %v261, %v260
    %vm270 = vcmask 523264
    %v272 = vsel %vm270, %v230, 0
    %274 = vmatprep.subr.bf16.mxu0 0
    %275 = vmatpush1.bf16.msra.mxu0 %v262
    %276 = vmatprep.subr.bf16.mxu0 0
    %277 = vmatpush1.bf16.msra.mxu0 %v263
    %278 = vmatprep.subr.bf16.mxu0 0
    %279 = vmatpush1.bf16.msra.mxu0 %v264
    %280 = vmatprep.subr.bf16.mxu0 0
    %281 = vmatpush1.bf16.msra.mxu0 %v265
    %282 = vmatprep.subr.bf16.mxu0 0
    %283 = vmatpush1.bf16.msra.mxu0 0
    %284 = vmatprep.subr.bf16.mxu0 0
    %285 = vmatpush1.bf16.msra.mxu0 0
    %286 = vmatprep.subr.bf16.mxu0 0
    %287 = vmatpush1.bf16.msra.mxu0 0
    %288 = vmatprep.subr.bf16.mxu0 0
    %289 = vmatpush1.bf16.msra.mxu0 0
    %290 = vmatprep.subr.bf16.mxu0 0
    %291 = vmatpush1.bf16.msra.mxu0 0
    %292 = vmatprep.subr.bf16.mxu0 0
    %293 = vmatpush1.bf16.msra.mxu0 0
    %294 = vmatprep.subr.bf16.mxu0 0
    %295 = vmatpush1.bf16.msra.mxu0 0
    %296 = vmatprep.subr.bf16.mxu0 0
    %297 = vmatpush1.bf16.msra.mxu0 0
    %298 = vmatprep.subr.bf16.mxu0 0
    %299 = vmatpush1.bf16.msra.mxu0 0
    %300 = vmatprep.subr.bf16.mxu0 0
    %301 = vmatpush1.bf16.msra.mxu0 0
    %302 = vmatprep.subr.bf16.mxu0 0
    %303 = vmatpush1.bf16.msra.mxu0 0
    %304 = vmatprep.subr.bf16.mxu0 0
    %305 = vmatpush1.bf16.msra.mxu0 0
    %306 = vmatprep.mubr.bf16.mxu0 0
    %307 = vmatmul.mubr.bf16.gmra.mrb[0].mxu0 %v272
    %v308 = vpop.f32.mrb[0].mxu0
    %v309 = vadd.f32 %v244, %v308
    %v310 = vpop.f32.mrb[0].mxu0
    %v311 = vpop.f32.mrb[0].mxu0
    %v312 = vpop.f32.mrb[0].mxu0
    %313 = vdwg.mxu0
    %v314 = vmax.f32 %v309, 0.0
    %v315 = vpack.c.bf16 %v314, %v314
    %v316 = vld [vmem:[%s5] sm:$0xf]
    %v317 = vld [vmem:[%s5 + $0x4] sm:$0xf]
    %v318 = vld [vmem:[%s5 + $0x8] sm:$0xf]
    %v319 = vld [vmem:[%s5 + $0xc] sm:$0xf]
    %v320 = vld [vmem:[%s5 + $0x10] sm:$0xf]
    %v321 = vld [vmem:[%s5 + $0x14] sm:$0xf]
    %v322 = vld [vmem:[%s5 + $0x18] sm:$0xf]
    %v323 = vld [vmem:[%s5 + $0x1c] sm:$0xf]
    %v324 = vld [vmem:[%s6] sm:$0x1]
    %v326 = vlaneseq
    %v327 = vshrl.u32 %v326, 7
    %v328 = vsub.s32 0, %v327
    %v329 = vrot.slane %v324, %v328
    %v339 = vunpack.c.l.b16 %v316
    %v340 = vunpack.c.l.b16 %v317
    %v341 = vunpack.c.l.b16 %v318
    %v342 = vunpack.c.l.b16 %v319
    %v343 = vunpack.c.l.b16 %v320
    %v344 = vunpack.c.l.b16 %v321
    %v345 = vunpack.c.l.b16 %v322
    %v346 = vunpack.c.l.b16 %v323
    %v347 = vpack.c.b16 %v340, %v339
    %v348 = vpack.c.b16 %v342, %v341
    %v349 = vpack.c.b16 %v344, %v343
    %v350 = vpack.c.b16 %v346, %v345
    %v356 = vsel %vm270, %v315, 0
    %358 = vmatprep.subr.bf16.mxu0 0
    %359 = vmatpush1.bf16.msra.mxu0 %v347
    %360 = vmatprep.subr.bf16.mxu0 0
    %361 = vmatpush1.bf16.msra.mxu0 %v348
    %362 = vmatprep.subr.bf16.mxu0 0
    %363 = vmatpush1.bf16.msra.mxu0 %v349
    %364 = vmatprep.subr.bf16.mxu0 0
    %365 = vmatpush1.bf16.msra.mxu0 %v350
    %366 = vmatprep.subr.bf16.mxu0 0
    %367 = vmatpush1.bf16.msra.mxu0 0
    %368 = vmatprep.subr.bf16.mxu0 0
    %369 = vmatpush1.bf16.msra.mxu0 0
    %370 = vmatprep.subr.bf16.mxu0 0
    %371 = vmatpush1.bf16.msra.mxu0 0
    %372 = vmatprep.subr.bf16.mxu0 0
    %373 = vmatpush1.bf16.msra.mxu0 0
    %374 = vmatprep.subr.bf16.mxu0 0
    %375 = vmatpush1.bf16.msra.mxu0 0
    %376 = vmatprep.subr.bf16.mxu0 0
    %377 = vmatpush1.bf16.msra.mxu0 0
    %378 = vmatprep.subr.bf16.mxu0 0
    %379 = vmatpush1.bf16.msra.mxu0 0
    %380 = vmatprep.subr.bf16.mxu0 0
    %381 = vmatpush1.bf16.msra.mxu0 0
    %382 = vmatprep.subr.bf16.mxu0 0
    %383 = vmatpush1.bf16.msra.mxu0 0
    %384 = vmatprep.subr.bf16.mxu0 0
    %385 = vmatpush1.bf16.msra.mxu0 0
    %386 = vmatprep.subr.bf16.mxu0 0
    %387 = vmatpush1.bf16.msra.mxu0 0
    %388 = vmatprep.subr.bf16.mxu0 0
    %389 = vmatpush1.bf16.msra.mxu0 0
    %390 = vmatprep.mubr.bf16.mxu0 0
    %391 = vmatmul.mubr.bf16.gmra.mrb[0].mxu0 %v356
    %v392 = vpop.f32.mrb[0].mxu0
    %v393 = vadd.f32 %v329, %v392
    %v394 = vpop.f32.mrb[0].mxu0
    %v395 = vpop.f32.mrb[0].mxu0
    %v396 = vpop.f32.mrb[0].mxu0
    %397 = vdwg.mxu0
    %v398 = vmul.f32 %v393, %v393
    %vm399 = vcmask 254976
    %v400 = vsel %vm399, %v398, 0.0
    %401 = vadd.xlane.f32.xlu0 %v400
    %v402 = vpop.xlane.xlu0 %401
    %v403 = vrsqrt.pop %v402
    %v404 = vmul.f32 %v393, %v403
    %405 = vst.msk [vmem:[#allocation2] sm:$0x3] %vm399, %v404
    // Predicated region
    $region30: #{img_encoder_fixed.5} parent=1 // pred_check
      _
    $region31: #{img_encoder_fixed.5} parent=1 // pred_check_branch
      %407 = sbr.rel (0) target = $region33
    $region32: #{img_encoder_fixed.5} parent=1 // pred_region
      %s409 = ssub.s32 32, 32
      %410 = vsyncadd [#allocation3], %s409
      %s412 = sshll.u32 [#allocation2], 4
      %s413 = int_to_ptr.vmem [resolvable:$true] %s412
      %415 = dma.vmem_to_hbm [thread:$0]  %s413, 32, %s7, [#allocation3]
    $region33: #{img_encoder_fixed.5} parent=1 // pred_fallthru
      _
    // Predicated region
    $region34: #{img_encoder_fixed.5} parent=1 // pred_check
      _
    $region35: #{img_encoder_fixed.5} parent=1 // pred_check_branch
      %417 = sbr.rel (0) target = $region37
    $region36: #{img_encoder_fixed.5} parent=1 // pred_region
      %418 = dma.done [#allocation3], 32
    $region37: #{img_encoder_fixed.5} parent=1 // pred_fallthru
      _
    %419 = vsyncpa [#allocation3], 1

// kernel: img_encoder_fixed.3
$region0: #{img_encoder_fixed.3}
  #allocation0 [shape = 'u32[]', space=smem, size = 0x4, offset = 0x4, fixed_abs, tag = 'smem constant byte address 0x4 - core index']
  #allocation1 [shape = 'u32[144,128]{1,0:T(1,128)}', space=vmem, size = 0x12000, scoped, tag = 'internal scratch']
  %s0 = inlined_call_operand.vmem [shape: f32[2,4,88,3], index: 0, kind: input, shape index: {}]
  %s1 = inlined_call_operand.vmem [shape: f32[9,3,8], index: 1, kind: input, shape index: {}]
  %s2 = inlined_call_operand.vmem [shape: f32[1,8], index: 2, kind: input, shape index: {}]
  %s3 = inlined_call_operand.vmem [shape: f32[2,72,8], index: 3, kind: output, shape index: {}]
  %s4 = sld [smem:[#allocation0]]
  $region45: #{img_encoder_fixed.3} parent=0
    _
  %s6 = ssub.s32 1, %s4
  %s7 = scalar_select 0, %s6, %s4
  loop: start=0, step=1, limit=4
  $region2: #{img_encoder_fixed.3} parent=0 // loop_pre_header
    _
  $region3: #{img_encoder_fixed.3} parent=0 // loop_header
    %s9 = sphi 0, %s13
    %p10 = scmp.ge.s32.totalorder %s9, 4
    %s19 = sphi 0, %s21
    %s22 = sphi 0, %s19
    %s23 = sphi 0, %s22
    %s39 = sphi 0, %s23
    %s43 = sphi 0, %s43
    %s45 = sphi 0, %s43
    %s46 = sphi 0, %s45
    %s60 = sphi 0, %s46
    %s64 = sphi 0, %s64
    %s66 = sphi 0, %s64
    %s67 = sphi 0, %s66
    %s81 = sphi 0, %s67
    %s87 = sphi 0, %s89
    %s90 = sphi 0, %s87
    %s91 = sphi 0, %s90
    %s107 = sphi 0, %s91
  $region4: #{img_encoder_fixed.3} parent=0 // loop_header_branch
    %12 = sbr.rel (%p10) target = $region8
  $region5: #{img_encoder_fixed.3} parent=0 // loop_body
    %s14 = ssub.s32 %s9, 1
    %s15 = ssub.s32 %s9, 2
    %s16 = sadd.s32 %s9, 1
    %s17 = ssub.s32 %s9, %s16
    %p18 = scmp.eq.s32.totalorder %s17, 0
    %s20 = sadd.s32 %s19, 1
    %s21 = scalar_select %p18, %s19, %s20
    %p24 = pneg %p18
    %p25 = scmp.eq.s32.totalorder %s9, 1
    %p26 = por %p24, %p25
    %p27 = scmp.ne.s32.totalorder %s19, %s22
    %p28 = scmp.eq.s32.totalorder %s9, 0
    %p29 = por %p27, %p28
    %p30 = scmp.ne.s32.totalorder %s19, %s22
    %p31 = scmp.eq.s32.totalorder %s14, 1
    %p32 = por %p30, %p31
    %p33 = scmp.ne.s32.totalorder %s22, %s23
    %p34 = scmp.eq.s32.totalorder %s14, 0
    %p35 = por %p33, %p34
    %p36 = scmp.ne.s32.totalorder %s22, %s23
    %p37 = scmp.eq.s32.totalorder %s15, 1
    %p38 = por %p36, %p37
    %p40 = scmp.ne.s32.totalorder %s23, %s39
    %p41 = scmp.eq.s32.totalorder %s15, 0
    %p42 = por %p40, %p41
    %s44 = sadd.s32 %s43, 1
    %p47 = scmp.eq.s32.totalorder %s9, 1
    %p48 = scmp.ne.s32.totalorder %s43, %s45
    %p49 = scmp.eq.s32.totalorder %s9, 0
    %p50 = por %p48, %p49
    %p51 = scmp.ne.s32.totalorder %s43, %s45
    %p52 = scmp.eq.s32.totalorder %s14, 1
    %p53 = por %p51, %p52
    %p54 = scmp.ne.s32.totalorder %s45, %s46
    %p55 = scmp.eq.s32.totalorder %s14, 0
    %p56 = por %p54, %p55
    %p57 = scmp.ne.s32.totalorder %s45, %s46
    %p58 = scmp.eq.s32.totalorder %s15, 1
    %p59 = por %p57, %p58
    %p61 = scmp.ne.s32.totalorder %s46, %s60
    %p62 = scmp.eq.s32.totalorder %s15, 0
    %p63 = por %p61, %p62
    %s65 = sadd.s32 %s64, 1
    %p68 = scmp.eq.s32.totalorder %s9, 1
    %p69 = scmp.ne.s32.totalorder %s64, %s66
    %p70 = scmp.eq.s32.totalorder %s9, 0
    %p71 = por %p69, %p70
    %p72 = scmp.ne.s32.totalorder %s64, %s66
    %p73 = scmp.eq.s32.totalorder %s14, 1
    %p74 = por %p72, %p73
    %p75 = scmp.ne.s32.totalorder %s66, %s67
    %p76 = scmp.eq.s32.totalorder %s14, 0
    %p77 = por %p75, %p76
    %p78 = scmp.ne.s32.totalorder %s66, %s67
    %p79 = scmp.eq.s32.totalorder %s15, 1
    %p80 = por %p78, %p79
    %p82 = scmp.ne.s32.totalorder %s67, %s81
    %p83 = scmp.eq.s32.totalorder %s15, 0
    %p84 = por %p82, %p83
    %s85 = ssub.s32 %s9, %s16
    %p86 = scmp.eq.s32.totalorder %s85, 0
    %s88 = sadd.s32 %s87, 1
    %s89 = scalar_select %p86, %s87, %s88
    %p92 = pneg %p86
    %p93 = scmp.eq.s32.totalorder %s9, 1
    %p94 = por %p92, %p93
    %p95 = scmp.ne.s32.totalorder %s87, %s90
    %p96 = scmp.eq.s32.totalorder %s9, 0
    %p97 = por %p95, %p96
    %p98 = scmp.ne.s32.totalorder %s87, %s90
    %p99 = scmp.eq.s32.totalorder %s14, 1
    %p100 = por %p98, %p99
    %p101 = scmp.ne.s32.totalorder %s90, %s91
    %p102 = scmp.eq.s32.totalorder %s14, 0
    %p103 = por %p101, %p102
    %p104 = scmp.ne.s32.totalorder %s90, %s91
    %p105 = scmp.eq.s32.totalorder %s15, 1
    %p106 = por %p104, %p105
    %p108 = scmp.ne.s32.totalorder %s91, %s107
    %p109 = scmp.eq.s32.totalorder %s15, 0
    %p110 = por %p108, %p109
    %p111 = scmp.le.s32.totalorder 1, %s9
    %p112 = scmp.lt.s32.totalorder %s9, 3
    %p113 = pnand %p111, %p112
    %p114 = pneg %p113
    // Predicated region
    $region9: #{img_encoder_fixed.3} parent=5 // pred_check
      _
    $region10: #{img_encoder_fixed.3} parent=5 // pred_check_branch
      %116 = sbr.rel (%p113) target = $region12
    $region11: #{img_encoder_fixed.3} parent=5 // pred_region
      %s117 = ssub.s32 %s9, 1
      // Predicated region
      $region13: #{img_encoder_fixed.3} parent=11 // pred_check
        %p118 = pneg %p56
      $region14: #{img_encoder_fixed.3} parent=11 // pred_check_branch
        %120 = sbr.rel (%p118) target = $region16
      $region15: #{img_encoder_fixed.3} parent=11 // pred_region
        _
      $region16: #{img_encoder_fixed.3} parent=11 // pred_fallthru
        _
      // Predicated region
      $region17: #{img_encoder_fixed.3} parent=11 // pred_check
        %p121 = pneg %p77
      $region18: #{img_encoder_fixed.3} parent=11 // pred_check_branch
        %123 = sbr.rel (%p121) target = $region20
      $region19: #{img_encoder_fixed.3} parent=11 // pred_region
        _
      $region20: #{img_encoder_fixed.3} parent=11 // pred_fallthru
        _
    $region12: #{img_encoder_fixed.3} parent=5 // pred_fallthru
      _
    %p124 = scmp.lt.s32.totalorder %s9, 2
    // Predicated region
    $region21: #{img_encoder_fixed.3} parent=5 // pred_check
      %p125 = pneg %p124
    $region22: #{img_encoder_fixed.3} parent=5 // pred_check_branch
      %127 = sbr.rel (%p125) target = $region24
    $region23: #{img_encoder_fixed.3} parent=5 // pred_region
      // Predicated region
      $region25: #{img_encoder_fixed.3} parent=23 // pred_check
        %p128 = pneg %p29
      $region26: #{img_encoder_fixed.3} parent=23 // pred_check_branch
        %130 = sbr.rel (%p128) target = $region28
      $region27: #{img_encoder_fixed.3} parent=23 // pred_region
        %p131 = scmp.lt.s32.totalorder %s9, 1
        %s132 = scalar_select %p131, %s9, 1
        %s133 = smul.addr %s132, 44
        %s134 = smul.addr %s133, 8
        %s135 = scalar_lea.vmem %s0, %s134
      $region28: #{img_encoder_fixed.3} parent=23 // pred_fallthru
        _
    $region24: #{img_encoder_fixed.3} parent=5 // pred_fallthru
      _
    %p136 = scmp.le.s32.totalorder 1, %s9
    %p137 = scmp.lt.s32.totalorder %s9, 3
    %p138 = pnand %p136, %p137
    %p139 = pneg %p138
    // Predicated region
    $region29: #{img_encoder_fixed.3} parent=5 // pred_check
      _
    $region30: #{img_encoder_fixed.3} parent=5 // pred_check_branch
      %141 = sbr.rel (%p138) target = $region32
    $region31: #{img_encoder_fixed.3} parent=5 // pred_region
      %s142 = ssub.s32 %s9, 1
      %p143 = scmp.lt.s32.totalorder %s14, 1
      %s144 = scalar_select %p143, %s14, 1
      %s145 = smul.addr %s144, 44
      %s146 = smul.addr %s145, 8
      %s147 = scalar_lea.vmem %s0, %s146
      %p148 = pneg %p35
      %p149 = pneg %p32
      %p150 = pneg %p56
      %p151 = pneg %p53
      %p152 = pneg %p77
      %p153 = pneg %p74
      %p154 = pneg %p103
      %p155 = pneg %p100
      %p156 = scmp.lt.s32.totalorder %s14, 1
      %s157 = scalar_select %p156, %s14, 1
      %s158 = smul.addr %s157, 9
      %s159 = smul.addr %s158, 8
      %s160 = scalar_lea.vmem %s3, %s159
      %p161 = scmp.lt.s32.totalorder %s14, 1
      %s162 = scalar_select %p161, %s14, 1
      %s163 = smul.addr %s162, 44
      %s164 = smul.addr %s163, 8
      %s165 = scalar_lea.vmem %s0, %s164
      %p166 = scmp.lt.s32.totalorder %s14, 1
      %s167 = scalar_select %p166, %s14, 1
      %s168 = smul.addr %s167, 9
      %s169 = smul.addr %s168, 8
      %s170 = scalar_lea.vmem %s3, %s169
      %v171 = vld [vmem:[%s165] sm:$0xff]
      %v172 = vld [vmem:[%s165 + $0x8] sm:$0xff]
      %v173 = vld [vmem:[%s165 + $0x10] sm:$0xff]
      %v174 = vld [vmem:[%s165 + $0x18] sm:$0xff]
      %v175 = vld [vmem:[%s165 + $0x20] sm:$0xff]
      %v176 = vld [vmem:[%s165 + $0x28] sm:$0xff]
      %v177 = vld [vmem:[%s165 + $0x30] sm:$0xff]
      %v178 = vld [vmem:[%s165 + $0x38] sm:$0xff]
      %v179 = vld [vmem:[%s165 + $0x40] sm:$0xff]
      %v180 = vld [vmem:[%s1] sm:$0x7]
      %s181 = scalar_lea.vmem %s165, 88
      %v182 = vld [vmem:[%s181] sm:$0xff]
      %v183 = vld [vmem:[%s181 + $0x8] sm:$0xff]
      %v184 = vld [vmem:[%s181 + $0x10] sm:$0xff]
      %v185 = vld [vmem:[%s181 + $0x18] sm:$0xff]
      %v186 = vld [vmem:[%s181 + $0x20] sm:$0xff]
      %v187 = vld [vmem:[%s181 + $0x28] sm:$0xff]
      %v188 = vld [vmem:[%s181 + $0x30] sm:$0xff]
      %v189 = vld [vmem:[%s181 + $0x38] sm:$0xff]
      %v190 = vld [vmem:[%s181 + $0x40] sm:$0xff]
      %s191 = scalar_lea.vmem %s1, 4
      %v192 = vld [vmem:[%s191] sm:$0x7]
      %vm193 = vcmask 23552
      %v195 = vsel %vm193, %v182, 0
      %v198 = vsel %vm193, %v183, 0
      %v201 = vsel %vm193, %v184, 0
      %v204 = vsel %vm193, %v185, 0
      %v207 = vsel %vm193, %v186, 0
      %v210 = vsel %vm193, %v187, 0
      %v213 = vsel %vm193, %v188, 0
      %v216 = vsel %vm193, %v189, 0
      %v219 = vsel %vm193, %v190, 0
      %vm221 = vcmask 1042432
      %v223 = vsel %vm221, %v192, 0
      %225 = vmatprep.subr.mxu0 0.0
      %226 = vmatpush1.msra.mxu0 %v223
      %227 = vmatprep.subr.mxu0 0.0
      %228 = vmatpush1.msra.mxu0 0.0
      %229 = vmatprep.subr.mxu0 0.0
      %230 = vmatpush1.msra.mxu0 0.0
      %231 = vmatprep.subr.mxu0 0.0
      %232 = vmatpush1.msra.mxu0 0.0
      %233 = vmatprep.subr.mxu0 0.0
      %234 = vmatpush1.msra.mxu0 0.0
      %235 = vmatprep.subr.mxu0 0.0
      %236 = vmatpush1.msra.mxu0 0.0
      %237 = vmatprep.subr.mxu0 0.0
      %238 = vmatpush1.msra.mxu0 0.0
      %239 = vmatprep.subr.mxu0 0.0
      %240 = vmatpush1.msra.mxu0 0.0
      %241 = vmatprep.subr.mxu0 0.0
      %242 = vmatpush1.msra.mxu0 0.0
      %243 = vmatprep.subr.mxu0 0.0
      %244 = vmatpush1.msra.mxu0 0.0
      %245 = vmatprep.subr.mxu0 0.0
      %246 = vmatpush1.msra.mxu0 0.0
      %247 = vmatprep.subr.mxu0 0.0
      %248 = vmatpush1.msra.mxu0 0.0
      %249 = vmatprep.subr.mxu0 0.0
      %250 = vmatpush1.msra.mxu0 0.0
      %251 = vmatprep.subr.mxu0 0.0
      %252 = vmatpush1.msra.mxu0 0.0
      %253 = vmatprep.subr.mxu0 0.0
      %254 = vmatpush1.msra.mxu0 0.0
      %255 = vmatprep.subr.mxu0 0.0
      %256 = vmatpush1.msra.mxu0 0.0
      %257 = vmatprep.subr.mxu0 0.0
      %258 = vmatpush1.msra.mxu0 0.0
      %259 = vmatprep.subr.mxu0 0.0
      %260 = vmatpush1.msra.mxu0 0.0
      %261 = vmatprep.subr.mxu0 0.0
      %262 = vmatpush1.msra.mxu0 0.0
      %263 = vmatprep.subr.mxu0 0.0
      %264 = vmatpush1.msra.mxu0 0.0
      %265 = vmatprep.subr.mxu0 0.0
      %266 = vmatpush1.msra.mxu0 0.0
      %267 = vmatprep.subr.mxu0 0.0
      %268 = vmatpush1.msra.mxu0 0.0
      %269 = vmatprep.subr.mxu0 0.0
      %270 = vmatpush1.msra.mxu0 0.0
      %271 = vmatprep.subr.mxu0 0.0
      %272 = vmatpush1.msra.mxu0 0.0
      %273 = vmatprep.subr.mxu0 0.0
      %274 = vmatpush1.msra.mxu0 0.0
      %275 = vmatprep.subr.mxu0 0.0
      %276 = vmatpush1.msra.mxu0 0.0
      %277 = vmatprep.subr.mxu0 0.0
      %278 = vmatpush1.msra.mxu0 0.0
      %279 = vmatprep.subr.mxu0 0.0
      %280 = vmatpush1.msra.mxu0 0.0
      %281 = vmatprep.subr.mxu0 0.0
      %282 = vmatpush1.msra.mxu0 0.0
      %283 = vmatprep.subr.mxu0 0.0
      %284 = vmatpush1.msra.mxu0 0.0
      %285 = vmatprep.subr.mxu0 0.0
      %286 = vmatpush1.msra.mxu0 0.0
      %287 = vmatprep.subr.mxu0 0.0
      %288 = vmatpush1.msra.mxu0 0.0
      %289 = vmatprep.mubr.f32.mxu0 0.0
      %290 = vmatmul.mubr.f32.gmra.mrb[0].mxu0 %v195
      %v291 = vpop.f32.mrb[0].mxu0
      %v292 = vadd.f32 0.0, %v291
      %v293 = vpop.f32.mrb[0].mxu0
      %294 = vmatprep.mubr.f32.mxu0 0.0
      %295 = vmatmul.mubr.f32.gmra.mrb[0].mxu0 %v198
      %v296 = vpop.f32.mrb[0].mxu0
      %v297 = vadd.f32 0.0, %v296
      %v298 = vpop.f32.mrb[0].mxu0
      %299 = vmatprep.mubr.f32.mxu0 0.0
      %300 = vmatmul.mubr.f32.gmra.mrb[0].mxu0 %v201
      %v301 = vpop.f32.mrb[0].mxu0
      %v302 = vadd.f32 0.0, %v301
      %v303 = vpop.f32.mrb[0].mxu0
      %304 = vmatprep.mubr.f32.mxu0 0.0
      %305 = vmatmul.mubr.f32.gmra.mrb[0].mxu0 %v204
      %v306 = vpop.f32.mrb[0].mxu0
      %v307 = vadd.f32 0.0, %v306
      %v308 = vpop.f32.mrb[0].mxu0
      %309 = vmatprep.mubr.f32.mxu0 0.0
      %310 = vmatmul.mubr.f32.gmra.mrb[0].mxu0 %v207
      %v311 = vpop.f32.mrb[0].mxu0
      %v312 = vadd.f32 0.0, %v311
      %v313 = vpop.f32.mrb[0].mxu0
      %314 = vmatprep.mubr.f32.mxu0 0.0
      %315 = vmatmul.mubr.f32.gmra.mrb[0].mxu0 %v210
      %v316 = vpop.f32.mrb[0].mxu0
      %v317 = vadd.f32 0.0, %v316
      %v318 = vpop.f32.mrb[0].mxu0
      %319 = vmatprep.mubr.f32.mxu0 0.0
      %320 = vmatmul.mubr.f32.gmra.mrb[0].mxu0 %v213
      %v321 = vpop.f32.mrb[0].mxu0
      %v322 = vadd.f32 0.0, %v321
      %v323 = vpop.f32.mrb[0].mxu0
      %324 = vmatprep.mubr.f32.mxu0 0.0
      %325 = vmatmul.mubr.f32.gmra.mrb[0].mxu0 %v216
      %v326 = vpop.f32.mrb[0].mxu0
      %v327 = vadd.f32 0.0, %v326
      %v328 = vpop.f32.mrb[0].mxu0
      %329 = vmatprep.mubr.f32.mxu0 0.0
      %330 = vmatmul.mubr.f32.gmra.mrb[0].mxu0 %v219
      %v331 = vpop.f32.mrb[0].mxu0
      %v332 = vadd.f32 0.0, %v331
      %v333 = vpop.f32.mrb[0].mxu0
      %334 = vdwg.mxu0
      %v336 = vsel %vm193, %v171, 0
      %v339 = vsel %vm193, %v172, 0
      %v342 = vsel %vm193, %v173, 0
      %v345 = vsel %vm193, %v174, 0
      %v348 = vsel %vm193, %v175, 0
      %v351 = vsel %vm193, %v176, 0
      %v354 = vsel %vm193, %v177, 0
      %v357 = vsel %vm193, %v178, 0
      %v360 = vsel %vm193, %v179, 0
      %v363 = vsel %vm221, %v180, 0
      %365 = vmatprep.subr.mxu0 0.0
      %366 = vmatpush1.msra.mxu0 %v363
      %367 = vmatprep.subr.mxu0 0.0
      %368 = vmatpush1.msra.mxu0 0.0
      %369 = vmatprep.subr.mxu0 0.0
      %370 = vmatpush1.msra.mxu0 0.0
      %371 = vmatprep.subr.mxu0 0.0
      %372 = vmatpush1.msra.mxu0 0.0
      %373 = vmatprep.subr.mxu0 0.0
      %374 = vmatpush1.msra.mxu0 0.0
      %375 = vmatprep.subr.mxu0 0.0
      %376 = vmatpush1.msra.mxu0 0.0
      %377 = vmatprep.subr.mxu0 0.0
      %378 = vmatpush1.msra.mxu0 0.0
      %379 = vmatprep.subr.mxu0 0.0
      %380 = vmatpush1.msra.mxu0 0.0
      %381 = vmatprep.subr.mxu0 0.0
      %382 = vmatpush1.msra.mxu0 0.0
      %383 = vmatprep.subr.mxu0 0.0
      %384 = vmatpush1.msra.mxu0 0.0
      %385 = vmatprep.subr.mxu0 0.0
      %386 = vmatpush1.msra.mxu0 0.0
      %387 = vmatprep.subr.mxu0 0.0
      %388 = vmatpush1.msra.mxu0 0.0
      %389 = vmatprep.subr.mxu0 0.0
      %390 = vmatpush1.msra.mxu0 0.0
      %391 = vmatprep.subr.mxu0 0.0
      %392 = vmatpush1.msra.mxu0 0.0
      %393 = vmatprep.subr.mxu0 0.0
      %394 = vmatpush1.msra.mxu0 0.0
      %395 = vmatprep.subr.mxu0 0.0
      %396 = vmatpush1.msra.mxu0 0.0
      %397 = vmatprep.subr.mxu0 0.0
      %398 = vmatpush1.msra.mxu0 0.0
      %399 = vmatprep.subr.mxu0 0.0
      %400 = vmatpush1.msra.mxu0 0.0
      %401 = vmatprep.subr.mxu0 0.0
      %402 = vmatpush1.msra.mxu0 0.0
      %403 = vmatprep.subr.mxu0 0.0
      %404 = vmatpush1.msra.mxu0 0.0
      %405 = vmatprep.subr.mxu0 0.0
      %406 = vmatpush1.msra.mxu0 0.0
      %407 = vmatprep.subr.mxu0 0.0
      %408 = vmatpush1.msra.mxu0 0.0
      %409 = vmatprep.subr.mxu0 0.0
      %410 = vmatpush1.msra.mxu0 0.0
      %411 = vmatprep.subr.mxu0 0.0
      %412 = vmatpush1.msra.mxu0 0.0
      %413 = vmatprep.subr.mxu0 0.0
      %414 = vmatpush1.msra.mxu0 0.0
      %415 = vmatprep.subr.mxu0 0.0
      %416 = vmatpush1.msra.mxu0 0.0
      %417 = vmatprep.subr.mxu0 0.0
      %418 = vmatpush1.msra.mxu0 0.0
      %419 = vmatprep.subr.mxu0 0.0
      %420 = vmatpush1.msra.mxu0 0.0
      %421 = vmatprep.subr.mxu0 0.0
      %422 = vmatpush1.msra.mxu0 0.0
      %423 = vmatprep.subr.mxu0 0.0
      %424 = vmatpush1.msra.mxu0 0.0
      %425 = vmatprep.subr.mxu0 0.0
      %426 = vmatpush1.msra.mxu0 0.0
      %427 = vmatprep.subr.mxu0 0.0
      %428 = vmatpush1.msra.mxu0 0.0
      %429 = vmatprep.mubr.f32.mxu0 0.0
      %430 = vmatmul.mubr.f32.gmra.mrb[0].mxu0 %v336
      %v431 = vpop.f32.mrb[0].mxu0
      %v432 = vadd.f32 %v292, %v431
      %v433 = vpop.f32.mrb[0].mxu0
      %434 = vmatprep.mubr.f32.mxu0 0.0
      %435 = vmatmul.mubr.f32.gmra.mrb[0].mxu0 %v339
      %v436 = vpop.f32.mrb[0].mxu0
      %v437 = vadd.f32 %v297, %v436
      %v438 = vpop.f32.mrb[0].mxu0
      %439 = vmatprep.mubr.f32.mxu0 0.0
      %440 = vmatmul.mubr.f32.gmra.mrb[0].mxu0 %v342
      %v441 = vpop.f32.mrb[0].mxu0
      %v442 = vadd.f32 %v302, %v441
      %v443 = vpop.f32.mrb[0].mxu0
      %444 = vmatprep.mubr.f32.mxu0 0.0
      %445 = vmatmul.mubr.f32.gmra.mrb[0].mxu0 %v345
      %v446 = vpop.f32.mrb[0].mxu0
      %v447 = vadd.f32 %v307, %v446
      %v448 = vpop.f32.mrb[0].mxu0
      %449 = vmatprep.mubr.f32.mxu0 0.0
      %450 = vmatmul.mubr.f32.gmra.mrb[0].mxu0 %v348
      %v451 = vpop.f32.mrb[0].mxu0
      %v452 = vadd.f32 %v312, %v451
      %v453 = vpop.f32.mrb[0].mxu0
      %454 = vmatprep.mubr.f32.mxu0 0.0
      %455 = vmatmul.mubr.f32.gmra.mrb[0].mxu0 %v351
      %v456 = vpop.f32.mrb[0].mxu0
      %v457 = vadd.f32 %v317, %v456
      %v458 = vpop.f32.mrb[0].mxu0
      %459 = vmatprep.mubr.f32.mxu0 0.0
      %460 = vmatmul.mubr.f32.gmra.mrb[0].mxu0 %v354
      %v461 = vpop.f32.mrb[0].mxu0
      %v462 = vadd.f32 %v322, %v461
      %v463 = vpop.f32.mrb[0].mxu0
      %464 = vmatprep.mubr.f32.mxu0 0.0
      %465 = vmatmul.mubr.f32.gmra.mrb[0].mxu0 %v357
      %v466 = vpop.f32.mrb[0].mxu0
      %v467 = vadd.f32 %v327, %v466
      %v468 = vpop.f32.mrb[0].mxu0
      %469 = vmatprep.mubr.f32.mxu0 0.0
      %470 = vmatmul.mubr.f32.gmra.mrb[0].mxu0 %v360
      %v471 = vpop.f32.mrb[0].mxu0
      %v472 = vadd.f32 %v332, %v471
      %v473 = vpop.f32.mrb[0].mxu0
      %474 = vdwg.mxu0
      %v475 = vld [vmem:[%s165 + $0x1] sm:$0xff]
      %v476 = vld [vmem:[%s165 + $0x9] sm:$0xff]
      %v477 = vld [vmem:[%s165 + $0x11] sm:$0xff]
      %v478 = vld [vmem:[%s165 + $0x19] sm:$0xff]
      %v479 = vld [vmem:[%s165 + $0x21] sm:$0xff]
      %v480 = vld [vmem:[%s165 + $0x29] sm:$0xff]
      %v481 = vld [vmem:[%s165 + $0x31] sm:$0xff]
      %v482 = vld [vmem:[%s165 + $0x39] sm:$0xff]
      %v483 = vld [vmem:[%s165 + $0x41] sm:$0xff]
      %s484 = scalar_lea.vmem %s1, 8
      %v485 = vld [vmem:[%s484] sm:$0x7]
      %v487 = vsel %vm193, %v475, 0
      %v490 = vsel %vm193, %v476, 0
      %v493 = vsel %vm193, %v477, 0
      %v496 = vsel %vm193, %v478, 0
      %v499 = vsel %vm193, %v479, 0
      %v502 = vsel %vm193, %v480, 0
      %v505 = vsel %vm193, %v481, 0
      %v508 = vsel %vm193, %v482, 0
      %v511 = vsel %vm193, %v483, 0
      %v514 = vsel %vm221, %v485, 0
      %516 = vmatprep.subr.mxu0 0.0
      %517 = vmatpush1.msra.mxu0 %v514
      %518 = vmatprep.subr.mxu0 0.0
      %519 = vmatpush1.msra.mxu0 0.0
      %520 = vmatprep.subr.mxu0 0.0
      %521 = vmatpush1.msra.mxu0 0.0
      %522 = vmatprep.subr.mxu0 0.0
      %523 = vmatpush1.msra.mxu0 0.0
      %524 = vmatprep.subr.mxu0 0.0
      %525 = vmatpush1.msra.mxu0 0.0
      %526 = vmatprep.subr.mxu0 0.0
      %527 = vmatpush1.msra.mxu0 0.0
      %528 = vmatprep.subr.mxu0 0.0
      %529 = vmatpush1.msra.mxu0 0.0
      %530 = vmatprep.subr.mxu0 0.0
      %531 = vmatpush1.msra.mxu0 0.0
      %532 = vmatprep.subr.mxu0 0.0
      %533 = vmatpush1.msra.mxu0 0.0
      %534 = vmatprep.subr.mxu0 0.0
      %535 = vmatpush1.msra.mxu0 0.0
      %536 = vmatprep.subr.mxu0 0.0
      %537 = vmatpush1.msra.mxu0 0.0
      %538 = vmatprep.subr.mxu0 0.0
      %539 = vmatpush1.msra.mxu0 0.0
      %540 = vmatprep.subr.mxu0 0.0
      %541 = vmatpush1.msra.mxu0 0.0
      %542 = vmatprep.subr.mxu0 0.0
      %543 = vmatpush1.msra.mxu0 0.0
      %544 = vmatprep.subr.mxu0 0.0
      %545 = vmatpush1.msra.mxu0 0.0
      %546 = vmatprep.subr.mxu0 0.0
      %547 = vmatpush1.msra.mxu0 0.0
      %548 = vmatprep.subr.mxu0 0.0
      %549 = vmatpush1.msra.mxu0 0.0
      %550 = vmatprep.subr.mxu0 0.0
      %551 = vmatpush1.msra.mxu0 0.0
      %552 = vmatprep.subr.mxu0 0.0
      %553 = vmatpush1.msra.mxu0 0.0
      %554 = vmatprep.subr.mxu0 0.0
      %555 = vmatpush1.msra.mxu0 0.0
      %556 = vmatprep.subr.mxu0 0.0
      %557 = vmatpush1.msra.mxu0 0.0
      %558 = vmatprep.subr.mxu0 0.0
      %559 = vmatpush1.msra.mxu0 0.0
      %560 = vmatprep.subr.mxu0 0.0
      %561 = vmatpush1.msra.mxu0 0.0
      %562 = vmatprep.subr.mxu0 0.0
      %563 = vmatpush1.msra.mxu0 0.0
      %564 = vmatprep.subr.mxu0 0.0
      %565 = vmatpush1.msra.mxu0 0.0
      %566 = vmatprep.subr.mxu0 0.0
      %567 = vmatpush1.msra.mxu0 0.0
      %568 = vmatprep.subr.mxu0 0.0
      %569 = vmatpush1.msra.mxu0 0.0
      %570 = vmatprep.subr.mxu0 0.0
      %571 = vmatpush1.msra.mxu0 0.0
      %572 = vmatprep.subr.mxu0 0.0
      %573 = vmatpush1.msra.mxu0 0.0
      %574 = vmatprep.subr.mxu0 0.0
      %575 = vmatpush1.msra.mxu0 0.0
      %576 = vmatprep.subr.mxu0 0.0
      %577 = vmatpush1.msra.mxu0 0.0
      %578 = vmatprep.subr.mxu0 0.0
      %579 = vmatpush1.msra.mxu0 0.0
      %580 = vmatprep.mubr.f32.mxu0 0.0
      %581 = vmatmul.mubr.f32.gmra.mrb[0].mxu0 %v487
      %v582 = vpop.f32.mrb[0].mxu0
      %v583 = vadd.f32 0.0, %v582
      %v584 = vpop.f32.mrb[0].mxu0
      %585 = vmatprep.mubr.f32.mxu0 0.0
      %586 = vmatmul.mubr.f32.gmra.mrb[0].mxu0 %v490
      %v587 = vpop.f32.mrb[0].mxu0
      %v588 = vadd.f32 0.0, %v587
      %v589 = vpop.f32.mrb[0].mxu0
      %590 = vmatprep.mubr.f32.mxu0 0.0
      %591 = vmatmul.mubr.f32.gmra.mrb[0].mxu0 %v493
      %v592 = vpop.f32.mrb[0].mxu0
      %v593 = vadd.f32 0.0, %v592
      %v594 = vpop.f32.mrb[0].mxu0
      %595 = vmatprep.mubr.f32.mxu0 0.0
      %596 = vmatmul.mubr.f32.gmra.mrb[0].mxu0 %v496
      %v597 = vpop.f32.mrb[0].mxu0
      %v598 = vadd.f32 0.0, %v597
      %v599 = vpop.f32.mrb[0].mxu0
      %600 = vmatprep.mubr.f32.mxu0 0.0
      %601 = vmatmul.mubr.f32.gmra.mrb[0].mxu0 %v499
      %v602 = vpop.f32.mrb[0].mxu0
      %v603 = vadd.f32 0.0, %v602
      %v604 = vpop.f32.mrb[0].mxu0
      %605 = vmatprep.mubr.f32.mxu0 0.0
      %606 = vmatmul.mubr.f32.gmra.mrb[0].mxu0 %v502
      %v607 = vpop.f32.mrb[0].mxu0
      %v608 = vadd.f32 0.0, %v607
      %v609 = vpop.f32.mrb[0].mxu0
      %610 = vmatprep.mubr.f32.mxu0 0.0
      %611 = vmatmul.mubr.f32.gmra.mrb[0].mxu0 %v505
      %v612 = vpop.f32.mrb[0].mxu0
      %v613 = vadd.f32 0.0, %v612
      %v614 = vpop.f32.mrb[0].mxu0
      %615 = vmatprep.mubr.f32.mxu0 0.0
      %616 = vmatmul.mubr.f32.gmra.mrb[0].mxu0 %v508
      %v617 = vpop.f32.mrb[0].mxu0
      %v618 = vadd.f32 0.0, %v617
      %v619 = vpop.f32.mrb[0].mxu0
      %620 = vmatprep.mubr.f32.mxu0 0.0
      %621 = vmatmul.mubr.f32.gmra.mrb[0].mxu0 %v511
      %v622 = vpop.f32.mrb[0].mxu0
      %v623 = vadd.f32 0.0, %v622
      %v624 = vpop.f32.mrb[0].mxu0
      %625 = vdwg.mxu0
      %v626 = vadd.f32 %v432, %v583
      %v627 = vadd.f32 %v437, %v588
      %v628 = vadd.f32 %v442, %v593
      %v629 = vadd.f32 %v447, %v598
      %v630 = vadd.f32 %v452, %v603
      %v631 = vadd.f32 %v457, %v608
      %v632 = vadd.f32 %v462, %v613
      %v633 = vadd.f32 %v467, %v618
      %v634 = vadd.f32 %v472, %v623
      %s635 = scalar_lea.vmem %s165, 176
      %v636 = vld [vmem:[%s635] sm:$0xff]
      %v637 = vld [vmem:[%s635 + $0x8] sm:$0xff]
      %v638 = vld [vmem:[%s635 + $0x10] sm:$0xff]
      %v639 = vld [vmem:[%s635 + $0x18] sm:$0xff]
      %v640 = vld [vmem:[%s635 + $0x20] sm:$0xff]
      %v641 = vld [vmem:[%s635 + $0x28] sm:$0xff]
      %v642 = vld [vmem:[%s635 + $0x30] sm:$0xff]
      %v643 = vld [vmem:[%s635 + $0x38] sm:$0xff]
      %v644 = vld [vmem:[%s635 + $0x40] sm:$0xff]
      %s645 = scalar_lea.vmem %s1, 12
      %v646 = vld [vmem:[%s645] sm:$0x7]
      %v648 = vsel %vm193, %v636, 0
      %v651 = vsel %vm193, %v637, 0
      %v654 = vsel %vm193, %v638, 0
      %v657 = vsel %vm193, %v639, 0
      %v660 = vsel %vm193, %v640, 0
      %v663 = vsel %vm193, %v641, 0
      %v666 = vsel %vm193, %v642, 0
      %v669 = vsel %vm193, %v643, 0
      %v672 = vsel %vm193, %v644, 0
      %v675 = vsel %vm221, %v646, 0
      %677 = vmatprep.subr.mxu0 0.0
      %678 = vmatpush1.msra.mxu0 %v675
      %679 = vmatprep.subr.mxu0 0.0
      %680 = vmatpush1.msra.mxu0 0.0
      %681 = vmatprep.subr.mxu0 0.0
      %682 = vmatpush1.msra.mxu0 0.0
      %683 = vmatprep.subr.mxu0 0.0
      %684 = vmatpush1.msra.mxu0 0.0
      %685 = vmatprep.subr.mxu0 0.0
      %686 = vmatpush1.msra.mxu0 0.0
      %687 = vmatprep.subr.mxu0 0.0
      %688 = vmatpush1.msra.mxu0 0.0
      %689 = vmatprep.subr.mxu0 0.0
      %690 = vmatpush1.msra.mxu0 0.0
      %691 = vmatprep.subr.mxu0 0.0
      %692 = vmatpush1.msra.mxu0 0.0
      %693 = vmatprep.subr.mxu0 0.0
      %694 = vmatpush1.msra.mxu0 0.0
      %695 = vmatprep.subr.mxu0 0.0
      %696 = vmatpush1.msra.mxu0 0.0
      %697 = vmatprep.subr.mxu0 0.0
      %698 = vmatpush1.msra.mxu0 0.0
      %699 = vmatprep.subr.mxu0 0.0
      %700 = vmatpush1.msra.mxu0 0.0
      %701 = vmatprep.subr.mxu0 0.0
      %702 = vmatpush1.msra.mxu0 0.0
      %703 = vmatprep.subr.mxu0 0.0
      %704 = vmatpush1.msra.mxu0 0.0
      %705 = vmatprep.subr.mxu0 0.0
      %706 = vmatpush1.msra.mxu0 0.0
      %707 = vmatprep.subr.mxu0 0.0
      %708 = vmatpush1.msra.mxu0 0.0
      %709 = vmatprep.subr.mxu0 0.0
      %710 = vmatpush1.msra.mxu0 0.0
      %711 = vmatprep.subr.mxu0 0.0
      %712 = vmatpush1.msra.mxu0 0.0
      %713 = vmatprep.subr.mxu0 0.0
      %714 = vmatpush1.msra.mxu0 0.0
      %715 = vmatprep.subr.mxu0 0.0
      %716 = vmatpush1.msra.mxu0 0.0
      %717 = vmatprep.subr.mxu0 0.0
      %718 = vmatpush1.msra.mxu0 0.0
      %719 = vmatprep.subr.mxu0 0.0
      %720 = vmatpush1.msra.mxu0 0.0
      %721 = vmatprep.subr.mxu0 0.0
      %722 = vmatpush1.msra.mxu0 0.0
      %723 = vmatprep.subr.mxu0 0.0
      %724 = vmatpush1.msra.mxu0 0.0
      %725 = vmatprep.subr.mxu0 0.0
      %726 = vmatpush1.msra.mxu0 0.0
      %727 = vmatprep.subr.mxu0 0.0
      %728 = vmatpush1.msra.mxu0 0.0
      %729 = vmatprep.subr.mxu0 0.0
      %730 = vmatpush1.msra.mxu0 0.0
      %731 = vmatprep.subr.mxu0 0.0
      %732 = vmatpush1.msra.mxu0 0.0
      %733 = vmatprep.subr.mxu0 0.0
      %734 = vmatpush1.msra.mxu0 0.0
      %735 = vmatprep.subr.mxu0 0.0
      %736 = vmatpush1.msra.mxu0 0.0
      %737 = vmatprep.subr.mxu0 0.0
      %738 = vmatpush1.msra.mxu0 0.0
      %739 = vmatprep.subr.mxu0 0.0
      %740 = vmatpush1.msra.mxu0 0.0
      %741 = vmatprep.mubr.f32.mxu0 0.0
      %742 = vmatmul.mubr.f32.gmra.mrb[0].mxu0 %v648
      %v743 = vpop.f32.mrb[0].mxu0
      %v744 = vadd.f32 0.0, %v743
      %v745 = vpop.f32.mrb[0].mxu0
      %746 = vmatprep.mubr.f32.mxu0 0.0
      %747 = vmatmul.mubr.f32.gmra.mrb[0].mxu0 %v651
      %v748 = vpop.f32.mrb[0].mxu0
      %v749 = vadd.f32 0.0, %v748
      %v750 = vpop.f32.mrb[0].mxu0
      %751 = vmatprep.mubr.f32.mxu0 0.0
      %752 = vmatmul.mubr.f32.gmra.mrb[0].mxu0 %v654
      %v753 = vpop.f32.mrb[0].mxu0
      %v754 = vadd.f32 0.0, %v753
      %v755 = vpop.f32.mrb[0].mxu0
      %756 = vmatprep.mubr.f32.mxu0 0.0
      %757 = vmatmul.mubr.f32.gmra.mrb[0].mxu0 %v657
      %v758 = vpop.f32.mrb[0].mxu0
      %v759 = vadd.f32 0.0, %v758
      %v760 = vpop.f32.mrb[0].mxu0
      %761 = vmatprep.mubr.f32.mxu0 0.0
      %762 = vmatmul.mubr.f32.gmra.mrb[0].mxu0 %v660
      %v763 = vpop.f32.mrb[0].mxu0
      %v764 = vadd.f32 0.0, %v763
      %v765 = vpop.f32.mrb[0].mxu0
      %766 = vmatprep.mubr.f32.mxu0 0.0
      %767 = vmatmul.mubr.f32.gmra.mrb[0].mxu0 %v663
      %v768 = vpop.f32.mrb[0].mxu0
      %v769 = vadd.f32 0.0, %v768
      %v770 = vpop.f32.mrb[0].mxu0
      %771 = vmatprep.mubr.f32.mxu0 0.0
      %772 = vmatmul.mubr.f32.gmra.mrb[0].mxu0 %v666
      %v773 = vpop.f32.mrb[0].mxu0
      %v774 = vadd.f32 0.0, %v773
      %v775 = vpop.f32.mrb[0].mxu0
      %776 = vmatprep.mubr.f32.mxu0 0.0
      %777 = vmatmul.mubr.f32.gmra.mrb[0].mxu0 %v669
      %v778 = vpop.f32.mrb[0].mxu0
      %v779 = vadd.f32 0.0, %v778
      %v780 = vpop.f32.mrb[0].mxu0
      %781 = vmatprep.mubr.f32.mxu0 0.0
      %782 = vmatmul.mubr.f32.gmra.mrb[0].mxu0 %v672
      %v783 = vpop.f32.mrb[0].mxu0
      %v784 = vadd.f32 0.0, %v783
      %v785 = vpop.f32.mrb[0].mxu0
      %786 = vdwg.mxu0
      %v787 = vadd.f32 %v626, %v744
      %v788 = vadd.f32 %v627, %v749
      %v789 = vadd.f32 %v628, %v754
      %v790 = vadd.f32 %v629, %v759
      %v791 = vadd.f32 %v630, %v764
      %v792 = vadd.f32 %v631, %v769
      %v793 = vadd.f32 %v632, %v774
      %v794 = vadd.f32 %v633, %v779
      %v795 = vadd.f32 %v634, %v784
      %s796 = scalar_lea.vmem %s165, 264
      %v797 = vld [vmem:[%s796] sm:$0xff]
      %v798 = vld [vmem:[%s796 + $0x8] sm:$0xff]
      %v799 = vld [vmem:[%s796 + $0x10] sm:$0xff]
      %v800 = vld [vmem:[%s796 + $0x18] sm:$0xff]
      %v801 = vld [vmem:[%s796 + $0x20] sm:$0xff]
      %v802 = vld [vmem:[%s796 + $0x28] sm:$0xff]
      %v803 = vld [vmem:[%s796 + $0x30] sm:$0xff]
      %v804 = vld [vmem:[%s796 + $0x38] sm:$0xff]
      %v805 = vld [vmem:[%s796 + $0x40] sm:$0xff]
      %s806 = scalar_lea.vmem %s1, 16
      %v807 = vld [vmem:[%s806] sm:$0x7]
      %v809 = vsel %vm193, %v797, 0
      %v812 = vsel %vm193, %v798, 0
      %v815 = vsel %vm193, %v799, 0
      %v818 = vsel %vm193, %v800, 0
      %v821 = vsel %vm193, %v801, 0
      %v824 = vsel %vm193, %v802, 0
      %v827 = vsel %vm193, %v803, 0
      %v830 = vsel %vm193, %v804, 0
      %v833 = vsel %vm193, %v805, 0
      %v836 = vsel %vm221, %v807, 0
      %838 = vmatprep.subr.mxu0 0.0
      %839 = vmatpush1.msra.mxu0 %v836
      %840 = vmatprep.subr.mxu0 0.0
      %841 = vmatpush1.msra.mxu0 0.0
      %842 = vmatprep.subr.mxu0 0.0
      %843 = vmatpush1.msra.mxu0 0.0
      %844 = vmatprep.subr.mxu0 0.0
      %845 = vmatpush1.msra.mxu0 0.0
      %846 = vmatprep.subr.mxu0 0.0
      %847 = vmatpush1.msra.mxu0 0.0
      %848 = vmatprep.subr.mxu0 0.0
      %849 = vmatpush1.msra.mxu0 0.0
      %850 = vmatprep.subr.mxu0 0.0
      %851 = vmatpush1.msra.mxu0 0.0
      %852 = vmatprep.subr.mxu0 0.0
      %853 = vmatpush1.msra.mxu0 0.0
      %854 = vmatprep.subr.mxu0 0.0
      %855 = vmatpush1.msra.mxu0 0.0
      %856 = vmatprep.subr.mxu0 0.0
      %857 = vmatpush1.msra.mxu0 0.0
      %858 = vmatprep.subr.mxu0 0.0
      %859 = vmatpush1.msra.mxu0 0.0
      %860 = vmatprep.subr.mxu0 0.0
      %861 = vmatpush1.msra.mxu0 0.0
      %862 = vmatprep.subr.mxu0 0.0
      %863 = vmatpush1.msra.mxu0 0.0
      %864 = vmatprep.subr.mxu0 0.0
      %865 = vmatpush1.msra.mxu0 0.0
      %866 = vmatprep.subr.mxu0 0.0
      %867 = vmatpush1.msra.mxu0 0.0
      %868 = vmatprep.subr.mxu0 0.0
      %869 = vmatpush1.msra.mxu0 0.0
      %870 = vmatprep.subr.mxu0 0.0
      %871 = vmatpush1.msra.mxu0 0.0
      %872 = vmatprep.subr.mxu0 0.0
      %873 = vmatpush1.msra.mxu0 0.0
      %874 = vmatprep.subr.mxu0 0.0
      %875 = vmatpush1.msra.mxu0 0.0
      %876 = vmatprep.subr.mxu0 0.0
      %877 = vmatpush1.msra.mxu0 0.0
      %878 = vmatprep.subr.mxu0 0.0
      %879 = vmatpush1.msra.mxu0 0.0
      %880 = vmatprep.subr.mxu0 0.0
      %881 = vmatpush1.msra.mxu0 0.0
      %882 = vmatprep.subr.mxu0 0.0
      %883 = vmatpush1.msra.mxu0 0.0
      %884 = vmatprep.subr.mxu0 0.0
      %885 = vmatpush1.msra.mxu0 0.0
      %886 = vmatprep.subr.mxu0 0.0
      %887 = vmatpush1.msra.mxu0 0.0
      %888 = vmatprep.subr.mxu0 0.0
      %889 = vmatpush1.msra.mxu0 0.0
      %890 = vmatprep.subr.mxu0 0.0
      %891 = vmatpush1.msra.mxu0 0.0
      %892 = vmatprep.subr.mxu0 0.0
      %893 = vmatpush1.msra.mxu0 0.0
      %894 = vmatprep.subr.mxu0 0.0
      %895 = vmatpush1.msra.mxu0 0.0
      %896 = vmatprep.subr.mxu0 0.0
      %897 = vmatpush1.msra.mxu0 0.0
      %898 = vmatprep.subr.mxu0 0.0
      %899 = vmatpush1.msra.mxu0 0.0
      %900 = vmatprep.subr.mxu0 0.0
      %901 = vmatpush1.msra.mxu0 0.0
      %902 = vmatprep.mubr.f32.mxu0 0.0
      %903 = vmatmul.mubr.f32.gmra.mrb[0].mxu0 %v809
      %v904 = vpop.f32.mrb[0].mxu0
      %v905 = vadd.f32 0.0, %v904
      %v906 = vpop.f32.mrb[0].mxu0
      %907 = vmatprep.mubr.f32.mxu0 0.0
      %908 = vmatmul.mubr.f32.gmra.mrb[0].mxu0 %v812
      %v909 = vpop.f32.mrb[0].mxu0
      %v910 = vadd.f32 0.0, %v909
      %v911 = vpop.f32.mrb[0].mxu0
      %912 = vmatprep.mubr.f32.mxu0 0.0
      %913 = vmatmul.mubr.f32.gmra.mrb[0].mxu0 %v815
      %v914 = vpop.f32.mrb[0].mxu0
      %v915 = vadd.f32 0.0, %v914
      %v916 = vpop.f32.mrb[0].mxu0
      %917 = vmatprep.mubr.f32.mxu0 0.0
      %918 = vmatmul.mubr.f32.gmra.mrb[0].mxu0 %v818
      %v919 = vpop.f32.mrb[0].mxu0
      %v920 = vadd.f32 0.0, %v919
      %v921 = vpop.f32.mrb[0].mxu0
      %922 = vmatprep.mubr.f32.mxu0 0.0
      %923 = vmatmul.mubr.f32.gmra.mrb[0].mxu0 %v821
      %v924 = vpop.f32.mrb[0].mxu0
      %v925 = vadd.f32 0.0, %v924
      %v926 = vpop.f32.mrb[0].mxu0
      %927 = vmatprep.mubr.f32.mxu0 0.0
      %928 = vmatmul.mubr.f32.gmra.mrb[0].mxu0 %v824
      %v929 = vpop.f32.mrb[0].mxu0
      %v930 = vadd.f32 0.0, %v929
      %v931 = vpop.f32.mrb[0].mxu0
      %932 = vmatprep.mubr.f32.mxu0 0.0
      %933 = vmatmul.mubr.f32.gmra.mrb[0].mxu0 %v827
      %v934 = vpop.f32.mrb[0].mxu0
      %v935 = vadd.f32 0.0, %v934
      %v936 = vpop.f32.mrb[0].mxu0
      %937 = vmatprep.mubr.f32.mxu0 0.0
      %938 = vmatmul.mubr.f32.gmra.mrb[0].mxu0 %v830
      %v939 = vpop.f32.mrb[0].mxu0
      %v940 = vadd.f32 0.0, %v939
      %v941 = vpop.f32.mrb[0].mxu0
      %942 = vmatprep.mubr.f32.mxu0 0.0
      %943 = vmatmul.mubr.f32.gmra.mrb[0].mxu0 %v833
      %v944 = vpop.f32.mrb[0].mxu0
      %v945 = vadd.f32 0.0, %v944
      %v946 = vpop.f32.mrb[0].mxu0
      %947 = vdwg.mxu0
      %v948 = vadd.f32 %v787, %v905
      %v949 = vadd.f32 %v788, %v910
      %v950 = vadd.f32 %v789, %v915
      %v951 = vadd.f32 %v790, %v920
      %v952 = vadd.f32 %v791, %v925
      %v953 = vadd.f32 %v792, %v930
      %v954 = vadd.f32 %v793, %v935
      %v955 = vadd.f32 %v794, %v940
      %v956 = vadd.f32 %v795, %v945
      %v957 = vld [vmem:[%s635 + $0x1] sm:$0xff]
      %v958 = vld [vmem:[%s635 + $0x9] sm:$0xff]
      %v959 = vld [vmem:[%s635 + $0x11] sm:$0xff]
      %v960 = vld [vmem:[%s635 + $0x19] sm:$0xff]
      %v961 = vld [vmem:[%s635 + $0x21] sm:$0xff]
      %v962 = vld [vmem:[%s635 + $0x29] sm:$0xff]
      %v963 = vld [vmem:[%s635 + $0x31] sm:$0xff]
      %v964 = vld [vmem:[%s635 + $0x39] sm:$0xff]
      %v965 = vld [vmem:[%s635 + $0x41] sm:$0xff]
      %s966 = scalar_lea.vmem %s1, 20
      %v967 = vld [vmem:[%s966] sm:$0x7]
      %v969 = vsel %vm193, %v957, 0
      %v972 = vsel %vm193, %v958, 0
      %v975 = vsel %vm193, %v959, 0
      %v978 = vsel %vm193, %v960, 0
      %v981 = vsel %vm193, %v961, 0
      %v984 = vsel %vm193, %v962, 0
      %v987 = vsel %vm193, %v963, 0
      %v990 = vsel %vm193, %v964, 0
      %v993 = vsel %vm193, %v965, 0
      %v996 = vsel %vm221, %v967, 0
      %998 = vmatprep.subr.mxu0 0.0
      %999 = vmatpush1.msra.mxu0 %v996
      %1000 = vmatprep.subr.mxu0 0.0
      %1001 = vmatpush1.msra.mxu0 0.0
      %1002 = vmatprep.subr.mxu0 0.0
      %1003 = vmatpush1.msra.mxu0 0.0
      %1004 = vmatprep.subr.mxu0 0.0
      %1005 = vmatpush1.msra.mxu0 0.0
      %1006 = vmatprep.subr.mxu0 0.0
      %1007 = vmatpush1.msra.mxu0 0.0
      %1008 = vmatprep.subr.mxu0 0.0
      %1009 = vmatpush1.msra.mxu0 0.0
      %1010 = vmatprep.subr.mxu0 0.0
      %1011 = vmatpush1.msra.mxu0 0.0
      %1012 = vmatprep.subr.mxu0 0.0
      %1013 = vmatpush1.msra.mxu0 0.0
      %1014 = vmatprep.subr.mxu0 0.0
      %1015 = vmatpush1.msra.mxu0 0.0
      %1016 = vmatprep.subr.mxu0 0.0
      %1017 = vmatpush1.msra.mxu0 0.0
      %1018 = vmatprep.subr.mxu0 0.0
      %1019 = vmatpush1.msra.mxu0 0.0
      %1020 = vmatprep.subr.mxu0 0.0
      %1021 = vmatpush1.msra.mxu0 0.0
      %1022 = vmatprep.subr.mxu0 0.0
      %1023 = vmatpush1.msra.mxu0 0.0
      %1024 = vmatprep.subr.mxu0 0.0
      %1025 = vmatpush1.msra.mxu0 0.0
      %1026 = vmatprep.subr.mxu0 0.0
      %1027 = vmatpush1.msra.mxu0 0.0
      %1028 = vmatprep.subr.mxu0 0.0
      %1029 = vmatpush1.msra.mxu0 0.0
      %1030 = vmatprep.subr.mxu0 0.0
      %1031 = vmatpush1.msra.mxu0 0.0
      %1032 = vmatprep.subr.mxu0 0.0
      %1033 = vmatpush1.msra.mxu0 0.0
      %1034 = vmatprep.subr.mxu0 0.0
      %1035 = vmatpush1.msra.mxu0 0.0
      %1036 = vmatprep.subr.mxu0 0.0
      %1037 = vmatpush1.msra.mxu0 0.0
      %1038 = vmatprep.subr.mxu0 0.0
      %1039 = vmatpush1.msra.mxu0 0.0
      %1040 = vmatprep.subr.mxu0 0.0
      %1041 = vmatpush1.msra.mxu0 0.0
      %1042 = vmatprep.subr.mxu0 0.0
      %1043 = vmatpush1.msra.mxu0 0.0
      %1044 = vmatprep.subr.mxu0 0.0
      %1045 = vmatpush1.msra.mxu0 0.0
      %1046 = vmatprep.subr.mxu0 0.0
      %1047 = vmatpush1.msra.mxu0 0.0
      %1048 = vmatprep.subr.mxu0 0.0
      %1049 = vmatpush1.msra.mxu0 0.0
      %1050 = vmatprep.subr.mxu0 0.0
      %1051 = vmatpush1.msra.mxu0 0.0
      %1052 = vmatprep.subr.mxu0 0.0
      %1053 = vmatpush1.msra.mxu0 0.0
      %1054 = vmatprep.subr.mxu0 0.0
      %1055 = vmatpush1.msra.mxu0 0.0
      %1056 = vmatprep.subr.mxu0 0.0
      %1057 = vmatpush1.msra.mxu0 0.0
      %1058 = vmatprep.subr.mxu0 0.0
      %1059 = vmatpush1.msra.mxu0 0.0
      %1060 = vmatprep.subr.mxu0 0.0
      %1061 = vmatpush1.msra.mxu0 0.0
      %1062 = vmatprep.mubr.f32.mxu0 0.0
      %1063 = vmatmul.mubr.f32.gmra.mrb[0].mxu0 %v969
      %v1064 = vpop.f32.mrb[0].mxu0
      %v1065 = vadd.f32 0.0, %v1064
      %v1066 = vpop.f32.mrb[0].mxu0
      %1067 = vmatprep.mubr.f32.mxu0 0.0
      %1068 = vmatmul.mubr.f32.gmra.mrb[0].mxu0 %v972
      %v1069 = vpop.f32.mrb[0].mxu0
      %v1070 = vadd.f32 0.0, %v1069
      %v1071 = vpop.f32.mrb[0].mxu0
      %1072 = vmatprep.mubr.f32.mxu0 0.0
      %1073 = vmatmul.mubr.f32.gmra.mrb[0].mxu0 %v975
      %v1074 = vpop.f32.mrb[0].mxu0
      %v1075 = vadd.f32 0.0, %v1074
      %v1076 = vpop.f32.mrb[0].mxu0
      %1077 = vmatprep.mubr.f32.mxu0 0.0
      %1078 = vmatmul.mubr.f32.gmra.mrb[0].mxu0 %v978
      %v1079 = vpop.f32.mrb[0].mxu0
      %v1080 = vadd.f32 0.0, %v1079
      %v1081 = vpop.f32.mrb[0].mxu0
      %1082 = vmatprep.mubr.f32.mxu0 0.0
      %1083 = vmatmul.mubr.f32.gmra.mrb[0].mxu0 %v981
      %v1084 = vpop.f32.mrb[0].mxu0
      %v1085 = vadd.f32 0.0, %v1084
      %v1086 = vpop.f32.mrb[0].mxu0
      %1087 = vmatprep.mubr.f32.mxu0 0.0
      %1088 = vmatmul.mubr.f32.gmra.mrb[0].mxu0 %v984
      %v1089 = vpop.f32.mrb[0].mxu0
      %v1090 = vadd.f32 0.0, %v1089
      %v1091 = vpop.f32.mrb[0].mxu0
      %1092 = vmatprep.mubr.f32.mxu0 0.0
      %1093 = vmatmul.mubr.f32.gmra.mrb[0].mxu0 %v987
      %v1094 = vpop.f32.mrb[0].mxu0
      %v1095 = vadd.f32 0.0, %v1094
      %v1096 = vpop.f32.mrb[0].mxu0
      %1097 = vmatprep.mubr.f32.mxu0 0.0
      %1098 = vmatmul.mubr.f32.gmra.mrb[0].mxu0 %v990
      %v1099 = vpop.f32.mrb[0].mxu0
      %v1100 = vadd.f32 0.0, %v1099
      %v1101 = vpop.f32.mrb[0].mxu0
      %1102 = vmatprep.mubr.f32.mxu0 0.0
      %1103 = vmatmul.mubr.f32.gmra.mrb[0].mxu0 %v993
      %v1104 = vpop.f32.mrb[0].mxu0
      %v1105 = vadd.f32 0.0, %v1104
      %v1106 = vpop.f32.mrb[0].mxu0
      %1107 = vdwg.mxu0
      %v1108 = vadd.f32 %v948, %v1065
      %v1109 = vadd.f32 %v949, %v1070
      %v1110 = vadd.f32 %v950, %v1075
      %v1111 = vadd.f32 %v951, %v1080
      %v1112 = vadd.f32 %v952, %v1085
      %v1113 = vadd.f32 %v953, %v1090
      %v1114 = vadd.f32 %v954, %v1095
      %v1115 = vadd.f32 %v955, %v1100
      %v1116 = vadd.f32 %v956, %v1105
      %v1117 = vld [vmem:[%s165 + $0x9] sm:$0xff]
      %v1118 = vld [vmem:[%s165 + $0x11] sm:$0xff]
      %v1119 = vld [vmem:[%s165 + $0x19] sm:$0xff]
      %v1120 = vld [vmem:[%s165 + $0x21] sm:$0xff]
      %v1121 = vld [vmem:[%s165 + $0x29] sm:$0xff]
      %v1122 = vld [vmem:[%s165 + $0x31] sm:$0xff]
      %v1123 = vld [vmem:[%s165 + $0x39] sm:$0xff]
      %v1124 = vld [vmem:[%s165 + $0x41] sm:$0xff]
      %v1125 = vld [vmem:[%s165 + $0x49] sm:$0xff]
      %s1126 = scalar_lea.vmem %s1, 24
      %v1127 = vld [vmem:[%s1126] sm:$0x7]
      %v1129 = vsel %vm193, %v1117, 0
      %v1132 = vsel %vm193, %v1118, 0
      %v1135 = vsel %vm193, %v1119, 0
      %v1138 = vsel %vm193, %v1120, 0
      %v1141 = vsel %vm193, %v1121, 0
      %v1144 = vsel %vm193, %v1122, 0
      %v1147 = vsel %vm193, %v1123, 0
      %v1150 = vsel %vm193, %v1124, 0
      %v1153 = vsel %vm193, %v1125, 0
      %v1156 = vsel %vm221, %v1127, 0
      %1158 = vmatprep.subr.mxu0 0.0
      %1159 = vmatpush1.msra.mxu0 %v1156
      %1160 = vmatprep.subr.mxu0 0.0
      %1161 = vmatpush1.msra.mxu0 0.0
      %1162 = vmatprep.subr.mxu0 0.0
      %1163 = vmatpush1.msra.mxu0 0.0
      %1164 = vmatprep.subr.mxu0 0.0
      %1165 = vmatpush1.msra.mxu0 0.0
      %1166 = vmatprep.subr.mxu0 0.0
      %1167 = vmatpush1.msra.mxu0 0.0
      %1168 = vmatprep.subr.mxu0 0.0
      %1169 = vmatpush1.msra.mxu0 0.0
      %1170 = vmatprep.subr.mxu0 0.0
      %1171 = vmatpush1.msra.mxu0 0.0
      %1172 = vmatprep.subr.mxu0 0.0
      %1173 = vmatpush1.msra.mxu0 0.0
      %1174 = vmatprep.subr.mxu0 0.0
      %1175 = vmatpush1.msra.mxu0 0.0
      %1176 = vmatprep.subr.mxu0 0.0
      %1177 = vmatpush1.msra.mxu0 0.0
      %1178 = vmatprep.subr.mxu0 0.0
      %1179 = vmatpush1.msra.mxu0 0.0
      %1180 = vmatprep.subr.mxu0 0.0
      %1181 = vmatpush1.msra.mxu0 0.0
      %1182 = vmatprep.subr.mxu0 0.0
      %1183 = vmatpush1.msra.mxu0 0.0
      %1184 = vmatprep.subr.mxu0 0.0
      %1185 = vmatpush1.msra.mxu0 0.0
      %1186 = vmatprep.subr.mxu0 0.0
      %1187 = vmatpush1.msra.mxu0 0.0
      %1188 = vmatprep.subr.mxu0 0.0
      %1189 = vmatpush1.msra.mxu0 0.0
      %1190 = vmatprep.subr.mxu0 0.0
      %1191 = vmatpush1.msra.mxu0 0.0
      %1192 = vmatprep.subr.mxu0 0.0
      %1193 = vmatpush1.msra.mxu0 0.0
      %1194 = vmatprep.subr.mxu0 0.0
      %1195 = vmatpush1.msra.mxu0 0.0
      %1196 = vmatprep.subr.mxu0 0.0
      %1197 = vmatpush1.msra.mxu0 0.0
      %1198 = vmatprep.subr.mxu0 0.0
      %1199 = vmatpush1.msra.mxu0 0.0
      %1200 = vmatprep.subr.mxu0 0.0
      %1201 = vmatpush1.msra.mxu0 0.0
      %1202 = vmatprep.subr.mxu0 0.0
      %1203 = vmatpush1.msra.mxu0 0.0
      %1204 = vmatprep.subr.mxu0 0.0
      %1205 = vmatpush1.msra.mxu0 0.0
      %1206 = vmatprep.subr.mxu0 0.0
      %1207 = vmatpush1.msra.mxu0 0.0
      %1208 = vmatprep.subr.mxu0 0.0
      %1209 = vmatpush1.msra.mxu0 0.0
      %1210 = vmatprep.subr.mxu0 0.0
      %1211 = vmatpush1.msra.mxu0 0.0
      %1212 = vmatprep.subr.mxu0 0.0
      %1213 = vmatpush1.msra.mxu0 0.0
      %1214 = vmatprep.subr.mxu0 0.0
      %1215 = vmatpush1.msra.mxu0 0.0
      %1216 = vmatprep.subr.mxu0 0.0
      %1217 = vmatpush1.msra.mxu0 0.0
      %1218 = vmatprep.subr.mxu0 0.0
      %1219 = vmatpush1.msra.mxu0 0.0
      %1220 = vmatprep.subr.mxu0 0.0
      %1221 = vmatpush1.msra.mxu0 0.0
      %1222 = vmatprep.mubr.f32.mxu0 0.0
      %1223 = vmatmul.mubr.f32.gmra.mrb[0].mxu0 %v1129
      %v1224 = vpop.f32.mrb[0].mxu0
      %v1225 = vadd.f32 0.0, %v1224
      %v1226 = vpop.f32.mrb[0].mxu0
      %1227 = vmatprep.mubr.f32.mxu0 0.0
      %1228 = vmatmul.mubr.f32.gmra.mrb[0].mxu0 %v1132
      %v1229 = vpop.f32.mrb[0].mxu0
      %v1230 = vadd.f32 0.0, %v1229
      %v1231 = vpop.f32.mrb[0].mxu0
      %1232 = vmatprep.mubr.f32.mxu0 0.0
      %1233 = vmatmul.mubr.f32.gmra.mrb[0].mxu0 %v1135
      %v1234 = vpop.f32.mrb[0].mxu0
      %v1235 = vadd.f32 0.0, %v1234
      %v1236 = vpop.f32.mrb[0].mxu0
      %1237 = vmatprep.mubr.f32.mxu0 0.0
      %1238 = vmatmul.mubr.f32.gmra.mrb[0].mxu0 %v1138
      %v1239 = vpop.f32.mrb[0].mxu0
      %v1240 = vadd.f32 0.0, %v1239
      %v1241 = vpop.f32.mrb[0].mxu0
      %1242 = vmatprep.mubr.f32.mxu0 0.0
      %1243 = vmatmul.mubr.f32.gmra.mrb[0].mxu0 %v1141
      %v1244 = vpop.f32.mrb[0].mxu0
      %v1245 = vadd.f32 0.0, %v1244
      %v1246 = vpop.f32.mrb[0].mxu0
      %1247 = vmatprep.mubr.f32.mxu0 0.0
      %1248 = vmatmul.mubr.f32.gmra.mrb[0].mxu0 %v1144
      %v1249 = vpop.f32.mrb[0].mxu0
      %v1250 = vadd.f32 0.0, %v1249
      %v1251 = vpop.f32.mrb[0].mxu0
      %1252 = vmatprep.mubr.f32.mxu0 0.0
      %1253 = vmatmul.mubr.f32.gmra.mrb[0].mxu0 %v1147
      %v1254 = vpop.f32.mrb[0].mxu0
      %v1255 = vadd.f32 0.0, %v1254
      %v1256 = vpop.f32.mrb[0].mxu0
      %1257 = vmatprep.mubr.f32.mxu0 0.0
      %1258 = vmatmul.mubr.f32.gmra.mrb[0].mxu0 %v1150
      %v1259 = vpop.f32.mrb[0].mxu0
      %v1260 = vadd.f32 0.0, %v1259
      %v1261 = vpop.f32.mrb[0].mxu0
      %1262 = vmatprep.mubr.f32.mxu0 0.0
      %1263 = vmatmul.mubr.f32.gmra.mrb[0].mxu0 %v1153
      %v1264 = vpop.f32.mrb[0].mxu0
      %v1265 = vadd.f32 0.0, %v1264
      %v1266 = vpop.f32.mrb[0].mxu0
      %1267 = vdwg.mxu0
      %v1268 = vadd.f32 %v1108, %v1225
      %v1269 = vadd.f32 %v1109, %v1230
      %v1270 = vadd.f32 %v1110, %v1235
      %v1271 = vadd.f32 %v1111, %v1240
      %v1272 = vadd.f32 %v1112, %v1245
      %v1273 = vadd.f32 %v1113, %v1250
      %v1274 = vadd.f32 %v1114, %v1255
      %v1275 = vadd.f32 %v1115, %v1260
      %v1276 = vadd.f32 %v1116, %v1265
      %v1277 = vld [vmem:[%s181 + $0x9] sm:$0xff]
      %v1278 = vld [vmem:[%s181 + $0x11] sm:$0xff]
      %v1279 = vld [vmem:[%s181 + $0x19] sm:$0xff]
      %v1280 = vld [vmem:[%s181 + $0x21] sm:$0xff]
      %v1281 = vld [vmem:[%s181 + $0x29] sm:$0xff]
      %v1282 = vld [vmem:[%s181 + $0x31] sm:$0xff]
      %v1283 = vld [vmem:[%s181 + $0x39] sm:$0xff]
      %v1284 = vld [vmem:[%s181 + $0x41] sm:$0xff]
      %v1285 = vld [vmem:[%s181 + $0x49] sm:$0xff]
      %s1286 = scalar_lea.vmem %s1, 28
      %v1287 = vld [vmem:[%s1286] sm:$0x7]
      %v1289 = vsel %vm193, %v1277, 0
      %v1292 = vsel %vm193, %v1278, 0
      %v1295 = vsel %vm193, %v1279, 0
      %v1298 = vsel %vm193, %v1280, 0
      %v1301 = vsel %vm193, %v1281, 0
      %v1304 = vsel %vm193, %v1282, 0
      %v1307 = vsel %vm193, %v1283, 0
      %v1310 = vsel %vm193, %v1284, 0
      %v1313 = vsel %vm193, %v1285, 0
      %v1316 = vsel %vm221, %v1287, 0
      %1318 = vmatprep.subr.mxu0 0.0
      %1319 = vmatpush1.msra.mxu0 %v1316
      %1320 = vmatprep.subr.mxu0 0.0
      %1321 = vmatpush1.msra.mxu0 0.0
      %1322 = vmatprep.subr.mxu0 0.0
      %1323 = vmatpush1.msra.mxu0 0.0
      %1324 = vmatprep.subr.mxu0 0.0
      %1325 = vmatpush1.msra.mxu0 0.0
      %1326 = vmatprep.subr.mxu0 0.0
      %1327 = vmatpush1.msra.mxu0 0.0
      %1328 = vmatprep.subr.mxu0 0.0
      %1329 = vmatpush1.msra.mxu0 0.0
      %1330 = vmatprep.subr.mxu0 0.0
      %1331 = vmatpush1.msra.mxu0 0.0
      %1332 = vmatprep.subr.mxu0 0.0
      %1333 = vmatpush1.msra.mxu0 0.0
      %1334 = vmatprep.subr.mxu0 0.0
      %1335 = vmatpush1.msra.mxu0 0.0
      %1336 = vmatprep.subr.mxu0 0.0
      %1337 = vmatpush1.msra.mxu0 0.0
      %1338 = vmatprep.subr.mxu0 0.0
      %1339 = vmatpush1.msra.mxu0 0.0
      %1340 = vmatprep.subr.mxu0 0.0
      %1341 = vmatpush1.msra.mxu0 0.0
      %1342 = vmatprep.subr.mxu0 0.0
      %1343 = vmatpush1.msra.mxu0 0.0
      %1344 = vmatprep.subr.mxu0 0.0
      %1345 = vmatpush1.msra.mxu0 0.0
      %1346 = vmatprep.subr.mxu0 0.0
      %1347 = vmatpush1.msra.mxu0 0.0
      %1348 = vmatprep.subr.mxu0 0.0
      %1349 = vmatpush1.msra.mxu0 0.0
      %1350 = vmatprep.subr.mxu0 0.0
      %1351 = vmatpush1.msra.mxu0 0.0
      %1352 = vmatprep.subr.mxu0 0.0
      %1353 = vmatpush1.msra.mxu0 0.0
      %1354 = vmatprep.subr.mxu0 0.0
      %1355 = vmatpush1.msra.mxu0 0.0
      %1356 = vmatprep.subr.mxu0 0.0
      %1357 = vmatpush1.msra.mxu0 0.0
      %1358 = vmatprep.subr.mxu0 0.0
      %1359 = vmatpush1.msra.mxu0 0.0
      %1360 = vmatprep.subr.mxu0 0.0
      %1361 = vmatpush1.msra.mxu0 0.0
      %1362 = vmatprep.subr.mxu0 0.0
      %1363 = vmatpush1.msra.mxu0 0.0
      %1364 = vmatprep.subr.mxu0 0.0
      %1365 = vmatpush1.msra.mxu0 0.0
      %1366 = vmatprep.subr.mxu0 0.0
      %1367 = vmatpush1.msra.mxu0 0.0
      %1368 = vmatprep.subr.mxu0 0.0
      %1369 = vmatpush1.msra.mxu0 0.0
      %1370 = vmatprep.subr.mxu0 0.0
      %1371 = vmatpush1.msra.mxu0 0.0
      %1372 = vmatprep.subr.mxu0 0.0
      %1373 = vmatpush1.msra.mxu0 0.0
      %1374 = vmatprep.subr.mxu0 0.0
      %1375 = vmatpush1.msra.mxu0 0.0
      %1376 = vmatprep.subr.mxu0 0.0
      %1377 = vmatpush1.msra.mxu0 0.0
      %1378 = vmatprep.subr.mxu0 0.0
      %1379 = vmatpush1.msra.mxu0 0.0
      %1380 = vmatprep.subr.mxu0 0.0
      %1381 = vmatpush1.msra.mxu0 0.0
      %1382 = vmatprep.mubr.f32.mxu0 0.0
      %1383 = vmatmul.mubr.f32.gmra.mrb[0].mxu0 %v1289
      %v1384 = vpop.f32.mrb[0].mxu0
      %v1385 = vadd.f32 0.0, %v1384
      %v1386 = vpop.f32.mrb[0].mxu0
      %1387 = vmatprep.mubr.f32.mxu0 0.0
      %1388 = vmatmul.mubr.f32.gmra.mrb[0].mxu0 %v1292
      %v1389 = vpop.f32.mrb[0].mxu0
      %v1390 = vadd.f32 0.0, %v1389
      %v1391 = vpop.f32.mrb[0].mxu0
      %1392 = vmatprep.mubr.f32.mxu0 0.0
      %1393 = vmatmul.mubr.f32.gmra.mrb[0].mxu0 %v1295
      %v1394 = vpop.f32.mrb[0].mxu0
      %v1395 = vadd.f32 0.0, %v1394
      %v1396 = vpop.f32.mrb[0].mxu0
      %1397 = vmatprep.mubr.f32.mxu0 0.0
      %1398 = vmatmul.mubr.f32.gmra.mrb[0].mxu0 %v1298
      %v1399 = vpop.f32.mrb[0].mxu0
      %v1400 = vadd.f32 0.0, %v1399
      %v1401 = vpop.f32.mrb[0].mxu0
      %1402 = vmatprep.mubr.f32.mxu0 0.0
      %1403 = vmatmul.mubr.f32.gmra.mrb[0].mxu0 %v1301
      %v1404 = vpop.f32.mrb[0].mxu0
      %v1405 = vadd.f32 0.0, %v1404
      %v1406 = vpop.f32.mrb[0].mxu0
      %1407 = vmatprep.mubr.f32.mxu0 0.0
      %1408 = vmatmul.mubr.f32.gmra.mrb[0].mxu0 %v1304
      %v1409 = vpop.f32.mrb[0].mxu0
      %v1410 = vadd.f32 0.0, %v1409
      %v1411 = vpop.f32.mrb[0].mxu0
      %1412 = vmatprep.mubr.f32.mxu0 0.0
      %1413 = vmatmul.mubr.f32.gmra.mrb[0].mxu0 %v1307
      %v1414 = vpop.f32.mrb[0].mxu0
      %v1415 = vadd.f32 0.0, %v1414
      %v1416 = vpop.f32.mrb[0].mxu0
      %1417 = vmatprep.mubr.f32.mxu0 0.0
      %1418 = vmatmul.mubr.f32.gmra.mrb[0].mxu0 %v1310
      %v1419 = vpop.f32.mrb[0].mxu0
      %v1420 = vadd.f32 0.0, %v1419
      %v1421 = vpop.f32.mrb[0].mxu0
      %1422 = vmatprep.mubr.f32.mxu0 0.0
      %1423 = vmatmul.mubr.f32.gmra.mrb[0].mxu0 %v1313
      %v1424 = vpop.f32.mrb[0].mxu0
      %v1425 = vadd.f32 0.0, %v1424
      %v1426 = vpop.f32.mrb[0].mxu0
      %1427 = vdwg.mxu0
      %v1428 = vadd.f32 %v1268, %v1385
      %v1429 = vadd.f32 %v1269, %v1390
      %v1430 = vadd.f32 %v1270, %v1395
      %v1431 = vadd.f32 %v1271, %v1400
      %v1432 = vadd.f32 %v1272, %v1405
      %v1433 = vadd.f32 %v1273, %v1410
      %v1434 = vadd.f32 %v1274, %v1415
      %v1435 = vadd.f32 %v1275, %v1420
      %v1436 = vadd.f32 %v1276, %v1425
      %v1437 = vld [vmem:[%s165 + $0xa] sm:$0xff]
      %v1438 = vld [vmem:[%s165 + $0x12] sm:$0xff]
      %v1439 = vld [vmem:[%s165 + $0x1a] sm:$0xff]
      %v1440 = vld [vmem:[%s165 + $0x22] sm:$0xff]
      %v1441 = vld [vmem:[%s165 + $0x2a] sm:$0xff]
      %v1442 = vld [vmem:[%s165 + $0x32] sm:$0xff]
      %v1443 = vld [vmem:[%s165 + $0x3a] sm:$0xff]
      %v1444 = vld [vmem:[%s165 + $0x42] sm:$0xff]
      %v1445 = vld [vmem:[%s165 + $0x4a] sm:$0xff]
      %s1446 = scalar_lea.vmem %s1, 32
      %v1447 = vld [vmem:[%s1446] sm:$0x7]
      %v1449 = vsel %vm193, %v1437, 0
      %v1452 = vsel %vm193, %v1438, 0
      %v1455 = vsel %vm193, %v1439, 0
      %v1458 = vsel %vm193, %v1440, 0
      %v1461 = vsel %vm193, %v1441, 0
      %v1464 = vsel %vm193, %v1442, 0
      %v1467 = vsel %vm193, %v1443, 0
      %v1470 = vsel %vm193, %v1444, 0
      %v1473 = vsel %vm193, %v1445, 0
      %v1476 = vsel %vm221, %v1447, 0
      %1478 = vmatprep.subr.mxu0 0.0
      %1479 = vmatpush1.msra.mxu0 %v1476
      %1480 = vmatprep.subr.mxu0 0.0
      %1481 = vmatpush1.msra.mxu0 0.0
      %1482 = vmatprep.subr.mxu0 0.0
      %1483 = vmatpush1.msra.mxu0 0.0
      %1484 = vmatprep.subr.mxu0 0.0
      %1485 = vmatpush1.msra.mxu0 0.0
      %1486 = vmatprep.subr.mxu0 0.0
      %1487 = vmatpush1.msra.mxu0 0.0
      %1488 = vmatprep.subr.mxu0 0.0
      %1489 = vmatpush1.msra.mxu0 0.0
      %1490 = vmatprep.subr.mxu0 0.0
      %1491 = vmatpush1.msra.mxu0 0.0
      %1492 = vmatprep.subr.mxu0 0.0
      %1493 = vmatpush1.msra.mxu0 0.0
      %1494 = vmatprep.subr.mxu0 0.0
      %1495 = vmatpush1.msra.mxu0 0.0
      %1496 = vmatprep.subr.mxu0 0.0
      %1497 = vmatpush1.msra.mxu0 0.0
      %1498 = vmatprep.subr.mxu0 0.0
      %1499 = vmatpush1.msra.mxu0 0.0
      %1500 = vmatprep.subr.mxu0 0.0
      %1501 = vmatpush1.msra.mxu0 0.0
      %1502 = vmatprep.subr.mxu0 0.0
      %1503 = vmatpush1.msra.mxu0 0.0
      %1504 = vmatprep.subr.mxu0 0.0
      %1505 = vmatpush1.msra.mxu0 0.0
      %1506 = vmatprep.subr.mxu0 0.0
      %1507 = vmatpush1.msra.mxu0 0.0
      %1508 = vmatprep.subr.mxu0 0.0
      %1509 = vmatpush1.msra.mxu0 0.0
      %1510 = vmatprep.subr.mxu0 0.0
      %1511 = vmatpush1.msra.mxu0 0.0
      %1512 = vmatprep.subr.mxu0 0.0
      %1513 = vmatpush1.msra.mxu0 0.0
      %1514 = vmatprep.subr.mxu0 0.0
      %1515 = vmatpush1.msra.mxu0 0.0
      %1516 = vmatprep.subr.mxu0 0.0
      %1517 = vmatpush1.msra.mxu0 0.0
      %1518 = vmatprep.subr.mxu0 0.0
      %1519 = vmatpush1.msra.mxu0 0.0
      %1520 = vmatprep.subr.mxu0 0.0
      %1521 = vmatpush1.msra.mxu0 0.0
      %1522 = vmatprep.subr.mxu0 0.0
      %1523 = vmatpush1.msra.mxu0 0.0
      %1524 = vmatprep.subr.mxu0 0.0
      %1525 = vmatpush1.msra.mxu0 0.0
      %1526 = vmatprep.subr.mxu0 0.0
      %1527 = vmatpush1.msra.mxu0 0.0
      %1528 = vmatprep.subr.mxu0 0.0
      %1529 = vmatpush1.msra.mxu0 0.0
      %1530 = vmatprep.subr.mxu0 0.0
      %1531 = vmatpush1.msra.mxu0 0.0
      %1532 = vmatprep.subr.mxu0 0.0
      %1533 = vmatpush1.msra.mxu0 0.0
      %1534 = vmatprep.subr.mxu0 0.0
      %1535 = vmatpush1.msra.mxu0 0.0
      %1536 = vmatprep.subr.mxu0 0.0
      %1537 = vmatpush1.msra.mxu0 0.0
      %1538 = vmatprep.subr.mxu0 0.0
      %1539 = vmatpush1.msra.mxu0 0.0
      %1540 = vmatprep.subr.mxu0 0.0
      %1541 = vmatpush1.msra.mxu0 0.0
      %1542 = vmatprep.mubr.f32.mxu0 0.0
      %1543 = vmatmul.mubr.f32.gmra.mrb[0].mxu0 %v1449
      %v1544 = vpop.f32.mrb[0].mxu0
      %v1545 = vadd.f32 0.0, %v1544
      %v1546 = vpop.f32.mrb[0].mxu0
      %1547 = vmatprep.mubr.f32.mxu0 0.0
      %1548 = vmatmul.mubr.f32.gmra.mrb[0].mxu0 %v1452
      %v1549 = vpop.f32.mrb[0].mxu0
      %v1550 = vadd.f32 0.0, %v1549
      %v1551 = vpop.f32.mrb[0].mxu0
      %1552 = vmatprep.mubr.f32.mxu0 0.0
      %1553 = vmatmul.mubr.f32.gmra.mrb[0].mxu0 %v1455
      %v1554 = vpop.f32.mrb[0].mxu0
      %v1555 = vadd.f32 0.0, %v1554
      %v1556 = vpop.f32.mrb[0].mxu0
      %1557 = vmatprep.mubr.f32.mxu0 0.0
      %1558 = vmatmul.mubr.f32.gmra.mrb[0].mxu0 %v1458
      %v1559 = vpop.f32.mrb[0].mxu0
      %v1560 = vadd.f32 0.0, %v1559
      %v1561 = vpop.f32.mrb[0].mxu0
      %1562 = vmatprep.mubr.f32.mxu0 0.0
      %1563 = vmatmul.mubr.f32.gmra.mrb[0].mxu0 %v1461
      %v1564 = vpop.f32.mrb[0].mxu0
      %v1565 = vadd.f32 0.0, %v1564
      %v1566 = vpop.f32.mrb[0].mxu0
      %1567 = vmatprep.mubr.f32.mxu0 0.0
      %1568 = vmatmul.mubr.f32.gmra.mrb[0].mxu0 %v1464
      %v1569 = vpop.f32.mrb[0].mxu0
      %v1570 = vadd.f32 0.0, %v1569
      %v1571 = vpop.f32.mrb[0].mxu0
      %1572 = vmatprep.mubr.f32.mxu0 0.0
      %1573 = vmatmul.mubr.f32.gmra.mrb[0].mxu0 %v1467
      %v1574 = vpop.f32.mrb[0].mxu0
      %v1575 = vadd.f32 0.0, %v1574
      %v1576 = vpop.f32.mrb[0].mxu0
      %1577 = vmatprep.mubr.f32.mxu0 0.0
      %1578 = vmatmul.mubr.f32.gmra.mrb[0].mxu0 %v1470
      %v1579 = vpop.f32.mrb[0].mxu0
      %v1580 = vadd.f32 0.0, %v1579
      %v1581 = vpop.f32.mrb[0].mxu0
      %1582 = vmatprep.mubr.f32.mxu0 0.0
      %1583 = vmatmul.mubr.f32.gmra.mrb[0].mxu0 %v1473
      %v1584 = vpop.f32.mrb[0].mxu0
      %v1585 = vadd.f32 0.0, %v1584
      %v1586 = vpop.f32.mrb[0].mxu0
      %1587 = vdwg.mxu0
      %v1588 = vadd.f32 %v1428, %v1545
      %v1589 = vadd.f32 %v1429, %v1550
      %v1590 = vadd.f32 %v1430, %v1555
      %v1591 = vadd.f32 %v1431, %v1560
      %v1592 = vadd.f32 %v1432, %v1565
      %v1593 = vadd.f32 %v1433, %v1570
      %v1594 = vadd.f32 %v1434, %v1575
      %v1595 = vadd.f32 %v1435, %v1580
      %v1596 = vadd.f32 %v1436, %v1585
      %1597 = vmatprep.subr.mxu0 0.0
      %1598 = vmatpush1.msra.mxu0 %v223
      %1599 = vmatprep.subr.mxu0 0.0
      %1600 = vmatpush1.msra.mxu0 0.0
      %1601 = vmatprep.subr.mxu0 0.0
      %1602 = vmatpush1.msra.mxu0 0.0
      %1603 = vmatprep.subr.mxu0 0.0
      %1604 = vmatpush1.msra.mxu0 0.0
      %1605 = vmatprep.subr.mxu0 0.0
      %1606 = vmatpush1.msra.mxu0 0.0
      %1607 = vmatprep.subr.mxu0 0.0
      %1608 = vmatpush1.msra.mxu0 0.0
      %1609 = vmatprep.subr.mxu0 0.0
      %1610 = vmatpush1.msra.mxu0 0.0
      %1611 = vmatprep.subr.mxu0 0.0
      %1612 = vmatpush1.msra.mxu0 0.0
      %1613 = vmatprep.subr.mxu0 0.0
      %1614 = vmatpush1.msra.mxu0 0.0
      %1615 = vmatprep.subr.mxu0 0.0
      %1616 = vmatpush1.msra.mxu0 0.0
      %1617 = vmatprep.subr.mxu0 0.0
      %1618 = vmatpush1.msra.mxu0 0.0
      %1619 = vmatprep.subr.mxu0 0.0
      %1620 = vmatpush1.msra.mxu0 0.0
      %1621 = vmatprep.subr.mxu0 0.0
      %1622 = vmatpush1.msra.mxu0 0.0
      %1623 = vmatprep.subr.mxu0 0.0
      %1624 = vmatpush1.msra.mxu0 0.0
      %1625 = vmatprep.subr.mxu0 0.0
      %1626 = vmatpush1.msra.mxu0 0.0
      %1627 = vmatprep.subr.mxu0 0.0
      %1628 = vmatpush1.msra.mxu0 0.0
      %1629 = vmatprep.subr.mxu0 0.0
      %1630 = vmatpush1.msra.mxu0 0.0
      %1631 = vmatprep.subr.mxu0 0.0
      %1632 = vmatpush1.msra.mxu0 0.0
      %1633 = vmatprep.subr.mxu0 0.0
      %1634 = vmatpush1.msra.mxu0 0.0
      %1635 = vmatprep.subr.mxu0 0.0
      %1636 = vmatpush1.msra.mxu0 0.0
      %1637 = vmatprep.subr.mxu0 0.0
      %1638 = vmatpush1.msra.mxu0 0.0
      %1639 = vmatprep.subr.mxu0 0.0
      %1640 = vmatpush1.msra.mxu0 0.0
      %1641 = vmatprep.subr.mxu0 0.0
      %1642 = vmatpush1.msra.mxu0 0.0
      %1643 = vmatprep.subr.mxu0 0.0
      %1644 = vmatpush1.msra.mxu0 0.0
      %1645 = vmatprep.subr.mxu0 0.0
      %1646 = vmatpush1.msra.mxu0 0.0
      %1647 = vmatprep.subr.mxu0 0.0
      %1648 = vmatpush1.msra.mxu0 0.0
      %1649 = vmatprep.subr.mxu0 0.0
      %1650 = vmatpush1.msra.mxu0 0.0
      %1651 = vmatprep.subr.mxu0 0.0
      %1652 = vmatpush1.msra.mxu0 0.0
      %1653 = vmatprep.subr.mxu0 0.0
      %1654 = vmatpush1.msra.mxu0 0.0
      %1655 = vmatprep.subr.mxu0 0.0
      %1656 = vmatpush1.msra.mxu0 0.0
      %1657 = vmatprep.subr.mxu0 0.0
      %1658 = vmatpush1.msra.mxu0 0.0
      %1659 = vmatprep.subr.mxu0 0.0
      %1660 = vmatpush1.msra.mxu0 0.0
      %1661 = vmatprep.mubr.f32.mxu0 0.0
      %1662 = vmatmul.mubr.f32.gmra.mrb[0].mxu0 %v487
      %v1663 = vpop.f32.mrb[0].mxu0
      %v1664 = vadd.f32 0.0, %v1663
      %v1665 = vpop.f32.mrb[0].mxu0
      %1666 = vmatprep.mubr.f32.mxu0 0.0
      %1667 = vmatmul.mubr.f32.gmra.mrb[0].mxu0 %v490
      %v1668 = vpop.f32.mrb[0].mxu0
      %v1669 = vadd.f32 0.0, %v1668
      %v1670 = vpop.f32.mrb[0].mxu0
      %1671 = vmatprep.mubr.f32.mxu0 0.0
      %1672 = vmatmul.mubr.f32.gmra.mrb[0].mxu0 %v493
      %v1673 = vpop.f32.mrb[0].mxu0
      %v1674 = vadd.f32 0.0, %v1673
      %v1675 = vpop.f32.mrb[0].mxu0
      %1676 = vmatprep.mubr.f32.mxu0 0.0
      %1677 = vmatmul.mubr.f32.gmra.mrb[0].mxu0 %v496
      %v1678 = vpop.f32.mrb[0].mxu0
      %v1679 = vadd.f32 0.0, %v1678
      %v1680 = vpop.f32.mrb[0].mxu0
      %1681 = vmatprep.mubr.f32.mxu0 0.0
      %1682 = vmatmul.mubr.f32.gmra.mrb[0].mxu0 %v499
      %v1683 = vpop.f32.mrb[0].mxu0
      %v1684 = vadd.f32 0.0, %v1683
      %v1685 = vpop.f32.mrb[0].mxu0
      %1686 = vmatprep.mubr.f32.mxu0 0.0
      %1687 = vmatmul.mubr.f32.gmra.mrb[0].mxu0 %v502
      %v1688 = vpop.f32.mrb[0].mxu0
      %v1689 = vadd.f32 0.0, %v1688
      %v1690 = vpop.f32.mrb[0].mxu0
      %1691 = vmatprep.mubr.f32.mxu0 0.0
      %1692 = vmatmul.mubr.f32.gmra.mrb[0].mxu0 %v505
      %v1693 = vpop.f32.mrb[0].mxu0
      %v1694 = vadd.f32 0.0, %v1693
      %v1695 = vpop.f32.mrb[0].mxu0
      %1696 = vmatprep.mubr.f32.mxu0 0.0
      %1697 = vmatmul.mubr.f32.gmra.mrb[0].mxu0 %v508
      %v1698 = vpop.f32.mrb[0].mxu0
      %v1699 = vadd.f32 0.0, %v1698
      %v1700 = vpop.f32.mrb[0].mxu0
      %1701 = vmatprep.mubr.f32.mxu0 0.0
      %1702 = vmatmul.mubr.f32.gmra.mrb[0].mxu0 %v511
      %v1703 = vpop.f32.mrb[0].mxu0
      %v1704 = vadd.f32 0.0, %v1703
      %v1705 = vpop.f32.mrb[0].mxu0
      %1706 = vdwg.mxu0
      %1707 = vmatprep.subr.mxu0 0.0
      %1708 = vmatpush1.msra.mxu0 %v363
      %1709 = vmatprep.subr.mxu0 0.0
      %1710 = vmatpush1.msra.mxu0 0.0
      %1711 = vmatprep.subr.mxu0 0.0
      %1712 = vmatpush1.msra.mxu0 0.0
      %1713 = vmatprep.subr.mxu0 0.0
      %1714 = vmatpush1.msra.mxu0 0.0
      %1715 = vmatprep.subr.mxu0 0.0
      %1716 = vmatpush1.msra.mxu0 0.0
      %1717 = vmatprep.subr.mxu0 0.0
      %1718 = vmatpush1.msra.mxu0 0.0
      %1719 = vmatprep.subr.mxu0 0.0
      %1720 = vmatpush1.msra.mxu0 0.0
      %1721 = vmatprep.subr.mxu0 0.0
      %1722 = vmatpush1.msra.mxu0 0.0
      %1723 = vmatprep.subr.mxu0 0.0
      %1724 = vmatpush1.msra.mxu0 0.0
      %1725 = vmatprep.subr.mxu0 0.0
      %1726 = vmatpush1.msra.mxu0 0.0
      %1727 = vmatprep.subr.mxu0 0.0
      %1728 = vmatpush1.msra.mxu0 0.0
      %1729 = vmatprep.subr.mxu0 0.0
      %1730 = vmatpush1.msra.mxu0 0.0
      %1731 = vmatprep.subr.mxu0 0.0
      %1732 = vmatpush1.msra.mxu0 0.0
      %1733 = vmatprep.subr.mxu0 0.0
      %1734 = vmatpush1.msra.mxu0 0.0
      %1735 = vmatprep.subr.mxu0 0.0
      %1736 = vmatpush1.msra.mxu0 0.0
      %1737 = vmatprep.subr.mxu0 0.0
      %1738 = vmatpush1.msra.mxu0 0.0
      %1739 = vmatprep.subr.mxu0 0.0
      %1740 = vmatpush1.msra.mxu0 0.0
      %1741 = vmatprep.subr.mxu0 0.0
      %1742 = vmatpush1.msra.mxu0 0.0
      %1743 = vmatprep.subr.mxu0 0.0
      %1744 = vmatpush1.msra.mxu0 0.0
      %1745 = vmatprep.subr.mxu0 0.0
      %1746 = vmatpush1.msra.mxu0 0.0
      %1747 = vmatprep.subr.mxu0 0.0
      %1748 = vmatpush1.msra.mxu0 0.0
      %1749 = vmatprep.subr.mxu0 0.0
      %1750 = vmatpush1.msra.mxu0 0.0
      %1751 = vmatprep.subr.mxu0 0.0
      %1752 = vmatpush1.msra.mxu0 0.0
      %1753 = vmatprep.subr.mxu0 0.0
      %1754 = vmatpush1.msra.mxu0 0.0
      %1755 = vmatprep.subr.mxu0 0.0
      %1756 = vmatpush1.msra.mxu0 0.0
      %1757 = vmatprep.subr.mxu0 0.0
      %1758 = vmatpush1.msra.mxu0 0.0
      %1759 = vmatprep.subr.mxu0 0.0
      %1760 = vmatpush1.msra.mxu0 0.0
      %1761 = vmatprep.subr.mxu0 0.0
      %1762 = vmatpush1.msra.mxu0 0.0
      %1763 = vmatprep.subr.mxu0 0.0
      %1764 = vmatpush1.msra.mxu0 0.0
      %1765 = vmatprep.subr.mxu0 0.0
      %1766 = vmatpush1.msra.mxu0 0.0
      %1767 = vmatprep.subr.mxu0 0.0
      %1768 = vmatpush1.msra.mxu0 0.0
      %1769 = vmatprep.subr.mxu0 0.0
      %1770 = vmatpush1.msra.mxu0 0.0
      %1771 = vmatprep.mubr.f32.mxu0 0.0
      %1772 = vmatmul.mubr.f32.gmra.mrb[0].mxu0 %v195
      %v1773 = vpop.f32.mrb[0].mxu0
      %v1774 = vadd.f32 %v1664, %v1773
      %v1775 = vpop.f32.mrb[0].mxu0
      %1776 = vmatprep.mubr.f32.mxu0 0.0
      %1777 = vmatmul.mubr.f32.gmra.mrb[0].mxu0 %v198
      %v1778 = vpop.f32.mrb[0].mxu0
      %v1779 = vadd.f32 %v1669, %v1778
      %v1780 = vpop.f32.mrb[0].mxu0
      %1781 = vmatprep.mubr.f32.mxu0 0.0
      %1782 = vmatmul.mubr.f32.gmra.mrb[0].mxu0 %v201
      %v1783 = vpop.f32.mrb[0].mxu0
      %v1784 = vadd.f32 %v1674, %v1783
      %v1785 = vpop.f32.mrb[0].mxu0
      %1786 = vmatprep.mubr.f32.mxu0 0.0
      %1787 = vmatmul.mubr.f32.gmra.mrb[0].mxu0 %v204
      %v1788 = vpop.f32.mrb[0].mxu0
      %v1789 = vadd.f32 %v1679, %v1788
      %v1790 = vpop.f32.mrb[0].mxu0
      %1791 = vmatprep.mubr.f32.mxu0 0.0
      %1792 = vmatmul.mubr.f32.gmra.mrb[0].mxu0 %v207
      %v1793 = vpop.f32.mrb[0].mxu0
      %v1794 = vadd.f32 %v1684, %v1793
      %v1795 = vpop.f32.mrb[0].mxu0
      %1796 = vmatprep.mubr.f32.mxu0 0.0
      %1797 = vmatmul.mubr.f32.gmra.mrb[0].mxu0 %v210
      %v1798 = vpop.f32.mrb[0].mxu0
      %v1799 = vadd.f32 %v1689, %v1798
      %v1800 = vpop.f32.mrb[0].mxu0
      %1801 = vmatprep.mubr.f32.mxu0 0.0
      %1802 = vmatmul.mubr.f32.gmra.mrb[0].mxu0 %v213
      %v1803 = vpop.f32.mrb[0].mxu0
      %v1804 = vadd.f32 %v1694, %v1803
      %v1805 = vpop.f32.mrb[0].mxu0
      %1806 = vmatprep.mubr.f32.mxu0 0.0
      %1807 = vmatmul.mubr.f32.gmra.mrb[0].mxu0 %v216
      %v1808 = vpop.f32.mrb[0].mxu0
      %v1809 = vadd.f32 %v1699, %v1808
      %v1810 = vpop.f32.mrb[0].mxu0
      %1811 = vmatprep.mubr.f32.mxu0 0.0
      %1812 = vmatmul.mubr.f32.gmra.mrb[0].mxu0 %v219
      %v1813 = vpop.f32.mrb[0].mxu0
      %v1814 = vadd.f32 %v1704, %v1813
      %v1815 = vpop.f32.mrb[0].mxu0
      %1816 = vdwg.mxu0
      %v1817 = vld [vmem:[%s181 + $0x1] sm:$0xff]
      %v1818 = vld [vmem:[%s181 + $0x9] sm:$0xff]
      %v1819 = vld [vmem:[%s181 + $0x11] sm:$0xff]
      %v1820 = vld [vmem:[%s181 + $0x19] sm:$0xff]
      %v1821 = vld [vmem:[%s181 + $0x21] sm:$0xff]
      %v1822 = vld [vmem:[%s181 + $0x29] sm:$0xff]
      %v1823 = vld [vmem:[%s181 + $0x31] sm:$0xff]
      %v1824 = vld [vmem:[%s181 + $0x39] sm:$0xff]
      %v1825 = vld [vmem:[%s181 + $0x41] sm:$0xff]
      %v1827 = vsel %vm193, %v1817, 0
      %v1830 = vsel %vm193, %v1818, 0
      %v1833 = vsel %vm193, %v1819, 0
      %v1836 = vsel %vm193, %v1820, 0
      %v1839 = vsel %vm193, %v1821, 0
      %v1842 = vsel %vm193, %v1822, 0
      %v1845 = vsel %vm193, %v1823, 0
      %v1848 = vsel %vm193, %v1824, 0
      %v1851 = vsel %vm193, %v1825, 0
      %1853 = vmatprep.subr.mxu0 0.0
      %1854 = vmatpush1.msra.mxu0 %v514
      %1855 = vmatprep.subr.mxu0 0.0
      %1856 = vmatpush1.msra.mxu0 0.0
      %1857 = vmatprep.subr.mxu0 0.0
      %1858 = vmatpush1.msra.mxu0 0.0
      %1859 = vmatprep.subr.mxu0 0.0
      %1860 = vmatpush1.msra.mxu0 0.0
      %1861 = vmatprep.subr.mxu0 0.0
      %1862 = vmatpush1.msra.mxu0 0.0
      %1863 = vmatprep.subr.mxu0 0.0
      %1864 = vmatpush1.msra.mxu0 0.0
      %1865 = vmatprep.subr.mxu0 0.0
      %1866 = vmatpush1.msra.mxu0 0.0
      %1867 = vmatprep.subr.mxu0 0.0
      %1868 = vmatpush1.msra.mxu0 0.0
      %1869 = vmatprep.subr.mxu0 0.0
      %1870 = vmatpush1.msra.mxu0 0.0
      %1871 = vmatprep.subr.mxu0 0.0
      %1872 = vmatpush1.msra.mxu0 0.0
      %1873 = vmatprep.subr.mxu0 0.0
      %1874 = vmatpush1.msra.mxu0 0.0
      %1875 = vmatprep.subr.mxu0 0.0
      %1876 = vmatpush1.msra.mxu0 0.0
      %1877 = vmatprep.subr.mxu0 0.0
      %1878 = vmatpush1.msra.mxu0 0.0
      %1879 = vmatprep.subr.mxu0 0.0
      %1880 = vmatpush1.msra.mxu0 0.0
      %1881 = vmatprep.subr.mxu0 0.0
      %1882 = vmatpush1.msra.mxu0 0.0
      %1883 = vmatprep.subr.mxu0 0.0
      %1884 = vmatpush1.msra.mxu0 0.0
      %1885 = vmatprep.subr.mxu0 0.0
      %1886 = vmatpush1.msra.mxu0 0.0
      %1887 = vmatprep.subr.mxu0 0.0
      %1888 = vmatpush1.msra.mxu0 0.0
      %1889 = vmatprep.subr.mxu0 0.0
      %1890 = vmatpush1.msra.mxu0 0.0
      %1891 = vmatprep.subr.mxu0 0.0
      %1892 = vmatpush1.msra.mxu0 0.0
      %1893 = vmatprep.subr.mxu0 0.0
      %1894 = vmatpush1.msra.mxu0 0.0
      %1895 = vmatprep.subr.mxu0 0.0
      %1896 = vmatpush1.msra.mxu0 0.0
      %1897 = vmatprep.subr.mxu0 0.0
      %1898 = vmatpush1.msra.mxu0 0.0
      %1899 = vmatprep.subr.mxu0 0.0
      %1900 = vmatpush1.msra.mxu0 0.0
      %1901 = vmatprep.subr.mxu0 0.0
      %1902 = vmatpush1.msra.mxu0 0.0
      %1903 = vmatprep.subr.mxu0 0.0
      %1904 = vmatpush1.msra.mxu0 0.0
      %1905 = vmatprep.subr.mxu0 0.0
      %1906 = vmatpush1.msra.mxu0 0.0
      %1907 = vmatprep.subr.mxu0 0.0
      %1908 = vmatpush1.msra.mxu0 0.0
      %1909 = vmatprep.subr.mxu0 0.0
      %1910 = vmatpush1.msra.mxu0 0.0
      %1911 = vmatprep.subr.mxu0 0.0
      %1912 = vmatpush1.msra.mxu0 0.0
      %1913 = vmatprep.subr.mxu0 0.0
      %1914 = vmatpush1.msra.mxu0 0.0
      %1915 = vmatprep.subr.mxu0 0.0
      %1916 = vmatpush1.msra.mxu0 0.0
      %1917 = vmatprep.mubr.f32.mxu0 0.0
      %1918 = vmatmul.mubr.f32.gmra.mrb[0].mxu0 %v1827
      %v1919 = vpop.f32.mrb[0].mxu0
      %v1920 = vadd.f32 0.0, %v1919
      %v1921 = vpop.f32.mrb[0].mxu0
      %1922 = vmatprep.mubr.f32.mxu0 0.0
      %1923 = vmatmul.mubr.f32.gmra.mrb[0].mxu0 %v1830
      %v1924 = vpop.f32.mrb[0].mxu0
      %v1925 = vadd.f32 0.0, %v1924
      %v1926 = vpop.f32.mrb[0].mxu0
      %1927 = vmatprep.mubr.f32.mxu0 0.0
      %1928 = vmatmul.mubr.f32.gmra.mrb[0].mxu0 %v1833
      %v1929 = vpop.f32.mrb[0].mxu0
      %v1930 = vadd.f32 0.0, %v1929
      %v1931 = vpop.f32.mrb[0].mxu0
      %1932 = vmatprep.mubr.f32.mxu0 0.0
      %1933 = vmatmul.mubr.f32.gmra.mrb[0].mxu0 %v1836
      %v1934 = vpop.f32.mrb[0].mxu0
      %v1935 = vadd.f32 0.0, %v1934
      %v1936 = vpop.f32.mrb[0].mxu0
      %1937 = vmatprep.mubr.f32.mxu0 0.0
      %1938 = vmatmul.mubr.f32.gmra.mrb[0].mxu0 %v1839
      %v1939 = vpop.f32.mrb[0].mxu0
      %v1940 = vadd.f32 0.0, %v1939
      %v1941 = vpop.f32.mrb[0].mxu0
      %1942 = vmatprep.mubr.f32.mxu0 0.0
      %1943 = vmatmul.mubr.f32.gmra.mrb[0].mxu0 %v1842
      %v1944 = vpop.f32.mrb[0].mxu0
      %v1945 = vadd.f32 0.0, %v1944
      %v1946 = vpop.f32.mrb[0].mxu0
      %1947 = vmatprep.mubr.f32.mxu0 0.0
      %1948 = vmatmul.mubr.f32.gmra.mrb[0].mxu0 %v1845
      %v1949 = vpop.f32.mrb[0].mxu0
      %v1950 = vadd.f32 0.0, %v1949
      %v1951 = vpop.f32.mrb[0].mxu0
      %1952 = vmatprep.mubr.f32.mxu0 0.0
      %1953 = vmatmul.mubr.f32.gmra.mrb[0].mxu0 %v1848
      %v1954 = vpop.f32.mrb[0].mxu0
      %v1955 = vadd.f32 0.0, %v1954
      %v1956 = vpop.f32.mrb[0].mxu0
      %1957 = vmatprep.mubr.f32.mxu0 0.0
      %1958 = vmatmul.mubr.f32.gmra.mrb[0].mxu0 %v1851
      %v1959 = vpop.f32.mrb[0].mxu0
      %v1960 = vadd.f32 0.0, %v1959
      %v1961 = vpop.f32.mrb[0].mxu0
      %1962 = vdwg.mxu0
      %v1963 = vadd.f32 %v1774, %v1920
      %v1964 = vadd.f32 %v1779, %v1925
      %v1965 = vadd.f32 %v1784, %v1930
      %v1966 = vadd.f32 %v1789, %v1935
      %v1967 = vadd.f32 %v1794, %v1940
      %v1968 = vadd.f32 %v1799, %v1945
      %v1969 = vadd.f32 %v1804, %v1950
      %v1970 = vadd.f32 %v1809, %v1955
      %v1971 = vadd.f32 %v1814, %v1960
      %1972 = vmatprep.subr.mxu0 0.0
      %1973 = vmatpush1.msra.mxu0 %v675
      %1974 = vmatprep.subr.mxu0 0.0
      %1975 = vmatpush1.msra.mxu0 0.0
      %1976 = vmatprep.subr.mxu0 0.0
      %1977 = vmatpush1.msra.mxu0 0.0
      %1978 = vmatprep.subr.mxu0 0.0
      %1979 = vmatpush1.msra.mxu0 0.0
      %1980 = vmatprep.subr.mxu0 0.0
      %1981 = vmatpush1.msra.mxu0 0.0
      %1982 = vmatprep.subr.mxu0 0.0
      %1983 = vmatpush1.msra.mxu0 0.0
      %1984 = vmatprep.subr.mxu0 0.0
      %1985 = vmatpush1.msra.mxu0 0.0
      %1986 = vmatprep.subr.mxu0 0.0
      %1987 = vmatpush1.msra.mxu0 0.0
      %1988 = vmatprep.subr.mxu0 0.0
      %1989 = vmatpush1.msra.mxu0 0.0
      %1990 = vmatprep.subr.mxu0 0.0
      %1991 = vmatpush1.msra.mxu0 0.0
      %1992 = vmatprep.subr.mxu0 0.0
      %1993 = vmatpush1.msra.mxu0 0.0
      %1994 = vmatprep.subr.mxu0 0.0
      %1995 = vmatpush1.msra.mxu0 0.0
      %1996 = vmatprep.subr.mxu0 0.0
      %1997 = vmatpush1.msra.mxu0 0.0
      %1998 = vmatprep.subr.mxu0 0.0
      %1999 = vmatpush1.msra.mxu0 0.0
      %2000 = vmatprep.subr.mxu0 0.0
      %2001 = vmatpush1.msra.mxu0 0.0
      %2002 = vmatprep.subr.mxu0 0.0
      %2003 = vmatpush1.msra.mxu0 0.0
      %2004 = vmatprep.subr.mxu0 0.0
      %2005 = vmatpush1.msra.mxu0 0.0
      %2006 = vmatprep.subr.mxu0 0.0
      %2007 = vmatpush1.msra.mxu0 0.0
      %2008 = vmatprep.subr.mxu0 0.0
      %2009 = vmatpush1.msra.mxu0 0.0
      %2010 = vmatprep.subr.mxu0 0.0
      %2011 = vmatpush1.msra.mxu0 0.0
      %2012 = vmatprep.subr.mxu0 0.0
      %2013 = vmatpush1.msra.mxu0 0.0
      %2014 = vmatprep.subr.mxu0 0.0
      %2015 = vmatpush1.msra.mxu0 0.0
      %2016 = vmatprep.subr.mxu0 0.0
      %2017 = vmatpush1.msra.mxu0 0.0
      %2018 = vmatprep.subr.mxu0 0.0
      %2019 = vmatpush1.msra.mxu0 0.0
      %2020 = vmatprep.subr.mxu0 0.0
      %2021 = vmatpush1.msra.mxu0 0.0
      %2022 = vmatprep.subr.mxu0 0.0
      %2023 = vmatpush1.msra.mxu0 0.0
      %2024 = vmatprep.subr.mxu0 0.0
      %2025 = vmatpush1.msra.mxu0 0.0
      %2026 = vmatprep.subr.mxu0 0.0
      %2027 = vmatpush1.msra.mxu0 0.0
      %2028 = vmatprep.subr.mxu0 0.0
      %2029 = vmatpush1.msra.mxu0 0.0
      %2030 = vmatprep.subr.mxu0 0.0
      %2031 = vmatpush1.msra.mxu0 0.0
      %2032 = vmatprep.subr.mxu0 0.0
      %2033 = vmatpush1.msra.mxu0 0.0
      %2034 = vmatprep.subr.mxu0 0.0
      %2035 = vmatpush1.msra.mxu0 0.0
      %2036 = vmatprep.mubr.f32.mxu0 0.0
      %2037 = vmatmul.mubr.f32.gmra.mrb[0].mxu0 %v809
      %v2038 = vpop.f32.mrb[0].mxu0
      %v2039 = vadd.f32 0.0, %v2038
      %v2040 = vpop.f32.mrb[0].mxu0
      %2041 = vmatprep.mubr.f32.mxu0 0.0
      %2042 = vmatmul.mubr.f32.gmra.mrb[0].mxu0 %v812
      %v2043 = vpop.f32.mrb[0].mxu0
      %v2044 = vadd.f32 0.0, %v2043
      %v2045 = vpop.f32.mrb[0].mxu0
      %2046 = vmatprep.mubr.f32.mxu0 0.0
      %2047 = vmatmul.mubr.f32.gmra.mrb[0].mxu0 %v815
      %v2048 = vpop.f32.mrb[0].mxu0
      %v2049 = vadd.f32 0.0, %v2048
      %v2050 = vpop.f32.mrb[0].mxu0
      %2051 = vmatprep.mubr.f32.mxu0 0.0
      %2052 = vmatmul.mubr.f32.gmra.mrb[0].mxu0 %v818
      %v2053 = vpop.f32.mrb[0].mxu0
      %v2054 = vadd.f32 0.0, %v2053
      %v2055 = vpop.f32.mrb[0].mxu0
      %2056 = vmatprep.mubr.f32.mxu0 0.0
      %2057 = vmatmul.mubr.f32.gmra.mrb[0].mxu0 %v821
      %v2058 = vpop.f32.mrb[0].mxu0
      %v2059 = vadd.f32 0.0, %v2058
      %v2060 = vpop.f32.mrb[0].mxu0
      %2061 = vmatprep.mubr.f32.mxu0 0.0
      %2062 = vmatmul.mubr.f32.gmra.mrb[0].mxu0 %v824
      %v2063 = vpop.f32.mrb[0].mxu0
      %v2064 = vadd.f32 0.0, %v2063
      %v2065 = vpop.f32.mrb[0].mxu0
      %2066 = vmatprep.mubr.f32.mxu0 0.0
      %2067 = vmatmul.mubr.f32.gmra.mrb[0].mxu0 %v827
      %v2068 = vpop.f32.mrb[0].mxu0
      %v2069 = vadd.f32 0.0, %v2068
      %v2070 = vpop.f32.mrb[0].mxu0
      %2071 = vmatprep.mubr.f32.mxu0 0.0
      %2072 = vmatmul.mubr.f32.gmra.mrb[0].mxu0 %v830
      %v2073 = vpop.f32.mrb[0].mxu0
      %v2074 = vadd.f32 0.0, %v2073
      %v2075 = vpop.f32.mrb[0].mxu0
      %2076 = vmatprep.mubr.f32.mxu0 0.0
      %2077 = vmatmul.mubr.f32.gmra.mrb[0].mxu0 %v833
      %v2078 = vpop.f32.mrb[0].mxu0
      %v2079 = vadd.f32 0.0, %v2078
      %v2080 = vpop.f32.mrb[0].mxu0
      %2081 = vdwg.mxu0
      %v2082 = vadd.f32 %v1963, %v2039
      %v2083 = vadd.f32 %v1964, %v2044
      %v2084 = vadd.f32 %v1965, %v2049
      %v2085 = vadd.f32 %v1966, %v2054
      %v2086 = vadd.f32 %v1967, %v2059
      %v2087 = vadd.f32 %v1968, %v2064
      %v2088 = vadd.f32 %v1969, %v2069
      %v2089 = vadd.f32 %v1970, %v2074
      %v2090 = vadd.f32 %v1971, %v2079
      %2091 = vmatprep.subr.mxu0 0.0
      %2092 = vmatpush1.msra.mxu0 %v836
      %2093 = vmatprep.subr.mxu0 0.0
      %2094 = vmatpush1.msra.mxu0 0.0
      %2095 = vmatprep.subr.mxu0 0.0
      %2096 = vmatpush1.msra.mxu0 0.0
      %2097 = vmatprep.subr.mxu0 0.0
      %2098 = vmatpush1.msra.mxu0 0.0
      %2099 = vmatprep.subr.mxu0 0.0
      %2100 = vmatpush1.msra.mxu0 0.0
      %2101 = vmatprep.subr.mxu0 0.0
      %2102 = vmatpush1.msra.mxu0 0.0
      %2103 = vmatprep.subr.mxu0 0.0
      %2104 = vmatpush1.msra.mxu0 0.0
      %2105 = vmatprep.subr.mxu0 0.0
      %2106 = vmatpush1.msra.mxu0 0.0
      %2107 = vmatprep.subr.mxu0 0.0
      %2108 = vmatpush1.msra.mxu0 0.0
      %2109 = vmatprep.subr.mxu0 0.0
      %2110 = vmatpush1.msra.mxu0 0.0
      %2111 = vmatprep.subr.mxu0 0.0
      %2112 = vmatpush1.msra.mxu0 0.0
      %2113 = vmatprep.subr.mxu0 0.0
      %2114 = vmatpush1.msra.mxu0 0.0
      %2115 = vmatprep.subr.mxu0 0.0
      %2116 = vmatpush1.msra.mxu0 0.0
      %2117 = vmatprep.subr.mxu0 0.0
      %2118 = vmatpush1.msra.mxu0 0.0
      %2119 = vmatprep.subr.mxu0 0.0
      %2120 = vmatpush1.msra.mxu0 0.0
      %2121 = vmatprep.subr.mxu0 0.0
      %2122 = vmatpush1.msra.mxu0 0.0
      %2123 = vmatprep.subr.mxu0 0.0
      %2124 = vmatpush1.msra.mxu0 0.0
      %2125 = vmatprep.subr.mxu0 0.0
      %2126 = vmatpush1.msra.mxu0 0.0
      %2127 = vmatprep.subr.mxu0 0.0
      %2128 = vmatpush1.msra.mxu0 0.0
      %2129 = vmatprep.subr.mxu0 0.0
      %2130 = vmatpush1.msra.mxu0 0.0
      %2131 = vmatprep.subr.mxu0 0.0
      %2132 = vmatpush1.msra.mxu0 0.0
      %2133 = vmatprep.subr.mxu0 0.0
      %2134 = vmatpush1.msra.mxu0 0.0
      %2135 = vmatprep.subr.mxu0 0.0
      %2136 = vmatpush1.msra.mxu0 0.0
      %2137 = vmatprep.subr.mxu0 0.0
      %2138 = vmatpush1.msra.mxu0 0.0
      %2139 = vmatprep.subr.mxu0 0.0
      %2140 = vmatpush1.msra.mxu0 0.0
      %2141 = vmatprep.subr.mxu0 0.0
      %2142 = vmatpush1.msra.mxu0 0.0
      %2143 = vmatprep.subr.mxu0 0.0
      %2144 = vmatpush1.msra.mxu0 0.0
      %2145 = vmatprep.subr.mxu0 0.0
      %2146 = vmatpush1.msra.mxu0 0.0
      %2147 = vmatprep.subr.mxu0 0.0
      %2148 = vmatpush1.msra.mxu0 0.0
      %2149 = vmatprep.subr.mxu0 0.0
      %2150 = vmatpush1.msra.mxu0 0.0
      %2151 = vmatprep.subr.mxu0 0.0
      %2152 = vmatpush1.msra.mxu0 0.0
      %2153 = vmatprep.subr.mxu0 0.0
      %2154 = vmatpush1.msra.mxu0 0.0
      %2155 = vmatprep.mubr.f32.mxu0 0.0
      %2156 = vmatmul.mubr.f32.gmra.mrb[0].mxu0 %v969
      %v2157 = vpop.f32.mrb[0].mxu0
      %v2158 = vadd.f32 0.0, %v2157
      %v2159 = vpop.f32.mrb[0].mxu0
      %2160 = vmatprep.mubr.f32.mxu0 0.0
      %2161 = vmatmul.mubr.f32.gmra.mrb[0].mxu0 %v972
      %v2162 = vpop.f32.mrb[0].mxu0
      %v2163 = vadd.f32 0.0, %v2162
      %v2164 = vpop.f32.mrb[0].mxu0
      %2165 = vmatprep.mubr.f32.mxu0 0.0
      %2166 = vmatmul.mubr.f32.gmra.mrb[0].mxu0 %v975
      %v2167 = vpop.f32.mrb[0].mxu0
      %v2168 = vadd.f32 0.0, %v2167
      %v2169 = vpop.f32.mrb[0].mxu0
      %2170 = vmatprep.mubr.f32.mxu0 0.0
      %2171 = vmatmul.mubr.f32.gmra.mrb[0].mxu0 %v978
      %v2172 = vpop.f32.mrb[0].mxu0
      %v2173 = vadd.f32 0.0, %v2172
      %v2174 = vpop.f32.mrb[0].mxu0
      %2175 = vmatprep.mubr.f32.mxu0 0.0
      %2176 = vmatmul.mubr.f32.gmra.mrb[0].mxu0 %v981
      %v2177 = vpop.f32.mrb[0].mxu0
      %v2178 = vadd.f32 0.0, %v2177
      %v2179 = vpop.f32.mrb[0].mxu0
      %2180 = vmatprep.mubr.f32.mxu0 0.0
      %2181 = vmatmul.mubr.f32.gmra.mrb[0].mxu0 %v984
      %v2182 = vpop.f32.mrb[0].mxu0
      %v2183 = vadd.f32 0.0, %v2182
      %v2184 = vpop.f32.mrb[0].mxu0
      %2185 = vmatprep.mubr.f32.mxu0 0.0
      %2186 = vmatmul.mubr.f32.gmra.mrb[0].mxu0 %v987
      %v2187 = vpop.f32.mrb[0].mxu0
      %v2188 = vadd.f32 0.0, %v2187
      %v2189 = vpop.f32.mrb[0].mxu0
      %2190 = vmatprep.mubr.f32.mxu0 0.0
      %2191 = vmatmul.mubr.f32.gmra.mrb[0].mxu0 %v990
      %v2192 = vpop.f32.mrb[0].mxu0
      %v2193 = vadd.f32 0.0, %v2192
      %v2194 = vpop.f32.mrb[0].mxu0
      %2195 = vmatprep.mubr.f32.mxu0 0.0
      %2196 = vmatmul.mubr.f32.gmra.mrb[0].mxu0 %v993
      %v2197 = vpop.f32.mrb[0].mxu0
      %v2198 = vadd.f32 0.0, %v2197
      %v2199 = vpop.f32.mrb[0].mxu0
      %2200 = vdwg.mxu0
      %v2201 = vadd.f32 %v2082, %v2158
      %v2202 = vadd.f32 %v2083, %v2163
      %v2203 = vadd.f32 %v2084, %v2168
      %v2204 = vadd.f32 %v2085, %v2173
      %v2205 = vadd.f32 %v2086, %v2178
      %v2206 = vadd.f32 %v2087, %v2183
      %v2207 = vadd.f32 %v2088, %v2188
      %v2208 = vadd.f32 %v2089, %v2193
      %v2209 = vadd.f32 %v2090, %v2198
      %v2210 = vld [vmem:[%s796 + $0x1] sm:$0xff]
      %v2211 = vld [vmem:[%s796 + $0x9] sm:$0xff]
      %v2212 = vld [vmem:[%s796 + $0x11] sm:$0xff]
      %v2213 = vld [vmem:[%s796 + $0x19] sm:$0xff]
      %v2214 = vld [vmem:[%s796 + $0x21] sm:$0xff]
      %v2215 = vld [vmem:[%s796 + $0x29] sm:$0xff]
      %v2216 = vld [vmem:[%s796 + $0x31] sm:$0xff]
      %v2217 = vld [vmem:[%s796 + $0x39] sm:$0xff]
      %v2218 = vld [vmem:[%s796 + $0x41] sm:$0xff]
      %v2220 = vsel %vm193, %v2210, 0
      %v2223 = vsel %vm193, %v2211, 0
      %v2226 = vsel %vm193, %v2212, 0
      %v2229 = vsel %vm193, %v2213, 0
      %v2232 = vsel %vm193, %v2214, 0
      %v2235 = vsel %vm193, %v2215, 0
      %v2238 = vsel %vm193, %v2216, 0
      %v2241 = vsel %vm193, %v2217, 0
      %v2244 = vsel %vm193, %v2218, 0
      %2246 = vmatprep.subr.mxu0 0.0
      %2247 = vmatpush1.msra.mxu0 %v996
      %2248 = vmatprep.subr.mxu0 0.0
      %2249 = vmatpush1.msra.mxu0 0.0
      %2250 = vmatprep.subr.mxu0 0.0
      %2251 = vmatpush1.msra.mxu0 0.0
      %2252 = vmatprep.subr.mxu0 0.0
      %2253 = vmatpush1.msra.mxu0 0.0
      %2254 = vmatprep.subr.mxu0 0.0
      %2255 = vmatpush1.msra.mxu0 0.0
      %2256 = vmatprep.subr.mxu0 0.0
      %2257 = vmatpush1.msra.mxu0 0.0
      %2258 = vmatprep.subr.mxu0 0.0
      %2259 = vmatpush1.msra.mxu0 0.0
      %2260 = vmatprep.subr.mxu0 0.0
      %2261 = vmatpush1.msra.mxu0 0.0
      %2262 = vmatprep.subr.mxu0 0.0
      %2263 = vmatpush1.msra.mxu0 0.0
      %2264 = vmatprep.subr.mxu0 0.0
      %2265 = vmatpush1.msra.mxu0 0.0
      %2266 = vmatprep.subr.mxu0 0.0
      %2267 = vmatpush1.msra.mxu0 0.0
      %2268 = vmatprep.subr.mxu0 0.0
      %2269 = vmatpush1.msra.mxu0 0.0
      %2270 = vmatprep.subr.mxu0 0.0
      %2271 = vmatpush1.msra.mxu0 0.0
      %2272 = vmatprep.subr.mxu0 0.0
      %2273 = vmatpush1.msra.mxu0 0.0
      %2274 = vmatprep.subr.mxu0 0.0
      %2275 = vmatpush1.msra.mxu0 0.0
      %2276 = vmatprep.subr.mxu0 0.0
      %2277 = vmatpush1.msra.mxu0 0.0
      %2278 = vmatprep.subr.mxu0 0.0
      %2279 = vmatpush1.msra.mxu0 0.0
      %2280 = vmatprep.subr.mxu0 0.0
      %2281 = vmatpush1.msra.mxu0 0.0
      %2282 = vmatprep.subr.mxu0 0.0
      %2283 = vmatpush1.msra.mxu0 0.0
      %2284 = vmatprep.subr.mxu0 0.0
      %2285 = vmatpush1.msra.mxu0 0.0
      %2286 = vmatprep.subr.mxu0 0.0
      %2287 = vmatpush1.msra.mxu0 0.0
      %2288 = vmatprep.subr.mxu0 0.0
      %2289 = vmatpush1.msra.mxu0 0.0
      %2290 = vmatprep.subr.mxu0 0.0
      %2291 = vmatpush1.msra.mxu0 0.0
      %2292 = vmatprep.subr.mxu0 0.0
      %2293 = vmatpush1.msra.mxu0 0.0
      %2294 = vmatprep.subr.mxu0 0.0
      %2295 = vmatpush1.msra.mxu0 0.0
      %2296 = vmatprep.subr.mxu0 0.0
      %2297 = vmatpush1.msra.mxu0 0.0
      %2298 = vmatprep.subr.mxu0 0.0
      %2299 = vmatpush1.msra.mxu0 0.0
      %2300 = vmatprep.subr.mxu0 0.0
      %2301 = vmatpush1.msra.mxu0 0.0
      %2302 = vmatprep.subr.mxu0 0.0
      %2303 = vmatpush1.msra.mxu0 0.0
      %2304 = vmatprep.subr.mxu0 0.0
      %2305 = vmatpush1.msra.mxu0 0.0
      %2306 = vmatprep.subr.mxu0 0.0
      %2307 = vmatpush1.msra.mxu0 0.0
      %2308 = vmatprep.subr.mxu0 0.0
      %2309 = vmatpush1.msra.mxu0 0.0
      %2310 = vmatprep.mubr.f32.mxu0 0.0
      %2311 = vmatmul.mubr.f32.gmra.mrb[0].mxu0 %v2220
      %v2312 = vpop.f32.mrb[0].mxu0
      %v2313 = vadd.f32 0.0, %v2312
      %v2314 = vpop.f32.mrb[0].mxu0
      %2315 = vmatprep.mubr.f32.mxu0 0.0
      %2316 = vmatmul.mubr.f32.gmra.mrb[0].mxu0 %v2223
      %v2317 = vpop.f32.mrb[0].mxu0
      %v2318 = vadd.f32 0.0, %v2317
      %v2319 = vpop.f32.mrb[0].mxu0
      %2320 = vmatprep.mubr.f32.mxu0 0.0
      %2321 = vmatmul.mubr.f32.gmra.mrb[0].mxu0 %v2226
      %v2322 = vpop.f32.mrb[0].mxu0
      %v2323 = vadd.f32 0.0, %v2322
      %v2324 = vpop.f32.mrb[0].mxu0
      %2325 = vmatprep.mubr.f32.mxu0 0.0
      %2326 = vmatmul.mubr.f32.gmra.mrb[0].mxu0 %v2229
      %v2327 = vpop.f32.mrb[0].mxu0
      %v2328 = vadd.f32 0.0, %v2327
      %v2329 = vpop.f32.mrb[0].mxu0
      %2330 = vmatprep.mubr.f32.mxu0 0.0
      %2331 = vmatmul.mubr.f32.gmra.mrb[0].mxu0 %v2232
      %v2332 = vpop.f32.mrb[0].mxu0
      %v2333 = vadd.f32 0.0, %v2332
      %v2334 = vpop.f32.mrb[0].mxu0
      %2335 = vmatprep.mubr.f32.mxu0 0.0
      %2336 = vmatmul.mubr.f32.gmra.mrb[0].mxu0 %v2235
      %v2337 = vpop.f32.mrb[0].mxu0
      %v2338 = vadd.f32 0.0, %v2337
      %v2339 = vpop.f32.mrb[0].mxu0
      %2340 = vmatprep.mubr.f32.mxu0 0.0
      %2341 = vmatmul.mubr.f32.gmra.mrb[0].mxu0 %v2238
      %v2342 = vpop.f32.mrb[0].mxu0
      %v2343 = vadd.f32 0.0, %v2342
      %v2344 = vpop.f32.mrb[0].mxu0
      %2345 = vmatprep.mubr.f32.mxu0 0.0
      %2346 = vmatmul.mubr.f32.gmra.mrb[0].mxu0 %v2241
      %v2347 = vpop.f32.mrb[0].mxu0
      %v2348 = vadd.f32 0.0, %v2347
      %v2349 = vpop.f32.mrb[0].mxu0
      %2350 = vmatprep.mubr.f32.mxu0 0.0
      %2351 = vmatmul.mubr.f32.gmra.mrb[0].mxu0 %v2244
      %v2352 = vpop.f32.mrb[0].mxu0
      %v2353 = vadd.f32 0.0, %v2352
      %v2354 = vpop.f32.mrb[0].mxu0
      %2355 = vdwg.mxu0
      %v2356 = vadd.f32 %v2201, %v2313
      %v2357 = vadd.f32 %v2202, %v2318
      %v2358 = vadd.f32 %v2203, %v2323
      %v2359 = vadd.f32 %v2204, %v2328
      %v2360 = vadd.f32 %v2205, %v2333
      %v2361 = vadd.f32 %v2206, %v2338
      %v2362 = vadd.f32 %v2207, %v2343
      %v2363 = vadd.f32 %v2208, %v2348
      %v2364 = vadd.f32 %v2209, %v2353
      %2365 = vmatprep.subr.mxu0 0.0
      %2366 = vmatpush1.msra.mxu0 %v1156
      %2367 = vmatprep.subr.mxu0 0.0
      %2368 = vmatpush1.msra.mxu0 0.0
      %2369 = vmatprep.subr.mxu0 0.0
      %2370 = vmatpush1.msra.mxu0 0.0
      %2371 = vmatprep.subr.mxu0 0.0
      %2372 = vmatpush1.msra.mxu0 0.0
      %2373 = vmatprep.subr.mxu0 0.0
      %2374 = vmatpush1.msra.mxu0 0.0
      %2375 = vmatprep.subr.mxu0 0.0
      %2376 = vmatpush1.msra.mxu0 0.0
      %2377 = vmatprep.subr.mxu0 0.0
      %2378 = vmatpush1.msra.mxu0 0.0
      %2379 = vmatprep.subr.mxu0 0.0
      %2380 = vmatpush1.msra.mxu0 0.0
      %2381 = vmatprep.subr.mxu0 0.0
      %2382 = vmatpush1.msra.mxu0 0.0
      %2383 = vmatprep.subr.mxu0 0.0
      %2384 = vmatpush1.msra.mxu0 0.0
      %2385 = vmatprep.subr.mxu0 0.0
      %2386 = vmatpush1.msra.mxu0 0.0
      %2387 = vmatprep.subr.mxu0 0.0
      %2388 = vmatpush1.msra.mxu0 0.0
      %2389 = vmatprep.subr.mxu0 0.0
      %2390 = vmatpush1.msra.mxu0 0.0
      %2391 = vmatprep.subr.mxu0 0.0
      %2392 = vmatpush1.msra.mxu0 0.0
      %2393 = vmatprep.subr.mxu0 0.0
      %2394 = vmatpush1.msra.mxu0 0.0
      %2395 = vmatprep.subr.mxu0 0.0
      %2396 = vmatpush1.msra.mxu0 0.0
      %2397 = vmatprep.subr.mxu0 0.0
      %2398 = vmatpush1.msra.mxu0 0.0
      %2399 = vmatprep.subr.mxu0 0.0
      %2400 = vmatpush1.msra.mxu0 0.0
      %2401 = vmatprep.subr.mxu0 0.0
      %2402 = vmatpush1.msra.mxu0 0.0
      %2403 = vmatprep.subr.mxu0 0.0
      %2404 = vmatpush1.msra.mxu0 0.0
      %2405 = vmatprep.subr.mxu0 0.0
      %2406 = vmatpush1.msra.mxu0 0.0
      %2407 = vmatprep.subr.mxu0 0.0
      %2408 = vmatpush1.msra.mxu0 0.0
      %2409 = vmatprep.subr.mxu0 0.0
      %2410 = vmatpush1.msra.mxu0 0.0
      %2411 = vmatprep.subr.mxu0 0.0
      %2412 = vmatpush1.msra.mxu0 0.0
      %2413 = vmatprep.subr.mxu0 0.0
      %2414 = vmatpush1.msra.mxu0 0.0
      %2415 = vmatprep.subr.mxu0 0.0
      %2416 = vmatpush1.msra.mxu0 0.0
      %2417 = vmatprep.subr.mxu0 0.0
      %2418 = vmatpush1.msra.mxu0 0.0
      %2419 = vmatprep.subr.mxu0 0.0
      %2420 = vmatpush1.msra.mxu0 0.0
      %2421 = vmatprep.subr.mxu0 0.0
      %2422 = vmatpush1.msra.mxu0 0.0
      %2423 = vmatprep.subr.mxu0 0.0
      %2424 = vmatpush1.msra.mxu0 0.0
      %2425 = vmatprep.subr.mxu0 0.0
      %2426 = vmatpush1.msra.mxu0 0.0
      %2427 = vmatprep.subr.mxu0 0.0
      %2428 = vmatpush1.msra.mxu0 0.0
      %2429 = vmatprep.mubr.f32.mxu0 0.0
      %2430 = vmatmul.mubr.f32.gmra.mrb[0].mxu0 %v1289
      %v2431 = vpop.f32.mrb[0].mxu0
      %v2432 = vadd.f32 0.0, %v2431
      %v2433 = vpop.f32.mrb[0].mxu0
      %2434 = vmatprep.mubr.f32.mxu0 0.0
      %2435 = vmatmul.mubr.f32.gmra.mrb[0].mxu0 %v1292
      %v2436 = vpop.f32.mrb[0].mxu0
      %v2437 = vadd.f32 0.0, %v2436
      %v2438 = vpop.f32.mrb[0].mxu0
      %2439 = vmatprep.mubr.f32.mxu0 0.0
      %2440 = vmatmul.mubr.f32.gmra.mrb[0].mxu0 %v1295
      %v2441 = vpop.f32.mrb[0].mxu0
      %v2442 = vadd.f32 0.0, %v2441
      %v2443 = vpop.f32.mrb[0].mxu0
      %2444 = vmatprep.mubr.f32.mxu0 0.0
      %2445 = vmatmul.mubr.f32.gmra.mrb[0].mxu0 %v1298
      %v2446 = vpop.f32.mrb[0].mxu0
      %v2447 = vadd.f32 0.0, %v2446
      %v2448 = vpop.f32.mrb[0].mxu0
      %2449 = vmatprep.mubr.f32.mxu0 0.0
      %2450 = vmatmul.mubr.f32.gmra.mrb[0].mxu0 %v1301
      %v2451 = vpop.f32.mrb[0].mxu0
      %v2452 = vadd.f32 0.0, %v2451
      %v2453 = vpop.f32.mrb[0].mxu0
      %2454 = vmatprep.mubr.f32.mxu0 0.0
      %2455 = vmatmul.mubr.f32.gmra.mrb[0].mxu0 %v1304
      %v2456 = vpop.f32.mrb[0].mxu0
      %v2457 = vadd.f32 0.0, %v2456
      %v2458 = vpop.f32.mrb[0].mxu0
      %2459 = vmatprep.mubr.f32.mxu0 0.0
      %2460 = vmatmul.mubr.f32.gmra.mrb[0].mxu0 %v1307
      %v2461 = vpop.f32.mrb[0].mxu0
      %v2462 = vadd.f32 0.0, %v2461
      %v2463 = vpop.f32.mrb[0].mxu0
      %2464 = vmatprep.mubr.f32.mxu0 0.0
      %2465 = vmatmul.mubr.f32.gmra.mrb[0].mxu0 %v1310
      %v2466 = vpop.f32.mrb[0].mxu0
      %v2467 = vadd.f32 0.0, %v2466
      %v2468 = vpop.f32.mrb[0].mxu0
      %2469 = vmatprep.mubr.f32.mxu0 0.0
      %2470 = vmatmul.mubr.f32.gmra.mrb[0].mxu0 %v1313
      %v2471 = vpop.f32.mrb[0].mxu0
      %v2472 = vadd.f32 0.0, %v2471
      %v2473 = vpop.f32.mrb[0].mxu0
      %2474 = vdwg.mxu0
      %v2475 = vadd.f32 %v2356, %v2432
      %v2476 = vadd.f32 %v2357, %v2437
      %v2477 = vadd.f32 %v2358, %v2442
      %v2478 = vadd.f32 %v2359, %v2447
      %v2479 = vadd.f32 %v2360, %v2452
      %v2480 = vadd.f32 %v2361, %v2457
      %v2481 = vadd.f32 %v2362, %v2462
      %v2482 = vadd.f32 %v2363, %v2467
      %v2483 = vadd.f32 %v2364, %v2472
      %2484 = vmatprep.subr.mxu0 0.0
      %2485 = vmatpush1.msra.mxu0 %v1316
      %2486 = vmatprep.subr.mxu0 0.0
      %2487 = vmatpush1.msra.mxu0 0.0
      %2488 = vmatprep.subr.mxu0 0.0
      %2489 = vmatpush1.msra.mxu0 0.0
      %2490 = vmatprep.subr.mxu0 0.0
      %2491 = vmatpush1.msra.mxu0 0.0
      %2492 = vmatprep.subr.mxu0 0.0
      %2493 = vmatpush1.msra.mxu0 0.0
      %2494 = vmatprep.subr.mxu0 0.0
      %2495 = vmatpush1.msra.mxu0 0.0
      %2496 = vmatprep.subr.mxu0 0.0
      %2497 = vmatpush1.msra.mxu0 0.0
      %2498 = vmatprep.subr.mxu0 0.0
      %2499 = vmatpush1.msra.mxu0 0.0
      %2500 = vmatprep.subr.mxu0 0.0
      %2501 = vmatpush1.msra.mxu0 0.0
      %2502 = vmatprep.subr.mxu0 0.0
      %2503 = vmatpush1.msra.mxu0 0.0
      %2504 = vmatprep.subr.mxu0 0.0
      %2505 = vmatpush1.msra.mxu0 0.0
      %2506 = vmatprep.subr.mxu0 0.0
      %2507 = vmatpush1.msra.mxu0 0.0
      %2508 = vmatprep.subr.mxu0 0.0
      %2509 = vmatpush1.msra.mxu0 0.0
      %2510 = vmatprep.subr.mxu0 0.0
      %2511 = vmatpush1.msra.mxu0 0.0
      %2512 = vmatprep.subr.mxu0 0.0
      %2513 = vmatpush1.msra.mxu0 0.0
      %2514 = vmatprep.subr.mxu0 0.0
      %2515 = vmatpush1.msra.mxu0 0.0
      %2516 = vmatprep.subr.mxu0 0.0
      %2517 = vmatpush1.msra.mxu0 0.0
      %2518 = vmatprep.subr.mxu0 0.0
      %2519 = vmatpush1.msra.mxu0 0.0
      %2520 = vmatprep.subr.mxu0 0.0
      %2521 = vmatpush1.msra.mxu0 0.0
      %2522 = vmatprep.subr.mxu0 0.0
      %2523 = vmatpush1.msra.mxu0 0.0
      %2524 = vmatprep.subr.mxu0 0.0
      %2525 = vmatpush1.msra.mxu0 0.0
      %2526 = vmatprep.subr.mxu0 0.0
      %2527 = vmatpush1.msra.mxu0 0.0
      %2528 = vmatprep.subr.mxu0 0.0
      %2529 = vmatpush1.msra.mxu0 0.0
      %2530 = vmatprep.subr.mxu0 0.0
      %2531 = vmatpush1.msra.mxu0 0.0
      %2532 = vmatprep.subr.mxu0 0.0
      %2533 = vmatpush1.msra.mxu0 0.0
      %2534 = vmatprep.subr.mxu0 0.0
      %2535 = vmatpush1.msra.mxu0 0.0
      %2536 = vmatprep.subr.mxu0 0.0
      %2537 = vmatpush1.msra.mxu0 0.0
      %2538 = vmatprep.subr.mxu0 0.0
      %2539 = vmatpush1.msra.mxu0 0.0
      %2540 = vmatprep.subr.mxu0 0.0
      %2541 = vmatpush1.msra.mxu0 0.0
      %2542 = vmatprep.subr.mxu0 0.0
      %2543 = vmatpush1.msra.mxu0 0.0
      %2544 = vmatprep.subr.mxu0 0.0
      %2545 = vmatpush1.msra.mxu0 0.0
      %2546 = vmatprep.subr.mxu0 0.0
      %2547 = vmatpush1.msra.mxu0 0.0
      %2548 = vmatprep.mubr.f32.mxu0 0.0
      %2549 = vmatmul.mubr.f32.gmra.mrb[0].mxu0 %v1449
      %v2550 = vpop.f32.mrb[0].mxu0
      %v2551 = vadd.f32 0.0, %v2550
      %v2552 = vpop.f32.mrb[0].mxu0
      %2553 = vmatprep.mubr.f32.mxu0 0.0
      %2554 = vmatmul.mubr.f32.gmra.mrb[0].mxu0 %v1452
      %v2555 = vpop.f32.mrb[0].mxu0
      %v2556 = vadd.f32 0.0, %v2555
      %v2557 = vpop.f32.mrb[0].mxu0
      %2558 = vmatprep.mubr.f32.mxu0 0.0
      %2559 = vmatmul.mubr.f32.gmra.mrb[0].mxu0 %v1455
      %v2560 = vpop.f32.mrb[0].mxu0
      %v2561 = vadd.f32 0.0, %v2560
      %v2562 = vpop.f32.mrb[0].mxu0
      %2563 = vmatprep.mubr.f32.mxu0 0.0
      %2564 = vmatmul.mubr.f32.gmra.mrb[0].mxu0 %v1458
      %v2565 = vpop.f32.mrb[0].mxu0
      %v2566 = vadd.f32 0.0, %v2565
      %v2567 = vpop.f32.mrb[0].mxu0
      %2568 = vmatprep.mubr.f32.mxu0 0.0
      %2569 = vmatmul.mubr.f32.gmra.mrb[0].mxu0 %v1461
      %v2570 = vpop.f32.mrb[0].mxu0
      %v2571 = vadd.f32 0.0, %v2570
      %v2572 = vpop.f32.mrb[0].mxu0
      %2573 = vmatprep.mubr.f32.mxu0 0.0
      %2574 = vmatmul.mubr.f32.gmra.mrb[0].mxu0 %v1464
      %v2575 = vpop.f32.mrb[0].mxu0
      %v2576 = vadd.f32 0.0, %v2575
      %v2577 = vpop.f32.mrb[0].mxu0
      %2578 = vmatprep.mubr.f32.mxu0 0.0
      %2579 = vmatmul.mubr.f32.gmra.mrb[0].mxu0 %v1467
      %v2580 = vpop.f32.mrb[0].mxu0
      %v2581 = vadd.f32 0.0, %v2580
      %v2582 = vpop.f32.mrb[0].mxu0
      %2583 = vmatprep.mubr.f32.mxu0 0.0
      %2584 = vmatmul.mubr.f32.gmra.mrb[0].mxu0 %v1470
      %v2585 = vpop.f32.mrb[0].mxu0
      %v2586 = vadd.f32 0.0, %v2585
      %v2587 = vpop.f32.mrb[0].mxu0
      %2588 = vmatprep.mubr.f32.mxu0 0.0
      %2589 = vmatmul.mubr.f32.gmra.mrb[0].mxu0 %v1473
      %v2590 = vpop.f32.mrb[0].mxu0
      %v2591 = vadd.f32 0.0, %v2590
      %v2592 = vpop.f32.mrb[0].mxu0
      %2593 = vdwg.mxu0
      %v2594 = vadd.f32 %v2475, %v2551
      %v2595 = vadd.f32 %v2476, %v2556
      %v2596 = vadd.f32 %v2477, %v2561
      %v2597 = vadd.f32 %v2478, %v2566
      %v2598 = vadd.f32 %v2479, %v2571
      %v2599 = vadd.f32 %v2480, %v2576
      %v2600 = vadd.f32 %v2481, %v2581
      %v2601 = vadd.f32 %v2482, %v2586
      %v2602 = vadd.f32 %v2483, %v2591
      %v2603 = vld [vmem:[%s181 + $0xa] sm:$0xff]
      %v2604 = vld [vmem:[%s181 + $0x12] sm:$0xff]
      %v2605 = vld [vmem:[%s181 + $0x1a] sm:$0xff]
      %v2606 = vld [vmem:[%s181 + $0x22] sm:$0xff]
      %v2607 = vld [vmem:[%s181 + $0x2a] sm:$0xff]
      %v2608 = vld [vmem:[%s181 + $0x32] sm:$0xff]
      %v2609 = vld [vmem:[%s181 + $0x3a] sm:$0xff]
      %v2610 = vld [vmem:[%s181 + $0x42] sm:$0xff]
      %v2611 = vld [vmem:[%s181 + $0x4a] sm:$0xff]
      %v2613 = vsel %vm193, %v2603, 0
      %v2616 = vsel %vm193, %v2604, 0
      %v2619 = vsel %vm193, %v2605, 0
      %v2622 = vsel %vm193, %v2606, 0
      %v2625 = vsel %vm193, %v2607, 0
      %v2628 = vsel %vm193, %v2608, 0
      %v2631 = vsel %vm193, %v2609, 0
      %v2634 = vsel %vm193, %v2610, 0
      %v2637 = vsel %vm193, %v2611, 0
      %2639 = vmatprep.subr.mxu0 0.0
      %2640 = vmatpush1.msra.mxu0 %v1476
      %2641 = vmatprep.subr.mxu0 0.0
      %2642 = vmatpush1.msra.mxu0 0.0
      %2643 = vmatprep.subr.mxu0 0.0
      %2644 = vmatpush1.msra.mxu0 0.0
      %2645 = vmatprep.subr.mxu0 0.0
      %2646 = vmatpush1.msra.mxu0 0.0
      %2647 = vmatprep.subr.mxu0 0.0
      %2648 = vmatpush1.msra.mxu0 0.0
      %2649 = vmatprep.subr.mxu0 0.0
      %2650 = vmatpush1.msra.mxu0 0.0
      %2651 = vmatprep.subr.mxu0 0.0
      %2652 = vmatpush1.msra.mxu0 0.0
      %2653 = vmatprep.subr.mxu0 0.0
      %2654 = vmatpush1.msra.mxu0 0.0
      %2655 = vmatprep.subr.mxu0 0.0
      %2656 = vmatpush1.msra.mxu0 0.0
      %2657 = vmatprep.subr.mxu0 0.0
      %2658 = vmatpush1.msra.mxu0 0.0
      %2659 = vmatprep.subr.mxu0 0.0
      %2660 = vmatpush1.msra.mxu0 0.0
      %2661 = vmatprep.subr.mxu0 0.0
      %2662 = vmatpush1.msra.mxu0 0.0
      %2663 = vmatprep.subr.mxu0 0.0
      %2664 = vmatpush1.msra.mxu0 0.0
      %2665 = vmatprep.subr.mxu0 0.0
      %2666 = vmatpush1.msra.mxu0 0.0
      %2667 = vmatprep.subr.mxu0 0.0
      %2668 = vmatpush1.msra.mxu0 0.0
      %2669 = vmatprep.subr.mxu0 0.0
      %2670 = vmatpush1.msra.mxu0 0.0
      %2671 = vmatprep.subr.mxu0 0.0
      %2672 = vmatpush1.msra.mxu0 0.0
      %2673 = vmatprep.subr.mxu0 0.0
      %2674 = vmatpush1.msra.mxu0 0.0
      %2675 = vmatprep.subr.mxu0 0.0
      %2676 = vmatpush1.msra.mxu0 0.0
      %2677 = vmatprep.subr.mxu0 0.0
      %2678 = vmatpush1.msra.mxu0 0.0
      %2679 = vmatprep.subr.mxu0 0.0
      %2680 = vmatpush1.msra.mxu0 0.0
      %2681 = vmatprep.subr.mxu0 0.0
      %2682 = vmatpush1.msra.mxu0 0.0
      %2683 = vmatprep.subr.mxu0 0.0
      %2684 = vmatpush1.msra.mxu0 0.0
      %2685 = vmatprep.subr.mxu0 0.0
      %2686 = vmatpush1.msra.mxu0 0.0
      %2687 = vmatprep.subr.mxu0 0.0
      %2688 = vmatpush1.msra.mxu0 0.0
      %2689 = vmatprep.subr.mxu0 0.0
      %2690 = vmatpush1.msra.mxu0 0.0
      %2691 = vmatprep.subr.mxu0 0.0
      %2692 = vmatpush1.msra.mxu0 0.0
      %2693 = vmatprep.subr.mxu0 0.0
      %2694 = vmatpush1.msra.mxu0 0.0
      %2695 = vmatprep.subr.mxu0 0.0
      %2696 = vmatpush1.msra.mxu0 0.0
      %2697 = vmatprep.subr.mxu0 0.0
      %2698 = vmatpush1.msra.mxu0 0.0
      %2699 = vmatprep.subr.mxu0 0.0
      %2700 = vmatpush1.msra.mxu0 0.0
      %2701 = vmatprep.subr.mxu0 0.0
      %2702 = vmatpush1.msra.mxu0 0.0
      %2703 = vmatprep.mubr.f32.mxu0 0.0
      %2704 = vmatmul.mubr.f32.gmra.mrb[0].mxu0 %v2613
      %v2705 = vpop.f32.mrb[0].mxu0
      %v2706 = vadd.f32 0.0, %v2705
      %v2707 = vpop.f32.mrb[0].mxu0
      %2708 = vmatprep.mubr.f32.mxu0 0.0
      %2709 = vmatmul.mubr.f32.gmra.mrb[0].mxu0 %v2616
      %v2710 = vpop.f32.mrb[0].mxu0
      %v2711 = vadd.f32 0.0, %v2710
      %v2712 = vpop.f32.mrb[0].mxu0
      %2713 = vmatprep.mubr.f32.mxu0 0.0
      %2714 = vmatmul.mubr.f32.gmra.mrb[0].mxu0 %v2619
      %v2715 = vpop.f32.mrb[0].mxu0
      %v2716 = vadd.f32 0.0, %v2715
      %v2717 = vpop.f32.mrb[0].mxu0
      %2718 = vmatprep.mubr.f32.mxu0 0.0
      %2719 = vmatmul.mubr.f32.gmra.mrb[0].mxu0 %v2622
      %v2720 = vpop.f32.mrb[0].mxu0
      %v2721 = vadd.f32 0.0, %v2720
      %v2722 = vpop.f32.mrb[0].mxu0
      %2723 = vmatprep.mubr.f32.mxu0 0.0
      %2724 = vmatmul.mubr.f32.gmra.mrb[0].mxu0 %v2625
      %v2725 = vpop.f32.mrb[0].mxu0
      %v2726 = vadd.f32 0.0, %v2725
      %v2727 = vpop.f32.mrb[0].mxu0
      %2728 = vmatprep.mubr.f32.mxu0 0.0
      %2729 = vmatmul.mubr.f32.gmra.mrb[0].mxu0 %v2628
      %v2730 = vpop.f32.mrb[0].mxu0
      %v2731 = vadd.f32 0.0, %v2730
      %v2732 = vpop.f32.mrb[0].mxu0
      %2733 = vmatprep.mubr.f32.mxu0 0.0
      %2734 = vmatmul.mubr.f32.gmra.mrb[0].mxu0 %v2631
      %v2735 = vpop.f32.mrb[0].mxu0
      %v2736 = vadd.f32 0.0, %v2735
      %v2737 = vpop.f32.mrb[0].mxu0
      %2738 = vmatprep.mubr.f32.mxu0 0.0
      %2739 = vmatmul.mubr.f32.gmra.mrb[0].mxu0 %v2634
      %v2740 = vpop.f32.mrb[0].mxu0
      %v2741 = vadd.f32 0.0, %v2740
      %v2742 = vpop.f32.mrb[0].mxu0
      %2743 = vmatprep.mubr.f32.mxu0 0.0
      %2744 = vmatmul.mubr.f32.gmra.mrb[0].mxu0 %v2637
      %v2745 = vpop.f32.mrb[0].mxu0
      %v2746 = vadd.f32 0.0, %v2745
      %v2747 = vpop.f32.mrb[0].mxu0
      %2748 = vdwg.mxu0
      %v2749 = vadd.f32 %v2594, %v2706
      %v2750 = vadd.f32 %v2595, %v2711
      %v2751 = vadd.f32 %v2596, %v2716
      %v2752 = vadd.f32 %v2597, %v2721
      %v2753 = vadd.f32 %v2598, %v2726
      %v2754 = vadd.f32 %v2599, %v2731
      %v2755 = vadd.f32 %v2600, %v2736
      %v2756 = vadd.f32 %v2601, %v2741
      %v2757 = vadd.f32 %v2602, %v2746
      %v2758 = vmax.f32 %v1588, %v2749
      %v2759 = vmax.f32 %v1589, %v2750
      %v2760 = vmax.f32 %v1590, %v2751
      %v2761 = vmax.f32 %v1591, %v2752
      %v2762 = vmax.f32 %v1592, %v2753
      %v2763 = vmax.f32 %v1593, %v2754
      %v2764 = vmax.f32 %v1594, %v2755
      %v2765 = vmax.f32 %v1595, %v2756
      %v2766 = vmax.f32 %v1596, %v2757
      %2767 = vmatprep.subr.mxu0 0.0
      %2768 = vmatpush1.msra.mxu0 %v223
      %2769 = vmatprep.subr.mxu0 0.0
      %2770 = vmatpush1.msra.mxu0 0.0
      %2771 = vmatprep.subr.mxu0 0.0
      %2772 = vmatpush1.msra.mxu0 0.0
      %2773 = vmatprep.subr.mxu0 0.0
      %2774 = vmatpush1.msra.mxu0 0.0
      %2775 = vmatprep.subr.mxu0 0.0
      %2776 = vmatpush1.msra.mxu0 0.0
      %2777 = vmatprep.subr.mxu0 0.0
      %2778 = vmatpush1.msra.mxu0 0.0
      %2779 = vmatprep.subr.mxu0 0.0
      %2780 = vmatpush1.msra.mxu0 0.0
      %2781 = vmatprep.subr.mxu0 0.0
      %2782 = vmatpush1.msra.mxu0 0.0
      %2783 = vmatprep.subr.mxu0 0.0
      %2784 = vmatpush1.msra.mxu0 0.0
      %2785 = vmatprep.subr.mxu0 0.0
      %2786 = vmatpush1.msra.mxu0 0.0
      %2787 = vmatprep.subr.mxu0 0.0
      %2788 = vmatpush1.msra.mxu0 0.0
      %2789 = vmatprep.subr.mxu0 0.0
      %2790 = vmatpush1.msra.mxu0 0.0
      %2791 = vmatprep.subr.mxu0 0.0
      %2792 = vmatpush1.msra.mxu0 0.0
      %2793 = vmatprep.subr.mxu0 0.0
      %2794 = vmatpush1.msra.mxu0 0.0
      %2795 = vmatprep.subr.mxu0 0.0
      %2796 = vmatpush1.msra.mxu0 0.0
      %2797 = vmatprep.subr.mxu0 0.0
      %2798 = vmatpush1.msra.mxu0 0.0
      %2799 = vmatprep.subr.mxu0 0.0
      %2800 = vmatpush1.msra.mxu0 0.0
      %2801 = vmatprep.subr.mxu0 0.0
      %2802 = vmatpush1.msra.mxu0 0.0
      %2803 = vmatprep.subr.mxu0 0.0
      %2804 = vmatpush1.msra.mxu0 0.0
      %2805 = vmatprep.subr.mxu0 0.0
      %2806 = vmatpush1.msra.mxu0 0.0
      %2807 = vmatprep.subr.mxu0 0.0
      %2808 = vmatpush1.msra.mxu0 0.0
      %2809 = vmatprep.subr.mxu0 0.0
      %2810 = vmatpush1.msra.mxu0 0.0
      %2811 = vmatprep.subr.mxu0 0.0
      %2812 = vmatpush1.msra.mxu0 0.0
      %2813 = vmatprep.subr.mxu0 0.0
      %2814 = vmatpush1.msra.mxu0 0.0
      %2815 = vmatprep.subr.mxu0 0.0
      %2816 = vmatpush1.msra.mxu0 0.0
      %2817 = vmatprep.subr.mxu0 0.0
      %2818 = vmatpush1.msra.mxu0 0.0
      %2819 = vmatprep.subr.mxu0 0.0
      %2820 = vmatpush1.msra.mxu0 0.0
      %2821 = vmatprep.subr.mxu0 0.0
      %2822 = vmatpush1.msra.mxu0 0.0
      %2823 = vmatprep.subr.mxu0 0.0
      %2824 = vmatpush1.msra.mxu0 0.0
      %2825 = vmatprep.subr.mxu0 0.0
      %2826 = vmatpush1.msra.mxu0 0.0
      %2827 = vmatprep.subr.mxu0 0.0
      %2828 = vmatpush1.msra.mxu0 0.0
      %2829 = vmatprep.subr.mxu0 0.0
      %2830 = vmatpush1.msra.mxu0 0.0
      %2831 = vmatprep.mubr.f32.mxu0 0.0
      %2832 = vmatmul.mubr.f32.gmra.mrb[0].mxu0 %v809
      %v2833 = vpop.f32.mrb[0].mxu0
      %v2834 = vadd.f32 0.0, %v2833
      %v2835 = vpop.f32.mrb[0].mxu0
      %2836 = vmatprep.mubr.f32.mxu0 0.0
      %2837 = vmatmul.mubr.f32.gmra.mrb[0].mxu0 %v812
      %v2838 = vpop.f32.mrb[0].mxu0
      %v2839 = vadd.f32 0.0, %v2838
      %v2840 = vpop.f32.mrb[0].mxu0
      %2841 = vmatprep.mubr.f32.mxu0 0.0
      %2842 = vmatmul.mubr.f32.gmra.mrb[0].mxu0 %v815
      %v2843 = vpop.f32.mrb[0].mxu0
      %v2844 = vadd.f32 0.0, %v2843
      %v2845 = vpop.f32.mrb[0].mxu0
      %2846 = vmatprep.mubr.f32.mxu0 0.0
      %2847 = vmatmul.mubr.f32.gmra.mrb[0].mxu0 %v818
      %v2848 = vpop.f32.mrb[0].mxu0
      %v2849 = vadd.f32 0.0, %v2848
      %v2850 = vpop.f32.mrb[0].mxu0
      %2851 = vmatprep.mubr.f32.mxu0 0.0
      %2852 = vmatmul.mubr.f32.gmra.mrb[0].mxu0 %v821
      %v2853 = vpop.f32.mrb[0].mxu0
      %v2854 = vadd.f32 0.0, %v2853
      %v2855 = vpop.f32.mrb[0].mxu0
      %2856 = vmatprep.mubr.f32.mxu0 0.0
      %2857 = vmatmul.mubr.f32.gmra.mrb[0].mxu0 %v824
      %v2858 = vpop.f32.mrb[0].mxu0
      %v2859 = vadd.f32 0.0, %v2858
      %v2860 = vpop.f32.mrb[0].mxu0
      %2861 = vmatprep.mubr.f32.mxu0 0.0
      %2862 = vmatmul.mubr.f32.gmra.mrb[0].mxu0 %v827
      %v2863 = vpop.f32.mrb[0].mxu0
      %v2864 = vadd.f32 0.0, %v2863
      %v2865 = vpop.f32.mrb[0].mxu0
      %2866 = vmatprep.mubr.f32.mxu0 0.0
      %2867 = vmatmul.mubr.f32.gmra.mrb[0].mxu0 %v830
      %v2868 = vpop.f32.mrb[0].mxu0
      %v2869 = vadd.f32 0.0, %v2868
      %v2870 = vpop.f32.mrb[0].mxu0
      %2871 = vmatprep.mubr.f32.mxu0 0.0
      %2872 = vmatmul.mubr.f32.gmra.mrb[0].mxu0 %v833
      %v2873 = vpop.f32.mrb[0].mxu0
      %v2874 = vadd.f32 0.0, %v2873
      %v2875 = vpop.f32.mrb[0].mxu0
      %2876 = vdwg.mxu0
      %2877 = vmatprep.subr.mxu0 0.0
      %2878 = vmatpush1.msra.mxu0 %v363
      %2879 = vmatprep.subr.mxu0 0.0
      %2880 = vmatpush1.msra.mxu0 0.0
      %2881 = vmatprep.subr.mxu0 0.0
      %2882 = vmatpush1.msra.mxu0 0.0
      %2883 = vmatprep.subr.mxu0 0.0
      %2884 = vmatpush1.msra.mxu0 0.0
      %2885 = vmatprep.subr.mxu0 0.0
      %2886 = vmatpush1.msra.mxu0 0.0
      %2887 = vmatprep.subr.mxu0 0.0
      %2888 = vmatpush1.msra.mxu0 0.0
      %2889 = vmatprep.subr.mxu0 0.0
      %2890 = vmatpush1.msra.mxu0 0.0
      %2891 = vmatprep.subr.mxu0 0.0
      %2892 = vmatpush1.msra.mxu0 0.0
      %2893 = vmatprep.subr.mxu0 0.0
      %2894 = vmatpush1.msra.mxu0 0.0
      %2895 = vmatprep.subr.mxu0 0.0
      %2896 = vmatpush1.msra.mxu0 0.0
      %2897 = vmatprep.subr.mxu0 0.0
      %2898 = vmatpush1.msra.mxu0 0.0
      %2899 = vmatprep.subr.mxu0 0.0
      %2900 = vmatpush1.msra.mxu0 0.0
      %2901 = vmatprep.subr.mxu0 0.0
      %2902 = vmatpush1.msra.mxu0 0.0
      %2903 = vmatprep.subr.mxu0 0.0
      %2904 = vmatpush1.msra.mxu0 0.0
      %2905 = vmatprep.subr.mxu0 0.0
      %2906 = vmatpush1.msra.mxu0 0.0
      %2907 = vmatprep.subr.mxu0 0.0
      %2908 = vmatpush1.msra.mxu0 0.0
      %2909 = vmatprep.subr.mxu0 0.0
      %2910 = vmatpush1.msra.mxu0 0.0
      %2911 = vmatprep.subr.mxu0 0.0
      %2912 = vmatpush1.msra.mxu0 0.0
      %2913 = vmatprep.subr.mxu0 0.0
      %2914 = vmatpush1.msra.mxu0 0.0
      %2915 = vmatprep.subr.mxu0 0.0
      %2916 = vmatpush1.msra.mxu0 0.0
      %2917 = vmatprep.subr.mxu0 0.0
      %2918 = vmatpush1.msra.mxu0 0.0
      %2919 = vmatprep.subr.mxu0 0.0
      %2920 = vmatpush1.msra.mxu0 0.0
      %2921 = vmatprep.subr.mxu0 0.0
      %2922 = vmatpush1.msra.mxu0 0.0
      %2923 = vmatprep.subr.mxu0 0.0
      %2924 = vmatpush1.msra.mxu0 0.0
      %2925 = vmatprep.subr.mxu0 0.0
      %2926 = vmatpush1.msra.mxu0 0.0
      %2927 = vmatprep.subr.mxu0 0.0
      %2928 = vmatpush1.msra.mxu0 0.0
      %2929 = vmatprep.subr.mxu0 0.0
      %2930 = vmatpush1.msra.mxu0 0.0
      %2931 = vmatprep.subr.mxu0 0.0
      %2932 = vmatpush1.msra.mxu0 0.0
      %2933 = vmatprep.subr.mxu0 0.0
      %2934 = vmatpush1.msra.mxu0 0.0
      %2935 = vmatprep.subr.mxu0 0.0
      %2936 = vmatpush1.msra.mxu0 0.0
      %2937 = vmatprep.subr.mxu0 0.0
      %2938 = vmatpush1.msra.mxu0 0.0
      %2939 = vmatprep.subr.mxu0 0.0
      %2940 = vmatpush1.msra.mxu0 0.0
      %2941 = vmatprep.mubr.f32.mxu0 0.0
      %2942 = vmatmul.mubr.f32.gmra.mrb[0].mxu0 %v648
      %v2943 = vpop.f32.mrb[0].mxu0
      %v2944 = vadd.f32 %v2834, %v2943
      %v2945 = vpop.f32.mrb[0].mxu0
      %2946 = vmatprep.mubr.f32.mxu0 0.0
      %2947 = vmatmul.mubr.f32.gmra.mrb[0].mxu0 %v651
      %v2948 = vpop.f32.mrb[0].mxu0
      %v2949 = vadd.f32 %v2839, %v2948
      %v2950 = vpop.f32.mrb[0].mxu0
      %2951 = vmatprep.mubr.f32.mxu0 0.0
      %2952 = vmatmul.mubr.f32.gmra.mrb[0].mxu0 %v654
      %v2953 = vpop.f32.mrb[0].mxu0
      %v2954 = vadd.f32 %v2844, %v2953
      %v2955 = vpop.f32.mrb[0].mxu0
      %2956 = vmatprep.mubr.f32.mxu0 0.0
      %2957 = vmatmul.mubr.f32.gmra.mrb[0].mxu0 %v657
      %v2958 = vpop.f32.mrb[0].mxu0
      %v2959 = vadd.f32 %v2849, %v2958
      %v2960 = vpop.f32.mrb[0].mxu0
      %2961 = vmatprep.mubr.f32.mxu0 0.0
      %2962 = vmatmul.mubr.f32.gmra.mrb[0].mxu0 %v660
      %v2963 = vpop.f32.mrb[0].mxu0
      %v2964 = vadd.f32 %v2854, %v2963
      %v2965 = vpop.f32.mrb[0].mxu0
      %2966 = vmatprep.mubr.f32.mxu0 0.0
      %2967 = vmatmul.mubr.f32.gmra.mrb[0].mxu0 %v663
      %v2968 = vpop.f32.mrb[0].mxu0
      %v2969 = vadd.f32 %v2859, %v2968
      %v2970 = vpop.f32.mrb[0].mxu0
      %2971 = vmatprep.mubr.f32.mxu0 0.0
      %2972 = vmatmul.mubr.f32.gmra.mrb[0].mxu0 %v666
      %v2973 = vpop.f32.mrb[0].mxu0
      %v2974 = vadd.f32 %v2864, %v2973
      %v2975 = vpop.f32.mrb[0].mxu0
      %2976 = vmatprep.mubr.f32.mxu0 0.0
      %2977 = vmatmul.mubr.f32.gmra.mrb[0].mxu0 %v669
      %v2978 = vpop.f32.mrb[0].mxu0
      %v2979 = vadd.f32 %v2869, %v2978
      %v2980 = vpop.f32.mrb[0].mxu0
      %2981 = vmatprep.mubr.f32.mxu0 0.0
      %2982 = vmatmul.mubr.f32.gmra.mrb[0].mxu0 %v672
      %v2983 = vpop.f32.mrb[0].mxu0
      %v2984 = vadd.f32 %v2874, %v2983
      %v2985 = vpop.f32.mrb[0].mxu0
      %2986 = vdwg.mxu0
      %2987 = vmatprep.subr.mxu0 0.0
      %2988 = vmatpush1.msra.mxu0 %v514
      %2989 = vmatprep.subr.mxu0 0.0
      %2990 = vmatpush1.msra.mxu0 0.0
      %2991 = vmatprep.subr.mxu0 0.0
      %2992 = vmatpush1.msra.mxu0 0.0
      %2993 = vmatprep.subr.mxu0 0.0
      %2994 = vmatpush1.msra.mxu0 0.0
      %2995 = vmatprep.subr.mxu0 0.0
      %2996 = vmatpush1.msra.mxu0 0.0
      %2997 = vmatprep.subr.mxu0 0.0
      %2998 = vmatpush1.msra.mxu0 0.0
      %2999 = vmatprep.subr.mxu0 0.0
      %3000 = vmatpush1.msra.mxu0 0.0
      %3001 = vmatprep.subr.mxu0 0.0
      %3002 = vmatpush1.msra.mxu0 0.0
      %3003 = vmatprep.subr.mxu0 0.0
      %3004 = vmatpush1.msra.mxu0 0.0
      %3005 = vmatprep.subr.mxu0 0.0
      %3006 = vmatpush1.msra.mxu0 0.0
      %3007 = vmatprep.subr.mxu0 0.0
      %3008 = vmatpush1.msra.mxu0 0.0
      %3009 = vmatprep.subr.mxu0 0.0
      %3010 = vmatpush1.msra.mxu0 0.0
      %3011 = vmatprep.subr.mxu0 0.0
      %3012 = vmatpush1.msra.mxu0 0.0
      %3013 = vmatprep.subr.mxu0 0.0
      %3014 = vmatpush1.msra.mxu0 0.0
      %3015 = vmatprep.subr.mxu0 0.0
      %3016 = vmatpush1.msra.mxu0 0.0
      %3017 = vmatprep.subr.mxu0 0.0
      %3018 = vmatpush1.msra.mxu0 0.0
      %3019 = vmatprep.subr.mxu0 0.0
      %3020 = vmatpush1.msra.mxu0 0.0
      %3021 = vmatprep.subr.mxu0 0.0
      %3022 = vmatpush1.msra.mxu0 0.0
      %3023 = vmatprep.subr.mxu0 0.0
      %3024 = vmatpush1.msra.mxu0 0.0
      %3025 = vmatprep.subr.mxu0 0.0
      %3026 = vmatpush1.msra.mxu0 0.0
      %3027 = vmatprep.subr.mxu0 0.0
      %3028 = vmatpush1.msra.mxu0 0.0
      %3029 = vmatprep.subr.mxu0 0.0
      %3030 = vmatpush1.msra.mxu0 0.0
      %3031 = vmatprep.subr.mxu0 0.0
      %3032 = vmatpush1.msra.mxu0 0.0
      %3033 = vmatprep.subr.mxu0 0.0
      %3034 = vmatpush1.msra.mxu0 0.0
      %3035 = vmatprep.subr.mxu0 0.0
      %3036 = vmatpush1.msra.mxu0 0.0
      %3037 = vmatprep.subr.mxu0 0.0
      %3038 = vmatpush1.msra.mxu0 0.0
      %3039 = vmatprep.subr.mxu0 0.0
      %3040 = vmatpush1.msra.mxu0 0.0
      %3041 = vmatprep.subr.mxu0 0.0
      %3042 = vmatpush1.msra.mxu0 0.0
      %3043 = vmatprep.subr.mxu0 0.0
      %3044 = vmatpush1.msra.mxu0 0.0
      %3045 = vmatprep.subr.mxu0 0.0
      %3046 = vmatpush1.msra.mxu0 0.0
      %3047 = vmatprep.subr.mxu0 0.0
      %3048 = vmatpush1.msra.mxu0 0.0
      %3049 = vmatprep.subr.mxu0 0.0
      %3050 = vmatpush1.msra.mxu0 0.0
      %3051 = vmatprep.mubr.f32.mxu0 0.0
      %3052 = vmatmul.mubr.f32.gmra.mrb[0].mxu0 %v969
      %v3053 = vpop.f32.mrb[0].mxu0
      %v3054 = vadd.f32 0.0, %v3053
      %v3055 = vpop.f32.mrb[0].mxu0
      %3056 = vmatprep.mubr.f32.mxu0 0.0
      %3057 = vmatmul.mubr.f32.gmra.mrb[0].mxu0 %v972
      %v3058 = vpop.f32.mrb[0].mxu0
      %v3059 = vadd.f32 0.0, %v3058
      %v3060 = vpop.f32.mrb[0].mxu0
      %3061 = vmatprep.mubr.f32.mxu0 0.0
      %3062 = vmatmul.mubr.f32.gmra.mrb[0].mxu0 %v975
      %v3063 = vpop.f32.mrb[0].mxu0
      %v3064 = vadd.f32 0.0, %v3063
      %v3065 = vpop.f32.mrb[0].mxu0
      %3066 = vmatprep.mubr.f32.mxu0 0.0
      %3067 = vmatmul.mubr.f32.gmra.mrb[0].mxu0 %v978
      %v3068 = vpop.f32.mrb[0].mxu0
      %v3069 = vadd.f32 0.0, %v3068
      %v3070 = vpop.f32.mrb[0].mxu0
      %3071 = vmatprep.mubr.f32.mxu0 0.0
      %3072 = vmatmul.mubr.f32.gmra.mrb[0].mxu0 %v981
      %v3073 = vpop.f32.mrb[0].mxu0
      %v3074 = vadd.f32 0.0, %v3073
      %v3075 = vpop.f32.mrb[0].mxu0
      %3076 = vmatprep.mubr.f32.mxu0 0.0
      %3077 = vmatmul.mubr.f32.gmra.mrb[0].mxu0 %v984
      %v3078 = vpop.f32.mrb[0].mxu0
      %v3079 = vadd.f32 0.0, %v3078
      %v3080 = vpop.f32.mrb[0].mxu0
      %3081 = vmatprep.mubr.f32.mxu0 0.0
      %3082 = vmatmul.mubr.f32.gmra.mrb[0].mxu0 %v987
      %v3083 = vpop.f32.mrb[0].mxu0
      %v3084 = vadd.f32 0.0, %v3083
      %v3085 = vpop.f32.mrb[0].mxu0
      %3086 = vmatprep.mubr.f32.mxu0 0.0
      %3087 = vmatmul.mubr.f32.gmra.mrb[0].mxu0 %v990
      %v3088 = vpop.f32.mrb[0].mxu0
      %v3089 = vadd.f32 0.0, %v3088
      %v3090 = vpop.f32.mrb[0].mxu0
      %3091 = vmatprep.mubr.f32.mxu0 0.0
      %3092 = vmatmul.mubr.f32.gmra.mrb[0].mxu0 %v993
      %v3093 = vpop.f32.mrb[0].mxu0
      %v3094 = vadd.f32 0.0, %v3093
      %v3095 = vpop.f32.mrb[0].mxu0
      %3096 = vdwg.mxu0
      %v3097 = vadd.f32 %v2944, %v3054
      %v3098 = vadd.f32 %v2949, %v3059
      %v3099 = vadd.f32 %v2954, %v3064
      %v3100 = vadd.f32 %v2959, %v3069
      %v3101 = vadd.f32 %v2964, %v3074
      %v3102 = vadd.f32 %v2969, %v3079
      %v3103 = vadd.f32 %v2974, %v3084
      %v3104 = vadd.f32 %v2979, %v3089
      %v3105 = vadd.f32 %v2984, %v3094
      %3106 = vmatprep.subr.mxu0 0.0
      %3107 = vmatpush1.msra.mxu0 %v675
      %3108 = vmatprep.subr.mxu0 0.0
      %3109 = vmatpush1.msra.mxu0 0.0
      %3110 = vmatprep.subr.mxu0 0.0
      %3111 = vmatpush1.msra.mxu0 0.0
      %3112 = vmatprep.subr.mxu0 0.0
      %3113 = vmatpush1.msra.mxu0 0.0
      %3114 = vmatprep.subr.mxu0 0.0
      %3115 = vmatpush1.msra.mxu0 0.0
      %3116 = vmatprep.subr.mxu0 0.0
      %3117 = vmatpush1.msra.mxu0 0.0
      %3118 = vmatprep.subr.mxu0 0.0
      %3119 = vmatpush1.msra.mxu0 0.0
      %3120 = vmatprep.subr.mxu0 0.0
      %3121 = vmatpush1.msra.mxu0 0.0
      %3122 = vmatprep.subr.mxu0 0.0
      %3123 = vmatpush1.msra.mxu0 0.0
      %3124 = vmatprep.subr.mxu0 0.0
      %3125 = vmatpush1.msra.mxu0 0.0
      %3126 = vmatprep.subr.mxu0 0.0
      %3127 = vmatpush1.msra.mxu0 0.0
      %3128 = vmatprep.subr.mxu0 0.0
      %3129 = vmatpush1.msra.mxu0 0.0
      %3130 = vmatprep.subr.mxu0 0.0
      %3131 = vmatpush1.msra.mxu0 0.0
      %3132 = vmatprep.subr.mxu0 0.0
      %3133 = vmatpush1.msra.mxu0 0.0
      %3134 = vmatprep.subr.mxu0 0.0
      %3135 = vmatpush1.msra.mxu0 0.0
      %3136 = vmatprep.subr.mxu0 0.0
      %3137 = vmatpush1.msra.mxu0 0.0
      %3138 = vmatprep.subr.mxu0 0.0
      %3139 = vmatpush1.msra.mxu0 0.0
      %3140 = vmatprep.subr.mxu0 0.0
      %3141 = vmatpush1.msra.mxu0 0.0
      %3142 = vmatprep.subr.mxu0 0.0
      %3143 = vmatpush1.msra.mxu0 0.0
      %3144 = vmatprep.subr.mxu0 0.0
      %3145 = vmatpush1.msra.mxu0 0.0
      %3146 = vmatprep.subr.mxu0 0.0
      %3147 = vmatpush1.msra.mxu0 0.0
      %3148 = vmatprep.subr.mxu0 0.0
      %3149 = vmatpush1.msra.mxu0 0.0
      %3150 = vmatprep.subr.mxu0 0.0
      %3151 = vmatpush1.msra.mxu0 0.0
      %3152 = vmatprep.subr.mxu0 0.0
      %3153 = vmatpush1.msra.mxu0 0.0
      %3154 = vmatprep.subr.mxu0 0.0
      %3155 = vmatpush1.msra.mxu0 0.0
      %3156 = vmatprep.subr.mxu0 0.0
      %3157 = vmatpush1.msra.mxu0 0.0
      %3158 = vmatprep.subr.mxu0 0.0
      %3159 = vmatpush1.msra.mxu0 0.0
      %3160 = vmatprep.subr.mxu0 0.0
      %3161 = vmatpush1.msra.mxu0 0.0
      %3162 = vmatprep.subr.mxu0 0.0
      %3163 = vmatpush1.msra.mxu0 0.0
      %3164 = vmatprep.subr.mxu0 0.0
      %3165 = vmatpush1.msra.mxu0 0.0
      %3166 = vmatprep.subr.mxu0 0.0
      %3167 = vmatpush1.msra.mxu0 0.0
      %3168 = vmatprep.subr.mxu0 0.0
      %3169 = vmatpush1.msra.mxu0 0.0
      %3170 = vmatprep.mubr.f32.mxu0 0.0
      %3171 = vmatmul.mubr.f32.gmra.mrb[0].mxu0 %v1129
      %v3172 = vpop.f32.mrb[0].mxu0
      %v3173 = vadd.f32 0.0, %v3172
      %v3174 = vpop.f32.mrb[0].mxu0
      %3175 = vmatprep.mubr.f32.mxu0 0.0
      %3176 = vmatmul.mubr.f32.gmra.mrb[0].mxu0 %v1132
      %v3177 = vpop.f32.mrb[0].mxu0
      %v3178 = vadd.f32 0.0, %v3177
      %v3179 = vpop.f32.mrb[0].mxu0
      %3180 = vmatprep.mubr.f32.mxu0 0.0
      %3181 = vmatmul.mubr.f32.gmra.mrb[0].mxu0 %v1135
      %v3182 = vpop.f32.mrb[0].mxu0
      %v3183 = vadd.f32 0.0, %v3182
      %v3184 = vpop.f32.mrb[0].mxu0
      %3185 = vmatprep.mubr.f32.mxu0 0.0
      %3186 = vmatmul.mubr.f32.gmra.mrb[0].mxu0 %v1138
      %v3187 = vpop.f32.mrb[0].mxu0
      %v3188 = vadd.f32 0.0, %v3187
      %v3189 = vpop.f32.mrb[0].mxu0
      %3190 = vmatprep.mubr.f32.mxu0 0.0
      %3191 = vmatmul.mubr.f32.gmra.mrb[0].mxu0 %v1141
      %v3192 = vpop.f32.mrb[0].mxu0
      %v3193 = vadd.f32 0.0, %v3192
      %v3194 = vpop.f32.mrb[0].mxu0
      %3195 = vmatprep.mubr.f32.mxu0 0.0
      %3196 = vmatmul.mubr.f32.gmra.mrb[0].mxu0 %v1144
      %v3197 = vpop.f32.mrb[0].mxu0
      %v3198 = vadd.f32 0.0, %v3197
      %v3199 = vpop.f32.mrb[0].mxu0
      %3200 = vmatprep.mubr.f32.mxu0 0.0
      %3201 = vmatmul.mubr.f32.gmra.mrb[0].mxu0 %v1147
      %v3202 = vpop.f32.mrb[0].mxu0
      %v3203 = vadd.f32 0.0, %v3202
      %v3204 = vpop.f32.mrb[0].mxu0
      %3205 = vmatprep.mubr.f32.mxu0 0.0
      %3206 = vmatmul.mubr.f32.gmra.mrb[0].mxu0 %v1150
      %v3207 = vpop.f32.mrb[0].mxu0
      %v3208 = vadd.f32 0.0, %v3207
      %v3209 = vpop.f32.mrb[0].mxu0
      %3210 = vmatprep.mubr.f32.mxu0 0.0
      %3211 = vmatmul.mubr.f32.gmra.mrb[0].mxu0 %v1153
      %v3212 = vpop.f32.mrb[0].mxu0
      %v3213 = vadd.f32 0.0, %v3212
      %v3214 = vpop.f32.mrb[0].mxu0
      %3215 = vdwg.mxu0
      %v3216 = vadd.f32 %v3097, %v3173
      %v3217 = vadd.f32 %v3098, %v3178
      %v3218 = vadd.f32 %v3099, %v3183
      %v3219 = vadd.f32 %v3100, %v3188
      %v3220 = vadd.f32 %v3101, %v3193
      %v3221 = vadd.f32 %v3102, %v3198
      %v3222 = vadd.f32 %v3103, %v3203
      %v3223 = vadd.f32 %v3104, %v3208
      %v3224 = vadd.f32 %v3105, %v3213
      %3225 = vmatprep.subr.mxu0 0.0
      %3226 = vmatpush1.msra.mxu0 %v836
      %3227 = vmatprep.subr.mxu0 0.0
      %3228 = vmatpush1.msra.mxu0 0.0
      %3229 = vmatprep.subr.mxu0 0.0
      %3230 = vmatpush1.msra.mxu0 0.0
      %3231 = vmatprep.subr.mxu0 0.0
      %3232 = vmatpush1.msra.mxu0 0.0
      %3233 = vmatprep.subr.mxu0 0.0
      %3234 = vmatpush1.msra.mxu0 0.0
      %3235 = vmatprep.subr.mxu0 0.0
      %3236 = vmatpush1.msra.mxu0 0.0
      %3237 = vmatprep.subr.mxu0 0.0
      %3238 = vmatpush1.msra.mxu0 0.0
      %3239 = vmatprep.subr.mxu0 0.0
      %3240 = vmatpush1.msra.mxu0 0.0
      %3241 = vmatprep.subr.mxu0 0.0
      %3242 = vmatpush1.msra.mxu0 0.0
      %3243 = vmatprep.subr.mxu0 0.0
      %3244 = vmatpush1.msra.mxu0 0.0
      %3245 = vmatprep.subr.mxu0 0.0
      %3246 = vmatpush1.msra.mxu0 0.0
      %3247 = vmatprep.subr.mxu0 0.0
      %3248 = vmatpush1.msra.mxu0 0.0
      %3249 = vmatprep.subr.mxu0 0.0
      %3250 = vmatpush1.msra.mxu0 0.0
      %3251 = vmatprep.subr.mxu0 0.0
      %3252 = vmatpush1.msra.mxu0 0.0
      %3253 = vmatprep.subr.mxu0 0.0
      %3254 = vmatpush1.msra.mxu0 0.0
      %3255 = vmatprep.subr.mxu0 0.0
      %3256 = vmatpush1.msra.mxu0 0.0
      %3257 = vmatprep.subr.mxu0 0.0
      %3258 = vmatpush1.msra.mxu0 0.0
      %3259 = vmatprep.subr.mxu0 0.0
      %3260 = vmatpush1.msra.mxu0 0.0
      %3261 = vmatprep.subr.mxu0 0.0
      %3262 = vmatpush1.msra.mxu0 0.0
      %3263 = vmatprep.subr.mxu0 0.0
      %3264 = vmatpush1.msra.mxu0 0.0
      %3265 = vmatprep.subr.mxu0 0.0
      %3266 = vmatpush1.msra.mxu0 0.0
      %3267 = vmatprep.subr.mxu0 0.0
      %3268 = vmatpush1.msra.mxu0 0.0
      %3269 = vmatprep.subr.mxu0 0.0
      %3270 = vmatpush1.msra.mxu0 0.0
      %3271 = vmatprep.subr.mxu0 0.0
      %3272 = vmatpush1.msra.mxu0 0.0
      %3273 = vmatprep.subr.mxu0 0.0
      %3274 = vmatpush1.msra.mxu0 0.0
      %3275 = vmatprep.subr.mxu0 0.0
      %3276 = vmatpush1.msra.mxu0 0.0
      %3277 = vmatprep.subr.mxu0 0.0
      %3278 = vmatpush1.msra.mxu0 0.0
      %3279 = vmatprep.subr.mxu0 0.0
      %3280 = vmatpush1.msra.mxu0 0.0
      %3281 = vmatprep.subr.mxu0 0.0
      %3282 = vmatpush1.msra.mxu0 0.0
      %3283 = vmatprep.subr.mxu0 0.0
      %3284 = vmatpush1.msra.mxu0 0.0
      %3285 = vmatprep.subr.mxu0 0.0
      %3286 = vmatpush1.msra.mxu0 0.0
      %3287 = vmatprep.subr.mxu0 0.0
      %3288 = vmatpush1.msra.mxu0 0.0
      %3289 = vmatprep.mubr.f32.mxu0 0.0
      %3290 = vmatmul.mubr.f32.gmra.mrb[0].mxu0 %v1289
      %v3291 = vpop.f32.mrb[0].mxu0
      %v3292 = vadd.f32 0.0, %v3291
      %v3293 = vpop.f32.mrb[0].mxu0
      %3294 = vmatprep.mubr.f32.mxu0 0.0
      %3295 = vmatmul.mubr.f32.gmra.mrb[0].mxu0 %v1292
      %v3296 = vpop.f32.mrb[0].mxu0
      %v3297 = vadd.f32 0.0, %v3296
      %v3298 = vpop.f32.mrb[0].mxu0
      %3299 = vmatprep.mubr.f32.mxu0 0.0
      %3300 = vmatmul.mubr.f32.gmra.mrb[0].mxu0 %v1295
      %v3301 = vpop.f32.mrb[0].mxu0
      %v3302 = vadd.f32 0.0, %v3301
      %v3303 = vpop.f32.mrb[0].mxu0
      %3304 = vmatprep.mubr.f32.mxu0 0.0
      %3305 = vmatmul.mubr.f32.gmra.mrb[0].mxu0 %v1298
      %v3306 = vpop.f32.mrb[0].mxu0
      %v3307 = vadd.f32 0.0, %v3306
      %v3308 = vpop.f32.mrb[0].mxu0
      %3309 = vmatprep.mubr.f32.mxu0 0.0
      %3310 = vmatmul.mubr.f32.gmra.mrb[0].mxu0 %v1301
      %v3311 = vpop.f32.mrb[0].mxu0
      %v3312 = vadd.f32 0.0, %v3311
      %v3313 = vpop.f32.mrb[0].mxu0
      %3314 = vmatprep.mubr.f32.mxu0 0.0
      %3315 = vmatmul.mubr.f32.gmra.mrb[0].mxu0 %v1304
      %v3316 = vpop.f32.mrb[0].mxu0
      %v3317 = vadd.f32 0.0, %v3316
      %v3318 = vpop.f32.mrb[0].mxu0
      %3319 = vmatprep.mubr.f32.mxu0 0.0
      %3320 = vmatmul.mubr.f32.gmra.mrb[0].mxu0 %v1307
      %v3321 = vpop.f32.mrb[0].mxu0
      %v3322 = vadd.f32 0.0, %v3321
      %v3323 = vpop.f32.mrb[0].mxu0
      %3324 = vmatprep.mubr.f32.mxu0 0.0
      %3325 = vmatmul.mubr.f32.gmra.mrb[0].mxu0 %v1310
      %v3326 = vpop.f32.mrb[0].mxu0
      %v3327 = vadd.f32 0.0, %v3326
      %v3328 = vpop.f32.mrb[0].mxu0
      %3329 = vmatprep.mubr.f32.mxu0 0.0
      %3330 = vmatmul.mubr.f32.gmra.mrb[0].mxu0 %v1313
      %v3331 = vpop.f32.mrb[0].mxu0
      %v3332 = vadd.f32 0.0, %v3331
      %v3333 = vpop.f32.mrb[0].mxu0
      %3334 = vdwg.mxu0
      %v3335 = vadd.f32 %v3216, %v3292
      %v3336 = vadd.f32 %v3217, %v3297
      %v3337 = vadd.f32 %v3218, %v3302
      %v3338 = vadd.f32 %v3219, %v3307
      %v3339 = vadd.f32 %v3220, %v3312
      %v3340 = vadd.f32 %v3221, %v3317
      %v3341 = vadd.f32 %v3222, %v3322
      %v3342 = vadd.f32 %v3223, %v3327
      %v3343 = vadd.f32 %v3224, %v3332
      %3344 = vmatprep.subr.mxu0 0.0
      %3345 = vmatpush1.msra.mxu0 %v996
      %3346 = vmatprep.subr.mxu0 0.0
      %3347 = vmatpush1.msra.mxu0 0.0
      %3348 = vmatprep.subr.mxu0 0.0
      %3349 = vmatpush1.msra.mxu0 0.0
      %3350 = vmatprep.subr.mxu0 0.0
      %3351 = vmatpush1.msra.mxu0 0.0
      %3352 = vmatprep.subr.mxu0 0.0
      %3353 = vmatpush1.msra.mxu0 0.0
      %3354 = vmatprep.subr.mxu0 0.0
      %3355 = vmatpush1.msra.mxu0 0.0
      %3356 = vmatprep.subr.mxu0 0.0
      %3357 = vmatpush1.msra.mxu0 0.0
      %3358 = vmatprep.subr.mxu0 0.0
      %3359 = vmatpush1.msra.mxu0 0.0
      %3360 = vmatprep.subr.mxu0 0.0
      %3361 = vmatpush1.msra.mxu0 0.0
      %3362 = vmatprep.subr.mxu0 0.0
      %3363 = vmatpush1.msra.mxu0 0.0
      %3364 = vmatprep.subr.mxu0 0.0
      %3365 = vmatpush1.msra.mxu0 0.0
      %3366 = vmatprep.subr.mxu0 0.0
      %3367 = vmatpush1.msra.mxu0 0.0
      %3368 = vmatprep.subr.mxu0 0.0
      %3369 = vmatpush1.msra.mxu0 0.0
      %3370 = vmatprep.subr.mxu0 0.0
      %3371 = vmatpush1.msra.mxu0 0.0
      %3372 = vmatprep.subr.mxu0 0.0
      %3373 = vmatpush1.msra.mxu0 0.0
      %3374 = vmatprep.subr.mxu0 0.0
      %3375 = vmatpush1.msra.mxu0 0.0
      %3376 = vmatprep.subr.mxu0 0.0
      %3377 = vmatpush1.msra.mxu0 0.0
      %3378 = vmatprep.subr.mxu0 0.0
      %3379 = vmatpush1.msra.mxu0 0.0
      %3380 = vmatprep.subr.mxu0 0.0
      %3381 = vmatpush1.msra.mxu0 0.0
      %3382 = vmatprep.subr.mxu0 0.0
      %3383 = vmatpush1.msra.mxu0 0.0
      %3384 = vmatprep.subr.mxu0 0.0
      %3385 = vmatpush1.msra.mxu0 0.0
      %3386 = vmatprep.subr.mxu0 0.0
      %3387 = vmatpush1.msra.mxu0 0.0
      %3388 = vmatprep.subr.mxu0 0.0
      %3389 = vmatpush1.msra.mxu0 0.0
      %3390 = vmatprep.subr.mxu0 0.0
      %3391 = vmatpush1.msra.mxu0 0.0
      %3392 = vmatprep.subr.mxu0 0.0
      %3393 = vmatpush1.msra.mxu0 0.0
      %3394 = vmatprep.subr.mxu0 0.0
      %3395 = vmatpush1.msra.mxu0 0.0
      %3396 = vmatprep.subr.mxu0 0.0
      %3397 = vmatpush1.msra.mxu0 0.0
      %3398 = vmatprep.subr.mxu0 0.0
      %3399 = vmatpush1.msra.mxu0 0.0
      %3400 = vmatprep.subr.mxu0 0.0
      %3401 = vmatpush1.msra.mxu0 0.0
      %3402 = vmatprep.subr.mxu0 0.0
      %3403 = vmatpush1.msra.mxu0 0.0
      %3404 = vmatprep.subr.mxu0 0.0
      %3405 = vmatpush1.msra.mxu0 0.0
      %3406 = vmatprep.subr.mxu0 0.0
      %3407 = vmatpush1.msra.mxu0 0.0
      %3408 = vmatprep.mubr.f32.mxu0 0.0
      %3409 = vmatmul.mubr.f32.gmra.mrb[0].mxu0 %v1449
      %v3410 = vpop.f32.mrb[0].mxu0
      %v3411 = vadd.f32 0.0, %v3410
      %v3412 = vpop.f32.mrb[0].mxu0
      %3413 = vmatprep.mubr.f32.mxu0 0.0
      %3414 = vmatmul.mubr.f32.gmra.mrb[0].mxu0 %v1452
      %v3415 = vpop.f32.mrb[0].mxu0
      %v3416 = vadd.f32 0.0, %v3415
      %v3417 = vpop.f32.mrb[0].mxu0
      %3418 = vmatprep.mubr.f32.mxu0 0.0
      %3419 = vmatmul.mubr.f32.gmra.mrb[0].mxu0 %v1455
      %v3420 = vpop.f32.mrb[0].mxu0
      %v3421 = vadd.f32 0.0, %v3420
      %v3422 = vpop.f32.mrb[0].mxu0
      %3423 = vmatprep.mubr.f32.mxu0 0.0
      %3424 = vmatmul.mubr.f32.gmra.mrb[0].mxu0 %v1458
      %v3425 = vpop.f32.mrb[0].mxu0
      %v3426 = vadd.f32 0.0, %v3425
      %v3427 = vpop.f32.mrb[0].mxu0
      %3428 = vmatprep.mubr.f32.mxu0 0.0
      %3429 = vmatmul.mubr.f32.gmra.mrb[0].mxu0 %v1461
      %v3430 = vpop.f32.mrb[0].mxu0
      %v3431 = vadd.f32 0.0, %v3430
      %v3432 = vpop.f32.mrb[0].mxu0
      %3433 = vmatprep.mubr.f32.mxu0 0.0
      %3434 = vmatmul.mubr.f32.gmra.mrb[0].mxu0 %v1464
      %v3435 = vpop.f32.mrb[0].mxu0
      %v3436 = vadd.f32 0.0, %v3435
      %v3437 = vpop.f32.mrb[0].mxu0
      %3438 = vmatprep.mubr.f32.mxu0 0.0
      %3439 = vmatmul.mubr.f32.gmra.mrb[0].mxu0 %v1467
      %v3440 = vpop.f32.mrb[0].mxu0
      %v3441 = vadd.f32 0.0, %v3440
      %v3442 = vpop.f32.mrb[0].mxu0
      %3443 = vmatprep.mubr.f32.mxu0 0.0
      %3444 = vmatmul.mubr.f32.gmra.mrb[0].mxu0 %v1470
      %v3445 = vpop.f32.mrb[0].mxu0
      %v3446 = vadd.f32 0.0, %v3445
      %v3447 = vpop.f32.mrb[0].mxu0
      %3448 = vmatprep.mubr.f32.mxu0 0.0
      %3449 = vmatmul.mubr.f32.gmra.mrb[0].mxu0 %v1473
      %v3450 = vpop.f32.mrb[0].mxu0
      %v3451 = vadd.f32 0.0, %v3450
      %v3452 = vpop.f32.mrb[0].mxu0
      %3453 = vdwg.mxu0
      %v3454 = vadd.f32 %v3335, %v3411
      %v3455 = vadd.f32 %v3336, %v3416
      %v3456 = vadd.f32 %v3337, %v3421
      %v3457 = vadd.f32 %v3338, %v3426
      %v3458 = vadd.f32 %v3339, %v3431
      %v3459 = vadd.f32 %v3340, %v3436
      %v3460 = vadd.f32 %v3341, %v3441
      %v3461 = vadd.f32 %v3342, %v3446
      %v3462 = vadd.f32 %v3343, %v3451
      %v3463 = vld [vmem:[%s635 + $0x9] sm:$0xff]
      %v3464 = vld [vmem:[%s635 + $0x11] sm:$0xff]
      %v3465 = vld [vmem:[%s635 + $0x19] sm:$0xff]
      %v3466 = vld [vmem:[%s635 + $0x21] sm:$0xff]
      %v3467 = vld [vmem:[%s635 + $0x29] sm:$0xff]
      %v3468 = vld [vmem:[%s635 + $0x31] sm:$0xff]
      %v3469 = vld [vmem:[%s635 + $0x39] sm:$0xff]
      %v3470 = vld [vmem:[%s635 + $0x41] sm:$0xff]
      %v3471 = vld [vmem:[%s635 + $0x49] sm:$0xff]
      %v3473 = vsel %vm193, %v3463, 0
      %v3476 = vsel %vm193, %v3464, 0
      %v3479 = vsel %vm193, %v3465, 0
      %v3482 = vsel %vm193, %v3466, 0
      %v3485 = vsel %vm193, %v3467, 0
      %v3488 = vsel %vm193, %v3468, 0
      %v3491 = vsel %vm193, %v3469, 0
      %v3494 = vsel %vm193, %v3470, 0
      %v3497 = vsel %vm193, %v3471, 0
      %3499 = vmatprep.subr.mxu0 0.0
      %3500 = vmatpush1.msra.mxu0 %v1156
      %3501 = vmatprep.subr.mxu0 0.0
      %3502 = vmatpush1.msra.mxu0 0.0
      %3503 = vmatprep.subr.mxu0 0.0
      %3504 = vmatpush1.msra.mxu0 0.0
      %3505 = vmatprep.subr.mxu0 0.0
      %3506 = vmatpush1.msra.mxu0 0.0
      %3507 = vmatprep.subr.mxu0 0.0
      %3508 = vmatpush1.msra.mxu0 0.0
      %3509 = vmatprep.subr.mxu0 0.0
      %3510 = vmatpush1.msra.mxu0 0.0
      %3511 = vmatprep.subr.mxu0 0.0
      %3512 = vmatpush1.msra.mxu0 0.0
      %3513 = vmatprep.subr.mxu0 0.0
      %3514 = vmatpush1.msra.mxu0 0.0
      %3515 = vmatprep.subr.mxu0 0.0
      %3516 = vmatpush1.msra.mxu0 0.0
      %3517 = vmatprep.subr.mxu0 0.0
      %3518 = vmatpush1.msra.mxu0 0.0
      %3519 = vmatprep.subr.mxu0 0.0
      %3520 = vmatpush1.msra.mxu0 0.0
      %3521 = vmatprep.subr.mxu0 0.0
      %3522 = vmatpush1.msra.mxu0 0.0
      %3523 = vmatprep.subr.mxu0 0.0
      %3524 = vmatpush1.msra.mxu0 0.0
      %3525 = vmatprep.subr.mxu0 0.0
      %3526 = vmatpush1.msra.mxu0 0.0
      %3527 = vmatprep.subr.mxu0 0.0
      %3528 = vmatpush1.msra.mxu0 0.0
      %3529 = vmatprep.subr.mxu0 0.0
      %3530 = vmatpush1.msra.mxu0 0.0
      %3531 = vmatprep.subr.mxu0 0.0
      %3532 = vmatpush1.msra.mxu0 0.0
      %3533 = vmatprep.subr.mxu0 0.0
      %3534 = vmatpush1.msra.mxu0 0.0
      %3535 = vmatprep.subr.mxu0 0.0
      %3536 = vmatpush1.msra.mxu0 0.0
      %3537 = vmatprep.subr.mxu0 0.0
      %3538 = vmatpush1.msra.mxu0 0.0
      %3539 = vmatprep.subr.mxu0 0.0
      %3540 = vmatpush1.msra.mxu0 0.0
      %3541 = vmatprep.subr.mxu0 0.0
      %3542 = vmatpush1.msra.mxu0 0.0
      %3543 = vmatprep.subr.mxu0 0.0
      %3544 = vmatpush1.msra.mxu0 0.0
      %3545 = vmatprep.subr.mxu0 0.0
      %3546 = vmatpush1.msra.mxu0 0.0
      %3547 = vmatprep.subr.mxu0 0.0
      %3548 = vmatpush1.msra.mxu0 0.0
      %3549 = vmatprep.subr.mxu0 0.0
      %3550 = vmatpush1.msra.mxu0 0.0
      %3551 = vmatprep.subr.mxu0 0.0
      %3552 = vmatpush1.msra.mxu0 0.0
      %3553 = vmatprep.subr.mxu0 0.0
      %3554 = vmatpush1.msra.mxu0 0.0
      %3555 = vmatprep.subr.mxu0 0.0
      %3556 = vmatpush1.msra.mxu0 0.0
      %3557 = vmatprep.subr.mxu0 0.0
      %3558 = vmatpush1.msra.mxu0 0.0
      %3559 = vmatprep.subr.mxu0 0.0
      %3560 = vmatpush1.msra.mxu0 0.0
      %3561 = vmatprep.subr.mxu0 0.0
      %3562 = vmatpush1.msra.mxu0 0.0
      %3563 = vmatprep.mubr.f32.mxu0 0.0
      %3564 = vmatmul.mubr.f32.gmra.mrb[0].mxu0 %v3473
      %v3565 = vpop.f32.mrb[0].mxu0
      %v3566 = vadd.f32 0.0, %v3565
      %v3567 = vpop.f32.mrb[0].mxu0
      %3568 = vmatprep.mubr.f32.mxu0 0.0
      %3569 = vmatmul.mubr.f32.gmra.mrb[0].mxu0 %v3476
      %v3570 = vpop.f32.mrb[0].mxu0
      %v3571 = vadd.f32 0.0, %v3570
      %v3572 = vpop.f32.mrb[0].mxu0
      %3573 = vmatprep.mubr.f32.mxu0 0.0
      %3574 = vmatmul.mubr.f32.gmra.mrb[0].mxu0 %v3479
      %v3575 = vpop.f32.mrb[0].mxu0
      %v3576 = vadd.f32 0.0, %v3575
      %v3577 = vpop.f32.mrb[0].mxu0
      %3578 = vmatprep.mubr.f32.mxu0 0.0
      %3579 = vmatmul.mubr.f32.gmra.mrb[0].mxu0 %v3482
      %v3580 = vpop.f32.mrb[0].mxu0
      %v3581 = vadd.f32 0.0, %v3580
      %v3582 = vpop.f32.mrb[0].mxu0
      %3583 = vmatprep.mubr.f32.mxu0 0.0
      %3584 = vmatmul.mubr.f32.gmra.mrb[0].mxu0 %v3485
      %v3585 = vpop.f32.mrb[0].mxu0
      %v3586 = vadd.f32 0.0, %v3585
      %v3587 = vpop.f32.mrb[0].mxu0
      %3588 = vmatprep.mubr.f32.mxu0 0.0
      %3589 = vmatmul.mubr.f32.gmra.mrb[0].mxu0 %v3488
      %v3590 = vpop.f32.mrb[0].mxu0
      %v3591 = vadd.f32 0.0, %v3590
      %v3592 = vpop.f32.mrb[0].mxu0
      %3593 = vmatprep.mubr.f32.mxu0 0.0
      %3594 = vmatmul.mubr.f32.gmra.mrb[0].mxu0 %v3491
      %v3595 = vpop.f32.mrb[0].mxu0
      %v3596 = vadd.f32 0.0, %v3595
      %v3597 = vpop.f32.mrb[0].mxu0
      %3598 = vmatprep.mubr.f32.mxu0 0.0
      %3599 = vmatmul.mubr.f32.gmra.mrb[0].mxu0 %v3494
      %v3600 = vpop.f32.mrb[0].mxu0
      %v3601 = vadd.f32 0.0, %v3600
      %v3602 = vpop.f32.mrb[0].mxu0
      %3603 = vmatprep.mubr.f32.mxu0 0.0
      %3604 = vmatmul.mubr.f32.gmra.mrb[0].mxu0 %v3497
      %v3605 = vpop.f32.mrb[0].mxu0
      %v3606 = vadd.f32 0.0, %v3605
      %v3607 = vpop.f32.mrb[0].mxu0
      %3608 = vdwg.mxu0
      %v3609 = vadd.f32 %v3454, %v3566
      %v3610 = vadd.f32 %v3455, %v3571
      %v3611 = vadd.f32 %v3456, %v3576
      %v3612 = vadd.f32 %v3457, %v3581
      %v3613 = vadd.f32 %v3458, %v3586
      %v3614 = vadd.f32 %v3459, %v3591
      %v3615 = vadd.f32 %v3460, %v3596
      %v3616 = vadd.f32 %v3461, %v3601
      %v3617 = vadd.f32 %v3462, %v3606
      %v3618 = vld [vmem:[%s796 + $0x9] sm:$0xff]
      %v3619 = vld [vmem:[%s796 + $0x11] sm:$0xff]
      %v3620 = vld [vmem:[%s796 + $0x19] sm:$0xff]
      %v3621 = vld [vmem:[%s796 + $0x21] sm:$0xff]
      %v3622 = vld [vmem:[%s796 + $0x29] sm:$0xff]
      %v3623 = vld [vmem:[%s796 + $0x31] sm:$0xff]
      %v3624 = vld [vmem:[%s796 + $0x39] sm:$0xff]
      %v3625 = vld [vmem:[%s796 + $0x41] sm:$0xff]
      %v3626 = vld [vmem:[%s796 + $0x49] sm:$0xff]
      %v3628 = vsel %vm193, %v3618, 0
      %v3631 = vsel %vm193, %v3619, 0
      %v3634 = vsel %vm193, %v3620, 0
      %v3637 = vsel %vm193, %v3621, 0
      %v3640 = vsel %vm193, %v3622, 0
      %v3643 = vsel %vm193, %v3623, 0
      %v3646 = vsel %vm193, %v3624, 0
      %v3649 = vsel %vm193, %v3625, 0
      %v3652 = vsel %vm193, %v3626, 0
      %3654 = vmatprep.subr.mxu0 0.0
      %3655 = vmatpush1.msra.mxu0 %v1316
      %3656 = vmatprep.subr.mxu0 0.0
      %3657 = vmatpush1.msra.mxu0 0.0
      %3658 = vmatprep.subr.mxu0 0.0
      %3659 = vmatpush1.msra.mxu0 0.0
      %3660 = vmatprep.subr.mxu0 0.0
      %3661 = vmatpush1.msra.mxu0 0.0
      %3662 = vmatprep.subr.mxu0 0.0
      %3663 = vmatpush1.msra.mxu0 0.0
      %3664 = vmatprep.subr.mxu0 0.0
      %3665 = vmatpush1.msra.mxu0 0.0
      %3666 = vmatprep.subr.mxu0 0.0
      %3667 = vmatpush1.msra.mxu0 0.0
      %3668 = vmatprep.subr.mxu0 0.0
      %3669 = vmatpush1.msra.mxu0 0.0
      %3670 = vmatprep.subr.mxu0 0.0
      %3671 = vmatpush1.msra.mxu0 0.0
      %3672 = vmatprep.subr.mxu0 0.0
      %3673 = vmatpush1.msra.mxu0 0.0
      %3674 = vmatprep.subr.mxu0 0.0
      %3675 = vmatpush1.msra.mxu0 0.0
      %3676 = vmatprep.subr.mxu0 0.0
      %3677 = vmatpush1.msra.mxu0 0.0
      %3678 = vmatprep.subr.mxu0 0.0
      %3679 = vmatpush1.msra.mxu0 0.0
      %3680 = vmatprep.subr.mxu0 0.0
      %3681 = vmatpush1.msra.mxu0 0.0
      %3682 = vmatprep.subr.mxu0 0.0
      %3683 = vmatpush1.msra.mxu0 0.0
      %3684 = vmatprep.subr.mxu0 0.0
      %3685 = vmatpush1.msra.mxu0 0.0
      %3686 = vmatprep.subr.mxu0 0.0
      %3687 = vmatpush1.msra.mxu0 0.0
      %3688 = vmatprep.subr.mxu0 0.0
      %3689 = vmatpush1.msra.mxu0 0.0
      %3690 = vmatprep.subr.mxu0 0.0
      %3691 = vmatpush1.msra.mxu0 0.0
      %3692 = vmatprep.subr.mxu0 0.0
      %3693 = vmatpush1.msra.mxu0 0.0
      %3694 = vmatprep.subr.mxu0 0.0
      %3695 = vmatpush1.msra.mxu0 0.0
      %3696 = vmatprep.subr.mxu0 0.0
      %3697 = vmatpush1.msra.mxu0 0.0
      %3698 = vmatprep.subr.mxu0 0.0
      %3699 = vmatpush1.msra.mxu0 0.0
      %3700 = vmatprep.subr.mxu0 0.0
      %3701 = vmatpush1.msra.mxu0 0.0
      %3702 = vmatprep.subr.mxu0 0.0
      %3703 = vmatpush1.msra.mxu0 0.0
      %3704 = vmatprep.subr.mxu0 0.0
      %3705 = vmatpush1.msra.mxu0 0.0
      %3706 = vmatprep.subr.mxu0 0.0
      %3707 = vmatpush1.msra.mxu0 0.0
      %3708 = vmatprep.subr.mxu0 0.0
      %3709 = vmatpush1.msra.mxu0 0.0
      %3710 = vmatprep.subr.mxu0 0.0
      %3711 = vmatpush1.msra.mxu0 0.0
      %3712 = vmatprep.subr.mxu0 0.0
      %3713 = vmatpush1.msra.mxu0 0.0
      %3714 = vmatprep.subr.mxu0 0.0
      %3715 = vmatpush1.msra.mxu0 0.0
      %3716 = vmatprep.subr.mxu0 0.0
      %3717 = vmatpush1.msra.mxu0 0.0
      %3718 = vmatprep.mubr.f32.mxu0 0.0
      %3719 = vmatmul.mubr.f32.gmra.mrb[0].mxu0 %v3628
      %v3720 = vpop.f32.mrb[0].mxu0
      %v3721 = vadd.f32 0.0, %v3720
      %v3722 = vpop.f32.mrb[0].mxu0
      %3723 = vmatprep.mubr.f32.mxu0 0.0
      %3724 = vmatmul.mubr.f32.gmra.mrb[0].mxu0 %v3631
      %v3725 = vpop.f32.mrb[0].mxu0
      %v3726 = vadd.f32 0.0, %v3725
      %v3727 = vpop.f32.mrb[0].mxu0
      %3728 = vmatprep.mubr.f32.mxu0 0.0
      %3729 = vmatmul.mubr.f32.gmra.mrb[0].mxu0 %v3634
      %v3730 = vpop.f32.mrb[0].mxu0
      %v3731 = vadd.f32 0.0, %v3730
      %v3732 = vpop.f32.mrb[0].mxu0
      %3733 = vmatprep.mubr.f32.mxu0 0.0
      %3734 = vmatmul.mubr.f32.gmra.mrb[0].mxu0 %v3637
      %v3735 = vpop.f32.mrb[0].mxu0
      %v3736 = vadd.f32 0.0, %v3735
      %v3737 = vpop.f32.mrb[0].mxu0
      %3738 = vmatprep.mubr.f32.mxu0 0.0
      %3739 = vmatmul.mubr.f32.gmra.mrb[0].mxu0 %v3640
      %v3740 = vpop.f32.mrb[0].mxu0
      %v3741 = vadd.f32 0.0, %v3740
      %v3742 = vpop.f32.mrb[0].mxu0
      %3743 = vmatprep.mubr.f32.mxu0 0.0
      %3744 = vmatmul.mubr.f32.gmra.mrb[0].mxu0 %v3643
      %v3745 = vpop.f32.mrb[0].mxu0
      %v3746 = vadd.f32 0.0, %v3745
      %v3747 = vpop.f32.mrb[0].mxu0
      %3748 = vmatprep.mubr.f32.mxu0 0.0
      %3749 = vmatmul.mubr.f32.gmra.mrb[0].mxu0 %v3646
      %v3750 = vpop.f32.mrb[0].mxu0
      %v3751 = vadd.f32 0.0, %v3750
      %v3752 = vpop.f32.mrb[0].mxu0
      %3753 = vmatprep.mubr.f32.mxu0 0.0
      %3754 = vmatmul.mubr.f32.gmra.mrb[0].mxu0 %v3649
      %v3755 = vpop.f32.mrb[0].mxu0
      %v3756 = vadd.f32 0.0, %v3755
      %v3757 = vpop.f32.mrb[0].mxu0
      %3758 = vmatprep.mubr.f32.mxu0 0.0
      %3759 = vmatmul.mubr.f32.gmra.mrb[0].mxu0 %v3652
      %v3760 = vpop.f32.mrb[0].mxu0
      %v3761 = vadd.f32 0.0, %v3760
      %v3762 = vpop.f32.mrb[0].mxu0
      %3763 = vdwg.mxu0
      %v3764 = vadd.f32 %v3609, %v3721
      %v3765 = vadd.f32 %v3610, %v3726
      %v3766 = vadd.f32 %v3611, %v3731
      %v3767 = vadd.f32 %v3612, %v3736
      %v3768 = vadd.f32 %v3613, %v3741
      %v3769 = vadd.f32 %v3614, %v3746
      %v3770 = vadd.f32 %v3615, %v3751
      %v3771 = vadd.f32 %v3616, %v3756
      %v3772 = vadd.f32 %v3617, %v3761
      %v3773 = vld [vmem:[%s635 + $0xa] sm:$0xff]
      %v3774 = vld [vmem:[%s635 + $0x12] sm:$0xff]
      %v3775 = vld [vmem:[%s635 + $0x1a] sm:$0xff]
      %v3776 = vld [vmem:[%s635 + $0x22] sm:$0xff]
      %v3777 = vld [vmem:[%s635 + $0x2a] sm:$0xff]
      %v3778 = vld [vmem:[%s635 + $0x32] sm:$0xff]
      %v3779 = vld [vmem:[%s635 + $0x3a] sm:$0xff]
      %v3780 = vld [vmem:[%s635 + $0x42] sm:$0xff]
      %v3781 = vld [vmem:[%s635 + $0x4a] sm:$0xff]
      %v3783 = vsel %vm193, %v3773, 0
      %v3786 = vsel %vm193, %v3774, 0
      %v3789 = vsel %vm193, %v3775, 0
      %v3792 = vsel %vm193, %v3776, 0
      %v3795 = vsel %vm193, %v3777, 0
      %v3798 = vsel %vm193, %v3778, 0
      %v3801 = vsel %vm193, %v3779, 0
      %v3804 = vsel %vm193, %v3780, 0
      %v3807 = vsel %vm193, %v3781, 0
      %3809 = vmatprep.subr.mxu0 0.0
      %3810 = vmatpush1.msra.mxu0 %v1476
      %3811 = vmatprep.subr.mxu0 0.0
      %3812 = vmatpush1.msra.mxu0 0.0
      %3813 = vmatprep.subr.mxu0 0.0
      %3814 = vmatpush1.msra.mxu0 0.0
      %3815 = vmatprep.subr.mxu0 0.0
      %3816 = vmatpush1.msra.mxu0 0.0
      %3817 = vmatprep.subr.mxu0 0.0
      %3818 = vmatpush1.msra.mxu0 0.0
      %3819 = vmatprep.subr.mxu0 0.0
      %3820 = vmatpush1.msra.mxu0 0.0
      %3821 = vmatprep.subr.mxu0 0.0
      %3822 = vmatpush1.msra.mxu0 0.0
      %3823 = vmatprep.subr.mxu0 0.0
      %3824 = vmatpush1.msra.mxu0 0.0
      %3825 = vmatprep.subr.mxu0 0.0
      %3826 = vmatpush1.msra.mxu0 0.0
      %3827 = vmatprep.subr.mxu0 0.0
      %3828 = vmatpush1.msra.mxu0 0.0
      %3829 = vmatprep.subr.mxu0 0.0
      %3830 = vmatpush1.msra.mxu0 0.0
      %3831 = vmatprep.subr.mxu0 0.0
      %3832 = vmatpush1.msra.mxu0 0.0
      %3833 = vmatprep.subr.mxu0 0.0
      %3834 = vmatpush1.msra.mxu0 0.0
      %3835 = vmatprep.subr.mxu0 0.0
      %3836 = vmatpush1.msra.mxu0 0.0
      %3837 = vmatprep.subr.mxu0 0.0
      %3838 = vmatpush1.msra.mxu0 0.0
      %3839 = vmatprep.subr.mxu0 0.0
      %3840 = vmatpush1.msra.mxu0 0.0
      %3841 = vmatprep.subr.mxu0 0.0
      %3842 = vmatpush1.msra.mxu0 0.0
      %3843 = vmatprep.subr.mxu0 0.0
      %3844 = vmatpush1.msra.mxu0 0.0
      %3845 = vmatprep.subr.mxu0 0.0
      %3846 = vmatpush1.msra.mxu0 0.0
      %3847 = vmatprep.subr.mxu0 0.0
      %3848 = vmatpush1.msra.mxu0 0.0
      %3849 = vmatprep.subr.mxu0 0.0
      %3850 = vmatpush1.msra.mxu0 0.0
      %3851 = vmatprep.subr.mxu0 0.0
      %3852 = vmatpush1.msra.mxu0 0.0
      %3853 = vmatprep.subr.mxu0 0.0
      %3854 = vmatpush1.msra.mxu0 0.0
      %3855 = vmatprep.subr.mxu0 0.0
      %3856 = vmatpush1.msra.mxu0 0.0
      %3857 = vmatprep.subr.mxu0 0.0
      %3858 = vmatpush1.msra.mxu0 0.0
      %3859 = vmatprep.subr.mxu0 0.0
      %3860 = vmatpush1.msra.mxu0 0.0
      %3861 = vmatprep.subr.mxu0 0.0
      %3862 = vmatpush1.msra.mxu0 0.0
      %3863 = vmatprep.subr.mxu0 0.0
      %3864 = vmatpush1.msra.mxu0 0.0
      %3865 = vmatprep.subr.mxu0 0.0
      %3866 = vmatpush1.msra.mxu0 0.0
      %3867 = vmatprep.subr.mxu0 0.0
      %3868 = vmatpush1.msra.mxu0 0.0
      %3869 = vmatprep.subr.mxu0 0.0
      %3870 = vmatpush1.msra.mxu0 0.0
      %3871 = vmatprep.subr.mxu0 0.0
      %3872 = vmatpush1.msra.mxu0 0.0
      %3873 = vmatprep.mubr.f32.mxu0 0.0
      %3874 = vmatmul.mubr.f32.gmra.mrb[0].mxu0 %v3783
      %v3875 = vpop.f32.mrb[0].mxu0
      %v3876 = vadd.f32 0.0, %v3875
      %v3877 = vpop.f32.mrb[0].mxu0
      %3878 = vmatprep.mubr.f32.mxu0 0.0
      %3879 = vmatmul.mubr.f32.gmra.mrb[0].mxu0 %v3786
      %v3880 = vpop.f32.mrb[0].mxu0
      %v3881 = vadd.f32 0.0, %v3880
      %v3882 = vpop.f32.mrb[0].mxu0
      %3883 = vmatprep.mubr.f32.mxu0 0.0
      %3884 = vmatmul.mubr.f32.gmra.mrb[0].mxu0 %v3789
      %v3885 = vpop.f32.mrb[0].mxu0
      %v3886 = vadd.f32 0.0, %v3885
      %v3887 = vpop.f32.mrb[0].mxu0
      %3888 = vmatprep.mubr.f32.mxu0 0.0
      %3889 = vmatmul.mubr.f32.gmra.mrb[0].mxu0 %v3792
      %v3890 = vpop.f32.mrb[0].mxu0
      %v3891 = vadd.f32 0.0, %v3890
      %v3892 = vpop.f32.mrb[0].mxu0
      %3893 = vmatprep.mubr.f32.mxu0 0.0
      %3894 = vmatmul.mubr.f32.gmra.mrb[0].mxu0 %v3795
      %v3895 = vpop.f32.mrb[0].mxu0
      %v3896 = vadd.f32 0.0, %v3895
      %v3897 = vpop.f32.mrb[0].mxu0
      %3898 = vmatprep.mubr.f32.mxu0 0.0
      %3899 = vmatmul.mubr.f32.gmra.mrb[0].mxu0 %v3798
      %v3900 = vpop.f32.mrb[0].mxu0
      %v3901 = vadd.f32 0.0, %v3900
      %v3902 = vpop.f32.mrb[0].mxu0
      %3903 = vmatprep.mubr.f32.mxu0 0.0
      %3904 = vmatmul.mubr.f32.gmra.mrb[0].mxu0 %v3801
      %v3905 = vpop.f32.mrb[0].mxu0
      %v3906 = vadd.f32 0.0, %v3905
      %v3907 = vpop.f32.mrb[0].mxu0
      %3908 = vmatprep.mubr.f32.mxu0 0.0
      %3909 = vmatmul.mubr.f32.gmra.mrb[0].mxu0 %v3804
      %v3910 = vpop.f32.mrb[0].mxu0
      %v3911 = vadd.f32 0.0, %v3910
      %v3912 = vpop.f32.mrb[0].mxu0
      %3913 = vmatprep.mubr.f32.mxu0 0.0
      %3914 = vmatmul.mubr.f32.gmra.mrb[0].mxu0 %v3807
      %v3915 = vpop.f32.mrb[0].mxu0
      %v3916 = vadd.f32 0.0, %v3915
      %v3917 = vpop.f32.mrb[0].mxu0
      %3918 = vdwg.mxu0
      %v3919 = vadd.f32 %v3764, %v3876
      %v3920 = vadd.f32 %v3765, %v3881
      %v3921 = vadd.f32 %v3766, %v3886
      %v3922 = vadd.f32 %v3767, %v3891
      %v3923 = vadd.f32 %v3768, %v3896
      %v3924 = vadd.f32 %v3769, %v3901
      %v3925 = vadd.f32 %v3770, %v3906
      %v3926 = vadd.f32 %v3771, %v3911
      %v3927 = vadd.f32 %v3772, %v3916
      %v3928 = vmax.f32 %v2758, %v3919
      %v3929 = vmax.f32 %v2759, %v3920
      %v3930 = vmax.f32 %v2760, %v3921
      %v3931 = vmax.f32 %v2761, %v3922
      %v3932 = vmax.f32 %v2762, %v3923
      %v3933 = vmax.f32 %v2763, %v3924
      %v3934 = vmax.f32 %v2764, %v3925
      %v3935 = vmax.f32 %v2765, %v3926
      %v3936 = vmax.f32 %v2766, %v3927
      %3937 = vmatprep.subr.mxu0 0.0
      %3938 = vmatpush1.msra.mxu0 %v223
      %3939 = vmatprep.subr.mxu0 0.0
      %3940 = vmatpush1.msra.mxu0 0.0
      %3941 = vmatprep.subr.mxu0 0.0
      %3942 = vmatpush1.msra.mxu0 0.0
      %3943 = vmatprep.subr.mxu0 0.0
      %3944 = vmatpush1.msra.mxu0 0.0
      %3945 = vmatprep.subr.mxu0 0.0
      %3946 = vmatpush1.msra.mxu0 0.0
      %3947 = vmatprep.subr.mxu0 0.0
      %3948 = vmatpush1.msra.mxu0 0.0
      %3949 = vmatprep.subr.mxu0 0.0
      %3950 = vmatpush1.msra.mxu0 0.0
      %3951 = vmatprep.subr.mxu0 0.0
      %3952 = vmatpush1.msra.mxu0 0.0
      %3953 = vmatprep.subr.mxu0 0.0
      %3954 = vmatpush1.msra.mxu0 0.0
      %3955 = vmatprep.subr.mxu0 0.0
      %3956 = vmatpush1.msra.mxu0 0.0
      %3957 = vmatprep.subr.mxu0 0.0
      %3958 = vmatpush1.msra.mxu0 0.0
      %3959 = vmatprep.subr.mxu0 0.0
      %3960 = vmatpush1.msra.mxu0 0.0
      %3961 = vmatprep.subr.mxu0 0.0
      %3962 = vmatpush1.msra.mxu0 0.0
      %3963 = vmatprep.subr.mxu0 0.0
      %3964 = vmatpush1.msra.mxu0 0.0
      %3965 = vmatprep.subr.mxu0 0.0
      %3966 = vmatpush1.msra.mxu0 0.0
      %3967 = vmatprep.subr.mxu0 0.0
      %3968 = vmatpush1.msra.mxu0 0.0
      %3969 = vmatprep.subr.mxu0 0.0
      %3970 = vmatpush1.msra.mxu0 0.0
      %3971 = vmatprep.subr.mxu0 0.0
      %3972 = vmatpush1.msra.mxu0 0.0
      %3973 = vmatprep.subr.mxu0 0.0
      %3974 = vmatpush1.msra.mxu0 0.0
      %3975 = vmatprep.subr.mxu0 0.0
      %3976 = vmatpush1.msra.mxu0 0.0
      %3977 = vmatprep.subr.mxu0 0.0
      %3978 = vmatpush1.msra.mxu0 0.0
      %3979 = vmatprep.subr.mxu0 0.0
      %3980 = vmatpush1.msra.mxu0 0.0
      %3981 = vmatprep.subr.mxu0 0.0
      %3982 = vmatpush1.msra.mxu0 0.0
      %3983 = vmatprep.subr.mxu0 0.0
      %3984 = vmatpush1.msra.mxu0 0.0
      %3985 = vmatprep.subr.mxu0 0.0
      %3986 = vmatpush1.msra.mxu0 0.0
      %3987 = vmatprep.subr.mxu0 0.0
      %3988 = vmatpush1.msra.mxu0 0.0
      %3989 = vmatprep.subr.mxu0 0.0
      %3990 = vmatpush1.msra.mxu0 0.0
      %3991 = vmatprep.subr.mxu0 0.0
      %3992 = vmatpush1.msra.mxu0 0.0
      %3993 = vmatprep.subr.mxu0 0.0
      %3994 = vmatpush1.msra.mxu0 0.0
      %3995 = vmatprep.subr.mxu0 0.0
      %3996 = vmatpush1.msra.mxu0 0.0
      %3997 = vmatprep.subr.mxu0 0.0
      %3998 = vmatpush1.msra.mxu0 0.0
      %3999 = vmatprep.subr.mxu0 0.0
      %4000 = vmatpush1.msra.mxu0 0.0
      %4001 = vmatprep.mubr.f32.mxu0 0.0
      %4002 = vmatmul.mubr.f32.gmra.mrb[0].mxu0 %v969
      %v4003 = vpop.f32.mrb[0].mxu0
      %v4004 = vadd.f32 0.0, %v4003
      %v4005 = vpop.f32.mrb[0].mxu0
      %4006 = vmatprep.mubr.f32.mxu0 0.0
      %4007 = vmatmul.mubr.f32.gmra.mrb[0].mxu0 %v972
      %v4008 = vpop.f32.mrb[0].mxu0
      %v4009 = vadd.f32 0.0, %v4008
      %v4010 = vpop.f32.mrb[0].mxu0
      %4011 = vmatprep.mubr.f32.mxu0 0.0
      %4012 = vmatmul.mubr.f32.gmra.mrb[0].mxu0 %v975
      %v4013 = vpop.f32.mrb[0].mxu0
      %v4014 = vadd.f32 0.0, %v4013
      %v4015 = vpop.f32.mrb[0].mxu0
      %4016 = vmatprep.mubr.f32.mxu0 0.0
      %4017 = vmatmul.mubr.f32.gmra.mrb[0].mxu0 %v978
      %v4018 = vpop.f32.mrb[0].mxu0
      %v4019 = vadd.f32 0.0, %v4018
      %v4020 = vpop.f32.mrb[0].mxu0
      %4021 = vmatprep.mubr.f32.mxu0 0.0
      %4022 = vmatmul.mubr.f32.gmra.mrb[0].mxu0 %v981
      %v4023 = vpop.f32.mrb[0].mxu0
      %v4024 = vadd.f32 0.0, %v4023
      %v4025 = vpop.f32.mrb[0].mxu0
      %4026 = vmatprep.mubr.f32.mxu0 0.0
      %4027 = vmatmul.mubr.f32.gmra.mrb[0].mxu0 %v984
      %v4028 = vpop.f32.mrb[0].mxu0
      %v4029 = vadd.f32 0.0, %v4028
      %v4030 = vpop.f32.mrb[0].mxu0
      %4031 = vmatprep.mubr.f32.mxu0 0.0
      %4032 = vmatmul.mubr.f32.gmra.mrb[0].mxu0 %v987
      %v4033 = vpop.f32.mrb[0].mxu0
      %v4034 = vadd.f32 0.0, %v4033
      %v4035 = vpop.f32.mrb[0].mxu0
      %4036 = vmatprep.mubr.f32.mxu0 0.0
      %4037 = vmatmul.mubr.f32.gmra.mrb[0].mxu0 %v990
      %v4038 = vpop.f32.mrb[0].mxu0
      %v4039 = vadd.f32 0.0, %v4038
      %v4040 = vpop.f32.mrb[0].mxu0
      %4041 = vmatprep.mubr.f32.mxu0 0.0
      %4042 = vmatmul.mubr.f32.gmra.mrb[0].mxu0 %v993
      %v4043 = vpop.f32.mrb[0].mxu0
      %v4044 = vadd.f32 0.0, %v4043
      %v4045 = vpop.f32.mrb[0].mxu0
      %4046 = vdwg.mxu0
      %4047 = vmatprep.subr.mxu0 0.0
      %4048 = vmatpush1.msra.mxu0 %v363
      %4049 = vmatprep.subr.mxu0 0.0
      %4050 = vmatpush1.msra.mxu0 0.0
      %4051 = vmatprep.subr.mxu0 0.0
      %4052 = vmatpush1.msra.mxu0 0.0
      %4053 = vmatprep.subr.mxu0 0.0
      %4054 = vmatpush1.msra.mxu0 0.0
      %4055 = vmatprep.subr.mxu0 0.0
      %4056 = vmatpush1.msra.mxu0 0.0
      %4057 = vmatprep.subr.mxu0 0.0
      %4058 = vmatpush1.msra.mxu0 0.0
      %4059 = vmatprep.subr.mxu0 0.0
      %4060 = vmatpush1.msra.mxu0 0.0
      %4061 = vmatprep.subr.mxu0 0.0
      %4062 = vmatpush1.msra.mxu0 0.0
      %4063 = vmatprep.subr.mxu0 0.0
      %4064 = vmatpush1.msra.mxu0 0.0
      %4065 = vmatprep.subr.mxu0 0.0
      %4066 = vmatpush1.msra.mxu0 0.0
      %4067 = vmatprep.subr.mxu0 0.0
      %4068 = vmatpush1.msra.mxu0 0.0
      %4069 = vmatprep.subr.mxu0 0.0
      %4070 = vmatpush1.msra.mxu0 0.0
      %4071 = vmatprep.subr.mxu0 0.0
      %4072 = vmatpush1.msra.mxu0 0.0
      %4073 = vmatprep.subr.mxu0 0.0
      %4074 = vmatpush1.msra.mxu0 0.0
      %4075 = vmatprep.subr.mxu0 0.0
      %4076 = vmatpush1.msra.mxu0 0.0
      %4077 = vmatprep.subr.mxu0 0.0
      %4078 = vmatpush1.msra.mxu0 0.0
      %4079 = vmatprep.subr.mxu0 0.0
      %4080 = vmatpush1.msra.mxu0 0.0
      %4081 = vmatprep.subr.mxu0 0.0
      %4082 = vmatpush1.msra.mxu0 0.0
      %4083 = vmatprep.subr.mxu0 0.0
      %4084 = vmatpush1.msra.mxu0 0.0
      %4085 = vmatprep.subr.mxu0 0.0
      %4086 = vmatpush1.msra.mxu0 0.0
      %4087 = vmatprep.subr.mxu0 0.0
      %4088 = vmatpush1.msra.mxu0 0.0
      %4089 = vmatprep.subr.mxu0 0.0
      %4090 = vmatpush1.msra.mxu0 0.0
      %4091 = vmatprep.subr.mxu0 0.0
      %4092 = vmatpush1.msra.mxu0 0.0
      %4093 = vmatprep.subr.mxu0 0.0
      %4094 = vmatpush1.msra.mxu0 0.0
      %4095 = vmatprep.subr.mxu0 0.0
      %4096 = vmatpush1.msra.mxu0 0.0
      %4097 = vmatprep.subr.mxu0 0.0
      %4098 = vmatpush1.msra.mxu0 0.0
      %4099 = vmatprep.subr.mxu0 0.0
      %4100 = vmatpush1.msra.mxu0 0.0
      %4101 = vmatprep.subr.mxu0 0.0
      %4102 = vmatpush1.msra.mxu0 0.0
      %4103 = vmatprep.subr.mxu0 0.0
      %4104 = vmatpush1.msra.mxu0 0.0
      %4105 = vmatprep.subr.mxu0 0.0
      %4106 = vmatpush1.msra.mxu0 0.0
      %4107 = vmatprep.subr.mxu0 0.0
      %4108 = vmatpush1.msra.mxu0 0.0
      %4109 = vmatprep.subr.mxu0 0.0
      %4110 = vmatpush1.msra.mxu0 0.0
      %4111 = vmatprep.mubr.f32.mxu0 0.0
      %4112 = vmatmul.mubr.f32.gmra.mrb[0].mxu0 %v809
      %v4113 = vpop.f32.mrb[0].mxu0
      %v4114 = vadd.f32 %v4004, %v4113
      %v4115 = vpop.f32.mrb[0].mxu0
      %4116 = vmatprep.mubr.f32.mxu0 0.0
      %4117 = vmatmul.mubr.f32.gmra.mrb[0].mxu0 %v812
      %v4118 = vpop.f32.mrb[0].mxu0
      %v4119 = vadd.f32 %v4009, %v4118
      %v4120 = vpop.f32.mrb[0].mxu0
      %4121 = vmatprep.mubr.f32.mxu0 0.0
      %4122 = vmatmul.mubr.f32.gmra.mrb[0].mxu0 %v815
      %v4123 = vpop.f32.mrb[0].mxu0
      %v4124 = vadd.f32 %v4014, %v4123
      %v4125 = vpop.f32.mrb[0].mxu0
      %4126 = vmatprep.mubr.f32.mxu0 0.0
      %4127 = vmatmul.mubr.f32.gmra.mrb[0].mxu0 %v818
      %v4128 = vpop.f32.mrb[0].mxu0
      %v4129 = vadd.f32 %v4019, %v4128
      %v4130 = vpop.f32.mrb[0].mxu0
      %4131 = vmatprep.mubr.f32.mxu0 0.0
      %4132 = vmatmul.mubr.f32.gmra.mrb[0].mxu0 %v821
      %v4133 = vpop.f32.mrb[0].mxu0
      %v4134 = vadd.f32 %v4024, %v4133
      %v4135 = vpop.f32.mrb[0].mxu0
      %4136 = vmatprep.mubr.f32.mxu0 0.0
      %4137 = vmatmul.mubr.f32.gmra.mrb[0].mxu0 %v824
      %v4138 = vpop.f32.mrb[0].mxu0
      %v4139 = vadd.f32 %v4029, %v4138
      %v4140 = vpop.f32.mrb[0].mxu0
      %4141 = vmatprep.mubr.f32.mxu0 0.0
      %4142 = vmatmul.mubr.f32.gmra.mrb[0].mxu0 %v827
      %v4143 = vpop.f32.mrb[0].mxu0
      %v4144 = vadd.f32 %v4034, %v4143
      %v4145 = vpop.f32.mrb[0].mxu0
      %4146 = vmatprep.mubr.f32.mxu0 0.0
      %4147 = vmatmul.mubr.f32.gmra.mrb[0].mxu0 %v830
      %v4148 = vpop.f32.mrb[0].mxu0
      %v4149 = vadd.f32 %v4039, %v4148
      %v4150 = vpop.f32.mrb[0].mxu0
      %4151 = vmatprep.mubr.f32.mxu0 0.0
      %4152 = vmatmul.mubr.f32.gmra.mrb[0].mxu0 %v833
      %v4153 = vpop.f32.mrb[0].mxu0
      %v4154 = vadd.f32 %v4044, %v4153
      %v4155 = vpop.f32.mrb[0].mxu0
      %4156 = vdwg.mxu0
      %4157 = vmatprep.subr.mxu0 0.0
      %4158 = vmatpush1.msra.mxu0 %v514
      %4159 = vmatprep.subr.mxu0 0.0
      %4160 = vmatpush1.msra.mxu0 0.0
      %4161 = vmatprep.subr.mxu0 0.0
      %4162 = vmatpush1.msra.mxu0 0.0
      %4163 = vmatprep.subr.mxu0 0.0
      %4164 = vmatpush1.msra.mxu0 0.0
      %4165 = vmatprep.subr.mxu0 0.0
      %4166 = vmatpush1.msra.mxu0 0.0
      %4167 = vmatprep.subr.mxu0 0.0
      %4168 = vmatpush1.msra.mxu0 0.0
      %4169 = vmatprep.subr.mxu0 0.0
      %4170 = vmatpush1.msra.mxu0 0.0
      %4171 = vmatprep.subr.mxu0 0.0
      %4172 = vmatpush1.msra.mxu0 0.0
      %4173 = vmatprep.subr.mxu0 0.0
      %4174 = vmatpush1.msra.mxu0 0.0
      %4175 = vmatprep.subr.mxu0 0.0
      %4176 = vmatpush1.msra.mxu0 0.0
      %4177 = vmatprep.subr.mxu0 0.0
      %4178 = vmatpush1.msra.mxu0 0.0
      %4179 = vmatprep.subr.mxu0 0.0
      %4180 = vmatpush1.msra.mxu0 0.0
      %4181 = vmatprep.subr.mxu0 0.0
      %4182 = vmatpush1.msra.mxu0 0.0
      %4183 = vmatprep.subr.mxu0 0.0
      %4184 = vmatpush1.msra.mxu0 0.0
      %4185 = vmatprep.subr.mxu0 0.0
      %4186 = vmatpush1.msra.mxu0 0.0
      %4187 = vmatprep.subr.mxu0 0.0
      %4188 = vmatpush1.msra.mxu0 0.0
      %4189 = vmatprep.subr.mxu0 0.0
      %4190 = vmatpush1.msra.mxu0 0.0
      %4191 = vmatprep.subr.mxu0 0.0
      %4192 = vmatpush1.msra.mxu0 0.0
      %4193 = vmatprep.subr.mxu0 0.0
      %4194 = vmatpush1.msra.mxu0 0.0
      %4195 = vmatprep.subr.mxu0 0.0
      %4196 = vmatpush1.msra.mxu0 0.0
      %4197 = vmatprep.subr.mxu0 0.0
      %4198 = vmatpush1.msra.mxu0 0.0
      %4199 = vmatprep.subr.mxu0 0.0
      %4200 = vmatpush1.msra.mxu0 0.0
      %4201 = vmatprep.subr.mxu0 0.0
      %4202 = vmatpush1.msra.mxu0 0.0
      %4203 = vmatprep.subr.mxu0 0.0
      %4204 = vmatpush1.msra.mxu0 0.0
      %4205 = vmatprep.subr.mxu0 0.0
      %4206 = vmatpush1.msra.mxu0 0.0
      %4207 = vmatprep.subr.mxu0 0.0
      %4208 = vmatpush1.msra.mxu0 0.0
      %4209 = vmatprep.subr.mxu0 0.0
      %4210 = vmatpush1.msra.mxu0 0.0
      %4211 = vmatprep.subr.mxu0 0.0
      %4212 = vmatpush1.msra.mxu0 0.0
      %4213 = vmatprep.subr.mxu0 0.0
      %4214 = vmatpush1.msra.mxu0 0.0
      %4215 = vmatprep.subr.mxu0 0.0
      %4216 = vmatpush1.msra.mxu0 0.0
      %4217 = vmatprep.subr.mxu0 0.0
      %4218 = vmatpush1.msra.mxu0 0.0
      %4219 = vmatprep.subr.mxu0 0.0
      %4220 = vmatpush1.msra.mxu0 0.0
      %4221 = vmatprep.mubr.f32.mxu0 0.0
      %4222 = vmatmul.mubr.f32.gmra.mrb[0].mxu0 %v2220
      %v4223 = vpop.f32.mrb[0].mxu0
      %v4224 = vadd.f32 0.0, %v4223
      %v4225 = vpop.f32.mrb[0].mxu0
      %4226 = vmatprep.mubr.f32.mxu0 0.0
      %4227 = vmatmul.mubr.f32.gmra.mrb[0].mxu0 %v2223
      %v4228 = vpop.f32.mrb[0].mxu0
      %v4229 = vadd.f32 0.0, %v4228
      %v4230 = vpop.f32.mrb[0].mxu0
      %4231 = vmatprep.mubr.f32.mxu0 0.0
      %4232 = vmatmul.mubr.f32.gmra.mrb[0].mxu0 %v2226
      %v4233 = vpop.f32.mrb[0].mxu0
      %v4234 = vadd.f32 0.0, %v4233
      %v4235 = vpop.f32.mrb[0].mxu0
      %4236 = vmatprep.mubr.f32.mxu0 0.0
      %4237 = vmatmul.mubr.f32.gmra.mrb[0].mxu0 %v2229
      %v4238 = vpop.f32.mrb[0].mxu0
      %v4239 = vadd.f32 0.0, %v4238
      %v4240 = vpop.f32.mrb[0].mxu0
      %4241 = vmatprep.mubr.f32.mxu0 0.0
      %4242 = vmatmul.mubr.f32.gmra.mrb[0].mxu0 %v2232
      %v4243 = vpop.f32.mrb[0].mxu0
      %v4244 = vadd.f32 0.0, %v4243
      %v4245 = vpop.f32.mrb[0].mxu0
      %4246 = vmatprep.mubr.f32.mxu0 0.0
      %4247 = vmatmul.mubr.f32.gmra.mrb[0].mxu0 %v2235
      %v4248 = vpop.f32.mrb[0].mxu0
      %v4249 = vadd.f32 0.0, %v4248
      %v4250 = vpop.f32.mrb[0].mxu0
      %4251 = vmatprep.mubr.f32.mxu0 0.0
      %4252 = vmatmul.mubr.f32.gmra.mrb[0].mxu0 %v2238
      %v4253 = vpop.f32.mrb[0].mxu0
      %v4254 = vadd.f32 0.0, %v4253
      %v4255 = vpop.f32.mrb[0].mxu0
      %4256 = vmatprep.mubr.f32.mxu0 0.0
      %4257 = vmatmul.mubr.f32.gmra.mrb[0].mxu0 %v2241
      %v4258 = vpop.f32.mrb[0].mxu0
      %v4259 = vadd.f32 0.0, %v4258
      %v4260 = vpop.f32.mrb[0].mxu0
      %4261 = vmatprep.mubr.f32.mxu0 0.0
      %4262 = vmatmul.mubr.f32.gmra.mrb[0].mxu0 %v2244
      %v4263 = vpop.f32.mrb[0].mxu0
      %v4264 = vadd.f32 0.0, %v4263
      %v4265 = vpop.f32.mrb[0].mxu0
      %4266 = vdwg.mxu0
      %v4267 = vadd.f32 %v4114, %v4224
      %v4268 = vadd.f32 %v4119, %v4229
      %v4269 = vadd.f32 %v4124, %v4234
      %v4270 = vadd.f32 %v4129, %v4239
      %v4271 = vadd.f32 %v4134, %v4244
      %v4272 = vadd.f32 %v4139, %v4249
      %v4273 = vadd.f32 %v4144, %v4254
      %v4274 = vadd.f32 %v4149, %v4259
      %v4275 = vadd.f32 %v4154, %v4264
      %4276 = vmatprep.subr.mxu0 0.0
      %4277 = vmatpush1.msra.mxu0 %v675
      %4278 = vmatprep.subr.mxu0 0.0
      %4279 = vmatpush1.msra.mxu0 0.0
      %4280 = vmatprep.subr.mxu0 0.0
      %4281 = vmatpush1.msra.mxu0 0.0
      %4282 = vmatprep.subr.mxu0 0.0
      %4283 = vmatpush1.msra.mxu0 0.0
      %4284 = vmatprep.subr.mxu0 0.0
      %4285 = vmatpush1.msra.mxu0 0.0
      %4286 = vmatprep.subr.mxu0 0.0
      %4287 = vmatpush1.msra.mxu0 0.0
      %4288 = vmatprep.subr.mxu0 0.0
      %4289 = vmatpush1.msra.mxu0 0.0
      %4290 = vmatprep.subr.mxu0 0.0
      %4291 = vmatpush1.msra.mxu0 0.0
      %4292 = vmatprep.subr.mxu0 0.0
      %4293 = vmatpush1.msra.mxu0 0.0
      %4294 = vmatprep.subr.mxu0 0.0
      %4295 = vmatpush1.msra.mxu0 0.0
      %4296 = vmatprep.subr.mxu0 0.0
      %4297 = vmatpush1.msra.mxu0 0.0
      %4298 = vmatprep.subr.mxu0 0.0
      %4299 = vmatpush1.msra.mxu0 0.0
      %4300 = vmatprep.subr.mxu0 0.0
      %4301 = vmatpush1.msra.mxu0 0.0
      %4302 = vmatprep.subr.mxu0 0.0
      %4303 = vmatpush1.msra.mxu0 0.0
      %4304 = vmatprep.subr.mxu0 0.0
      %4305 = vmatpush1.msra.mxu0 0.0
      %4306 = vmatprep.subr.mxu0 0.0
      %4307 = vmatpush1.msra.mxu0 0.0
      %4308 = vmatprep.subr.mxu0 0.0
      %4309 = vmatpush1.msra.mxu0 0.0
      %4310 = vmatprep.subr.mxu0 0.0
      %4311 = vmatpush1.msra.mxu0 0.0
      %4312 = vmatprep.subr.mxu0 0.0
      %4313 = vmatpush1.msra.mxu0 0.0
      %4314 = vmatprep.subr.mxu0 0.0
      %4315 = vmatpush1.msra.mxu0 0.0
      %4316 = vmatprep.subr.mxu0 0.0
      %4317 = vmatpush1.msra.mxu0 0.0
      %4318 = vmatprep.subr.mxu0 0.0
      %4319 = vmatpush1.msra.mxu0 0.0
      %4320 = vmatprep.subr.mxu0 0.0
      %4321 = vmatpush1.msra.mxu0 0.0
      %4322 = vmatprep.subr.mxu0 0.0
      %4323 = vmatpush1.msra.mxu0 0.0
      %4324 = vmatprep.subr.mxu0 0.0
      %4325 = vmatpush1.msra.mxu0 0.0
      %4326 = vmatprep.subr.mxu0 0.0
      %4327 = vmatpush1.msra.mxu0 0.0
      %4328 = vmatprep.subr.mxu0 0.0
      %4329 = vmatpush1.msra.mxu0 0.0
      %4330 = vmatprep.subr.mxu0 0.0
      %4331 = vmatpush1.msra.mxu0 0.0
      %4332 = vmatprep.subr.mxu0 0.0
      %4333 = vmatpush1.msra.mxu0 0.0
      %4334 = vmatprep.subr.mxu0 0.0
      %4335 = vmatpush1.msra.mxu0 0.0
      %4336 = vmatprep.subr.mxu0 0.0
      %4337 = vmatpush1.msra.mxu0 0.0
      %4338 = vmatprep.subr.mxu0 0.0
      %4339 = vmatpush1.msra.mxu0 0.0
      %4340 = vmatprep.mubr.f32.mxu0 0.0
      %4341 = vmatmul.mubr.f32.gmra.mrb[0].mxu0 %v1289
      %v4342 = vpop.f32.mrb[0].mxu0
      %v4343 = vadd.f32 0.0, %v4342
      %v4344 = vpop.f32.mrb[0].mxu0
      %4345 = vmatprep.mubr.f32.mxu0 0.0
      %4346 = vmatmul.mubr.f32.gmra.mrb[0].mxu0 %v1292
      %v4347 = vpop.f32.mrb[0].mxu0
      %v4348 = vadd.f32 0.0, %v4347
      %v4349 = vpop.f32.mrb[0].mxu0
      %4350 = vmatprep.mubr.f32.mxu0 0.0
      %4351 = vmatmul.mubr.f32.gmra.mrb[0].mxu0 %v1295
      %v4352 = vpop.f32.mrb[0].mxu0
      %v4353 = vadd.f32 0.0, %v4352
      %v4354 = vpop.f32.mrb[0].mxu0
      %4355 = vmatprep.mubr.f32.mxu0 0.0
      %4356 = vmatmul.mubr.f32.gmra.mrb[0].mxu0 %v1298
      %v4357 = vpop.f32.mrb[0].mxu0
      %v4358 = vadd.f32 0.0, %v4357
      %v4359 = vpop.f32.mrb[0].mxu0
      %4360 = vmatprep.mubr.f32.mxu0 0.0
      %4361 = vmatmul.mubr.f32.gmra.mrb[0].mxu0 %v1301
      %v4362 = vpop.f32.mrb[0].mxu0
      %v4363 = vadd.f32 0.0, %v4362
      %v4364 = vpop.f32.mrb[0].mxu0
      %4365 = vmatprep.mubr.f32.mxu0 0.0
      %4366 = vmatmul.mubr.f32.gmra.mrb[0].mxu0 %v1304
      %v4367 = vpop.f32.mrb[0].mxu0
      %v4368 = vadd.f32 0.0, %v4367
      %v4369 = vpop.f32.mrb[0].mxu0
      %4370 = vmatprep.mubr.f32.mxu0 0.0
      %4371 = vmatmul.mubr.f32.gmra.mrb[0].mxu0 %v1307
      %v4372 = vpop.f32.mrb[0].mxu0
      %v4373 = vadd.f32 0.0, %v4372
      %v4374 = vpop.f32.mrb[0].mxu0
      %4375 = vmatprep.mubr.f32.mxu0 0.0
      %4376 = vmatmul.mubr.f32.gmra.mrb[0].mxu0 %v1310
      %v4377 = vpop.f32.mrb[0].mxu0
      %v4378 = vadd.f32 0.0, %v4377
      %v4379 = vpop.f32.mrb[0].mxu0
      %4380 = vmatprep.mubr.f32.mxu0 0.0
      %4381 = vmatmul.mubr.f32.gmra.mrb[0].mxu0 %v1313
      %v4382 = vpop.f32.mrb[0].mxu0
      %v4383 = vadd.f32 0.0, %v4382
      %v4384 = vpop.f32.mrb[0].mxu0
      %4385 = vdwg.mxu0
      %v4386 = vadd.f32 %v4267, %v4343
      %v4387 = vadd.f32 %v4268, %v4348
      %v4388 = vadd.f32 %v4269, %v4353
      %v4389 = vadd.f32 %v4270, %v4358
      %v4390 = vadd.f32 %v4271, %v4363
      %v4391 = vadd.f32 %v4272, %v4368
      %v4392 = vadd.f32 %v4273, %v4373
      %v4393 = vadd.f32 %v4274, %v4378
      %v4394 = vadd.f32 %v4275, %v4383
      %4395 = vmatprep.subr.mxu0 0.0
      %4396 = vmatpush1.msra.mxu0 %v836
      %4397 = vmatprep.subr.mxu0 0.0
      %4398 = vmatpush1.msra.mxu0 0.0
      %4399 = vmatprep.subr.mxu0 0.0
      %4400 = vmatpush1.msra.mxu0 0.0
      %4401 = vmatprep.subr.mxu0 0.0
      %4402 = vmatpush1.msra.mxu0 0.0
      %4403 = vmatprep.subr.mxu0 0.0
      %4404 = vmatpush1.msra.mxu0 0.0
      %4405 = vmatprep.subr.mxu0 0.0
      %4406 = vmatpush1.msra.mxu0 0.0
      %4407 = vmatprep.subr.mxu0 0.0
      %4408 = vmatpush1.msra.mxu0 0.0
      %4409 = vmatprep.subr.mxu0 0.0
      %4410 = vmatpush1.msra.mxu0 0.0
      %4411 = vmatprep.subr.mxu0 0.0
      %4412 = vmatpush1.msra.mxu0 0.0
      %4413 = vmatprep.subr.mxu0 0.0
      %4414 = vmatpush1.msra.mxu0 0.0
      %4415 = vmatprep.subr.mxu0 0.0
      %4416 = vmatpush1.msra.mxu0 0.0
      %4417 = vmatprep.subr.mxu0 0.0
      %4418 = vmatpush1.msra.mxu0 0.0
      %4419 = vmatprep.subr.mxu0 0.0
      %4420 = vmatpush1.msra.mxu0 0.0
      %4421 = vmatprep.subr.mxu0 0.0
      %4422 = vmatpush1.msra.mxu0 0.0
      %4423 = vmatprep.subr.mxu0 0.0
      %4424 = vmatpush1.msra.mxu0 0.0
      %4425 = vmatprep.subr.mxu0 0.0
      %4426 = vmatpush1.msra.mxu0 0.0
      %4427 = vmatprep.subr.mxu0 0.0
      %4428 = vmatpush1.msra.mxu0 0.0
      %4429 = vmatprep.subr.mxu0 0.0
      %4430 = vmatpush1.msra.mxu0 0.0
      %4431 = vmatprep.subr.mxu0 0.0
      %4432 = vmatpush1.msra.mxu0 0.0
      %4433 = vmatprep.subr.mxu0 0.0
      %4434 = vmatpush1.msra.mxu0 0.0
      %4435 = vmatprep.subr.mxu0 0.0
      %4436 = vmatpush1.msra.mxu0 0.0
      %4437 = vmatprep.subr.mxu0 0.0
      %4438 = vmatpush1.msra.mxu0 0.0
      %4439 = vmatprep.subr.mxu0 0.0
      %4440 = vmatpush1.msra.mxu0 0.0
      %4441 = vmatprep.subr.mxu0 0.0
      %4442 = vmatpush1.msra.mxu0 0.0
      %4443 = vmatprep.subr.mxu0 0.0
      %4444 = vmatpush1.msra.mxu0 0.0
      %4445 = vmatprep.subr.mxu0 0.0
      %4446 = vmatpush1.msra.mxu0 0.0
      %4447 = vmatprep.subr.mxu0 0.0
      %4448 = vmatpush1.msra.mxu0 0.0
      %4449 = vmatprep.subr.mxu0 0.0
      %4450 = vmatpush1.msra.mxu0 0.0
      %4451 = vmatprep.subr.mxu0 0.0
      %4452 = vmatpush1.msra.mxu0 0.0
      %4453 = vmatprep.subr.mxu0 0.0
      %4454 = vmatpush1.msra.mxu0 0.0
      %4455 = vmatprep.subr.mxu0 0.0
      %4456 = vmatpush1.msra.mxu0 0.0
      %4457 = vmatprep.subr.mxu0 0.0
      %4458 = vmatpush1.msra.mxu0 0.0
      %4459 = vmatprep.mubr.f32.mxu0 0.0
      %4460 = vmatmul.mubr.f32.gmra.mrb[0].mxu0 %v1449
      %v4461 = vpop.f32.mrb[0].mxu0
      %v4462 = vadd.f32 0.0, %v4461
      %v4463 = vpop.f32.mrb[0].mxu0
      %4464 = vmatprep.mubr.f32.mxu0 0.0
      %4465 = vmatmul.mubr.f32.gmra.mrb[0].mxu0 %v1452
      %v4466 = vpop.f32.mrb[0].mxu0
      %v4467 = vadd.f32 0.0, %v4466
      %v4468 = vpop.f32.mrb[0].mxu0
      %4469 = vmatprep.mubr.f32.mxu0 0.0
      %4470 = vmatmul.mubr.f32.gmra.mrb[0].mxu0 %v1455
      %v4471 = vpop.f32.mrb[0].mxu0
      %v4472 = vadd.f32 0.0, %v4471
      %v4473 = vpop.f32.mrb[0].mxu0
      %4474 = vmatprep.mubr.f32.mxu0 0.0
      %4475 = vmatmul.mubr.f32.gmra.mrb[0].mxu0 %v1458
      %v4476 = vpop.f32.mrb[0].mxu0
      %v4477 = vadd.f32 0.0, %v4476
      %v4478 = vpop.f32.mrb[0].mxu0
      %4479 = vmatprep.mubr.f32.mxu0 0.0
      %4480 = vmatmul.mubr.f32.gmra.mrb[0].mxu0 %v1461
      %v4481 = vpop.f32.mrb[0].mxu0
      %v4482 = vadd.f32 0.0, %v4481
      %v4483 = vpop.f32.mrb[0].mxu0
      %4484 = vmatprep.mubr.f32.mxu0 0.0
      %4485 = vmatmul.mubr.f32.gmra.mrb[0].mxu0 %v1464
      %v4486 = vpop.f32.mrb[0].mxu0
      %v4487 = vadd.f32 0.0, %v4486
      %v4488 = vpop.f32.mrb[0].mxu0
      %4489 = vmatprep.mubr.f32.mxu0 0.0
      %4490 = vmatmul.mubr.f32.gmra.mrb[0].mxu0 %v1467
      %v4491 = vpop.f32.mrb[0].mxu0
      %v4492 = vadd.f32 0.0, %v4491
      %v4493 = vpop.f32.mrb[0].mxu0
      %4494 = vmatprep.mubr.f32.mxu0 0.0
      %4495 = vmatmul.mubr.f32.gmra.mrb[0].mxu0 %v1470
      %v4496 = vpop.f32.mrb[0].mxu0
      %v4497 = vadd.f32 0.0, %v4496
      %v4498 = vpop.f32.mrb[0].mxu0
      %4499 = vmatprep.mubr.f32.mxu0 0.0
      %4500 = vmatmul.mubr.f32.gmra.mrb[0].mxu0 %v1473
      %v4501 = vpop.f32.mrb[0].mxu0
      %v4502 = vadd.f32 0.0, %v4501
      %v4503 = vpop.f32.mrb[0].mxu0
      %4504 = vdwg.mxu0
      %v4505 = vadd.f32 %v4386, %v4462
      %v4506 = vadd.f32 %v4387, %v4467
      %v4507 = vadd.f32 %v4388, %v4472
      %v4508 = vadd.f32 %v4389, %v4477
      %v4509 = vadd.f32 %v4390, %v4482
      %v4510 = vadd.f32 %v4391, %v4487
      %v4511 = vadd.f32 %v4392, %v4492
      %v4512 = vadd.f32 %v4393, %v4497
      %v4513 = vadd.f32 %v4394, %v4502
      %4514 = vmatprep.subr.mxu0 0.0
      %4515 = vmatpush1.msra.mxu0 %v996
      %4516 = vmatprep.subr.mxu0 0.0
      %4517 = vmatpush1.msra.mxu0 0.0
      %4518 = vmatprep.subr.mxu0 0.0
      %4519 = vmatpush1.msra.mxu0 0.0
      %4520 = vmatprep.subr.mxu0 0.0
      %4521 = vmatpush1.msra.mxu0 0.0
      %4522 = vmatprep.subr.mxu0 0.0
      %4523 = vmatpush1.msra.mxu0 0.0
      %4524 = vmatprep.subr.mxu0 0.0
      %4525 = vmatpush1.msra.mxu0 0.0
      %4526 = vmatprep.subr.mxu0 0.0
      %4527 = vmatpush1.msra.mxu0 0.0
      %4528 = vmatprep.subr.mxu0 0.0
      %4529 = vmatpush1.msra.mxu0 0.0
      %4530 = vmatprep.subr.mxu0 0.0
      %4531 = vmatpush1.msra.mxu0 0.0
      %4532 = vmatprep.subr.mxu0 0.0
      %4533 = vmatpush1.msra.mxu0 0.0
      %4534 = vmatprep.subr.mxu0 0.0
      %4535 = vmatpush1.msra.mxu0 0.0
      %4536 = vmatprep.subr.mxu0 0.0
      %4537 = vmatpush1.msra.mxu0 0.0
      %4538 = vmatprep.subr.mxu0 0.0
      %4539 = vmatpush1.msra.mxu0 0.0
      %4540 = vmatprep.subr.mxu0 0.0
      %4541 = vmatpush1.msra.mxu0 0.0
      %4542 = vmatprep.subr.mxu0 0.0
      %4543 = vmatpush1.msra.mxu0 0.0
      %4544 = vmatprep.subr.mxu0 0.0
      %4545 = vmatpush1.msra.mxu0 0.0
      %4546 = vmatprep.subr.mxu0 0.0
      %4547 = vmatpush1.msra.mxu0 0.0
      %4548 = vmatprep.subr.mxu0 0.0
      %4549 = vmatpush1.msra.mxu0 0.0
      %4550 = vmatprep.subr.mxu0 0.0
      %4551 = vmatpush1.msra.mxu0 0.0
      %4552 = vmatprep.subr.mxu0 0.0
      %4553 = vmatpush1.msra.mxu0 0.0
      %4554 = vmatprep.subr.mxu0 0.0
      %4555 = vmatpush1.msra.mxu0 0.0
      %4556 = vmatprep.subr.mxu0 0.0
      %4557 = vmatpush1.msra.mxu0 0.0
      %4558 = vmatprep.subr.mxu0 0.0
      %4559 = vmatpush1.msra.mxu0 0.0
      %4560 = vmatprep.subr.mxu0 0.0
      %4561 = vmatpush1.msra.mxu0 0.0
      %4562 = vmatprep.subr.mxu0 0.0
      %4563 = vmatpush1.msra.mxu0 0.0
      %4564 = vmatprep.subr.mxu0 0.0
      %4565 = vmatpush1.msra.mxu0 0.0
      %4566 = vmatprep.subr.mxu0 0.0
      %4567 = vmatpush1.msra.mxu0 0.0
      %4568 = vmatprep.subr.mxu0 0.0
      %4569 = vmatpush1.msra.mxu0 0.0
      %4570 = vmatprep.subr.mxu0 0.0
      %4571 = vmatpush1.msra.mxu0 0.0
      %4572 = vmatprep.subr.mxu0 0.0
      %4573 = vmatpush1.msra.mxu0 0.0
      %4574 = vmatprep.subr.mxu0 0.0
      %4575 = vmatpush1.msra.mxu0 0.0
      %4576 = vmatprep.subr.mxu0 0.0
      %4577 = vmatpush1.msra.mxu0 0.0
      %4578 = vmatprep.mubr.f32.mxu0 0.0
      %4579 = vmatmul.mubr.f32.gmra.mrb[0].mxu0 %v2613
      %v4580 = vpop.f32.mrb[0].mxu0
      %v4581 = vadd.f32 0.0, %v4580
      %v4582 = vpop.f32.mrb[0].mxu0
      %4583 = vmatprep.mubr.f32.mxu0 0.0
      %4584 = vmatmul.mubr.f32.gmra.mrb[0].mxu0 %v2616
      %v4585 = vpop.f32.mrb[0].mxu0
      %v4586 = vadd.f32 0.0, %v4585
      %v4587 = vpop.f32.mrb[0].mxu0
      %4588 = vmatprep.mubr.f32.mxu0 0.0
      %4589 = vmatmul.mubr.f32.gmra.mrb[0].mxu0 %v2619
      %v4590 = vpop.f32.mrb[0].mxu0
      %v4591 = vadd.f32 0.0, %v4590
      %v4592 = vpop.f32.mrb[0].mxu0
      %4593 = vmatprep.mubr.f32.mxu0 0.0
      %4594 = vmatmul.mubr.f32.gmra.mrb[0].mxu0 %v2622
      %v4595 = vpop.f32.mrb[0].mxu0
      %v4596 = vadd.f32 0.0, %v4595
      %v4597 = vpop.f32.mrb[0].mxu0
      %4598 = vmatprep.mubr.f32.mxu0 0.0
      %4599 = vmatmul.mubr.f32.gmra.mrb[0].mxu0 %v2625
      %v4600 = vpop.f32.mrb[0].mxu0
      %v4601 = vadd.f32 0.0, %v4600
      %v4602 = vpop.f32.mrb[0].mxu0
      %4603 = vmatprep.mubr.f32.mxu0 0.0
      %4604 = vmatmul.mubr.f32.gmra.mrb[0].mxu0 %v2628
      %v4605 = vpop.f32.mrb[0].mxu0
      %v4606 = vadd.f32 0.0, %v4605
      %v4607 = vpop.f32.mrb[0].mxu0
      %4608 = vmatprep.mubr.f32.mxu0 0.0
      %4609 = vmatmul.mubr.f32.gmra.mrb[0].mxu0 %v2631
      %v4610 = vpop.f32.mrb[0].mxu0
      %v4611 = vadd.f32 0.0, %v4610
      %v4612 = vpop.f32.mrb[0].mxu0
      %4613 = vmatprep.mubr.f32.mxu0 0.0
      %4614 = vmatmul.mubr.f32.gmra.mrb[0].mxu0 %v2634
      %v4615 = vpop.f32.mrb[0].mxu0
      %v4616 = vadd.f32 0.0, %v4615
      %v4617 = vpop.f32.mrb[0].mxu0
      %4618 = vmatprep.mubr.f32.mxu0 0.0
      %4619 = vmatmul.mubr.f32.gmra.mrb[0].mxu0 %v2637
      %v4620 = vpop.f32.mrb[0].mxu0
      %v4621 = vadd.f32 0.0, %v4620
      %v4622 = vpop.f32.mrb[0].mxu0
      %4623 = vdwg.mxu0
      %v4624 = vadd.f32 %v4505, %v4581
      %v4625 = vadd.f32 %v4506, %v4586
      %v4626 = vadd.f32 %v4507, %v4591
      %v4627 = vadd.f32 %v4508, %v4596
      %v4628 = vadd.f32 %v4509, %v4601
      %v4629 = vadd.f32 %v4510, %v4606
      %v4630 = vadd.f32 %v4511, %v4611
      %v4631 = vadd.f32 %v4512, %v4616
      %v4632 = vadd.f32 %v4513, %v4621
      %4633 = vmatprep.subr.mxu0 0.0
      %4634 = vmatpush1.msra.mxu0 %v1156
      %4635 = vmatprep.subr.mxu0 0.0
      %4636 = vmatpush1.msra.mxu0 0.0
      %4637 = vmatprep.subr.mxu0 0.0
      %4638 = vmatpush1.msra.mxu0 0.0
      %4639 = vmatprep.subr.mxu0 0.0
      %4640 = vmatpush1.msra.mxu0 0.0
      %4641 = vmatprep.subr.mxu0 0.0
      %4642 = vmatpush1.msra.mxu0 0.0
      %4643 = vmatprep.subr.mxu0 0.0
      %4644 = vmatpush1.msra.mxu0 0.0
      %4645 = vmatprep.subr.mxu0 0.0
      %4646 = vmatpush1.msra.mxu0 0.0
      %4647 = vmatprep.subr.mxu0 0.0
      %4648 = vmatpush1.msra.mxu0 0.0
      %4649 = vmatprep.subr.mxu0 0.0
      %4650 = vmatpush1.msra.mxu0 0.0
      %4651 = vmatprep.subr.mxu0 0.0
      %4652 = vmatpush1.msra.mxu0 0.0
      %4653 = vmatprep.subr.mxu0 0.0
      %4654 = vmatpush1.msra.mxu0 0.0
      %4655 = vmatprep.subr.mxu0 0.0
      %4656 = vmatpush1.msra.mxu0 0.0
      %4657 = vmatprep.subr.mxu0 0.0
      %4658 = vmatpush1.msra.mxu0 0.0
      %4659 = vmatprep.subr.mxu0 0.0
      %4660 = vmatpush1.msra.mxu0 0.0
      %4661 = vmatprep.subr.mxu0 0.0
      %4662 = vmatpush1.msra.mxu0 0.0
      %4663 = vmatprep.subr.mxu0 0.0
      %4664 = vmatpush1.msra.mxu0 0.0
      %4665 = vmatprep.subr.mxu0 0.0
      %4666 = vmatpush1.msra.mxu0 0.0
      %4667 = vmatprep.subr.mxu0 0.0
      %4668 = vmatpush1.msra.mxu0 0.0
      %4669 = vmatprep.subr.mxu0 0.0
      %4670 = vmatpush1.msra.mxu0 0.0
      %4671 = vmatprep.subr.mxu0 0.0
      %4672 = vmatpush1.msra.mxu0 0.0
      %4673 = vmatprep.subr.mxu0 0.0
      %4674 = vmatpush1.msra.mxu0 0.0
      %4675 = vmatprep.subr.mxu0 0.0
      %4676 = vmatpush1.msra.mxu0 0.0
      %4677 = vmatprep.subr.mxu0 0.0
      %4678 = vmatpush1.msra.mxu0 0.0
      %4679 = vmatprep.subr.mxu0 0.0
      %4680 = vmatpush1.msra.mxu0 0.0
      %4681 = vmatprep.subr.mxu0 0.0
      %4682 = vmatpush1.msra.mxu0 0.0
      %4683 = vmatprep.subr.mxu0 0.0
      %4684 = vmatpush1.msra.mxu0 0.0
      %4685 = vmatprep.subr.mxu0 0.0
      %4686 = vmatpush1.msra.mxu0 0.0
      %4687 = vmatprep.subr.mxu0 0.0
      %4688 = vmatpush1.msra.mxu0 0.0
      %4689 = vmatprep.subr.mxu0 0.0
      %4690 = vmatpush1.msra.mxu0 0.0
      %4691 = vmatprep.subr.mxu0 0.0
      %4692 = vmatpush1.msra.mxu0 0.0
      %4693 = vmatprep.subr.mxu0 0.0
      %4694 = vmatpush1.msra.mxu0 0.0
      %4695 = vmatprep.subr.mxu0 0.0
      %4696 = vmatpush1.msra.mxu0 0.0
      %4697 = vmatprep.mubr.f32.mxu0 0.0
      %4698 = vmatmul.mubr.f32.gmra.mrb[0].mxu0 %v3628
      %v4699 = vpop.f32.mrb[0].mxu0
      %v4700 = vadd.f32 0.0, %v4699
      %v4701 = vpop.f32.mrb[0].mxu0
      %4702 = vmatprep.mubr.f32.mxu0 0.0
      %4703 = vmatmul.mubr.f32.gmra.mrb[0].mxu0 %v3631
      %v4704 = vpop.f32.mrb[0].mxu0
      %v4705 = vadd.f32 0.0, %v4704
      %v4706 = vpop.f32.mrb[0].mxu0
      %4707 = vmatprep.mubr.f32.mxu0 0.0
      %4708 = vmatmul.mubr.f32.gmra.mrb[0].mxu0 %v3634
      %v4709 = vpop.f32.mrb[0].mxu0
      %v4710 = vadd.f32 0.0, %v4709
      %v4711 = vpop.f32.mrb[0].mxu0
      %4712 = vmatprep.mubr.f32.mxu0 0.0
      %4713 = vmatmul.mubr.f32.gmra.mrb[0].mxu0 %v3637
      %v4714 = vpop.f32.mrb[0].mxu0
      %v4715 = vadd.f32 0.0, %v4714
      %v4716 = vpop.f32.mrb[0].mxu0
      %4717 = vmatprep.mubr.f32.mxu0 0.0
      %4718 = vmatmul.mubr.f32.gmra.mrb[0].mxu0 %v3640
      %v4719 = vpop.f32.mrb[0].mxu0
      %v4720 = vadd.f32 0.0, %v4719
      %v4721 = vpop.f32.mrb[0].mxu0
      %4722 = vmatprep.mubr.f32.mxu0 0.0
      %4723 = vmatmul.mubr.f32.gmra.mrb[0].mxu0 %v3643
      %v4724 = vpop.f32.mrb[0].mxu0
      %v4725 = vadd.f32 0.0, %v4724
      %v4726 = vpop.f32.mrb[0].mxu0
      %4727 = vmatprep.mubr.f32.mxu0 0.0
      %4728 = vmatmul.mubr.f32.gmra.mrb[0].mxu0 %v3646
      %v4729 = vpop.f32.mrb[0].mxu0
      %v4730 = vadd.f32 0.0, %v4729
      %v4731 = vpop.f32.mrb[0].mxu0
      %4732 = vmatprep.mubr.f32.mxu0 0.0
      %4733 = vmatmul.mubr.f32.gmra.mrb[0].mxu0 %v3649
      %v4734 = vpop.f32.mrb[0].mxu0
      %v4735 = vadd.f32 0.0, %v4734
      %v4736 = vpop.f32.mrb[0].mxu0
      %4737 = vmatprep.mubr.f32.mxu0 0.0
      %4738 = vmatmul.mubr.f32.gmra.mrb[0].mxu0 %v3652
      %v4739 = vpop.f32.mrb[0].mxu0
      %v4740 = vadd.f32 0.0, %v4739
      %v4741 = vpop.f32.mrb[0].mxu0
      %4742 = vdwg.mxu0
      %v4743 = vadd.f32 %v4624, %v4700
      %v4744 = vadd.f32 %v4625, %v4705
      %v4745 = vadd.f32 %v4626, %v4710
      %v4746 = vadd.f32 %v4627, %v4715
      %v4747 = vadd.f32 %v4628, %v4720
      %v4748 = vadd.f32 %v4629, %v4725
      %v4749 = vadd.f32 %v4630, %v4730
      %v4750 = vadd.f32 %v4631, %v4735
      %v4751 = vadd.f32 %v4632, %v4740
      %4752 = vmatprep.subr.mxu0 0.0
      %4753 = vmatpush1.msra.mxu0 %v1316
      %4754 = vmatprep.subr.mxu0 0.0
      %4755 = vmatpush1.msra.mxu0 0.0
      %4756 = vmatprep.subr.mxu0 0.0
      %4757 = vmatpush1.msra.mxu0 0.0
      %4758 = vmatprep.subr.mxu0 0.0
      %4759 = vmatpush1.msra.mxu0 0.0
      %4760 = vmatprep.subr.mxu0 0.0
      %4761 = vmatpush1.msra.mxu0 0.0
      %4762 = vmatprep.subr.mxu0 0.0
      %4763 = vmatpush1.msra.mxu0 0.0
      %4764 = vmatprep.subr.mxu0 0.0
      %4765 = vmatpush1.msra.mxu0 0.0
      %4766 = vmatprep.subr.mxu0 0.0
      %4767 = vmatpush1.msra.mxu0 0.0
      %4768 = vmatprep.subr.mxu0 0.0
      %4769 = vmatpush1.msra.mxu0 0.0
      %4770 = vmatprep.subr.mxu0 0.0
      %4771 = vmatpush1.msra.mxu0 0.0
      %4772 = vmatprep.subr.mxu0 0.0
      %4773 = vmatpush1.msra.mxu0 0.0
      %4774 = vmatprep.subr.mxu0 0.0
      %4775 = vmatpush1.msra.mxu0 0.0
      %4776 = vmatprep.subr.mxu0 0.0
      %4777 = vmatpush1.msra.mxu0 0.0
      %4778 = vmatprep.subr.mxu0 0.0
      %4779 = vmatpush1.msra.mxu0 0.0
      %4780 = vmatprep.subr.mxu0 0.0
      %4781 = vmatpush1.msra.mxu0 0.0
      %4782 = vmatprep.subr.mxu0 0.0
      %4783 = vmatpush1.msra.mxu0 0.0
      %4784 = vmatprep.subr.mxu0 0.0
      %4785 = vmatpush1.msra.mxu0 0.0
      %4786 = vmatprep.subr.mxu0 0.0
      %4787 = vmatpush1.msra.mxu0 0.0
      %4788 = vmatprep.subr.mxu0 0.0
      %4789 = vmatpush1.msra.mxu0 0.0
      %4790 = vmatprep.subr.mxu0 0.0
      %4791 = vmatpush1.msra.mxu0 0.0
      %4792 = vmatprep.subr.mxu0 0.0
      %4793 = vmatpush1.msra.mxu0 0.0
      %4794 = vmatprep.subr.mxu0 0.0
      %4795 = vmatpush1.msra.mxu0 0.0
      %4796 = vmatprep.subr.mxu0 0.0
      %4797 = vmatpush1.msra.mxu0 0.0
      %4798 = vmatprep.subr.mxu0 0.0
      %4799 = vmatpush1.msra.mxu0 0.0
      %4800 = vmatprep.subr.mxu0 0.0
      %4801 = vmatpush1.msra.mxu0 0.0
      %4802 = vmatprep.subr.mxu0 0.0
      %4803 = vmatpush1.msra.mxu0 0.0
      %4804 = vmatprep.subr.mxu0 0.0
      %4805 = vmatpush1.msra.mxu0 0.0
      %4806 = vmatprep.subr.mxu0 0.0
      %4807 = vmatpush1.msra.mxu0 0.0
      %4808 = vmatprep.subr.mxu0 0.0
      %4809 = vmatpush1.msra.mxu0 0.0
      %4810 = vmatprep.subr.mxu0 0.0
      %4811 = vmatpush1.msra.mxu0 0.0
      %4812 = vmatprep.subr.mxu0 0.0
      %4813 = vmatpush1.msra.mxu0 0.0
      %4814 = vmatprep.subr.mxu0 0.0
      %4815 = vmatpush1.msra.mxu0 0.0
      %4816 = vmatprep.mubr.f32.mxu0 0.0
      %4817 = vmatmul.mubr.f32.gmra.mrb[0].mxu0 %v3783
      %v4818 = vpop.f32.mrb[0].mxu0
      %v4819 = vadd.f32 0.0, %v4818
      %v4820 = vpop.f32.mrb[0].mxu0
      %4821 = vmatprep.mubr.f32.mxu0 0.0
      %4822 = vmatmul.mubr.f32.gmra.mrb[0].mxu0 %v3786
      %v4823 = vpop.f32.mrb[0].mxu0
      %v4824 = vadd.f32 0.0, %v4823
      %v4825 = vpop.f32.mrb[0].mxu0
      %4826 = vmatprep.mubr.f32.mxu0 0.0
      %4827 = vmatmul.mubr.f32.gmra.mrb[0].mxu0 %v3789
      %v4828 = vpop.f32.mrb[0].mxu0
      %v4829 = vadd.f32 0.0, %v4828
      %v4830 = vpop.f32.mrb[0].mxu0
      %4831 = vmatprep.mubr.f32.mxu0 0.0
      %4832 = vmatmul.mubr.f32.gmra.mrb[0].mxu0 %v3792
      %v4833 = vpop.f32.mrb[0].mxu0
      %v4834 = vadd.f32 0.0, %v4833
      %v4835 = vpop.f32.mrb[0].mxu0
      %4836 = vmatprep.mubr.f32.mxu0 0.0
      %4837 = vmatmul.mubr.f32.gmra.mrb[0].mxu0 %v3795
      %v4838 = vpop.f32.mrb[0].mxu0
      %v4839 = vadd.f32 0.0, %v4838
      %v4840 = vpop.f32.mrb[0].mxu0
      %4841 = vmatprep.mubr.f32.mxu0 0.0
      %4842 = vmatmul.mubr.f32.gmra.mrb[0].mxu0 %v3798
      %v4843 = vpop.f32.mrb[0].mxu0
      %v4844 = vadd.f32 0.0, %v4843
      %v4845 = vpop.f32.mrb[0].mxu0
      %4846 = vmatprep.mubr.f32.mxu0 0.0
      %4847 = vmatmul.mubr.f32.gmra.mrb[0].mxu0 %v3801
      %v4848 = vpop.f32.mrb[0].mxu0
      %v4849 = vadd.f32 0.0, %v4848
      %v4850 = vpop.f32.mrb[0].mxu0
      %4851 = vmatprep.mubr.f32.mxu0 0.0
      %4852 = vmatmul.mubr.f32.gmra.mrb[0].mxu0 %v3804
      %v4853 = vpop.f32.mrb[0].mxu0
      %v4854 = vadd.f32 0.0, %v4853
      %v4855 = vpop.f32.mrb[0].mxu0
      %4856 = vmatprep.mubr.f32.mxu0 0.0
      %4857 = vmatmul.mubr.f32.gmra.mrb[0].mxu0 %v3807
      %v4858 = vpop.f32.mrb[0].mxu0
      %v4859 = vadd.f32 0.0, %v4858
      %v4860 = vpop.f32.mrb[0].mxu0
      %4861 = vdwg.mxu0
      %v4862 = vadd.f32 %v4743, %v4819
      %v4863 = vadd.f32 %v4744, %v4824
      %v4864 = vadd.f32 %v4745, %v4829
      %v4865 = vadd.f32 %v4746, %v4834
      %v4866 = vadd.f32 %v4747, %v4839
      %v4867 = vadd.f32 %v4748, %v4844
      %v4868 = vadd.f32 %v4749, %v4849
      %v4869 = vadd.f32 %v4750, %v4854
      %v4870 = vadd.f32 %v4751, %v4859
      %v4871 = vld [vmem:[%s796 + $0xa] sm:$0xff]
      %v4872 = vld [vmem:[%s796 + $0x12] sm:$0xff]
      %v4873 = vld [vmem:[%s796 + $0x1a] sm:$0xff]
      %v4874 = vld [vmem:[%s796 + $0x22] sm:$0xff]
      %v4875 = vld [vmem:[%s796 + $0x2a] sm:$0xff]
      %v4876 = vld [vmem:[%s796 + $0x32] sm:$0xff]
      %v4877 = vld [vmem:[%s796 + $0x3a] sm:$0xff]
      %v4878 = vld [vmem:[%s796 + $0x42] sm:$0xff]
      %v4879 = vld [vmem:[%s796 + $0x4a] sm:$0xff]
      %v4881 = vsel %vm193, %v4871, 0
      %v4884 = vsel %vm193, %v4872, 0
      %v4887 = vsel %vm193, %v4873, 0
      %v4890 = vsel %vm193, %v4874, 0
      %v4893 = vsel %vm193, %v4875, 0
      %v4896 = vsel %vm193, %v4876, 0
      %v4899 = vsel %vm193, %v4877, 0
      %v4902 = vsel %vm193, %v4878, 0
      %v4905 = vsel %vm193, %v4879, 0
      %4907 = vmatprep.subr.mxu0 0.0
      %4908 = vmatpush1.msra.mxu0 %v1476
      %4909 = vmatprep.subr.mxu0 0.0
      %4910 = vmatpush1.msra.mxu0 0.0
      %4911 = vmatprep.subr.mxu0 0.0
      %4912 = vmatpush1.msra.mxu0 0.0
      %4913 = vmatprep.subr.mxu0 0.0
      %4914 = vmatpush1.msra.mxu0 0.0
      %4915 = vmatprep.subr.mxu0 0.0
      %4916 = vmatpush1.msra.mxu0 0.0
      %4917 = vmatprep.subr.mxu0 0.0
      %4918 = vmatpush1.msra.mxu0 0.0
      %4919 = vmatprep.subr.mxu0 0.0
      %4920 = vmatpush1.msra.mxu0 0.0
      %4921 = vmatprep.subr.mxu0 0.0
      %4922 = vmatpush1.msra.mxu0 0.0
      %4923 = vmatprep.subr.mxu0 0.0
      %4924 = vmatpush1.msra.mxu0 0.0
      %4925 = vmatprep.subr.mxu0 0.0
      %4926 = vmatpush1.msra.mxu0 0.0
      %4927 = vmatprep.subr.mxu0 0.0
      %4928 = vmatpush1.msra.mxu0 0.0
      %4929 = vmatprep.subr.mxu0 0.0
      %4930 = vmatpush1.msra.mxu0 0.0
      %4931 = vmatprep.subr.mxu0 0.0
      %4932 = vmatpush1.msra.mxu0 0.0
      %4933 = vmatprep.subr.mxu0 0.0
      %4934 = vmatpush1.msra.mxu0 0.0
      %4935 = vmatprep.subr.mxu0 0.0
      %4936 = vmatpush1.msra.mxu0 0.0
      %4937 = vmatprep.subr.mxu0 0.0
      %4938 = vmatpush1.msra.mxu0 0.0
      %4939 = vmatprep.subr.mxu0 0.0
      %4940 = vmatpush1.msra.mxu0 0.0
      %4941 = vmatprep.subr.mxu0 0.0
      %4942 = vmatpush1.msra.mxu0 0.0
      %4943 = vmatprep.subr.mxu0 0.0
      %4944 = vmatpush1.msra.mxu0 0.0
      %4945 = vmatprep.subr.mxu0 0.0
      %4946 = vmatpush1.msra.mxu0 0.0
      %4947 = vmatprep.subr.mxu0 0.0
      %4948 = vmatpush1.msra.mxu0 0.0
      %4949 = vmatprep.subr.mxu0 0.0
      %4950 = vmatpush1.msra.mxu0 0.0
      %4951 = vmatprep.subr.mxu0 0.0
      %4952 = vmatpush1.msra.mxu0 0.0
      %4953 = vmatprep.subr.mxu0 0.0
      %4954 = vmatpush1.msra.mxu0 0.0
      %4955 = vmatprep.subr.mxu0 0.0
      %4956 = vmatpush1.msra.mxu0 0.0
      %4957 = vmatprep.subr.mxu0 0.0
      %4958 = vmatpush1.msra.mxu0 0.0
      %4959 = vmatprep.subr.mxu0 0.0
      %4960 = vmatpush1.msra.mxu0 0.0
      %4961 = vmatprep.subr.mxu0 0.0
      %4962 = vmatpush1.msra.mxu0 0.0
      %4963 = vmatprep.subr.mxu0 0.0
      %4964 = vmatpush1.msra.mxu0 0.0
      %4965 = vmatprep.subr.mxu0 0.0
      %4966 = vmatpush1.msra.mxu0 0.0
      %4967 = vmatprep.subr.mxu0 0.0
      %4968 = vmatpush1.msra.mxu0 0.0
      %4969 = vmatprep.subr.mxu0 0.0
      %4970 = vmatpush1.msra.mxu0 0.0
      %4971 = vmatprep.mubr.f32.mxu0 0.0
      %4972 = vmatmul.mubr.f32.gmra.mrb[0].mxu0 %v4881
      %v4973 = vpop.f32.mrb[0].mxu0
      %v4974 = vadd.f32 0.0, %v4973
      %v4975 = vpop.f32.mrb[0].mxu0
      %4976 = vmatprep.mubr.f32.mxu0 0.0
      %4977 = vmatmul.mubr.f32.gmra.mrb[0].mxu0 %v4884
      %v4978 = vpop.f32.mrb[0].mxu0
      %v4979 = vadd.f32 0.0, %v4978
      %v4980 = vpop.f32.mrb[0].mxu0
      %4981 = vmatprep.mubr.f32.mxu0 0.0
      %4982 = vmatmul.mubr.f32.gmra.mrb[0].mxu0 %v4887
      %v4983 = vpop.f32.mrb[0].mxu0
      %v4984 = vadd.f32 0.0, %v4983
      %v4985 = vpop.f32.mrb[0].mxu0
      %4986 = vmatprep.mubr.f32.mxu0 0.0
      %4987 = vmatmul.mubr.f32.gmra.mrb[0].mxu0 %v4890
      %v4988 = vpop.f32.mrb[0].mxu0
      %v4989 = vadd.f32 0.0, %v4988
      %v4990 = vpop.f32.mrb[0].mxu0
      %4991 = vmatprep.mubr.f32.mxu0 0.0
      %4992 = vmatmul.mubr.f32.gmra.mrb[0].mxu0 %v4893
      %v4993 = vpop.f32.mrb[0].mxu0
      %v4994 = vadd.f32 0.0, %v4993
      %v4995 = vpop.f32.mrb[0].mxu0
      %4996 = vmatprep.mubr.f32.mxu0 0.0
      %4997 = vmatmul.mubr.f32.gmra.mrb[0].mxu0 %v4896
      %v4998 = vpop.f32.mrb[0].mxu0
      %v4999 = vadd.f32 0.0, %v4998
      %v5000 = vpop.f32.mrb[0].mxu0
      %5001 = vmatprep.mubr.f32.mxu0 0.0
      %5002 = vmatmul.mubr.f32.gmra.mrb[0].mxu0 %v4899
      %v5003 = vpop.f32.mrb[0].mxu0
      %v5004 = vadd.f32 0.0, %v5003
      %v5005 = vpop.f32.mrb[0].mxu0
      %5006 = vmatprep.mubr.f32.mxu0 0.0
      %5007 = vmatmul.mubr.f32.gmra.mrb[0].mxu0 %v4902
      %v5008 = vpop.f32.mrb[0].mxu0
      %v5009 = vadd.f32 0.0, %v5008
      %v5010 = vpop.f32.mrb[0].mxu0
      %5011 = vmatprep.mubr.f32.mxu0 0.0
      %5012 = vmatmul.mubr.f32.gmra.mrb[0].mxu0 %v4905
      %v5013 = vpop.f32.mrb[0].mxu0
      %v5014 = vadd.f32 0.0, %v5013
      %v5015 = vpop.f32.mrb[0].mxu0
      %5016 = vdwg.mxu0
      %v5017 = vadd.f32 %v4862, %v4974
      %v5018 = vadd.f32 %v4863, %v4979
      %v5019 = vadd.f32 %v4864, %v4984
      %v5020 = vadd.f32 %v4865, %v4989
      %v5021 = vadd.f32 %v4866, %v4994
      %v5022 = vadd.f32 %v4867, %v4999
      %v5023 = vadd.f32 %v4868, %v5004
      %v5024 = vadd.f32 %v4869, %v5009
      %v5025 = vadd.f32 %v4870, %v5014
      %v5026 = vmax.f32 %v3928, %v5017
      %v5027 = vmax.f32 %v3929, %v5018
      %v5028 = vmax.f32 %v3930, %v5019
      %v5029 = vmax.f32 %v3931, %v5020
      %v5030 = vmax.f32 %v3932, %v5021
      %v5031 = vmax.f32 %v3933, %v5022
      %v5032 = vmax.f32 %v3934, %v5023
      %v5033 = vmax.f32 %v3935, %v5024
      %v5034 = vmax.f32 %v3936, %v5025
      %v5035 = vld [vmem:[%s2] sm:$0x1]
      %v5037 = vlaneseq
      %v5038 = vshrl.u32 %v5037, 7
      %v5039 = vsub.s32 0, %v5038
      %v5040 = vrot.slane %v5035, %v5039
      %v5042 = vadd.f32 %v5026, %v5040
      %v5043 = vadd.f32 %v5027, %v5040
      %v5044 = vadd.f32 %v5028, %v5040
      %v5045 = vadd.f32 %v5029, %v5040
      %v5046 = vadd.f32 %v5030, %v5040
      %v5047 = vadd.f32 %v5031, %v5040
      %v5048 = vadd.f32 %v5032, %v5040
      %v5049 = vadd.f32 %v5033, %v5040
      %v5050 = vadd.f32 %v5034, %v5040
      %v5051 = vmax.f32 %v5042, 0.0
      %v5052 = vmax.f32 %v5043, 0.0
      %v5053 = vmax.f32 %v5044, 0.0
      %v5054 = vmax.f32 %v5045, 0.0
      %v5055 = vmax.f32 %v5046, 0.0
      %v5056 = vmax.f32 %v5047, 0.0
      %v5057 = vmax.f32 %v5048, 0.0
      %v5058 = vmax.f32 %v5049, 0.0
      %v5059 = vmax.f32 %v5050, 0.0
      %vm5060 = vcmask 64512
      %5061 = vst.msk [vmem:[%s170] sm:$0xff] %vm5060, %v5051
      %5062 = vst.msk [vmem:[%s170 + $0x8] sm:$0xff] %vm5060, %v5052
      %5063 = vst.msk [vmem:[%s170 + $0x10] sm:$0xff] %vm5060, %v5053
      %5064 = vst.msk [vmem:[%s170 + $0x18] sm:$0xff] %vm5060, %v5054
      %5065 = vst.msk [vmem:[%s170 + $0x20] sm:$0xff] %vm5060, %v5055
      %5066 = vst.msk [vmem:[%s170 + $0x28] sm:$0xff] %vm5060, %v5056
      %5067 = vst.msk [vmem:[%s170 + $0x30] sm:$0xff] %vm5060, %v5057
      %5068 = vst.msk [vmem:[%s170 + $0x38] sm:$0xff] %vm5060, %v5058
      %5069 = vst.msk [vmem:[%s170 + $0x40] sm:$0xff] %vm5060, %v5059
      %p5070 = scmp.lt.s32.totalorder %s14, 1
      %s5071 = scalar_select %p5070, %s14, 1
      %s5072 = smul.addr %s5071, 9
      %s5073 = smul.addr %s5072, 8
      %s5074 = scalar_lea.vmem %s3, %s5073
      // Predicated region
      $region33: #{img_encoder_fixed.3} parent=31 // pred_check
        %p5075 = pneg %p100
      $region34: #{img_encoder_fixed.3} parent=31 // pred_check_branch
        %5077 = sbr.rel (%p5075) target = $region36
      $region35: #{img_encoder_fixed.3} parent=31 // pred_region
        _
      $region36: #{img_encoder_fixed.3} parent=31 // pred_fallthru
        _
    $region32: #{img_encoder_fixed.3} parent=5 // pred_fallthru
      _
    %p5078 = scmp.le.s32.totalorder 2, %s9
    // Predicated region
    $region37: #{img_encoder_fixed.3} parent=5 // pred_check
      %p5079 = pneg %p5078
    $region38: #{img_encoder_fixed.3} parent=5 // pred_check_branch
      %5081 = sbr.rel (%p5079) target = $region40
    $region39: #{img_encoder_fixed.3} parent=5 // pred_region
      %s5082 = ssub.s32 %s9, 2
      // Predicated region
      $region41: #{img_encoder_fixed.3} parent=39 // pred_check
        %p5083 = pneg %p106
      $region42: #{img_encoder_fixed.3} parent=39 // pred_check_branch
        %5085 = sbr.rel (%p5083) target = $region44
      $region43: #{img_encoder_fixed.3} parent=39 // pred_region
        %p5086 = scmp.lt.s32.totalorder %s15, 1
        %s5087 = scalar_select %p5086, %s15, 1
        %s5088 = smul.addr %s5087, 9
        %s5089 = smul.addr %s5088, 8
        %s5090 = scalar_lea.vmem %s3, %s5089
      $region44: #{img_encoder_fixed.3} parent=39 // pred_fallthru
        _
    $region40: #{img_encoder_fixed.3} parent=5 // pred_fallthru
      _
  $region6: #{img_encoder_fixed.3} parent=0 // loop_footer
    %s13 = sadd.s32 1, %s9
  $region7: #{img_encoder_fixed.3} parent=0 // loop_footer_branch
    %8 = sbr.rel target = $region3
  $region8: #{img_encoder_fixed.3} parent=0 // loop_exit
    _

</llo_original>
